<compile_context>
chip_gen: v7x
topology: tpu7x:2x2x1
jax: 0.10.0
libtpu: 0.0.40
codegen_flags: <defaults>
</compile_context>

<pallas_src>
import functools

import numpy as np
import jax
import jax.numpy as jnp
from jax.experimental import pallas as pl
from jax.experimental.pallas import tpu as pltpu


def _irblock_kernel(x_ref, bn1_s_ref, bn1_b_ref, t1_ref,
                    bn2_s_ref, bn2_b_ref, t2_ref,
                    fc1_wt_ref, fc1_b_ref, fc2_w_ref, fc2_b_ref,
                    out_ref, pad_ref, *, B, H, W, C, SH, M, off, w0, KM):
    WC = W * C

    # Zero the whole padded scratch once per grid step (== once per B samples).
    # This covers the per-sample halo rows, left/right halo columns, the
    # inter-sample gap rows AND the K-alignment padding lanes -- and it is safe
    # under megacore "parallel" grid splitting (no first-step-only guard).
    pad_ref[...] = jnp.zeros(pad_ref.shape, pad_ref.dtype)

    # ---- bn1 (folded affine) + ReLU on the whole (B, H, W*C) block ----
    h = jnp.maximum(x_ref[...] * bn1_s_ref[...] + bn1_b_ref[...], 0.0)
    hb = h.astype(pad_ref.dtype)

    # Scatter each sample's H interior rows into its (H+2)-row slab; the
    # interior lane offset `off` is 128-aligned.
    for s in range(B):
        pad_ref[s * SH + 1:s * SH + 1 + H, off:off + WC] = hb[s]

    def conv3x3(t_ref):
        # 3 large MXU calls (one per kernel row dy): (M, KM) @ (KM, W*C).
        acc = jnp.dot(pad_ref[0:M, w0:w0 + KM], t_ref[0],
                      preferred_element_type=jnp.float32)
        for dy in (1, 2):
            acc = acc + jnp.dot(pad_ref[dy:dy + M, w0:w0 + KM], t_ref[dy],
                                preferred_element_type=jnp.float32)
        return acc          # valid rows for sample s: [s*SH, s*SH + H)

    # ---- conv1, then bn2 + ReLU on valid rows only, write back for conv2 ----
    h1 = conv3x3(t1_ref)
    bn2_s = bn2_s_ref[...]
    bn2_b = bn2_b_ref[...]
    for s in range(B):
        h1s = jnp.maximum(h1[s * SH:s * SH + H, :] * bn2_s + bn2_b, 0.0)
        pad_ref[s * SH + 1:s * SH + 1 + H, off:off + WC] = h1s.astype(pad_ref.dtype)
    h2 = conv3x3(t2_ref)

    # ---- SE block + residual, per sample (tiny VPU/XLU work, off crit-path) ----
    hidden = fc1_wt_ref.shape[0]
    inv_hw = 1.0 / (H * W)
    fc2_bias = fc2_b_ref[...]                                   # (1, C)
    fc1_rows = [fc1_wt_ref[j:j + 1, :] for j in range(hidden)]  # (1, C) each
    fc2_rows = [fc2_w_ref[j:j + 1, :] for j in range(hidden)]   # (1, C) each
    fc1_bs = [fc1_b_ref[j] for j in range(hidden)]              # SMEM scalars
    for s in range(B):
        h2s = h2[s * SH:s * SH + H, :]                          # (H, W*C) f32
        rowsum = jnp.sum(h2s, axis=0, keepdims=True)            # (1, W*C)
        pooled = rowsum[:, 0:C]
        for xw in range(1, W):                                  # fold W lane-groups
            pooled = pooled + rowsum[:, xw * C:(xw + 1) * C]
        pooled = pooled * inv_hw                                # (1, C)
        g = fc2_bias
        for j in range(hidden):                                 # hidden = C // 16
            zj = jnp.sum(pooled * fc1_rows[j], axis=-1, keepdims=True)
            zj = jnp.maximum(zj + fc1_bs[j], 0.0)               # (1, 1)
            g = g + zj * fc2_rows[j]
        gate = jax.nn.sigmoid(g)                                # (1, C)
        gate_wc = jnp.concatenate([gate] * W, axis=-1)          # (1, W*C)
        # SE scale + residual; lane-dense unmasked (H, W*C) store per sample.
        out_ref[s] = (h2s * gate_wc + x_ref[s]).astype(out_ref.dtype)


def _mxu_k_depth():
    """MXU contraction depth: 256 on v6e/v7x, 128 on v5e and older."""
    try:
        kind = jax.devices()[0].device_kind.lower()
    except Exception:
        return 128
    if any(t in kind for t in ("v2", "v3", "v4", "v5")):
        return 128
    return 256


def _conv_row_toeplitz(w_hwio, W, k_total, row_offset):
    """3x3 HWIO conv weight -> 3 row-Toeplitz matmul operands of shape
    (k_total, W*Cout), with the payload placed at K-row offset `row_offset`
    (extra rows are zero so K-padding / lane-alignment contributes nothing)."""
    w = np.asarray(w_hwio, np.float32)
    kh, kw, cin, cout = w.shape
    T = np.zeros((kh, k_total, W * cout), np.float32)
    for dy in range(kh):
        for dx in range(kw):
            for x in range(W):
                r0 = row_offset + (x + dx) * cin
                T[dy, r0:r0 + cin, x * cout:(x + 1) * cout] = w[dy, dx]
    return T


def irblock_apply_lane_dense(x_ld, params, *, eps=1e-5, batch_block=16):
    """IRBlock forward on lane-dense activations x_ld: (N, H, W*C), channel
    fastest within each spatial column.  Use this entry point between chained
    IRBlocks to avoid per-block NCHW transposes."""
    x_ld = x_ld.astype(jnp.float32)
    N, H, WC = x_ld.shape
    C = params["w1"].shape[2]
    Cout = params["w1"].shape[3]
    assert WC % C == 0
    W = WC // C
    # stride=1 / downsample=None => residual requires inplanes == planes.
    assert C == Cout, "Pallas IRBlock supports stride=1, no downsample"
    hidden = params["fc1_w"].shape[-1]

    # ---- layout / tiling constants ----
    off = -(-C // 128) * 128                 # 128-aligned interior lane offset
    kw_raw = (W + 2) * C                     # raw contraction width (padded row)
    kw_al = -(-(off + (W + 1) * C) // 128) * 128   # lane-0-aligned, 128-multiple
    depth = _mxu_k_depth()
    if -(-kw_al // depth) <= -(-kw_raw // depth):
        w0, KM = 0, kw_al                    # v6e/v7x: aligned window, free K-pad
    else:
        w0, KM = off - C, kw_raw             # v5e: keep K minimal (no extra pass)
    L = w0 + KM                              # padded-row scratch width (lanes)

    B = max(1, min(batch_block, N))          # samples per grid step
    steps = -(-N // B)
    N_pad = steps * B
    SH = H + 2                               # rows per sample slab (with halos)
    M = -(-((B - 1) * SH + H) // 8) * 8      # matmul M (covers every valid row)
    pad_rows = M + 8                         # >= M + 2, 8-row aligned

    if N_pad != N:
        x_ld = jnp.concatenate(
            [x_ld, jnp.zeros((N_pad - N, H, WC), x_ld.dtype)], axis=0)

    def fold_bn(g, b, m, v):
        s = (g / jnp.sqrt(v + eps)).astype(jnp.float32)
        t = (b - m * s).astype(jnp.float32)
        return jnp.tile(s, W).reshape(1, WC), jnp.tile(t, W).reshape(1, WC)

    bn1_s, bn1_b = fold_bn(params["bn1_g"], params["bn1_b"],
                           params["bn1_m"], params["bn1_v"])
    bn2_s, bn2_b = fold_bn(params["bn2_g"], params["bn2_b"],
                           params["bn2_m"], params["bn2_v"])

    # bf16 MXU operands, f32 accumulation inside the kernel.
    row_off = (off - C) - w0
    t1 = jnp.asarray(_conv_row_toeplitz(params["w1"], W, KM, row_off), jnp.bfloat16)
    t2 = jnp.asarray(_conv_row_toeplitz(params["w2"], W, KM, row_off), jnp.bfloat16)

    fc1_wt = jnp.asarray(params["fc1_w"], jnp.float32).T        # (hidden, C)
    fc1_b = jnp.asarray(params["fc1_b"], jnp.float32)           # (hidden,) -> SMEM
    fc2_w = jnp.asarray(params["fc2_w"], jnp.float32)           # (hidden, C)
    fc2_b = jnp.asarray(params["fc2_b"], jnp.float32).reshape(1, C)

    flops = int(steps * 2 * 3 * 2 * M * KM * WC)                # 2 convs x 3 dy
    bytes_accessed = int(2 * N_pad * H * WC * 4 + (t1.size + t2.size) * 2
                         + 4 * WC * 4)

    kernel = functools.partial(_irblock_kernel, B=B, H=H, W=W, C=C, SH=SH,
                               M=M, off=off, w0=w0, KM=KM)

    out_ld = pl.pallas_call(
        kernel,
        out_shape=jax.ShapeDtypeStruct((N_pad, H, WC), jnp.float32),
        grid=(steps,),
        in_specs=[
            pl.BlockSpec((B, H, WC), lambda n: (n, 0, 0)),      # x block (lane-dense)
            pl.BlockSpec((1, WC), lambda n: (0, 0)),            # bn1 scale (W-tiled)
            pl.BlockSpec((1, WC), lambda n: (0, 0)),            # bn1 bias
            pl.BlockSpec((3, KM, WC), lambda n: (0, 0, 0)),     # conv1 Toeplitz bf16
            pl.BlockSpec((1, WC), lambda n: (0, 0)),            # bn2 scale
            pl.BlockSpec((1, WC), lambda n: (0, 0)),            # bn2 bias
            pl.BlockSpec((3, KM, WC), lambda n: (0, 0, 0)),     # conv2 Toeplitz bf16
            pl.BlockSpec((hidden, C), lambda n: (0, 0)),        # fc1 weight^T
            pl.BlockSpec(memory_space=pltpu.SMEM),              # fc1 bias scalars
            pl.BlockSpec((hidden, C), lambda n: (0, 0)),        # fc2 weight
            pl.BlockSpec((1, C), lambda n: (0, 0)),             # fc2 bias
        ],
        out_specs=pl.BlockSpec((B, H, WC), lambda n: (n, 0, 0)),
        scratch_shapes=[pltpu.VMEM((pad_rows, L), jnp.bfloat16)],  # stacked slabs
        compiler_params=pltpu.CompilerParams(
            dimension_semantics=("parallel",),                  # megacore on v7x
            vmem_limit_bytes=48 * 1024 * 1024),
        cost_estimate=pl.CostEstimate(flops=flops, transcendentals=N_pad * C,
                                      bytes_accessed=bytes_accessed),
    )(x_ld, bn1_s, bn1_b, t1, bn2_s, bn2_b, t2, fc1_wt, fc1_b, fc2_w, fc2_b)

    return out_ld[:N] if N_pad != N else out_ld


def irblock_forward(x_nchw, params, *, eps=1e-5, batch_block=16):
    """PyTorch-interface wrapper: NCHW in, NCHW out (transposes only at the
    network boundary; chained blocks should use irblock_apply_lane_dense)."""
    x_nchw = x_nchw.astype(jnp.float32)
    N, Cin, H, W = x_nchw.shape
    assert params["w1"].shape[2] == Cin and params["w1"].shape[3] == Cin, (
        "Pallas IRBlock supports stride=1, no downsample (inplanes == planes)")
    x_ld = jnp.transpose(x_nchw, (0, 2, 3, 1)).reshape(N, H, W * Cin)
    out_ld = irblock_apply_lane_dense(x_ld, params, eps=eps,
                                      batch_block=batch_block)
    out_nhwc = out_ld.reshape(N, H, W, Cin)
    return jnp.transpose(out_nhwc, (0, 3, 1, 2))


def ref_forward_nhwc(x, p, eps=1e-5):
    """Pure-JAX f32 reference (NHWC) for correctness checking."""
    def bn(h, g, b, m, v):
        return (h - m) * (g / jnp.sqrt(v + eps)) + b

    h = jax.nn.relu(bn(x, p["bn1_g"], p["bn1_b"], p["bn1_m"], p["bn1_v"]))
    h = jax.lax.conv_general_dilated(h, p["w1"], (1, 1), "SAME",
                                     dimension_numbers=("NHWC", "HWIO", "NHWC"))
    h = jax.nn.relu(bn(h, p["bn2_g"], p["bn2_b"], p["bn2_m"], p["bn2_v"]))
    h = jax.lax.conv_general_dilated(h, p["w2"], (1, 1), "SAME",
                                     dimension_numbers=("NHWC", "HWIO", "NHWC"))
    pooled = jnp.mean(h, axis=(1, 2))
    z = jax.nn.relu(pooled @ p["fc1_w"] + p["fc1_b"])
    gate = jax.nn.sigmoid(z @ p["fc2_w"] + p["fc2_b"])
    return h * gate[:, None, None, :] + x


def init_params(key, inplanes, planes, reduction=16):
    hidden = planes // reduction
    ks = jax.random.split(key, 10)
    p = {
        "bn1_g": 1.0 + 0.1 * jax.random.normal(ks[0], (inplanes,), jnp.float32),
        "bn1_b": 0.1 * jax.random.normal(ks[1], (inplanes,), jnp.float32),
        "bn1_m": 0.1 * jax.random.normal(ks[2], (inplanes,), jnp.float32),
        "bn1_v": 0.5 + jnp.abs(jax.random.normal(ks[3], (inplanes,), jnp.float32)),
        "w1": 0.1 * jax.random.normal(ks[4], (3, 3, inplanes, planes), jnp.float32),
        "bn2_g": 1.0 + 0.1 * jax.random.normal(ks[5], (planes,), jnp.float32),
        "bn2_b": 0.1 * jax.random.normal(ks[6], (planes,), jnp.float32),
        "bn2_m": 0.1 * jax.random.normal(ks[7], (planes,), jnp.float32),
        "bn2_v": 0.5 + jnp.abs(jax.random.normal(ks[8], (planes,), jnp.float32)),
        "w2": 0.1 * jax.random.normal(ks[9], (3, 3, planes, planes), jnp.float32),
    }
    ks2 = jax.random.split(jax.random.fold_in(key, 123), 4)
    p["fc1_w"] = 0.2 * jax.random.normal(ks2[0], (planes, hidden), jnp.float32)
    p["fc1_b"] = 0.1 * jax.random.normal(ks2[1], (hidden,), jnp.float32)
    p["fc2_w"] = 0.2 * jax.random.normal(ks2[2], (hidden, planes), jnp.float32)
    p["fc2_b"] = 0.1 * jax.random.normal(ks2[3], (planes,), jnp.float32)
    return p


if __name__ == "__main__":
    # stride=1, downsample=None, inplanes == planes (=32 so planes//16 >= 1).
    # N=32 with batch_block=16 => 2 grid steps, matmul M = 160 per step.
    N, C, H, W = 32, 32, 8, 8
    key = jax.random.PRNGKey(0)
    k_x, k_p = jax.random.split(key)

    x_nchw = jax.random.normal(k_x, (N, C, H, W), jnp.float32)
    params = init_params(k_p, inplanes=C, planes=C, reduction=16)

    out = jax.block_until_ready(irblock_forward(x_nchw, params, batch_block=16))

    # correctness check against the pure-f32 JAX reference (bf16 MXU operands
    # => looser tolerance than a pure-f32 run).
    x_nhwc = jnp.transpose(x_nchw, (0, 2, 3, 1))
    ref = jnp.transpose(ref_forward_nhwc(x_nhwc, params), (0, 3, 1, 2))
    assert out.shape == (N, C, H, W)
    max_err = float(jnp.max(jnp.abs(out - ref)))
    assert jnp.allclose(out, ref, rtol=5e-2, atol=1e-1), max_err

    print("KERNEL_OK")
</pallas_src>

<mosaic_0001>
module attributes {stable_mosaic.version = 11 : i64} {
  func.func @_irblock_kernel(%arg0: i32, %arg1: memref<16x8x256xf32, #tpu.memory_space<vmem>>, %arg2: memref<1x256xf32, #tpu.memory_space<vmem>>, %arg3: memref<1x256xf32, #tpu.memory_space<vmem>>, %arg4: memref<3x512x256xbf16, #tpu.memory_space<vmem>>, %arg5: memref<1x256xf32, #tpu.memory_space<vmem>>, %arg6: memref<1x256xf32, #tpu.memory_space<vmem>>, %arg7: memref<3x512x256xbf16, #tpu.memory_space<vmem>>, %arg8: memref<2x32xf32, #tpu.memory_space<vmem>>, %arg9: memref<2xf32, #tpu.memory_space<smem>>, %arg10: memref<2x32xf32, #tpu.memory_space<vmem>>, %arg11: memref<1x32xf32, #tpu.memory_space<vmem>>, %arg12: memref<16x8x256xf32, #tpu.memory_space<vmem>>, %arg13: memref<168x512xbf16, #tpu.memory_space<vmem>>) attributes {dimension_semantics = [#tpu.dimension_semantics<parallel>], iteration_bounds = array<i64: 2>, scalar_prefetch = 0 : i64, scratch_operands = 1 : i64, tpu.core_type = #tpu.core_type<tc>, window_params = [{transform_indices = @transform_0, window_bounds = array<i64: 16, 8, 256>}, {pipeline_mode = #tpu.pipeline_mode<synchronous>, transform_indices = @transform_1, window_bounds = array<i64: 1, 256>}, {pipeline_mode = #tpu.pipeline_mode<synchronous>, transform_indices = @transform_2, window_bounds = array<i64: 1, 256>}, {pipeline_mode = #tpu.pipeline_mode<synchronous>, transform_indices = @transform_3, window_bounds = array<i64: 3, 512, 256>}, {pipeline_mode = #tpu.pipeline_mode<synchronous>, transform_indices = @transform_4, window_bounds = array<i64: 1, 256>}, {pipeline_mode = #tpu.pipeline_mode<synchronous>, transform_indices = @transform_5, window_bounds = array<i64: 1, 256>}, {pipeline_mode = #tpu.pipeline_mode<synchronous>, transform_indices = @transform_6, window_bounds = array<i64: 3, 512, 256>}, {pipeline_mode = #tpu.pipeline_mode<synchronous>, transform_indices = @transform_7, window_bounds = array<i64: 2, 32>}, {transform_indices = @transform_8, window_bounds = array<i64: 2>}, {pipeline_mode = #tpu.pipeline_mode<synchronous>, transform_indices = @transform_9, window_bounds = array<i64: 2, 32>}, {pipeline_mode = #tpu.pipeline_mode<synchronous>, transform_indices = @transform_10, window_bounds = array<i64: 1, 32>}, {transform_indices = @transform_11, window_bounds = array<i64: 16, 8, 256>}]} {
    %cst = arith.constant 0.000000e+00 : bf16
    %0 = vector.broadcast %cst : bf16 to vector<168x512xbf16>
    %c0 = arith.constant 0 : index
    %c0_0 = arith.constant 0 : index
    %1 = vector.load %arg13[%c0, %c0_0] : memref<168x512xbf16, #tpu.memory_space<vmem>>, vector<168x512xbf16>
    tpu.vector_store %arg13[%c0, %c0_0], %0 {strides = array<i32>} : memref<168x512xbf16, #tpu.memory_space<vmem>>, vector<168x512xbf16>,
    %c0_1 = arith.constant 0 : index
    %c0_2 = arith.constant 0 : index
    %c0_3 = arith.constant 0 : index
    %2 = vector.load %arg1[%c0_1, %c0_2, %c0_3] : memref<16x8x256xf32, #tpu.memory_space<vmem>>, vector<16x8x256xf32>
    %c0_4 = arith.constant 0 : index
    %c0_5 = arith.constant 0 : index
    %3 = vector.load %arg2[%c0_4, %c0_5] : memref<1x256xf32, #tpu.memory_space<vmem>>, vector<1x256xf32>
    %4 = vector.shape_cast %3 : vector<1x256xf32> to vector<1x1x256xf32>
    %5 = vector.broadcast %4 : vector<1x1x256xf32> to vector<16x8x256xf32>
    %6 = arith.mulf %2, %5 : vector<16x8x256xf32>
    %c0_6 = arith.constant 0 : index
    %c0_7 = arith.constant 0 : index
    %7 = vector.load %arg3[%c0_6, %c0_7] : memref<1x256xf32, #tpu.memory_space<vmem>>, vector<1x256xf32>
    %8 = vector.shape_cast %7 : vector<1x256xf32> to vector<1x1x256xf32>
    %9 = vector.broadcast %8 : vector<1x1x256xf32> to vector<16x8x256xf32>
    %10 = arith.addf %6, %9 : vector<16x8x256xf32>
    %cst_8 = arith.constant 0.000000e+00 : f32
    %11 = vector.broadcast %cst_8 : f32 to vector<16x8x256xf32>
    %12 = arith.maximumf %10, %11 : vector<16x8x256xf32>
    %13 = arith.truncf %12 : vector<16x8x256xf32> to vector<16x8x256xbf16>
    %14 = vector.extract_strided_slice %13 {offsets = [0, 0, 0], sizes = [1, 8, 256], strides = [1, 1, 1]} : vector<16x8x256xbf16> to vector<1x8x256xbf16>
    %15 = vector.shape_cast %14 : vector<1x8x256xbf16> to vector<8x256xbf16>
    %c1 = arith.constant 1 : index
    %c128 = arith.constant 128 : index
    %16 = vector.load %arg13[%c1, %c128] : memref<168x512xbf16, #tpu.memory_space<vmem>>, vector<8x256xbf16>
    tpu.vector_store %arg13[%c1, %c128], %15 {strides = array<i32>} : memref<168x512xbf16, #tpu.memory_space<vmem>>, vector<8x256xbf16>,
    %17 = vector.extract_strided_slice %13 {offsets = [1, 0, 0], sizes = [1, 8, 256], strides = [1, 1, 1]} : vector<16x8x256xbf16> to vector<1x8x256xbf16>
    %18 = vector.shape_cast %17 : vector<1x8x256xbf16> to vector<8x256xbf16>
    %c11 = arith.constant 11 : index
    %c128_9 = arith.constant 128 : index
    %19 = vector.load %arg13[%c11, %c128_9] : memref<168x512xbf16, #tpu.memory_space<vmem>>, vector<8x256xbf16>
    tpu.vector_store %arg13[%c11, %c128_9], %18 {strides = array<i32>} : memref<168x512xbf16, #tpu.memory_space<vmem>>, vector<8x256xbf16>,
    %20 = vector.extract_strided_slice %13 {offsets = [2, 0, 0], sizes = [1, 8, 256], strides = [1, 1, 1]} : vector<16x8x256xbf16> to vector<1x8x256xbf16>
    %21 = vector.shape_cast %20 : vector<1x8x256xbf16> to vector<8x256xbf16>
    %c21 = arith.constant 21 : index
    %c128_10 = arith.constant 128 : index
    %22 = vector.load %arg13[%c21, %c128_10] : memref<168x512xbf16, #tpu.memory_space<vmem>>, vector<8x256xbf16>
    tpu.vector_store %arg13[%c21, %c128_10], %21 {strides = array<i32>} : memref<168x512xbf16, #tpu.memory_space<vmem>>, vector<8x256xbf16>,
    %23 = vector.extract_strided_slice %13 {offsets = [3, 0, 0], sizes = [1, 8, 256], strides = [1, 1, 1]} : vector<16x8x256xbf16> to vector<1x8x256xbf16>
    %24 = vector.shape_cast %23 : vector<1x8x256xbf16> to vector<8x256xbf16>
    %c31 = arith.constant 31 : index
    %c128_11 = arith.constant 128 : index
    %25 = vector.load %arg13[%c31, %c128_11] : memref<168x512xbf16, #tpu.memory_space<vmem>>, vector<8x256xbf16>
    tpu.vector_store %arg13[%c31, %c128_11], %24 {strides = array<i32>} : memref<168x512xbf16, #tpu.memory_space<vmem>>, vector<8x256xbf16>,
    %26 = vector.extract_strided_slice %13 {offsets = [4, 0, 0], sizes = [1, 8, 256], strides = [1, 1, 1]} : vector<16x8x256xbf16> to vector<1x8x256xbf16>
    %27 = vector.shape_cast %26 : vector<1x8x256xbf16> to vector<8x256xbf16>
    %c41 = arith.constant 41 : index
    %c128_12 = arith.constant 128 : index
    %28 = vector.load %arg13[%c41, %c128_12] : memref<168x512xbf16, #tpu.memory_space<vmem>>, vector<8x256xbf16>
    tpu.vector_store %arg13[%c41, %c128_12], %27 {strides = array<i32>} : memref<168x512xbf16, #tpu.memory_space<vmem>>, vector<8x256xbf16>,
    %29 = vector.extract_strided_slice %13 {offsets = [5, 0, 0], sizes = [1, 8, 256], strides = [1, 1, 1]} : vector<16x8x256xbf16> to vector<1x8x256xbf16>
    %30 = vector.shape_cast %29 : vector<1x8x256xbf16> to vector<8x256xbf16>
    %c51 = arith.constant 51 : index
    %c128_13 = arith.constant 128 : index
    %31 = vector.load %arg13[%c51, %c128_13] : memref<168x512xbf16, #tpu.memory_space<vmem>>, vector<8x256xbf16>
    tpu.vector_store %arg13[%c51, %c128_13], %30 {strides = array<i32>} : memref<168x512xbf16, #tpu.memory_space<vmem>>, vector<8x256xbf16>,
    %32 = vector.extract_strided_slice %13 {offsets = [6, 0, 0], sizes = [1, 8, 256], strides = [1, 1, 1]} : vector<16x8x256xbf16> to vector<1x8x256xbf16>
    %33 = vector.shape_cast %32 : vector<1x8x256xbf16> to vector<8x256xbf16>
    %c61 = arith.constant 61 : index
    %c128_14 = arith.constant 128 : index
    %34 = vector.load %arg13[%c61, %c128_14] : memref<168x512xbf16, #tpu.memory_space<vmem>>, vector<8x256xbf16>
    tpu.vector_store %arg13[%c61, %c128_14], %33 {strides = array<i32>} : memref<168x512xbf16, #tpu.memory_space<vmem>>, vector<8x256xbf16>,
    %35 = vector.extract_strided_slice %13 {offsets = [7, 0, 0], sizes = [1, 8, 256], strides = [1, 1, 1]} : vector<16x8x256xbf16> to vector<1x8x256xbf16>
    %36 = vector.shape_cast %35 : vector<1x8x256xbf16> to vector<8x256xbf16>
    %c71 = arith.constant 71 : index
    %c128_15 = arith.constant 128 : index
    %37 = vector.load %arg13[%c71, %c128_15] : memref<168x512xbf16, #tpu.memory_space<vmem>>, vector<8x256xbf16>
    tpu.vector_store %arg13[%c71, %c128_15], %36 {strides = array<i32>} : memref<168x512xbf16, #tpu.memory_space<vmem>>, vector<8x256xbf16>,
    %38 = vector.extract_strided_slice %13 {offsets = [8, 0, 0], sizes = [1, 8, 256], strides = [1, 1, 1]} : vector<16x8x256xbf16> to vector<1x8x256xbf16>
    %39 = vector.shape_cast %38 : vector<1x8x256xbf16> to vector<8x256xbf16>
    %c81 = arith.constant 81 : index
    %c128_16 = arith.constant 128 : index
    %40 = vector.load %arg13[%c81, %c128_16] : memref<168x512xbf16, #tpu.memory_space<vmem>>, vector<8x256xbf16>
    tpu.vector_store %arg13[%c81, %c128_16], %39 {strides = array<i32>} : memref<168x512xbf16, #tpu.memory_space<vmem>>, vector<8x256xbf16>,
    %41 = vector.extract_strided_slice %13 {offsets = [9, 0, 0], sizes = [1, 8, 256], strides = [1, 1, 1]} : vector<16x8x256xbf16> to vector<1x8x256xbf16>
    %42 = vector.shape_cast %41 : vector<1x8x256xbf16> to vector<8x256xbf16>
    %c91 = arith.constant 91 : index
    %c128_17 = arith.constant 128 : index
    %43 = vector.load %arg13[%c91, %c128_17] : memref<168x512xbf16, #tpu.memory_space<vmem>>, vector<8x256xbf16>
    tpu.vector_store %arg13[%c91, %c128_17], %42 {strides = array<i32>} : memref<168x512xbf16, #tpu.memory_space<vmem>>, vector<8x256xbf16>,
    %44 = vector.extract_strided_slice %13 {offsets = [10, 0, 0], sizes = [1, 8, 256], strides = [1, 1, 1]} : vector<16x8x256xbf16> to vector<1x8x256xbf16>
    %45 = vector.shape_cast %44 : vector<1x8x256xbf16> to vector<8x256xbf16>
    %c101 = arith.constant 101 : index
    %c128_18 = arith.constant 128 : index
    %46 = vector.load %arg13[%c101, %c128_18] : memref<168x512xbf16, #tpu.memory_space<vmem>>, vector<8x256xbf16>
    tpu.vector_store %arg13[%c101, %c128_18], %45 {strides = array<i32>} : memref<168x512xbf16, #tpu.memory_space<vmem>>, vector<8x256xbf16>,
    %47 = vector.extract_strided_slice %13 {offsets = [11, 0, 0], sizes = [1, 8, 256], strides = [1, 1, 1]} : vector<16x8x256xbf16> to vector<1x8x256xbf16>
    %48 = vector.shape_cast %47 : vector<1x8x256xbf16> to vector<8x256xbf16>
    %c111 = arith.constant 111 : index
    %c128_19 = arith.constant 128 : index
    %49 = vector.load %arg13[%c111, %c128_19] : memref<168x512xbf16, #tpu.memory_space<vmem>>, vector<8x256xbf16>
    tpu.vector_store %arg13[%c111, %c128_19], %48 {strides = array<i32>} : memref<168x512xbf16, #tpu.memory_space<vmem>>, vector<8x256xbf16>,
    %50 = vector.extract_strided_slice %13 {offsets = [12, 0, 0], sizes = [1, 8, 256], strides = [1, 1, 1]} : vector<16x8x256xbf16> to vector<1x8x256xbf16>
    %51 = vector.shape_cast %50 : vector<1x8x256xbf16> to vector<8x256xbf16>
    %c121 = arith.constant 121 : index
    %c128_20 = arith.constant 128 : index
    %52 = vector.load %arg13[%c121, %c128_20] : memref<168x512xbf16, #tpu.memory_space<vmem>>, vector<8x256xbf16>
    tpu.vector_store %arg13[%c121, %c128_20], %51 {strides = array<i32>} : memref<168x512xbf16, #tpu.memory_space<vmem>>, vector<8x256xbf16>,
    %53 = vector.extract_strided_slice %13 {offsets = [13, 0, 0], sizes = [1, 8, 256], strides = [1, 1, 1]} : vector<16x8x256xbf16> to vector<1x8x256xbf16>
    %54 = vector.shape_cast %53 : vector<1x8x256xbf16> to vector<8x256xbf16>
    %c131 = arith.constant 131 : index
    %c128_21 = arith.constant 128 : index
    %55 = vector.load %arg13[%c131, %c128_21] : memref<168x512xbf16, #tpu.memory_space<vmem>>, vector<8x256xbf16>
    tpu.vector_store %arg13[%c131, %c128_21], %54 {strides = array<i32>} : memref<168x512xbf16, #tpu.memory_space<vmem>>, vector<8x256xbf16>,
    %56 = vector.extract_strided_slice %13 {offsets = [14, 0, 0], sizes = [1, 8, 256], strides = [1, 1, 1]} : vector<16x8x256xbf16> to vector<1x8x256xbf16>
    %57 = vector.shape_cast %56 : vector<1x8x256xbf16> to vector<8x256xbf16>
    %c141 = arith.constant 141 : index
    %c128_22 = arith.constant 128 : index
    %58 = vector.load %arg13[%c141, %c128_22] : memref<168x512xbf16, #tpu.memory_space<vmem>>, vector<8x256xbf16>
    tpu.vector_store %arg13[%c141, %c128_22], %57 {strides = array<i32>} : memref<168x512xbf16, #tpu.memory_space<vmem>>, vector<8x256xbf16>,
    %59 = vector.extract_strided_slice %13 {offsets = [15, 0, 0], sizes = [1, 8, 256], strides = [1, 1, 1]} : vector<16x8x256xbf16> to vector<1x8x256xbf16>
    %60 = vector.shape_cast %59 : vector<1x8x256xbf16> to vector<8x256xbf16>
    %c151 = arith.constant 151 : index
    %c128_23 = arith.constant 128 : index
    %61 = vector.load %arg13[%c151, %c128_23] : memref<168x512xbf16, #tpu.memory_space<vmem>>, vector<8x256xbf16>
    tpu.vector_store %arg13[%c151, %c128_23], %60 {strides = array<i32>} : memref<168x512xbf16, #tpu.memory_space<vmem>>, vector<8x256xbf16>,
    %c0_24 = arith.constant 0 : index
    %c0_25 = arith.constant 0 : index
    %62 = vector.load %arg13[%c0_24, %c0_25] : memref<168x512xbf16, #tpu.memory_space<vmem>>, vector<160x512xbf16>
    %c0_26 = arith.constant 0 : index
    %c0_27 = arith.constant 0 : index
    %c0_28 = arith.constant 0 : index
    %63 = vector.load %arg4[%c0_26, %c0_27, %c0_28] : memref<3x512x256xbf16, #tpu.memory_space<vmem>>, vector<1x512x256xbf16>
    %64 = vector.shape_cast %63 : vector<1x512x256xbf16> to vector<512x256xbf16>
    %cst_29 = arith.constant dense<0.000000e+00> : vector<160x256xf32>
    %65 = tpu.matmul %62, %64, %cst_29 {dimension_numbers = #tpu.dot_dimension_numbers<[1], [0], [0], [1], [0, 0, 1, 1], [], []>} : vector<160x512xbf16>, vector<512x256xbf16>, vector<160x256xf32> -> vector<160x256xf32>
    %c1_30 = arith.constant 1 : index
    %c0_31 = arith.constant 0 : index
    %66 = vector.load %arg13[%c1_30, %c0_31] : memref<168x512xbf16, #tpu.memory_space<vmem>>, vector<160x512xbf16>
    %c1_32 = arith.constant 1 : index
    %c0_33 = arith.constant 0 : index
    %c0_34 = arith.constant 0 : index
    %67 = vector.load %arg4[%c1_32, %c0_33, %c0_34] : memref<3x512x256xbf16, #tpu.memory_space<vmem>>, vector<1x512x256xbf16>
    %68 = vector.shape_cast %67 : vector<1x512x256xbf16> to vector<512x256xbf16>
    %cst_35 = arith.constant dense<0.000000e+00> : vector<160x256xf32>
    %69 = tpu.matmul %66, %68, %cst_35 {dimension_numbers = #tpu.dot_dimension_numbers<[1], [0], [0], [1], [0, 0, 1, 1], [], []>} : vector<160x512xbf16>, vector<512x256xbf16>, vector<160x256xf32> -> vector<160x256xf32>
    %70 = arith.addf %65, %69 : vector<160x256xf32>
    %c2 = arith.constant 2 : index
    %c0_36 = arith.constant 0 : index
    %71 = vector.load %arg13[%c2, %c0_36] : memref<168x512xbf16, #tpu.memory_space<vmem>>, vector<160x512xbf16>
    %c2_37 = arith.constant 2 : index
    %c0_38 = arith.constant 0 : index
    %c0_39 = arith.constant 0 : index
    %72 = vector.load %arg4[%c2_37, %c0_38, %c0_39] : memref<3x512x256xbf16, #tpu.memory_space<vmem>>, vector<1x512x256xbf16>
    %73 = vector.shape_cast %72 : vector<1x512x256xbf16> to vector<512x256xbf16>
    %cst_40 = arith.constant dense<0.000000e+00> : vector<160x256xf32>
    %74 = tpu.matmul %71, %73, %cst_40 {dimension_numbers = #tpu.dot_dimension_numbers<[1], [0], [0], [1], [0, 0, 1, 1], [], []>} : vector<160x512xbf16>, vector<512x256xbf16>, vector<160x256xf32> -> vector<160x256xf32>
    %75 = arith.addf %70, %74 : vector<160x256xf32>
    %c0_41 = arith.constant 0 : index
    %c0_42 = arith.constant 0 : index
    %76 = vector.load %arg5[%c0_41, %c0_42] : memref<1x256xf32, #tpu.memory_space<vmem>>, vector<1x256xf32>
    %c0_43 = arith.constant 0 : index
    %c0_44 = arith.constant 0 : index
    %77 = vector.load %arg6[%c0_43, %c0_44] : memref<1x256xf32, #tpu.memory_space<vmem>>, vector<1x256xf32>
    %78 = vector.extract_strided_slice %75 {offsets = [0, 0], sizes = [8, 256], strides = [1, 1]} : vector<160x256xf32> to vector<8x256xf32>
    %79 = vector.broadcast %76 : vector<1x256xf32> to vector<8x256xf32>
    %80 = arith.mulf %78, %79 : vector<8x256xf32>
    %81 = vector.broadcast %77 : vector<1x256xf32> to vector<8x256xf32>
    %82 = arith.addf %80, %81 : vector<8x256xf32>
    %cst_45 = arith.constant 0.000000e+00 : f32
    %83 = vector.broadcast %cst_45 : f32 to vector<8x256xf32>
    %84 = arith.maximumf %82, %83 : vector<8x256xf32>
    %85 = arith.truncf %84 : vector<8x256xf32> to vector<8x256xbf16>
    %c1_46 = arith.constant 1 : index
    %c128_47 = arith.constant 128 : index
    %86 = vector.load %arg13[%c1_46, %c128_47] : memref<168x512xbf16, #tpu.memory_space<vmem>>, vector<8x256xbf16>
    tpu.vector_store %arg13[%c1_46, %c128_47], %85 {strides = array<i32>} : memref<168x512xbf16, #tpu.memory_space<vmem>>, vector<8x256xbf16>,
    %87 = vector.extract_strided_slice %75 {offsets = [10, 0], sizes = [8, 256], strides = [1, 1]} : vector<160x256xf32> to vector<8x256xf32>
    %88 = vector.broadcast %76 : vector<1x256xf32> to vector<8x256xf32>
    %89 = arith.mulf %87, %88 : vector<8x256xf32>
    %90 = vector.broadcast %77 : vector<1x256xf32> to vector<8x256xf32>
    %91 = arith.addf %89, %90 : vector<8x256xf32>
    %cst_48 = arith.constant 0.000000e+00 : f32
    %92 = vector.broadcast %cst_48 : f32 to vector<8x256xf32>
    %93 = arith.maximumf %91, %92 : vector<8x256xf32>
    %94 = arith.truncf %93 : vector<8x256xf32> to vector<8x256xbf16>
    %c11_49 = arith.constant 11 : index
    %c128_50 = arith.constant 128 : index
    %95 = vector.load %arg13[%c11_49, %c128_50] : memref<168x512xbf16, #tpu.memory_space<vmem>>, vector<8x256xbf16>
    tpu.vector_store %arg13[%c11_49, %c128_50], %94 {strides = array<i32>} : memref<168x512xbf16, #tpu.memory_space<vmem>>, vector<8x256xbf16>,
    %96 = vector.extract_strided_slice %75 {offsets = [20, 0], sizes = [8, 256], strides = [1, 1]} : vector<160x256xf32> to vector<8x256xf32>
    %97 = vector.broadcast %76 : vector<1x256xf32> to vector<8x256xf32>
    %98 = arith.mulf %96, %97 : vector<8x256xf32>
    %99 = vector.broadcast %77 : vector<1x256xf32> to vector<8x256xf32>
    %100 = arith.addf %98, %99 : vector<8x256xf32>
    %cst_51 = arith.constant 0.000000e+00 : f32
    %101 = vector.broadcast %cst_51 : f32 to vector<8x256xf32>
    %102 = arith.maximumf %100, %101 : vector<8x256xf32>
    %103 = arith.truncf %102 : vector<8x256xf32> to vector<8x256xbf16>
    %c21_52 = arith.constant 21 : index
    %c128_53 = arith.constant 128 : index
    %104 = vector.load %arg13[%c21_52, %c128_53] : memref<168x512xbf16, #tpu.memory_space<vmem>>, vector<8x256xbf16>
    tpu.vector_store %arg13[%c21_52, %c128_53], %103 {strides = array<i32>} : memref<168x512xbf16, #tpu.memory_space<vmem>>, vector<8x256xbf16>,
    %105 = vector.extract_strided_slice %75 {offsets = [30, 0], sizes = [8, 256], strides = [1, 1]} : vector<160x256xf32> to vector<8x256xf32>
    %106 = vector.broadcast %76 : vector<1x256xf32> to vector<8x256xf32>
    %107 = arith.mulf %105, %106 : vector<8x256xf32>
    %108 = vector.broadcast %77 : vector<1x256xf32> to vector<8x256xf32>
    %109 = arith.addf %107, %108 : vector<8x256xf32>
    %cst_54 = arith.constant 0.000000e+00 : f32
    %110 = vector.broadcast %cst_54 : f32 to vector<8x256xf32>
    %111 = arith.maximumf %109, %110 : vector<8x256xf32>
    %112 = arith.truncf %111 : vector<8x256xf32> to vector<8x256xbf16>
    %c31_55 = arith.constant 31 : index
    %c128_56 = arith.constant 128 : index
    %113 = vector.load %arg13[%c31_55, %c128_56] : memref<168x512xbf16, #tpu.memory_space<vmem>>, vector<8x256xbf16>
    tpu.vector_store %arg13[%c31_55, %c128_56], %112 {strides = array<i32>} : memref<168x512xbf16, #tpu.memory_space<vmem>>, vector<8x256xbf16>,
    %114 = vector.extract_strided_slice %75 {offsets = [40, 0], sizes = [8, 256], strides = [1, 1]} : vector<160x256xf32> to vector<8x256xf32>
    %115 = vector.broadcast %76 : vector<1x256xf32> to vector<8x256xf32>
    %116 = arith.mulf %114, %115 : vector<8x256xf32>
    %117 = vector.broadcast %77 : vector<1x256xf32> to vector<8x256xf32>
    %118 = arith.addf %116, %117 : vector<8x256xf32>
    %cst_57 = arith.constant 0.000000e+00 : f32
    %119 = vector.broadcast %cst_57 : f32 to vector<8x256xf32>
    %120 = arith.maximumf %118, %119 : vector<8x256xf32>
    %121 = arith.truncf %120 : vector<8x256xf32> to vector<8x256xbf16>
    %c41_58 = arith.constant 41 : index
    %c128_59 = arith.constant 128 : index
    %122 = vector.load %arg13[%c41_58, %c128_59] : memref<168x512xbf16, #tpu.memory_space<vmem>>, vector<8x256xbf16>
    tpu.vector_store %arg13[%c41_58, %c128_59], %121 {strides = array<i32>} : memref<168x512xbf16, #tpu.memory_space<vmem>>, vector<8x256xbf16>,
    %123 = vector.extract_strided_slice %75 {offsets = [50, 0], sizes = [8, 256], strides = [1, 1]} : vector<160x256xf32> to vector<8x256xf32>
    %124 = vector.broadcast %76 : vector<1x256xf32> to vector<8x256xf32>
    %125 = arith.mulf %123, %124 : vector<8x256xf32>
    %126 = vector.broadcast %77 : vector<1x256xf32> to vector<8x256xf32>
    %127 = arith.addf %125, %126 : vector<8x256xf32>
    %cst_60 = arith.constant 0.000000e+00 : f32
    %128 = vector.broadcast %cst_60 : f32 to vector<8x256xf32>
    %129 = arith.maximumf %127, %128 : vector<8x256xf32>
    %130 = arith.truncf %129 : vector<8x256xf32> to vector<8x256xbf16>
    %c51_61 = arith.constant 51 : index
    %c128_62 = arith.constant 128 : index
    %131 = vector.load %arg13[%c51_61, %c128_62] : memref<168x512xbf16, #tpu.memory_space<vmem>>, vector<8x256xbf16>
    tpu.vector_store %arg13[%c51_61, %c128_62], %130 {strides = array<i32>} : memref<168x512xbf16, #tpu.memory_space<vmem>>, vector<8x256xbf16>,
    %132 = vector.extract_strided_slice %75 {offsets = [60, 0], sizes = [8, 256], strides = [1, 1]} : vector<160x256xf32> to vector<8x256xf32>
    %133 = vector.broadcast %76 : vector<1x256xf32> to vector<8x256xf32>
    %134 = arith.mulf %132, %133 : vector<8x256xf32>
    %135 = vector.broadcast %77 : vector<1x256xf32> to vector<8x256xf32>
    %136 = arith.addf %134, %135 : vector<8x256xf32>
    %cst_63 = arith.constant 0.000000e+00 : f32
    %137 = vector.broadcast %cst_63 : f32 to vector<8x256xf32>
    %138 = arith.maximumf %136, %137 : vector<8x256xf32>
    %139 = arith.truncf %138 : vector<8x256xf32> to vector<8x256xbf16>
    %c61_64 = arith.constant 61 : index
    %c128_65 = arith.constant 128 : index
    %140 = vector.load %arg13[%c61_64, %c128_65] : memref<168x512xbf16, #tpu.memory_space<vmem>>, vector<8x256xbf16>
    tpu.vector_store %arg13[%c61_64, %c128_65], %139 {strides = array<i32>} : memref<168x512xbf16, #tpu.memory_space<vmem>>, vector<8x256xbf16>,
    %141 = vector.extract_strided_slice %75 {offsets = [70, 0], sizes = [8, 256], strides = [1, 1]} : vector<160x256xf32> to vector<8x256xf32>
    %142 = vector.broadcast %76 : vector<1x256xf32> to vector<8x256xf32>
    %143 = arith.mulf %141, %142 : vector<8x256xf32>
    %144 = vector.broadcast %77 : vector<1x256xf32> to vector<8x256xf32>
    %145 = arith.addf %143, %144 : vector<8x256xf32>
    %cst_66 = arith.constant 0.000000e+00 : f32
    %146 = vector.broadcast %cst_66 : f32 to vector<8x256xf32>
    %147 = arith.maximumf %145, %146 : vector<8x256xf32>
    %148 = arith.truncf %147 : vector<8x256xf32> to vector<8x256xbf16>
    %c71_67 = arith.constant 71 : index
    %c128_68 = arith.constant 128 : index
    %149 = vector.load %arg13[%c71_67, %c128_68] : memref<168x512xbf16, #tpu.memory_space<vmem>>, vector<8x256xbf16>
    tpu.vector_store %arg13[%c71_67, %c128_68], %148 {strides = array<i32>} : memref<168x512xbf16, #tpu.memory_space<vmem>>, vector<8x256xbf16>,
    %150 = vector.extract_strided_slice %75 {offsets = [80, 0], sizes = [8, 256], strides = [1, 1]} : vector<160x256xf32> to vector<8x256xf32>
    %151 = vector.broadcast %76 : vector<1x256xf32> to vector<8x256xf32>
    %152 = arith.mulf %150, %151 : vector<8x256xf32>
    %153 = vector.broadcast %77 : vector<1x256xf32> to vector<8x256xf32>
    %154 = arith.addf %152, %153 : vector<8x256xf32>
    %cst_69 = arith.constant 0.000000e+00 : f32
    %155 = vector.broadcast %cst_69 : f32 to vector<8x256xf32>
    %156 = arith.maximumf %154, %155 : vector<8x256xf32>
    %157 = arith.truncf %156 : vector<8x256xf32> to vector<8x256xbf16>
    %c81_70 = arith.constant 81 : index
    %c128_71 = arith.constant 128 : index
    %158 = vector.load %arg13[%c81_70, %c128_71] : memref<168x512xbf16, #tpu.memory_space<vmem>>, vector<8x256xbf16>
    tpu.vector_store %arg13[%c81_70, %c128_71], %157 {strides = array<i32>} : memref<168x512xbf16, #tpu.memory_space<vmem>>, vector<8x256xbf16>,
    %159 = vector.extract_strided_slice %75 {offsets = [90, 0], sizes = [8, 256], strides = [1, 1]} : vector<160x256xf32> to vector<8x256xf32>
    %160 = vector.broadcast %76 : vector<1x256xf32> to vector<8x256xf32>
    %161 = arith.mulf %159, %160 : vector<8x256xf32>
    %162 = vector.broadcast %77 : vector<1x256xf32> to vector<8x256xf32>
    %163 = arith.addf %161, %162 : vector<8x256xf32>
    %cst_72 = arith.constant 0.000000e+00 : f32
    %164 = vector.broadcast %cst_72 : f32 to vector<8x256xf32>
    %165 = arith.maximumf %163, %164 : vector<8x256xf32>
    %166 = arith.truncf %165 : vector<8x256xf32> to vector<8x256xbf16>
    %c91_73 = arith.constant 91 : index
    %c128_74 = arith.constant 128 : index
    %167 = vector.load %arg13[%c91_73, %c128_74] : memref<168x512xbf16, #tpu.memory_space<vmem>>, vector<8x256xbf16>
    tpu.vector_store %arg13[%c91_73, %c128_74], %166 {strides = array<i32>} : memref<168x512xbf16, #tpu.memory_space<vmem>>, vector<8x256xbf16>,
    %168 = vector.extract_strided_slice %75 {offsets = [100, 0], sizes = [8, 256], strides = [1, 1]} : vector<160x256xf32> to vector<8x256xf32>
    %169 = vector.broadcast %76 : vector<1x256xf32> to vector<8x256xf32>
    %170 = arith.mulf %168, %169 : vector<8x256xf32>
    %171 = vector.broadcast %77 : vector<1x256xf32> to vector<8x256xf32>
    %172 = arith.addf %170, %171 : vector<8x256xf32>
    %cst_75 = arith.constant 0.000000e+00 : f32
    %173 = vector.broadcast %cst_75 : f32 to vector<8x256xf32>
    %174 = arith.maximumf %172, %173 : vector<8x256xf32>
    %175 = arith.truncf %174 : vector<8x256xf32> to vector<8x256xbf16>
    %c101_76 = arith.constant 101 : index
    %c128_77 = arith.constant 128 : index
    %176 = vector.load %arg13[%c101_76, %c128_77] : memref<168x512xbf16, #tpu.memory_space<vmem>>, vector<8x256xbf16>
    tpu.vector_store %arg13[%c101_76, %c128_77], %175 {strides = array<i32>} : memref<168x512xbf16, #tpu.memory_space<vmem>>, vector<8x256xbf16>,
    %177 = vector.extract_strided_slice %75 {offsets = [110, 0], sizes = [8, 256], strides = [1, 1]} : vector<160x256xf32> to vector<8x256xf32>
    %178 = vector.broadcast %76 : vector<1x256xf32> to vector<8x256xf32>
    %179 = arith.mulf %177, %178 : vector<8x256xf32>
    %180 = vector.broadcast %77 : vector<1x256xf32> to vector<8x256xf32>
    %181 = arith.addf %179, %180 : vector<8x256xf32>
    %cst_78 = arith.constant 0.000000e+00 : f32
    %182 = vector.broadcast %cst_78 : f32 to vector<8x256xf32>
    %183 = arith.maximumf %181, %182 : vector<8x256xf32>
    %184 = arith.truncf %183 : vector<8x256xf32> to vector<8x256xbf16>
    %c111_79 = arith.constant 111 : index
    %c128_80 = arith.constant 128 : index
    %185 = vector.load %arg13[%c111_79, %c128_80] : memref<168x512xbf16, #tpu.memory_space<vmem>>, vector<8x256xbf16>
    tpu.vector_store %arg13[%c111_79, %c128_80], %184 {strides = array<i32>} : memref<168x512xbf16, #tpu.memory_space<vmem>>, vector<8x256xbf16>,
    %186 = vector.extract_strided_slice %75 {offsets = [120, 0], sizes = [8, 256], strides = [1, 1]} : vector<160x256xf32> to vector<8x256xf32>
    %187 = vector.broadcast %76 : vector<1x256xf32> to vector<8x256xf32>
    %188 = arith.mulf %186, %187 : vector<8x256xf32>
    %189 = vector.broadcast %77 : vector<1x256xf32> to vector<8x256xf32>
    %190 = arith.addf %188, %189 : vector<8x256xf32>
    %cst_81 = arith.constant 0.000000e+00 : f32
    %191 = vector.broadcast %cst_81 : f32 to vector<8x256xf32>
    %192 = arith.maximumf %190, %191 : vector<8x256xf32>
    %193 = arith.truncf %192 : vector<8x256xf32> to vector<8x256xbf16>
    %c121_82 = arith.constant 121 : index
    %c128_83 = arith.constant 128 : index
    %194 = vector.load %arg13[%c121_82, %c128_83] : memref<168x512xbf16, #tpu.memory_space<vmem>>, vector<8x256xbf16>
    tpu.vector_store %arg13[%c121_82, %c128_83], %193 {strides = array<i32>} : memref<168x512xbf16, #tpu.memory_space<vmem>>, vector<8x256xbf16>,
    %195 = vector.extract_strided_slice %75 {offsets = [130, 0], sizes = [8, 256], strides = [1, 1]} : vector<160x256xf32> to vector<8x256xf32>
    %196 = vector.broadcast %76 : vector<1x256xf32> to vector<8x256xf32>
    %197 = arith.mulf %195, %196 : vector<8x256xf32>
    %198 = vector.broadcast %77 : vector<1x256xf32> to vector<8x256xf32>
    %199 = arith.addf %197, %198 : vector<8x256xf32>
    %cst_84 = arith.constant 0.000000e+00 : f32
    %200 = vector.broadcast %cst_84 : f32 to vector<8x256xf32>
    %201 = arith.maximumf %199, %200 : vector<8x256xf32>
    %202 = arith.truncf %201 : vector<8x256xf32> to vector<8x256xbf16>
    %c131_85 = arith.constant 131 : index
    %c128_86 = arith.constant 128 : index
    %203 = vector.load %arg13[%c131_85, %c128_86] : memref<168x512xbf16, #tpu.memory_space<vmem>>, vector<8x256xbf16>
    tpu.vector_store %arg13[%c131_85, %c128_86], %202 {strides = array<i32>} : memref<168x512xbf16, #tpu.memory_space<vmem>>, vector<8x256xbf16>,
    %204 = vector.extract_strided_slice %75 {offsets = [140, 0], sizes = [8, 256], strides = [1, 1]} : vector<160x256xf32> to vector<8x256xf32>
    %205 = vector.broadcast %76 : vector<1x256xf32> to vector<8x256xf32>
    %206 = arith.mulf %204, %205 : vector<8x256xf32>
    %207 = vector.broadcast %77 : vector<1x256xf32> to vector<8x256xf32>
    %208 = arith.addf %206, %207 : vector<8x256xf32>
    %cst_87 = arith.constant 0.000000e+00 : f32
    %209 = vector.broadcast %cst_87 : f32 to vector<8x256xf32>
    %210 = arith.maximumf %208, %209 : vector<8x256xf32>
    %211 = arith.truncf %210 : vector<8x256xf32> to vector<8x256xbf16>
    %c141_88 = arith.constant 141 : index
    %c128_89 = arith.constant 128 : index
    %212 = vector.load %arg13[%c141_88, %c128_89] : memref<168x512xbf16, #tpu.memory_space<vmem>>, vector<8x256xbf16>
    tpu.vector_store %arg13[%c141_88, %c128_89], %211 {strides = array<i32>} : memref<168x512xbf16, #tpu.memory_space<vmem>>, vector<8x256xbf16>,
    %213 = vector.extract_strided_slice %75 {offsets = [150, 0], sizes = [8, 256], strides = [1, 1]} : vector<160x256xf32> to vector<8x256xf32>
    %214 = vector.broadcast %76 : vector<1x256xf32> to vector<8x256xf32>
    %215 = arith.mulf %213, %214 : vector<8x256xf32>
    %216 = vector.broadcast %77 : vector<1x256xf32> to vector<8x256xf32>
    %217 = arith.addf %215, %216 : vector<8x256xf32>
    %cst_90 = arith.constant 0.000000e+00 : f32
    %218 = vector.broadcast %cst_90 : f32 to vector<8x256xf32>
    %219 = arith.maximumf %217, %218 : vector<8x256xf32>
    %220 = arith.truncf %219 : vector<8x256xf32> to vector<8x256xbf16>
    %c151_91 = arith.constant 151 : index
    %c128_92 = arith.constant 128 : index
    %221 = vector.load %arg13[%c151_91, %c128_92] : memref<168x512xbf16, #tpu.memory_space<vmem>>, vector<8x256xbf16>
    tpu.vector_store %arg13[%c151_91, %c128_92], %220 {strides = array<i32>} : memref<168x512xbf16, #tpu.memory_space<vmem>>, vector<8x256xbf16>,
    %c0_93 = arith.constant 0 : index
    %c0_94 = arith.constant 0 : index
    %222 = vector.load %arg13[%c0_93, %c0_94] : memref<168x512xbf16, #tpu.memory_space<vmem>>, vector<160x512xbf16>
    %c0_95 = arith.constant 0 : index
    %c0_96 = arith.constant 0 : index
    %c0_97 = arith.constant 0 : index
    %223 = vector.load %arg7[%c0_95, %c0_96, %c0_97] : memref<3x512x256xbf16, #tpu.memory_space<vmem>>, vector<1x512x256xbf16>
    %224 = vector.shape_cast %223 : vector<1x512x256xbf16> to vector<512x256xbf16>
    %cst_98 = arith.constant dense<0.000000e+00> : vector<160x256xf32>
    %225 = tpu.matmul %222, %224, %cst_98 {dimension_numbers = #tpu.dot_dimension_numbers<[1], [0], [0], [1], [0, 0, 1, 1], [], []>} : vector<160x512xbf16>, vector<512x256xbf16>, vector<160x256xf32> -> vector<160x256xf32>
    %c1_99 = arith.constant 1 : index
    %c0_100 = arith.constant 0 : index
    %226 = vector.load %arg13[%c1_99, %c0_100] : memref<168x512xbf16, #tpu.memory_space<vmem>>, vector<160x512xbf16>
    %c1_101 = arith.constant 1 : index
    %c0_102 = arith.constant 0 : index
    %c0_103 = arith.constant 0 : index
    %227 = vector.load %arg7[%c1_101, %c0_102, %c0_103] : memref<3x512x256xbf16, #tpu.memory_space<vmem>>, vector<1x512x256xbf16>
    %228 = vector.shape_cast %227 : vector<1x512x256xbf16> to vector<512x256xbf16>
    %cst_104 = arith.constant dense<0.000000e+00> : vector<160x256xf32>
    %229 = tpu.matmul %226, %228, %cst_104 {dimension_numbers = #tpu.dot_dimension_numbers<[1], [0], [0], [1], [0, 0, 1, 1], [], []>} : vector<160x512xbf16>, vector<512x256xbf16>, vector<160x256xf32> -> vector<160x256xf32>
    %230 = arith.addf %225, %229 : vector<160x256xf32>
    %c2_105 = arith.constant 2 : index
    %c0_106 = arith.constant 0 : index
    %231 = vector.load %arg13[%c2_105, %c0_106] : memref<168x512xbf16, #tpu.memory_space<vmem>>, vector<160x512xbf16>
    %c2_107 = arith.constant 2 : index
    %c0_108 = arith.constant 0 : index
    %c0_109 = arith.constant 0 : index
    %232 = vector.load %arg7[%c2_107, %c0_108, %c0_109] : memref<3x512x256xbf16, #tpu.memory_space<vmem>>, vector<1x512x256xbf16>
    %233 = vector.shape_cast %232 : vector<1x512x256xbf16> to vector<512x256xbf16>
    %cst_110 = arith.constant dense<0.000000e+00> : vector<160x256xf32>
    %234 = tpu.matmul %231, %233, %cst_110 {dimension_numbers = #tpu.dot_dimension_numbers<[1], [0], [0], [1], [0, 0, 1, 1], [], []>} : vector<160x512xbf16>, vector<512x256xbf16>, vector<160x256xf32> -> vector<160x256xf32>
    %235 = arith.addf %230, %234 : vector<160x256xf32>
    %c0_111 = arith.constant 0 : index
    %c0_112 = arith.constant 0 : index
    %236 = vector.load %arg11[%c0_111, %c0_112] : memref<1x32xf32, #tpu.memory_space<vmem>>, vector<1x32xf32>
    %c0_113 = arith.constant 0 : index
    %c0_114 = arith.constant 0 : index
    %237 = vector.load %arg8[%c0_113, %c0_114] : memref<2x32xf32, #tpu.memory_space<vmem>>, vector<1x32xf32>
    %c1_115 = arith.constant 1 : index
    %c0_116 = arith.constant 0 : index
    %238 = vector.load %arg8[%c1_115, %c0_116] : memref<2x32xf32, #tpu.memory_space<vmem>>, vector<1x32xf32>
    %c0_117 = arith.constant 0 : index
    %c0_118 = arith.constant 0 : index
    %239 = vector.load %arg10[%c0_117, %c0_118] : memref<2x32xf32, #tpu.memory_space<vmem>>, vector<1x32xf32>
    %c1_119 = arith.constant 1 : index
    %c0_120 = arith.constant 0 : index
    %240 = vector.load %arg10[%c1_119, %c0_120] : memref<2x32xf32, #tpu.memory_space<vmem>>, vector<1x32xf32>
    %c0_121 = arith.constant 0 : index
    %241 = memref.load %arg9[%c0_121] : memref<2xf32, #tpu.memory_space<smem>>
    %c1_122 = arith.constant 1 : index
    %242 = memref.load %arg9[%c1_122] : memref<2xf32, #tpu.memory_space<smem>>
    %243 = vector.extract_strided_slice %235 {offsets = [0, 0], sizes = [8, 256], strides = [1, 1]} : vector<160x256xf32> to vector<8x256xf32>
    %cst_123 = arith.constant dense<0.000000e+00> : vector<256xf32>
    %244 = vector.multi_reduction <add>, %243, %cst_123 [0] : vector<8x256xf32> to vector<256xf32>
    %245 = vector.shape_cast %244 : vector<256xf32> to vector<1x256xf32>
    %246 = vector.extract_strided_slice %245 {offsets = [0, 0], sizes = [1, 32], strides = [1, 1]} : vector<1x256xf32> to vector<1x32xf32>
    %247 = vector.extract_strided_slice %245 {offsets = [0, 32], sizes = [1, 32], strides = [1, 1]} : vector<1x256xf32> to vector<1x32xf32>
    %248 = arith.addf %246, %247 : vector<1x32xf32>
    %249 = vector.extract_strided_slice %245 {offsets = [0, 64], sizes = [1, 32], strides = [1, 1]} : vector<1x256xf32> to vector<1x32xf32>
    %250 = arith.addf %248, %249 : vector<1x32xf32>
    %251 = vector.extract_strided_slice %245 {offsets = [0, 96], sizes = [1, 32], strides = [1, 1]} : vector<1x256xf32> to vector<1x32xf32>
    %252 = arith.addf %250, %251 : vector<1x32xf32>
    %253 = vector.extract_strided_slice %245 {offsets = [0, 128], sizes = [1, 32], strides = [1, 1]} : vector<1x256xf32> to vector<1x32xf32>
    %254 = arith.addf %252, %253 : vector<1x32xf32>
    %255 = vector.extract_strided_slice %245 {offsets = [0, 160], sizes = [1, 32], strides = [1, 1]} : vector<1x256xf32> to vector<1x32xf32>
    %256 = arith.addf %254, %255 : vector<1x32xf32>
    %257 = vector.extract_strided_slice %245 {offsets = [0, 192], sizes = [1, 32], strides = [1, 1]} : vector<1x256xf32> to vector<1x32xf32>
    %258 = arith.addf %256, %257 : vector<1x32xf32>
    %259 = vector.extract_strided_slice %245 {offsets = [0, 224], sizes = [1, 32], strides = [1, 1]} : vector<1x256xf32> to vector<1x32xf32>
    %260 = arith.addf %258, %259 : vector<1x32xf32>
    %cst_124 = arith.constant 1.562500e-02 : f32
    %261 = vector.broadcast %cst_124 : f32 to vector<1x32xf32>
    %262 = arith.mulf %260, %261 : vector<1x32xf32>
    %263 = arith.mulf %262, %237 : vector<1x32xf32>
    %cst_125 = arith.constant dense<0.000000e+00> : vector<1xf32>
    %264 = vector.multi_reduction <add>, %263, %cst_125 [1] : vector<1x32xf32> to vector<1xf32>
    %265 = vector.shape_cast %264 : vector<1xf32> to vector<1x1xf32>
    %266 = vector.broadcast %241 : f32 to vector<1x1xf32>
    %267 = arith.addf %265, %266 : vector<1x1xf32>
    %cst_126 = arith.constant 0.000000e+00 : f32
    %268 = vector.broadcast %cst_126 : f32 to vector<1x1xf32>
    %269 = arith.maximumf %267, %268 : vector<1x1xf32>
    %270 = vector.broadcast %269 : vector<1x1xf32> to vector<1x32xf32>
    %271 = arith.mulf %270, %239 : vector<1x32xf32>
    %272 = arith.addf %236, %271 : vector<1x32xf32>
    %273 = arith.mulf %262, %238 : vector<1x32xf32>
    %cst_127 = arith.constant dense<0.000000e+00> : vector<1xf32>
    %274 = vector.multi_reduction <add>, %273, %cst_127 [1] : vector<1x32xf32> to vector<1xf32>
    %275 = vector.shape_cast %274 : vector<1xf32> to vector<1x1xf32>
    %276 = vector.broadcast %242 : f32 to vector<1x1xf32>
    %277 = arith.addf %275, %276 : vector<1x1xf32>
    %cst_128 = arith.constant 0.000000e+00 : f32
    %278 = vector.broadcast %cst_128 : f32 to vector<1x1xf32>
    %279 = arith.maximumf %277, %278 : vector<1x1xf32>
    %280 = vector.broadcast %279 : vector<1x1xf32> to vector<1x32xf32>
    %281 = arith.mulf %280, %240 : vector<1x32xf32>
    %282 = arith.addf %272, %281 : vector<1x32xf32>
    %283 = arith.negf %282 : vector<1x32xf32>
    %284 = math.exp %283 : vector<1x32xf32>
    %cst_129 = arith.constant 1.000000e+00 : f32
    %285 = vector.broadcast %cst_129 : f32 to vector<1x32xf32>
    %286 = arith.addf %285, %284 : vector<1x32xf32>
    %287 = arith.divf %285, %286 : vector<1x32xf32>
    %288 = tpu.concatenate %287, %287, %287, %287, %287, %287, %287, %287 in 1 : vector<1x32xf32>, vector<1x32xf32>, vector<1x32xf32>, vector<1x32xf32>, vector<1x32xf32>, vector<1x32xf32>, vector<1x32xf32>, vector<1x32xf32> -> vector<1x256xf32>
    %289 = vector.broadcast %288 : vector<1x256xf32> to vector<8x256xf32>
    %290 = arith.mulf %243, %289 : vector<8x256xf32>
    %c0_130 = arith.constant 0 : index
    %c0_131 = arith.constant 0 : index
    %c0_132 = arith.constant 0 : index
    %291 = vector.load %arg1[%c0_130, %c0_131, %c0_132] : memref<16x8x256xf32, #tpu.memory_space<vmem>>, vector<1x8x256xf32>
    %292 = vector.shape_cast %291 : vector<1x8x256xf32> to vector<8x256xf32>
    %293 = arith.addf %290, %292 : vector<8x256xf32>
    %c0_133 = arith.constant 0 : index
    %c0_134 = arith.constant 0 : index
    %c0_135 = arith.constant 0 : index
    %294 = vector.load %arg12[%c0_133, %c0_134, %c0_135] : memref<16x8x256xf32, #tpu.memory_space<vmem>>, vector<1x8x256xf32>
    %295 = vector.shape_cast %294 : vector<1x8x256xf32> to vector<8x256xf32>
    %296 = vector.shape_cast %293 : vector<8x256xf32> to vector<1x8x256xf32>
    tpu.vector_store %arg12[%c0_133, %c0_134, %c0_135], %296 {strides = array<i32>} : memref<16x8x256xf32, #tpu.memory_space<vmem>>, vector<1x8x256xf32>,
    %297 = vector.extract_strided_slice %235 {offsets = [10, 0], sizes = [8, 256], strides = [1, 1]} : vector<160x256xf32> to vector<8x256xf32>
    %cst_136 = arith.constant dense<0.000000e+00> : vector<256xf32>
    %298 = vector.multi_reduction <add>, %297, %cst_136 [0] : vector<8x256xf32> to vector<256xf32>
    %299 = vector.shape_cast %298 : vector<256xf32> to vector<1x256xf32>
    %300 = vector.extract_strided_slice %299 {offsets = [0, 0], sizes = [1, 32], strides = [1, 1]} : vector<1x256xf32> to vector<1x32xf32>
    %301 = vector.extract_strided_slice %299 {offsets = [0, 32], sizes = [1, 32], strides = [1, 1]} : vector<1x256xf32> to vector<1x32xf32>
    %302 = arith.addf %300, %301 : vector<1x32xf32>
    %303 = vector.extract_strided_slice %299 {offsets = [0, 64], sizes = [1, 32], strides = [1, 1]} : vector<1x256xf32> to vector<1x32xf32>
    %304 = arith.addf %302, %303 : vector<1x32xf32>
    %305 = vector.extract_strided_slice %299 {offsets = [0, 96], sizes = [1, 32], strides = [1, 1]} : vector<1x256xf32> to vector<1x32xf32>
    %306 = arith.addf %304, %305 : vector<1x32xf32>
    %307 = vector.extract_strided_slice %299 {offsets = [0, 128], sizes = [1, 32], strides = [1, 1]} : vector<1x256xf32> to vector<1x32xf32>
    %308 = arith.addf %306, %307 : vector<1x32xf32>
    %309 = vector.extract_strided_slice %299 {offsets = [0, 160], sizes = [1, 32], strides = [1, 1]} : vector<1x256xf32> to vector<1x32xf32>
    %310 = arith.addf %308, %309 : vector<1x32xf32>
    %311 = vector.extract_strided_slice %299 {offsets = [0, 192], sizes = [1, 32], strides = [1, 1]} : vector<1x256xf32> to vector<1x32xf32>
    %312 = arith.addf %310, %311 : vector<1x32xf32>
    %313 = vector.extract_strided_slice %299 {offsets = [0, 224], sizes = [1, 32], strides = [1, 1]} : vector<1x256xf32> to vector<1x32xf32>
    %314 = arith.addf %312, %313 : vector<1x32xf32>
    %cst_137 = arith.constant 1.562500e-02 : f32
    %315 = vector.broadcast %cst_137 : f32 to vector<1x32xf32>
    %316 = arith.mulf %314, %315 : vector<1x32xf32>
    %317 = arith.mulf %316, %237 : vector<1x32xf32>
    %cst_138 = arith.constant dense<0.000000e+00> : vector<1xf32>
    %318 = vector.multi_reduction <add>, %317, %cst_138 [1] : vector<1x32xf32> to vector<1xf32>
    %319 = vector.shape_cast %318 : vector<1xf32> to vector<1x1xf32>
    %320 = vector.broadcast %241 : f32 to vector<1x1xf32>
    %321 = arith.addf %319, %320 : vector<1x1xf32>
    %cst_139 = arith.constant 0.000000e+00 : f32
    %322 = vector.broadcast %cst_139 : f32 to vector<1x1xf32>
    %323 = arith.maximumf %321, %322 : vector<1x1xf32>
    %324 = vector.broadcast %323 : vector<1x1xf32> to vector<1x32xf32>
    %325 = arith.mulf %324, %239 : vector<1x32xf32>
    %326 = arith.addf %236, %325 : vector<1x32xf32>
    %327 = arith.mulf %316, %238 : vector<1x32xf32>
    %cst_140 = arith.constant dense<0.000000e+00> : vector<1xf32>
    %328 = vector.multi_reduction <add>, %327, %cst_140 [1] : vector<1x32xf32> to vector<1xf32>
    %329 = vector.shape_cast %328 : vector<1xf32> to vector<1x1xf32>
    %330 = vector.broadcast %242 : f32 to vector<1x1xf32>
    %331 = arith.addf %329, %330 : vector<1x1xf32>
    %cst_141 = arith.constant 0.000000e+00 : f32
    %332 = vector.broadcast %cst_141 : f32 to vector<1x1xf32>
    %333 = arith.maximumf %331, %332 : vector<1x1xf32>
    %334 = vector.broadcast %333 : vector<1x1xf32> to vector<1x32xf32>
    %335 = arith.mulf %334, %240 : vector<1x32xf32>
    %336 = arith.addf %326, %335 : vector<1x32xf32>
    %337 = arith.negf %336 : vector<1x32xf32>
    %338 = math.exp %337 : vector<1x32xf32>
    %cst_142 = arith.constant 1.000000e+00 : f32
    %339 = vector.broadcast %cst_142 : f32 to vector<1x32xf32>
    %340 = arith.addf %339, %338 : vector<1x32xf32>
    %341 = arith.divf %339, %340 : vector<1x32xf32>
    %342 = tpu.concatenate %341, %341, %341, %341, %341, %341, %341, %341 in 1 : vector<1x32xf32>, vector<1x32xf32>, vector<1x32xf32>, vector<1x32xf32>, vector<1x32xf32>, vector<1x32xf32>, vector<1x32xf32>, vector<1x32xf32> -> vector<1x256xf32>
    %343 = vector.broadcast %342 : vector<1x256xf32> to vector<8x256xf32>
    %344 = arith.mulf %297, %343 : vector<8x256xf32>
    %c1_143 = arith.constant 1 : index
    %c0_144 = arith.constant 0 : index
    %c0_145 = arith.constant 0 : index
    %345 = vector.load %arg1[%c1_143, %c0_144, %c0_145] : memref<16x8x256xf32, #tpu.memory_space<vmem>>, vector<1x8x256xf32>
    %346 = vector.shape_cast %345 : vector<1x8x256xf32> to vector<8x256xf32>
    %347 = arith.addf %344, %346 : vector<8x256xf32>
    %c1_146 = arith.constant 1 : index
    %c0_147 = arith.constant 0 : index
    %c0_148 = arith.constant 0 : index
    %348 = vector.load %arg12[%c1_146, %c0_147, %c0_148] : memref<16x8x256xf32, #tpu.memory_space<vmem>>, vector<1x8x256xf32>
    %349 = vector.shape_cast %348 : vector<1x8x256xf32> to vector<8x256xf32>
    %350 = vector.shape_cast %347 : vector<8x256xf32> to vector<1x8x256xf32>
    tpu.vector_store %arg12[%c1_146, %c0_147, %c0_148], %350 {strides = array<i32>} : memref<16x8x256xf32, #tpu.memory_space<vmem>>, vector<1x8x256xf32>,
    %351 = vector.extract_strided_slice %235 {offsets = [20, 0], sizes = [8, 256], strides = [1, 1]} : vector<160x256xf32> to vector<8x256xf32>
    %cst_149 = arith.constant dense<0.000000e+00> : vector<256xf32>
    %352 = vector.multi_reduction <add>, %351, %cst_149 [0] : vector<8x256xf32> to vector<256xf32>
    %353 = vector.shape_cast %352 : vector<256xf32> to vector<1x256xf32>
    %354 = vector.extract_strided_slice %353 {offsets = [0, 0], sizes = [1, 32], strides = [1, 1]} : vector<1x256xf32> to vector<1x32xf32>
    %355 = vector.extract_strided_slice %353 {offsets = [0, 32], sizes = [1, 32], strides = [1, 1]} : vector<1x256xf32> to vector<1x32xf32>
    %356 = arith.addf %354, %355 : vector<1x32xf32>
    %357 = vector.extract_strided_slice %353 {offsets = [0, 64], sizes = [1, 32], strides = [1, 1]} : vector<1x256xf32> to vector<1x32xf32>
    %358 = arith.addf %356, %357 : vector<1x32xf32>
    %359 = vector.extract_strided_slice %353 {offsets = [0, 96], sizes = [1, 32], strides = [1, 1]} : vector<1x256xf32> to vector<1x32xf32>
    %360 = arith.addf %358, %359 : vector<1x32xf32>
    %361 = vector.extract_strided_slice %353 {offsets = [0, 128], sizes = [1, 32], strides = [1, 1]} : vector<1x256xf32> to vector<1x32xf32>
    %362 = arith.addf %360, %361 : vector<1x32xf32>
    %363 = vector.extract_strided_slice %353 {offsets = [0, 160], sizes = [1, 32], strides = [1, 1]} : vector<1x256xf32> to vector<1x32xf32>
    %364 = arith.addf %362, %363 : vector<1x32xf32>
    %365 = vector.extract_strided_slice %353 {offsets = [0, 192], sizes = [1, 32], strides = [1, 1]} : vector<1x256xf32> to vector<1x32xf32>
    %366 = arith.addf %364, %365 : vector<1x32xf32>
    %367 = vector.extract_strided_slice %353 {offsets = [0, 224], sizes = [1, 32], strides = [1, 1]} : vector<1x256xf32> to vector<1x32xf32>
    %368 = arith.addf %366, %367 : vector<1x32xf32>
    %cst_150 = arith.constant 1.562500e-02 : f32
    %369 = vector.broadcast %cst_150 : f32 to vector<1x32xf32>
    %370 = arith.mulf %368, %369 : vector<1x32xf32>
    %371 = arith.mulf %370, %237 : vector<1x32xf32>
    %cst_151 = arith.constant dense<0.000000e+00> : vector<1xf32>
    %372 = vector.multi_reduction <add>, %371, %cst_151 [1] : vector<1x32xf32> to vector<1xf32>
    %373 = vector.shape_cast %372 : vector<1xf32> to vector<1x1xf32>
    %374 = vector.broadcast %241 : f32 to vector<1x1xf32>
    %375 = arith.addf %373, %374 : vector<1x1xf32>
    %cst_152 = arith.constant 0.000000e+00 : f32
    %376 = vector.broadcast %cst_152 : f32 to vector<1x1xf32>
    %377 = arith.maximumf %375, %376 : vector<1x1xf32>
    %378 = vector.broadcast %377 : vector<1x1xf32> to vector<1x32xf32>
    %379 = arith.mulf %378, %239 : vector<1x32xf32>
    %380 = arith.addf %236, %379 : vector<1x32xf32>
    %381 = arith.mulf %370, %238 : vector<1x32xf32>
    %cst_153 = arith.constant dense<0.000000e+00> : vector<1xf32>
    %382 = vector.multi_reduction <add>, %381, %cst_153 [1] : vector<1x32xf32> to vector<1xf32>
    %383 = vector.shape_cast %382 : vector<1xf32> to vector<1x1xf32>
    %384 = vector.broadcast %242 : f32 to vector<1x1xf32>
    %385 = arith.addf %383, %384 : vector<1x1xf32>
    %cst_154 = arith.constant 0.000000e+00 : f32
    %386 = vector.broadcast %cst_154 : f32 to vector<1x1xf32>
    %387 = arith.maximumf %385, %386 : vector<1x1xf32>
    %388 = vector.broadcast %387 : vector<1x1xf32> to vector<1x32xf32>
    %389 = arith.mulf %388, %240 : vector<1x32xf32>
    %390 = arith.addf %380, %389 : vector<1x32xf32>
    %391 = arith.negf %390 : vector<1x32xf32>
    %392 = math.exp %391 : vector<1x32xf32>
    %cst_155 = arith.constant 1.000000e+00 : f32
    %393 = vector.broadcast %cst_155 : f32 to vector<1x32xf32>
    %394 = arith.addf %393, %392 : vector<1x32xf32>
    %395 = arith.divf %393, %394 : vector<1x32xf32>
    %396 = tpu.concatenate %395, %395, %395, %395, %395, %395, %395, %395 in 1 : vector<1x32xf32>, vector<1x32xf32>, vector<1x32xf32>, vector<1x32xf32>, vector<1x32xf32>, vector<1x32xf32>, vector<1x32xf32>, vector<1x32xf32> -> vector<1x256xf32>
    %397 = vector.broadcast %396 : vector<1x256xf32> to vector<8x256xf32>
    %398 = arith.mulf %351, %397 : vector<8x256xf32>
    %c2_156 = arith.constant 2 : index
    %c0_157 = arith.constant 0 : index
    %c0_158 = arith.constant 0 : index
    %399 = vector.load %arg1[%c2_156, %c0_157, %c0_158] : memref<16x8x256xf32, #tpu.memory_space<vmem>>, vector<1x8x256xf32>
    %400 = vector.shape_cast %399 : vector<1x8x256xf32> to vector<8x256xf32>
    %401 = arith.addf %398, %400 : vector<8x256xf32>
    %c2_159 = arith.constant 2 : index
    %c0_160 = arith.constant 0 : index
    %c0_161 = arith.constant 0 : index
    %402 = vector.load %arg12[%c2_159, %c0_160, %c0_161] : memref<16x8x256xf32, #tpu.memory_space<vmem>>, vector<1x8x256xf32>
    %403 = vector.shape_cast %402 : vector<1x8x256xf32> to vector<8x256xf32>
    %404 = vector.shape_cast %401 : vector<8x256xf32> to vector<1x8x256xf32>
    tpu.vector_store %arg12[%c2_159, %c0_160, %c0_161], %404 {strides = array<i32>} : memref<16x8x256xf32, #tpu.memory_space<vmem>>, vector<1x8x256xf32>,
    %405 = vector.extract_strided_slice %235 {offsets = [30, 0], sizes = [8, 256], strides = [1, 1]} : vector<160x256xf32> to vector<8x256xf32>
    %cst_162 = arith.constant dense<0.000000e+00> : vector<256xf32>
    %406 = vector.multi_reduction <add>, %405, %cst_162 [0] : vector<8x256xf32> to vector<256xf32>
    %407 = vector.shape_cast %406 : vector<256xf32> to vector<1x256xf32>
    %408 = vector.extract_strided_slice %407 {offsets = [0, 0], sizes = [1, 32], strides = [1, 1]} : vector<1x256xf32> to vector<1x32xf32>
    %409 = vector.extract_strided_slice %407 {offsets = [0, 32], sizes = [1, 32], strides = [1, 1]} : vector<1x256xf32> to vector<1x32xf32>
    %410 = arith.addf %408, %409 : vector<1x32xf32>
    %411 = vector.extract_strided_slice %407 {offsets = [0, 64], sizes = [1, 32], strides = [1, 1]} : vector<1x256xf32> to vector<1x32xf32>
    %412 = arith.addf %410, %411 : vector<1x32xf32>
    %413 = vector.extract_strided_slice %407 {offsets = [0, 96], sizes = [1, 32], strides = [1, 1]} : vector<1x256xf32> to vector<1x32xf32>
    %414 = arith.addf %412, %413 : vector<1x32xf32>
    %415 = vector.extract_strided_slice %407 {offsets = [0, 128], sizes = [1, 32], strides = [1, 1]} : vector<1x256xf32> to vector<1x32xf32>
    %416 = arith.addf %414, %415 : vector<1x32xf32>
    %417 = vector.extract_strided_slice %407 {offsets = [0, 160], sizes = [1, 32], strides = [1, 1]} : vector<1x256xf32> to vector<1x32xf32>
    %418 = arith.addf %416, %417 : vector<1x32xf32>
    %419 = vector.extract_strided_slice %407 {offsets = [0, 192], sizes = [1, 32], strides = [1, 1]} : vector<1x256xf32> to vector<1x32xf32>
    %420 = arith.addf %418, %419 : vector<1x32xf32>
    %421 = vector.extract_strided_slice %407 {offsets = [0, 224], sizes = [1, 32], strides = [1, 1]} : vector<1x256xf32> to vector<1x32xf32>
    %422 = arith.addf %420, %421 : vector<1x32xf32>
    %cst_163 = arith.constant 1.562500e-02 : f32
    %423 = vector.broadcast %cst_163 : f32 to vector<1x32xf32>
    %424 = arith.mulf %422, %423 : vector<1x32xf32>
    %425 = arith.mulf %424, %237 : vector<1x32xf32>
    %cst_164 = arith.constant dense<0.000000e+00> : vector<1xf32>
    %426 = vector.multi_reduction <add>, %425, %cst_164 [1] : vector<1x32xf32> to vector<1xf32>
    %427 = vector.shape_cast %426 : vector<1xf32> to vector<1x1xf32>
    %428 = vector.broadcast %241 : f32 to vector<1x1xf32>
    %429 = arith.addf %427, %428 : vector<1x1xf32>
    %cst_165 = arith.constant 0.000000e+00 : f32
    %430 = vector.broadcast %cst_165 : f32 to vector<1x1xf32>
    %431 = arith.maximumf %429, %430 : vector<1x1xf32>
    %432 = vector.broadcast %431 : vector<1x1xf32> to vector<1x32xf32>
    %433 = arith.mulf %432, %239 : vector<1x32xf32>
    %434 = arith.addf %236, %433 : vector<1x32xf32>
    %435 = arith.mulf %424, %238 : vector<1x32xf32>
    %cst_166 = arith.constant dense<0.000000e+00> : vector<1xf32>
    %436 = vector.multi_reduction <add>, %435, %cst_166 [1] : vector<1x32xf32> to vector<1xf32>
    %437 = vector.shape_cast %436 : vector<1xf32> to vector<1x1xf32>
    %438 = vector.broadcast %242 : f32 to vector<1x1xf32>
    %439 = arith.addf %437, %438 : vector<1x1xf32>
    %cst_167 = arith.constant 0.000000e+00 : f32
    %440 = vector.broadcast %cst_167 : f32 to vector<1x1xf32>
    %441 = arith.maximumf %439, %440 : vector<1x1xf32>
    %442 = vector.broadcast %441 : vector<1x1xf32> to vector<1x32xf32>
    %443 = arith.mulf %442, %240 : vector<1x32xf32>
    %444 = arith.addf %434, %443 : vector<1x32xf32>
    %445 = arith.negf %444 : vector<1x32xf32>
    %446 = math.exp %445 : vector<1x32xf32>
    %cst_168 = arith.constant 1.000000e+00 : f32
    %447 = vector.broadcast %cst_168 : f32 to vector<1x32xf32>
    %448 = arith.addf %447, %446 : vector<1x32xf32>
    %449 = arith.divf %447, %448 : vector<1x32xf32>
    %450 = tpu.concatenate %449, %449, %449, %449, %449, %449, %449, %449 in 1 : vector<1x32xf32>, vector<1x32xf32>, vector<1x32xf32>, vector<1x32xf32>, vector<1x32xf32>, vector<1x32xf32>, vector<1x32xf32>, vector<1x32xf32> -> vector<1x256xf32>
    %451 = vector.broadcast %450 : vector<1x256xf32> to vector<8x256xf32>
    %452 = arith.mulf %405, %451 : vector<8x256xf32>
    %c3 = arith.constant 3 : index
    %c0_169 = arith.constant 0 : index
    %c0_170 = arith.constant 0 : index
    %453 = vector.load %arg1[%c3, %c0_169, %c0_170] : memref<16x8x256xf32, #tpu.memory_space<vmem>>, vector<1x8x256xf32>
    %454 = vector.shape_cast %453 : vector<1x8x256xf32> to vector<8x256xf32>
    %455 = arith.addf %452, %454 : vector<8x256xf32>
    %c3_171 = arith.constant 3 : index
    %c0_172 = arith.constant 0 : index
    %c0_173 = arith.constant 0 : index
    %456 = vector.load %arg12[%c3_171, %c0_172, %c0_173] : memref<16x8x256xf32, #tpu.memory_space<vmem>>, vector<1x8x256xf32>
    %457 = vector.shape_cast %456 : vector<1x8x256xf32> to vector<8x256xf32>
    %458 = vector.shape_cast %455 : vector<8x256xf32> to vector<1x8x256xf32>
    tpu.vector_store %arg12[%c3_171, %c0_172, %c0_173], %458 {strides = array<i32>} : memref<16x8x256xf32, #tpu.memory_space<vmem>>, vector<1x8x256xf32>,
    %459 = vector.extract_strided_slice %235 {offsets = [40, 0], sizes = [8, 256], strides = [1, 1]} : vector<160x256xf32> to vector<8x256xf32>
    %cst_174 = arith.constant dense<0.000000e+00> : vector<256xf32>
    %460 = vector.multi_reduction <add>, %459, %cst_174 [0] : vector<8x256xf32> to vector<256xf32>
    %461 = vector.shape_cast %460 : vector<256xf32> to vector<1x256xf32>
    %462 = vector.extract_strided_slice %461 {offsets = [0, 0], sizes = [1, 32], strides = [1, 1]} : vector<1x256xf32> to vector<1x32xf32>
    %463 = vector.extract_strided_slice %461 {offsets = [0, 32], sizes = [1, 32], strides = [1, 1]} : vector<1x256xf32> to vector<1x32xf32>
    %464 = arith.addf %462, %463 : vector<1x32xf32>
    %465 = vector.extract_strided_slice %461 {offsets = [0, 64], sizes = [1, 32], strides = [1, 1]} : vector<1x256xf32> to vector<1x32xf32>
    %466 = arith.addf %464, %465 : vector<1x32xf32>
    %467 = vector.extract_strided_slice %461 {offsets = [0, 96], sizes = [1, 32], strides = [1, 1]} : vector<1x256xf32> to vector<1x32xf32>
    %468 = arith.addf %466, %467 : vector<1x32xf32>
    %469 = vector.extract_strided_slice %461 {offsets = [0, 128], sizes = [1, 32], strides = [1, 1]} : vector<1x256xf32> to vector<1x32xf32>
    %470 = arith.addf %468, %469 : vector<1x32xf32>
    %471 = vector.extract_strided_slice %461 {offsets = [0, 160], sizes = [1, 32], strides = [1, 1]} : vector<1x256xf32> to vector<1x32xf32>
    %472 = arith.addf %470, %471 : vector<1x32xf32>
    %473 = vector.extract_strided_slice %461 {offsets = [0, 192], sizes = [1, 32], strides = [1, 1]} : vector<1x256xf32> to vector<1x32xf32>
    %474 = arith.addf %472, %473 : vector<1x32xf32>
    %475 = vector.extract_strided_slice %461 {offsets = [0, 224], sizes = [1, 32], strides = [1, 1]} : vector<1x256xf32> to vector<1x32xf32>
    %476 = arith.addf %474, %475 : vector<1x32xf32>
    %cst_175 = arith.constant 1.562500e-02 : f32
    %477 = vector.broadcast %cst_175 : f32 to vector<1x32xf32>
    %478 = arith.mulf %476, %477 : vector<1x32xf32>
    %479 = arith.mulf %478, %237 : vector<1x32xf32>
    %cst_176 = arith.constant dense<0.000000e+00> : vector<1xf32>
    %480 = vector.multi_reduction <add>, %479, %cst_176 [1] : vector<1x32xf32> to vector<1xf32>
    %481 = vector.shape_cast %480 : vector<1xf32> to vector<1x1xf32>
    %482 = vector.broadcast %241 : f32 to vector<1x1xf32>
    %483 = arith.addf %481, %482 : vector<1x1xf32>
    %cst_177 = arith.constant 0.000000e+00 : f32
    %484 = vector.broadcast %cst_177 : f32 to vector<1x1xf32>
    %485 = arith.maximumf %483, %484 : vector<1x1xf32>
    %486 = vector.broadcast %485 : vector<1x1xf32> to vector<1x32xf32>
    %487 = arith.mulf %486, %239 : vector<1x32xf32>
    %488 = arith.addf %236, %487 : vector<1x32xf32>
    %489 = arith.mulf %478, %238 : vector<1x32xf32>
    %cst_178 = arith.constant dense<0.000000e+00> : vector<1xf32>
    %490 = vector.multi_reduction <add>, %489, %cst_178 [1] : vector<1x32xf32> to vector<1xf32>
    %491 = vector.shape_cast %490 : vector<1xf32> to vector<1x1xf32>
    %492 = vector.broadcast %242 : f32 to vector<1x1xf32>
    %493 = arith.addf %491, %492 : vector<1x1xf32>
    %cst_179 = arith.constant 0.000000e+00 : f32
    %494 = vector.broadcast %cst_179 : f32 to vector<1x1xf32>
    %495 = arith.maximumf %493, %494 : vector<1x1xf32>
    %496 = vector.broadcast %495 : vector<1x1xf32> to vector<1x32xf32>
    %497 = arith.mulf %496, %240 : vector<1x32xf32>
    %498 = arith.addf %488, %497 : vector<1x32xf32>
    %499 = arith.negf %498 : vector<1x32xf32>
    %500 = math.exp %499 : vector<1x32xf32>
    %cst_180 = arith.constant 1.000000e+00 : f32
    %501 = vector.broadcast %cst_180 : f32 to vector<1x32xf32>
    %502 = arith.addf %501, %500 : vector<1x32xf32>
    %503 = arith.divf %501, %502 : vector<1x32xf32>
    %504 = tpu.concatenate %503, %503, %503, %503, %503, %503, %503, %503 in 1 : vector<1x32xf32>, vector<1x32xf32>, vector<1x32xf32>, vector<1x32xf32>, vector<1x32xf32>, vector<1x32xf32>, vector<1x32xf32>, vector<1x32xf32> -> vector<1x256xf32>
    %505 = vector.broadcast %504 : vector<1x256xf32> to vector<8x256xf32>
    %506 = arith.mulf %459, %505 : vector<8x256xf32>
    %c4 = arith.constant 4 : index
    %c0_181 = arith.constant 0 : index
    %c0_182 = arith.constant 0 : index
    %507 = vector.load %arg1[%c4, %c0_181, %c0_182] : memref<16x8x256xf32, #tpu.memory_space<vmem>>, vector<1x8x256xf32>
    %508 = vector.shape_cast %507 : vector<1x8x256xf32> to vector<8x256xf32>
    %509 = arith.addf %506, %508 : vector<8x256xf32>
    %c4_183 = arith.constant 4 : index
    %c0_184 = arith.constant 0 : index
    %c0_185 = arith.constant 0 : index
    %510 = vector.load %arg12[%c4_183, %c0_184, %c0_185] : memref<16x8x256xf32, #tpu.memory_space<vmem>>, vector<1x8x256xf32>
    %511 = vector.shape_cast %510 : vector<1x8x256xf32> to vector<8x256xf32>
    %512 = vector.shape_cast %509 : vector<8x256xf32> to vector<1x8x256xf32>
    tpu.vector_store %arg12[%c4_183, %c0_184, %c0_185], %512 {strides = array<i32>} : memref<16x8x256xf32, #tpu.memory_space<vmem>>, vector<1x8x256xf32>,
    %513 = vector.extract_strided_slice %235 {offsets = [50, 0], sizes = [8, 256], strides = [1, 1]} : vector<160x256xf32> to vector<8x256xf32>
    %cst_186 = arith.constant dense<0.000000e+00> : vector<256xf32>
    %514 = vector.multi_reduction <add>, %513, %cst_186 [0] : vector<8x256xf32> to vector<256xf32>
    %515 = vector.shape_cast %514 : vector<256xf32> to vector<1x256xf32>
    %516 = vector.extract_strided_slice %515 {offsets = [0, 0], sizes = [1, 32], strides = [1, 1]} : vector<1x256xf32> to vector<1x32xf32>
    %517 = vector.extract_strided_slice %515 {offsets = [0, 32], sizes = [1, 32], strides = [1, 1]} : vector<1x256xf32> to vector<1x32xf32>
    %518 = arith.addf %516, %517 : vector<1x32xf32>
    %519 = vector.extract_strided_slice %515 {offsets = [0, 64], sizes = [1, 32], strides = [1, 1]} : vector<1x256xf32> to vector<1x32xf32>
    %520 = arith.addf %518, %519 : vector<1x32xf32>
    %521 = vector.extract_strided_slice %515 {offsets = [0, 96], sizes = [1, 32], strides = [1, 1]} : vector<1x256xf32> to vector<1x32xf32>
    %522 = arith.addf %520, %521 : vector<1x32xf32>
    %523 = vector.extract_strided_slice %515 {offsets = [0, 128], sizes = [1, 32], strides = [1, 1]} : vector<1x256xf32> to vector<1x32xf32>
    %524 = arith.addf %522, %523 : vector<1x32xf32>
    %525 = vector.extract_strided_slice %515 {offsets = [0, 160], sizes = [1, 32], strides = [1, 1]} : vector<1x256xf32> to vector<1x32xf32>
    %526 = arith.addf %524, %525 : vector<1x32xf32>
    %527 = vector.extract_strided_slice %515 {offsets = [0, 192], sizes = [1, 32], strides = [1, 1]} : vector<1x256xf32> to vector<1x32xf32>
    %528 = arith.addf %526, %527 : vector<1x32xf32>
    %529 = vector.extract_strided_slice %515 {offsets = [0, 224], sizes = [1, 32], strides = [1, 1]} : vector<1x256xf32> to vector<1x32xf32>
    %530 = arith.addf %528, %529 : vector<1x32xf32>
    %cst_187 = arith.constant 1.562500e-02 : f32
    %531 = vector.broadcast %cst_187 : f32 to vector<1x32xf32>
    %532 = arith.mulf %530, %531 : vector<1x32xf32>
    %533 = arith.mulf %532, %237 : vector<1x32xf32>
    %cst_188 = arith.constant dense<0.000000e+00> : vector<1xf32>
    %534 = vector.multi_reduction <add>, %533, %cst_188 [1] : vector<1x32xf32> to vector<1xf32>
    %535 = vector.shape_cast %534 : vector<1xf32> to vector<1x1xf32>
    %536 = vector.broadcast %241 : f32 to vector<1x1xf32>
    %537 = arith.addf %535, %536 : vector<1x1xf32>
    %cst_189 = arith.constant 0.000000e+00 : f32
    %538 = vector.broadcast %cst_189 : f32 to vector<1x1xf32>
    %539 = arith.maximumf %537, %538 : vector<1x1xf32>
    %540 = vector.broadcast %539 : vector<1x1xf32> to vector<1x32xf32>
    %541 = arith.mulf %540, %239 : vector<1x32xf32>
    %542 = arith.addf %236, %541 : vector<1x32xf32>
    %543 = arith.mulf %532, %238 : vector<1x32xf32>
    %cst_190 = arith.constant dense<0.000000e+00> : vector<1xf32>
    %544 = vector.multi_reduction <add>, %543, %cst_190 [1] : vector<1x32xf32> to vector<1xf32>
    %545 = vector.shape_cast %544 : vector<1xf32> to vector<1x1xf32>
    %546 = vector.broadcast %242 : f32 to vector<1x1xf32>
    %547 = arith.addf %545, %546 : vector<1x1xf32>
    %cst_191 = arith.constant 0.000000e+00 : f32
    %548 = vector.broadcast %cst_191 : f32 to vector<1x1xf32>
    %549 = arith.maximumf %547, %548 : vector<1x1xf32>
    %550 = vector.broadcast %549 : vector<1x1xf32> to vector<1x32xf32>
    %551 = arith.mulf %550, %240 : vector<1x32xf32>
    %552 = arith.addf %542, %551 : vector<1x32xf32>
    %553 = arith.negf %552 : vector<1x32xf32>
    %554 = math.exp %553 : vector<1x32xf32>
    %cst_192 = arith.constant 1.000000e+00 : f32
    %555 = vector.broadcast %cst_192 : f32 to vector<1x32xf32>
    %556 = arith.addf %555, %554 : vector<1x32xf32>
    %557 = arith.divf %555, %556 : vector<1x32xf32>
    %558 = tpu.concatenate %557, %557, %557, %557, %557, %557, %557, %557 in 1 : vector<1x32xf32>, vector<1x32xf32>, vector<1x32xf32>, vector<1x32xf32>, vector<1x32xf32>, vector<1x32xf32>, vector<1x32xf32>, vector<1x32xf32> -> vector<1x256xf32>
    %559 = vector.broadcast %558 : vector<1x256xf32> to vector<8x256xf32>
    %560 = arith.mulf %513, %559 : vector<8x256xf32>
    %c5 = arith.constant 5 : index
    %c0_193 = arith.constant 0 : index
    %c0_194 = arith.constant 0 : index
    %561 = vector.load %arg1[%c5, %c0_193, %c0_194] : memref<16x8x256xf32, #tpu.memory_space<vmem>>, vector<1x8x256xf32>
    %562 = vector.shape_cast %561 : vector<1x8x256xf32> to vector<8x256xf32>
    %563 = arith.addf %560, %562 : vector<8x256xf32>
    %c5_195 = arith.constant 5 : index
    %c0_196 = arith.constant 0 : index
    %c0_197 = arith.constant 0 : index
    %564 = vector.load %arg12[%c5_195, %c0_196, %c0_197] : memref<16x8x256xf32, #tpu.memory_space<vmem>>, vector<1x8x256xf32>
    %565 = vector.shape_cast %564 : vector<1x8x256xf32> to vector<8x256xf32>
    %566 = vector.shape_cast %563 : vector<8x256xf32> to vector<1x8x256xf32>
    tpu.vector_store %arg12[%c5_195, %c0_196, %c0_197], %566 {strides = array<i32>} : memref<16x8x256xf32, #tpu.memory_space<vmem>>, vector<1x8x256xf32>,
    %567 = vector.extract_strided_slice %235 {offsets = [60, 0], sizes = [8, 256], strides = [1, 1]} : vector<160x256xf32> to vector<8x256xf32>
    %cst_198 = arith.constant dense<0.000000e+00> : vector<256xf32>
    %568 = vector.multi_reduction <add>, %567, %cst_198 [0] : vector<8x256xf32> to vector<256xf32>
    %569 = vector.shape_cast %568 : vector<256xf32> to vector<1x256xf32>
    %570 = vector.extract_strided_slice %569 {offsets = [0, 0], sizes = [1, 32], strides = [1, 1]} : vector<1x256xf32> to vector<1x32xf32>
    %571 = vector.extract_strided_slice %569 {offsets = [0, 32], sizes = [1, 32], strides = [1, 1]} : vector<1x256xf32> to vector<1x32xf32>
    %572 = arith.addf %570, %571 : vector<1x32xf32>
    %573 = vector.extract_strided_slice %569 {offsets = [0, 64], sizes = [1, 32], strides = [1, 1]} : vector<1x256xf32> to vector<1x32xf32>
    %574 = arith.addf %572, %573 : vector<1x32xf32>
    %575 = vector.extract_strided_slice %569 {offsets = [0, 96], sizes = [1, 32], strides = [1, 1]} : vector<1x256xf32> to vector<1x32xf32>
    %576 = arith.addf %574, %575 : vector<1x32xf32>
    %577 = vector.extract_strided_slice %569 {offsets = [0, 128], sizes = [1, 32], strides = [1, 1]} : vector<1x256xf32> to vector<1x32xf32>
    %578 = arith.addf %576, %577 : vector<1x32xf32>
    %579 = vector.extract_strided_slice %569 {offsets = [0, 160], sizes = [1, 32], strides = [1, 1]} : vector<1x256xf32> to vector<1x32xf32>
    %580 = arith.addf %578, %579 : vector<1x32xf32>
    %581 = vector.extract_strided_slice %569 {offsets = [0, 192], sizes = [1, 32], strides = [1, 1]} : vector<1x256xf32> to vector<1x32xf32>
    %582 = arith.addf %580, %581 : vector<1x32xf32>
    %583 = vector.extract_strided_slice %569 {offsets = [0, 224], sizes = [1, 32], strides = [1, 1]} : vector<1x256xf32> to vector<1x32xf32>
    %584 = arith.addf %582, %583 : vector<1x32xf32>
    %cst_199 = arith.constant 1.562500e-02 : f32
    %585 = vector.broadcast %cst_199 : f32 to vector<1x32xf32>
    %586 = arith.mulf %584, %585 : vector<1x32xf32>
    %587 = arith.mulf %586, %237 : vector<1x32xf32>
    %cst_200 = arith.constant dense<0.000000e+00> : vector<1xf32>
    %588 = vector.multi_reduction <add>, %587, %cst_200 [1] : vector<1x32xf32> to vector<1xf32>
    %589 = vector.shape_cast %588 : vector<1xf32> to vector<1x1xf32>
    %590 = vector.broadcast %241 : f32 to vector<1x1xf32>
    %591 = arith.addf %589, %590 : vector<1x1xf32>
    %cst_201 = arith.constant 0.000000e+00 : f32
    %592 = vector.broadcast %cst_201 : f32 to vector<1x1xf32>
    %593 = arith.maximumf %591, %592 : vector<1x1xf32>
    %594 = vector.broadcast %593 : vector<1x1xf32> to vector<1x32xf32>
    %595 = arith.mulf %594, %239 : vector<1x32xf32>
    %596 = arith.addf %236, %595 : vector<1x32xf32>
    %597 = arith.mulf %586, %238 : vector<1x32xf32>
    %cst_202 = arith.constant dense<0.000000e+00> : vector<1xf32>
    %598 = vector.multi_reduction <add>, %597, %cst_202 [1] : vector<1x32xf32> to vector<1xf32>
    %599 = vector.shape_cast %598 : vector<1xf32> to vector<1x1xf32>
    %600 = vector.broadcast %242 : f32 to vector<1x1xf32>
    %601 = arith.addf %599, %600 : vector<1x1xf32>
    %cst_203 = arith.constant 0.000000e+00 : f32
    %602 = vector.broadcast %cst_203 : f32 to vector<1x1xf32>
    %603 = arith.maximumf %601, %602 : vector<1x1xf32>
    %604 = vector.broadcast %603 : vector<1x1xf32> to vector<1x32xf32>
    %605 = arith.mulf %604, %240 : vector<1x32xf32>
    %606 = arith.addf %596, %605 : vector<1x32xf32>
    %607 = arith.negf %606 : vector<1x32xf32>
    %608 = math.exp %607 : vector<1x32xf32>
    %cst_204 = arith.constant 1.000000e+00 : f32
    %609 = vector.broadcast %cst_204 : f32 to vector<1x32xf32>
    %610 = arith.addf %609, %608 : vector<1x32xf32>
    %611 = arith.divf %609, %610 : vector<1x32xf32>
    %612 = tpu.concatenate %611, %611, %611, %611, %611, %611, %611, %611 in 1 : vector<1x32xf32>, vector<1x32xf32>, vector<1x32xf32>, vector<1x32xf32>, vector<1x32xf32>, vector<1x32xf32>, vector<1x32xf32>, vector<1x32xf32> -> vector<1x256xf32>
    %613 = vector.broadcast %612 : vector<1x256xf32> to vector<8x256xf32>
    %614 = arith.mulf %567, %613 : vector<8x256xf32>
    %c6 = arith.constant 6 : index
    %c0_205 = arith.constant 0 : index
    %c0_206 = arith.constant 0 : index
    %615 = vector.load %arg1[%c6, %c0_205, %c0_206] : memref<16x8x256xf32, #tpu.memory_space<vmem>>, vector<1x8x256xf32>
    %616 = vector.shape_cast %615 : vector<1x8x256xf32> to vector<8x256xf32>
    %617 = arith.addf %614, %616 : vector<8x256xf32>
    %c6_207 = arith.constant 6 : index
    %c0_208 = arith.constant 0 : index
    %c0_209 = arith.constant 0 : index
    %618 = vector.load %arg12[%c6_207, %c0_208, %c0_209] : memref<16x8x256xf32, #tpu.memory_space<vmem>>, vector<1x8x256xf32>
    %619 = vector.shape_cast %618 : vector<1x8x256xf32> to vector<8x256xf32>
    %620 = vector.shape_cast %617 : vector<8x256xf32> to vector<1x8x256xf32>
    tpu.vector_store %arg12[%c6_207, %c0_208, %c0_209], %620 {strides = array<i32>} : memref<16x8x256xf32, #tpu.memory_space<vmem>>, vector<1x8x256xf32>,
    %621 = vector.extract_strided_slice %235 {offsets = [70, 0], sizes = [8, 256], strides = [1, 1]} : vector<160x256xf32> to vector<8x256xf32>
    %cst_210 = arith.constant dense<0.000000e+00> : vector<256xf32>
    %622 = vector.multi_reduction <add>, %621, %cst_210 [0] : vector<8x256xf32> to vector<256xf32>
    %623 = vector.shape_cast %622 : vector<256xf32> to vector<1x256xf32>
    %624 = vector.extract_strided_slice %623 {offsets = [0, 0], sizes = [1, 32], strides = [1, 1]} : vector<1x256xf32> to vector<1x32xf32>
    %625 = vector.extract_strided_slice %623 {offsets = [0, 32], sizes = [1, 32], strides = [1, 1]} : vector<1x256xf32> to vector<1x32xf32>
    %626 = arith.addf %624, %625 : vector<1x32xf32>
    %627 = vector.extract_strided_slice %623 {offsets = [0, 64], sizes = [1, 32], strides = [1, 1]} : vector<1x256xf32> to vector<1x32xf32>
    %628 = arith.addf %626, %627 : vector<1x32xf32>
    %629 = vector.extract_strided_slice %623 {offsets = [0, 96], sizes = [1, 32], strides = [1, 1]} : vector<1x256xf32> to vector<1x32xf32>
    %630 = arith.addf %628, %629 : vector<1x32xf32>
    %631 = vector.extract_strided_slice %623 {offsets = [0, 128], sizes = [1, 32], strides = [1, 1]} : vector<1x256xf32> to vector<1x32xf32>
    %632 = arith.addf %630, %631 : vector<1x32xf32>
    %633 = vector.extract_strided_slice %623 {offsets = [0, 160], sizes = [1, 32], strides = [1, 1]} : vector<1x256xf32> to vector<1x32xf32>
    %634 = arith.addf %632, %633 : vector<1x32xf32>
    %635 = vector.extract_strided_slice %623 {offsets = [0, 192], sizes = [1, 32], strides = [1, 1]} : vector<1x256xf32> to vector<1x32xf32>
    %636 = arith.addf %634, %635 : vector<1x32xf32>
    %637 = vector.extract_strided_slice %623 {offsets = [0, 224], sizes = [1, 32], strides = [1, 1]} : vector<1x256xf32> to vector<1x32xf32>
    %638 = arith.addf %636, %637 : vector<1x32xf32>
    %cst_211 = arith.constant 1.562500e-02 : f32
    %639 = vector.broadcast %cst_211 : f32 to vector<1x32xf32>
    %640 = arith.mulf %638, %639 : vector<1x32xf32>
    %641 = arith.mulf %640, %237 : vector<1x32xf32>
    %cst_212 = arith.constant dense<0.000000e+00> : vector<1xf32>
    %642 = vector.multi_reduction <add>, %641, %cst_212 [1] : vector<1x32xf32> to vector<1xf32>
    %643 = vector.shape_cast %642 : vector<1xf32> to vector<1x1xf32>
    %644 = vector.broadcast %241 : f32 to vector<1x1xf32>
    %645 = arith.addf %643, %644 : vector<1x1xf32>
    %cst_213 = arith.constant 0.000000e+00 : f32
    %646 = vector.broadcast %cst_213 : f32 to vector<1x1xf32>
    %647 = arith.maximumf %645, %646 : vector<1x1xf32>
    %648 = vector.broadcast %647 : vector<1x1xf32> to vector<1x32xf32>
    %649 = arith.mulf %648, %239 : vector<1x32xf32>
    %650 = arith.addf %236, %649 : vector<1x32xf32>
    %651 = arith.mulf %640, %238 : vector<1x32xf32>
    %cst_214 = arith.constant dense<0.000000e+00> : vector<1xf32>
    %652 = vector.multi_reduction <add>, %651, %cst_214 [1] : vector<1x32xf32> to vector<1xf32>
    %653 = vector.shape_cast %652 : vector<1xf32> to vector<1x1xf32>
    %654 = vector.broadcast %242 : f32 to vector<1x1xf32>
    %655 = arith.addf %653, %654 : vector<1x1xf32>
    %cst_215 = arith.constant 0.000000e+00 : f32
    %656 = vector.broadcast %cst_215 : f32 to vector<1x1xf32>
    %657 = arith.maximumf %655, %656 : vector<1x1xf32>
    %658 = vector.broadcast %657 : vector<1x1xf32> to vector<1x32xf32>
    %659 = arith.mulf %658, %240 : vector<1x32xf32>
    %660 = arith.addf %650, %659 : vector<1x32xf32>
    %661 = arith.negf %660 : vector<1x32xf32>
    %662 = math.exp %661 : vector<1x32xf32>
    %cst_216 = arith.constant 1.000000e+00 : f32
    %663 = vector.broadcast %cst_216 : f32 to vector<1x32xf32>
    %664 = arith.addf %663, %662 : vector<1x32xf32>
    %665 = arith.divf %663, %664 : vector<1x32xf32>
    %666 = tpu.concatenate %665, %665, %665, %665, %665, %665, %665, %665 in 1 : vector<1x32xf32>, vector<1x32xf32>, vector<1x32xf32>, vector<1x32xf32>, vector<1x32xf32>, vector<1x32xf32>, vector<1x32xf32>, vector<1x32xf32> -> vector<1x256xf32>
    %667 = vector.broadcast %666 : vector<1x256xf32> to vector<8x256xf32>
    %668 = arith.mulf %621, %667 : vector<8x256xf32>
    %c7 = arith.constant 7 : index
    %c0_217 = arith.constant 0 : index
    %c0_218 = arith.constant 0 : index
    %669 = vector.load %arg1[%c7, %c0_217, %c0_218] : memref<16x8x256xf32, #tpu.memory_space<vmem>>, vector<1x8x256xf32>
    %670 = vector.shape_cast %669 : vector<1x8x256xf32> to vector<8x256xf32>
    %671 = arith.addf %668, %670 : vector<8x256xf32>
    %c7_219 = arith.constant 7 : index
    %c0_220 = arith.constant 0 : index
    %c0_221 = arith.constant 0 : index
    %672 = vector.load %arg12[%c7_219, %c0_220, %c0_221] : memref<16x8x256xf32, #tpu.memory_space<vmem>>, vector<1x8x256xf32>
    %673 = vector.shape_cast %672 : vector<1x8x256xf32> to vector<8x256xf32>
    %674 = vector.shape_cast %671 : vector<8x256xf32> to vector<1x8x256xf32>
    tpu.vector_store %arg12[%c7_219, %c0_220, %c0_221], %674 {strides = array<i32>} : memref<16x8x256xf32, #tpu.memory_space<vmem>>, vector<1x8x256xf32>,
    %675 = vector.extract_strided_slice %235 {offsets = [80, 0], sizes = [8, 256], strides = [1, 1]} : vector<160x256xf32> to vector<8x256xf32>
    %cst_222 = arith.constant dense<0.000000e+00> : vector<256xf32>
    %676 = vector.multi_reduction <add>, %675, %cst_222 [0] : vector<8x256xf32> to vector<256xf32>
    %677 = vector.shape_cast %676 : vector<256xf32> to vector<1x256xf32>
    %678 = vector.extract_strided_slice %677 {offsets = [0, 0], sizes = [1, 32], strides = [1, 1]} : vector<1x256xf32> to vector<1x32xf32>
    %679 = vector.extract_strided_slice %677 {offsets = [0, 32], sizes = [1, 32], strides = [1, 1]} : vector<1x256xf32> to vector<1x32xf32>
    %680 = arith.addf %678, %679 : vector<1x32xf32>
    %681 = vector.extract_strided_slice %677 {offsets = [0, 64], sizes = [1, 32], strides = [1, 1]} : vector<1x256xf32> to vector<1x32xf32>
    %682 = arith.addf %680, %681 : vector<1x32xf32>
    %683 = vector.extract_strided_slice %677 {offsets = [0, 96], sizes = [1, 32], strides = [1, 1]} : vector<1x256xf32> to vector<1x32xf32>
    %684 = arith.addf %682, %683 : vector<1x32xf32>
    %685 = vector.extract_strided_slice %677 {offsets = [0, 128], sizes = [1, 32], strides = [1, 1]} : vector<1x256xf32> to vector<1x32xf32>
    %686 = arith.addf %684, %685 : vector<1x32xf32>
    %687 = vector.extract_strided_slice %677 {offsets = [0, 160], sizes = [1, 32], strides = [1, 1]} : vector<1x256xf32> to vector<1x32xf32>
    %688 = arith.addf %686, %687 : vector<1x32xf32>
    %689 = vector.extract_strided_slice %677 {offsets = [0, 192], sizes = [1, 32], strides = [1, 1]} : vector<1x256xf32> to vector<1x32xf32>
    %690 = arith.addf %688, %689 : vector<1x32xf32>
    %691 = vector.extract_strided_slice %677 {offsets = [0, 224], sizes = [1, 32], strides = [1, 1]} : vector<1x256xf32> to vector<1x32xf32>
    %692 = arith.addf %690, %691 : vector<1x32xf32>
    %cst_223 = arith.constant 1.562500e-02 : f32
    %693 = vector.broadcast %cst_223 : f32 to vector<1x32xf32>
    %694 = arith.mulf %692, %693 : vector<1x32xf32>
    %695 = arith.mulf %694, %237 : vector<1x32xf32>
    %cst_224 = arith.constant dense<0.000000e+00> : vector<1xf32>
    %696 = vector.multi_reduction <add>, %695, %cst_224 [1] : vector<1x32xf32> to vector<1xf32>
    %697 = vector.shape_cast %696 : vector<1xf32> to vector<1x1xf32>
    %698 = vector.broadcast %241 : f32 to vector<1x1xf32>
    %699 = arith.addf %697, %698 : vector<1x1xf32>
    %cst_225 = arith.constant 0.000000e+00 : f32
    %700 = vector.broadcast %cst_225 : f32 to vector<1x1xf32>
    %701 = arith.maximumf %699, %700 : vector<1x1xf32>
    %702 = vector.broadcast %701 : vector<1x1xf32> to vector<1x32xf32>
    %703 = arith.mulf %702, %239 : vector<1x32xf32>
    %704 = arith.addf %236, %703 : vector<1x32xf32>
    %705 = arith.mulf %694, %238 : vector<1x32xf32>
    %cst_226 = arith.constant dense<0.000000e+00> : vector<1xf32>
    %706 = vector.multi_reduction <add>, %705, %cst_226 [1] : vector<1x32xf32> to vector<1xf32>
    %707 = vector.shape_cast %706 : vector<1xf32> to vector<1x1xf32>
    %708 = vector.broadcast %242 : f32 to vector<1x1xf32>
    %709 = arith.addf %707, %708 : vector<1x1xf32>
    %cst_227 = arith.constant 0.000000e+00 : f32
    %710 = vector.broadcast %cst_227 : f32 to vector<1x1xf32>
    %711 = arith.maximumf %709, %710 : vector<1x1xf32>
    %712 = vector.broadcast %711 : vector<1x1xf32> to vector<1x32xf32>
    %713 = arith.mulf %712, %240 : vector<1x32xf32>
    %714 = arith.addf %704, %713 : vector<1x32xf32>
    %715 = arith.negf %714 : vector<1x32xf32>
    %716 = math.exp %715 : vector<1x32xf32>
    %cst_228 = arith.constant 1.000000e+00 : f32
    %717 = vector.broadcast %cst_228 : f32 to vector<1x32xf32>
    %718 = arith.addf %717, %716 : vector<1x32xf32>
    %719 = arith.divf %717, %718 : vector<1x32xf32>
    %720 = tpu.concatenate %719, %719, %719, %719, %719, %719, %719, %719 in 1 : vector<1x32xf32>, vector<1x32xf32>, vector<1x32xf32>, vector<1x32xf32>, vector<1x32xf32>, vector<1x32xf32>, vector<1x32xf32>, vector<1x32xf32> -> vector<1x256xf32>
    %721 = vector.broadcast %720 : vector<1x256xf32> to vector<8x256xf32>
    %722 = arith.mulf %675, %721 : vector<8x256xf32>
    %c8 = arith.constant 8 : index
    %c0_229 = arith.constant 0 : index
    %c0_230 = arith.constant 0 : index
    %723 = vector.load %arg1[%c8, %c0_229, %c0_230] : memref<16x8x256xf32, #tpu.memory_space<vmem>>, vector<1x8x256xf32>
    %724 = vector.shape_cast %723 : vector<1x8x256xf32> to vector<8x256xf32>
    %725 = arith.addf %722, %724 : vector<8x256xf32>
    %c8_231 = arith.constant 8 : index
    %c0_232 = arith.constant 0 : index
    %c0_233 = arith.constant 0 : index
    %726 = vector.load %arg12[%c8_231, %c0_232, %c0_233] : memref<16x8x256xf32, #tpu.memory_space<vmem>>, vector<1x8x256xf32>
    %727 = vector.shape_cast %726 : vector<1x8x256xf32> to vector<8x256xf32>
    %728 = vector.shape_cast %725 : vector<8x256xf32> to vector<1x8x256xf32>
    tpu.vector_store %arg12[%c8_231, %c0_232, %c0_233], %728 {strides = array<i32>} : memref<16x8x256xf32, #tpu.memory_space<vmem>>, vector<1x8x256xf32>,
    %729 = vector.extract_strided_slice %235 {offsets = [90, 0], sizes = [8, 256], strides = [1, 1]} : vector<160x256xf32> to vector<8x256xf32>
    %cst_234 = arith.constant dense<0.000000e+00> : vector<256xf32>
    %730 = vector.multi_reduction <add>, %729, %cst_234 [0] : vector<8x256xf32> to vector<256xf32>
    %731 = vector.shape_cast %730 : vector<256xf32> to vector<1x256xf32>
    %732 = vector.extract_strided_slice %731 {offsets = [0, 0], sizes = [1, 32], strides = [1, 1]} : vector<1x256xf32> to vector<1x32xf32>
    %733 = vector.extract_strided_slice %731 {offsets = [0, 32], sizes = [1, 32], strides = [1, 1]} : vector<1x256xf32> to vector<1x32xf32>
    %734 = arith.addf %732, %733 : vector<1x32xf32>
    %735 = vector.extract_strided_slice %731 {offsets = [0, 64], sizes = [1, 32], strides = [1, 1]} : vector<1x256xf32> to vector<1x32xf32>
    %736 = arith.addf %734, %735 : vector<1x32xf32>
    %737 = vector.extract_strided_slice %731 {offsets = [0, 96], sizes = [1, 32], strides = [1, 1]} : vector<1x256xf32> to vector<1x32xf32>
    %738 = arith.addf %736, %737 : vector<1x32xf32>
    %739 = vector.extract_strided_slice %731 {offsets = [0, 128], sizes = [1, 32], strides = [1, 1]} : vector<1x256xf32> to vector<1x32xf32>
    %740 = arith.addf %738, %739 : vector<1x32xf32>
    %741 = vector.extract_strided_slice %731 {offsets = [0, 160], sizes = [1, 32], strides = [1, 1]} : vector<1x256xf32> to vector<1x32xf32>
    %742 = arith.addf %740, %741 : vector<1x32xf32>
    %743 = vector.extract_strided_slice %731 {offsets = [0, 192], sizes = [1, 32], strides = [1, 1]} : vector<1x256xf32> to vector<1x32xf32>
    %744 = arith.addf %742, %743 : vector<1x32xf32>
    %745 = vector.extract_strided_slice %731 {offsets = [0, 224], sizes = [1, 32], strides = [1, 1]} : vector<1x256xf32> to vector<1x32xf32>
    %746 = arith.addf %744, %745 : vector<1x32xf32>
    %cst_235 = arith.constant 1.562500e-02 : f32
    %747 = vector.broadcast %cst_235 : f32 to vector<1x32xf32>
    %748 = arith.mulf %746, %747 : vector<1x32xf32>
    %749 = arith.mulf %748, %237 : vector<1x32xf32>
    %cst_236 = arith.constant dense<0.000000e+00> : vector<1xf32>
    %750 = vector.multi_reduction <add>, %749, %cst_236 [1] : vector<1x32xf32> to vector<1xf32>
    %751 = vector.shape_cast %750 : vector<1xf32> to vector<1x1xf32>
    %752 = vector.broadcast %241 : f32 to vector<1x1xf32>
    %753 = arith.addf %751, %752 : vector<1x1xf32>
    %cst_237 = arith.constant 0.000000e+00 : f32
    %754 = vector.broadcast %cst_237 : f32 to vector<1x1xf32>
    %755 = arith.maximumf %753, %754 : vector<1x1xf32>
    %756 = vector.broadcast %755 : vector<1x1xf32> to vector<1x32xf32>
    %757 = arith.mulf %756, %239 : vector<1x32xf32>
    %758 = arith.addf %236, %757 : vector<1x32xf32>
    %759 = arith.mulf %748, %238 : vector<1x32xf32>
    %cst_238 = arith.constant dense<0.000000e+00> : vector<1xf32>
    %760 = vector.multi_reduction <add>, %759, %cst_238 [1] : vector<1x32xf32> to vector<1xf32>
    %761 = vector.shape_cast %760 : vector<1xf32> to vector<1x1xf32>
    %762 = vector.broadcast %242 : f32 to vector<1x1xf32>
    %763 = arith.addf %761, %762 : vector<1x1xf32>
    %cst_239 = arith.constant 0.000000e+00 : f32
    %764 = vector.broadcast %cst_239 : f32 to vector<1x1xf32>
    %765 = arith.maximumf %763, %764 : vector<1x1xf32>
    %766 = vector.broadcast %765 : vector<1x1xf32> to vector<1x32xf32>
    %767 = arith.mulf %766, %240 : vector<1x32xf32>
    %768 = arith.addf %758, %767 : vector<1x32xf32>
    %769 = arith.negf %768 : vector<1x32xf32>
    %770 = math.exp %769 : vector<1x32xf32>
    %cst_240 = arith.constant 1.000000e+00 : f32
    %771 = vector.broadcast %cst_240 : f32 to vector<1x32xf32>
    %772 = arith.addf %771, %770 : vector<1x32xf32>
    %773 = arith.divf %771, %772 : vector<1x32xf32>
    %774 = tpu.concatenate %773, %773, %773, %773, %773, %773, %773, %773 in 1 : vector<1x32xf32>, vector<1x32xf32>, vector<1x32xf32>, vector<1x32xf32>, vector<1x32xf32>, vector<1x32xf32>, vector<1x32xf32>, vector<1x32xf32> -> vector<1x256xf32>
    %775 = vector.broadcast %774 : vector<1x256xf32> to vector<8x256xf32>
    %776 = arith.mulf %729, %775 : vector<8x256xf32>
    %c9 = arith.constant 9 : index
    %c0_241 = arith.constant 0 : index
    %c0_242 = arith.constant 0 : index
    %777 = vector.load %arg1[%c9, %c0_241, %c0_242] : memref<16x8x256xf32, #tpu.memory_space<vmem>>, vector<1x8x256xf32>
    %778 = vector.shape_cast %777 : vector<1x8x256xf32> to vector<8x256xf32>
    %779 = arith.addf %776, %778 : vector<8x256xf32>
    %c9_243 = arith.constant 9 : index
    %c0_244 = arith.constant 0 : index
    %c0_245 = arith.constant 0 : index
    %780 = vector.load %arg12[%c9_243, %c0_244, %c0_245] : memref<16x8x256xf32, #tpu.memory_space<vmem>>, vector<1x8x256xf32>
    %781 = vector.shape_cast %780 : vector<1x8x256xf32> to vector<8x256xf32>
    %782 = vector.shape_cast %779 : vector<8x256xf32> to vector<1x8x256xf32>
    tpu.vector_store %arg12[%c9_243, %c0_244, %c0_245], %782 {strides = array<i32>} : memref<16x8x256xf32, #tpu.memory_space<vmem>>, vector<1x8x256xf32>,
    %783 = vector.extract_strided_slice %235 {offsets = [100, 0], sizes = [8, 256], strides = [1, 1]} : vector<160x256xf32> to vector<8x256xf32>
    %cst_246 = arith.constant dense<0.000000e+00> : vector<256xf32>
    %784 = vector.multi_reduction <add>, %783, %cst_246 [0] : vector<8x256xf32> to vector<256xf32>
    %785 = vector.shape_cast %784 : vector<256xf32> to vector<1x256xf32>
    %786 = vector.extract_strided_slice %785 {offsets = [0, 0], sizes = [1, 32], strides = [1, 1]} : vector<1x256xf32> to vector<1x32xf32>
    %787 = vector.extract_strided_slice %785 {offsets = [0, 32], sizes = [1, 32], strides = [1, 1]} : vector<1x256xf32> to vector<1x32xf32>
    %788 = arith.addf %786, %787 : vector<1x32xf32>
    %789 = vector.extract_strided_slice %785 {offsets = [0, 64], sizes = [1, 32], strides = [1, 1]} : vector<1x256xf32> to vector<1x32xf32>
    %790 = arith.addf %788, %789 : vector<1x32xf32>
    %791 = vector.extract_strided_slice %785 {offsets = [0, 96], sizes = [1, 32], strides = [1, 1]} : vector<1x256xf32> to vector<1x32xf32>
    %792 = arith.addf %790, %791 : vector<1x32xf32>
    %793 = vector.extract_strided_slice %785 {offsets = [0, 128], sizes = [1, 32], strides = [1, 1]} : vector<1x256xf32> to vector<1x32xf32>
    %794 = arith.addf %792, %793 : vector<1x32xf32>
    %795 = vector.extract_strided_slice %785 {offsets = [0, 160], sizes = [1, 32], strides = [1, 1]} : vector<1x256xf32> to vector<1x32xf32>
    %796 = arith.addf %794, %795 : vector<1x32xf32>
    %797 = vector.extract_strided_slice %785 {offsets = [0, 192], sizes = [1, 32], strides = [1, 1]} : vector<1x256xf32> to vector<1x32xf32>
    %798 = arith.addf %796, %797 : vector<1x32xf32>
    %799 = vector.extract_strided_slice %785 {offsets = [0, 224], sizes = [1, 32], strides = [1, 1]} : vector<1x256xf32> to vector<1x32xf32>
    %800 = arith.addf %798, %799 : vector<1x32xf32>
    %cst_247 = arith.constant 1.562500e-02 : f32
    %801 = vector.broadcast %cst_247 : f32 to vector<1x32xf32>
    %802 = arith.mulf %800, %801 : vector<1x32xf32>
    %803 = arith.mulf %802, %237 : vector<1x32xf32>
    %cst_248 = arith.constant dense<0.000000e+00> : vector<1xf32>
    %804 = vector.multi_reduction <add>, %803, %cst_248 [1] : vector<1x32xf32> to vector<1xf32>
    %805 = vector.shape_cast %804 : vector<1xf32> to vector<1x1xf32>
    %806 = vector.broadcast %241 : f32 to vector<1x1xf32>
    %807 = arith.addf %805, %806 : vector<1x1xf32>
    %cst_249 = arith.constant 0.000000e+00 : f32
    %808 = vector.broadcast %cst_249 : f32 to vector<1x1xf32>
    %809 = arith.maximumf %807, %808 : vector<1x1xf32>
    %810 = vector.broadcast %809 : vector<1x1xf32> to vector<1x32xf32>
    %811 = arith.mulf %810, %239 : vector<1x32xf32>
    %812 = arith.addf %236, %811 : vector<1x32xf32>
    %813 = arith.mulf %802, %238 : vector<1x32xf32>
    %cst_250 = arith.constant dense<0.000000e+00> : vector<1xf32>
    %814 = vector.multi_reduction <add>, %813, %cst_250 [1] : vector<1x32xf32> to vector<1xf32>
    %815 = vector.shape_cast %814 : vector<1xf32> to vector<1x1xf32>
    %816 = vector.broadcast %242 : f32 to vector<1x1xf32>
    %817 = arith.addf %815, %816 : vector<1x1xf32>
    %cst_251 = arith.constant 0.000000e+00 : f32
    %818 = vector.broadcast %cst_251 : f32 to vector<1x1xf32>
    %819 = arith.maximumf %817, %818 : vector<1x1xf32>
    %820 = vector.broadcast %819 : vector<1x1xf32> to vector<1x32xf32>
    %821 = arith.mulf %820, %240 : vector<1x32xf32>
    %822 = arith.addf %812, %821 : vector<1x32xf32>
    %823 = arith.negf %822 : vector<1x32xf32>
    %824 = math.exp %823 : vector<1x32xf32>
    %cst_252 = arith.constant 1.000000e+00 : f32
    %825 = vector.broadcast %cst_252 : f32 to vector<1x32xf32>
    %826 = arith.addf %825, %824 : vector<1x32xf32>
    %827 = arith.divf %825, %826 : vector<1x32xf32>
    %828 = tpu.concatenate %827, %827, %827, %827, %827, %827, %827, %827 in 1 : vector<1x32xf32>, vector<1x32xf32>, vector<1x32xf32>, vector<1x32xf32>, vector<1x32xf32>, vector<1x32xf32>, vector<1x32xf32>, vector<1x32xf32> -> vector<1x256xf32>
    %829 = vector.broadcast %828 : vector<1x256xf32> to vector<8x256xf32>
    %830 = arith.mulf %783, %829 : vector<8x256xf32>
    %c10 = arith.constant 10 : index
    %c0_253 = arith.constant 0 : index
    %c0_254 = arith.constant 0 : index
    %831 = vector.load %arg1[%c10, %c0_253, %c0_254] : memref<16x8x256xf32, #tpu.memory_space<vmem>>, vector<1x8x256xf32>
    %832 = vector.shape_cast %831 : vector<1x8x256xf32> to vector<8x256xf32>
    %833 = arith.addf %830, %832 : vector<8x256xf32>
    %c10_255 = arith.constant 10 : index
    %c0_256 = arith.constant 0 : index
    %c0_257 = arith.constant 0 : index
    %834 = vector.load %arg12[%c10_255, %c0_256, %c0_257] : memref<16x8x256xf32, #tpu.memory_space<vmem>>, vector<1x8x256xf32>
    %835 = vector.shape_cast %834 : vector<1x8x256xf32> to vector<8x256xf32>
    %836 = vector.shape_cast %833 : vector<8x256xf32> to vector<1x8x256xf32>
    tpu.vector_store %arg12[%c10_255, %c0_256, %c0_257], %836 {strides = array<i32>} : memref<16x8x256xf32, #tpu.memory_space<vmem>>, vector<1x8x256xf32>,
    %837 = vector.extract_strided_slice %235 {offsets = [110, 0], sizes = [8, 256], strides = [1, 1]} : vector<160x256xf32> to vector<8x256xf32>
    %cst_258 = arith.constant dense<0.000000e+00> : vector<256xf32>
    %838 = vector.multi_reduction <add>, %837, %cst_258 [0] : vector<8x256xf32> to vector<256xf32>
    %839 = vector.shape_cast %838 : vector<256xf32> to vector<1x256xf32>
    %840 = vector.extract_strided_slice %839 {offsets = [0, 0], sizes = [1, 32], strides = [1, 1]} : vector<1x256xf32> to vector<1x32xf32>
    %841 = vector.extract_strided_slice %839 {offsets = [0, 32], sizes = [1, 32], strides = [1, 1]} : vector<1x256xf32> to vector<1x32xf32>
    %842 = arith.addf %840, %841 : vector<1x32xf32>
    %843 = vector.extract_strided_slice %839 {offsets = [0, 64], sizes = [1, 32], strides = [1, 1]} : vector<1x256xf32> to vector<1x32xf32>
    %844 = arith.addf %842, %843 : vector<1x32xf32>
    %845 = vector.extract_strided_slice %839 {offsets = [0, 96], sizes = [1, 32], strides = [1, 1]} : vector<1x256xf32> to vector<1x32xf32>
    %846 = arith.addf %844, %845 : vector<1x32xf32>
    %847 = vector.extract_strided_slice %839 {offsets = [0, 128], sizes = [1, 32], strides = [1, 1]} : vector<1x256xf32> to vector<1x32xf32>
    %848 = arith.addf %846, %847 : vector<1x32xf32>
    %849 = vector.extract_strided_slice %839 {offsets = [0, 160], sizes = [1, 32], strides = [1, 1]} : vector<1x256xf32> to vector<1x32xf32>
    %850 = arith.addf %848, %849 : vector<1x32xf32>
    %851 = vector.extract_strided_slice %839 {offsets = [0, 192], sizes = [1, 32], strides = [1, 1]} : vector<1x256xf32> to vector<1x32xf32>
    %852 = arith.addf %850, %851 : vector<1x32xf32>
    %853 = vector.extract_strided_slice %839 {offsets = [0, 224], sizes = [1, 32], strides = [1, 1]} : vector<1x256xf32> to vector<1x32xf32>
    %854 = arith.addf %852, %853 : vector<1x32xf32>
    %cst_259 = arith.constant 1.562500e-02 : f32
    %855 = vector.broadcast %cst_259 : f32 to vector<1x32xf32>
    %856 = arith.mulf %854, %855 : vector<1x32xf32>
    %857 = arith.mulf %856, %237 : vector<1x32xf32>
    %cst_260 = arith.constant dense<0.000000e+00> : vector<1xf32>
    %858 = vector.multi_reduction <add>, %857, %cst_260 [1] : vector<1x32xf32> to vector<1xf32>
    %859 = vector.shape_cast %858 : vector<1xf32> to vector<1x1xf32>
    %860 = vector.broadcast %241 : f32 to vector<1x1xf32>
    %861 = arith.addf %859, %860 : vector<1x1xf32>
    %cst_261 = arith.constant 0.000000e+00 : f32
    %862 = vector.broadcast %cst_261 : f32 to vector<1x1xf32>
    %863 = arith.maximumf %861, %862 : vector<1x1xf32>
    %864 = vector.broadcast %863 : vector<1x1xf32> to vector<1x32xf32>
    %865 = arith.mulf %864, %239 : vector<1x32xf32>
    %866 = arith.addf %236, %865 : vector<1x32xf32>
    %867 = arith.mulf %856, %238 : vector<1x32xf32>
    %cst_262 = arith.constant dense<0.000000e+00> : vector<1xf32>
    %868 = vector.multi_reduction <add>, %867, %cst_262 [1] : vector<1x32xf32> to vector<1xf32>
    %869 = vector.shape_cast %868 : vector<1xf32> to vector<1x1xf32>
    %870 = vector.broadcast %242 : f32 to vector<1x1xf32>
    %871 = arith.addf %869, %870 : vector<1x1xf32>
    %cst_263 = arith.constant 0.000000e+00 : f32
    %872 = vector.broadcast %cst_263 : f32 to vector<1x1xf32>
    %873 = arith.maximumf %871, %872 : vector<1x1xf32>
    %874 = vector.broadcast %873 : vector<1x1xf32> to vector<1x32xf32>
    %875 = arith.mulf %874, %240 : vector<1x32xf32>
    %876 = arith.addf %866, %875 : vector<1x32xf32>
    %877 = arith.negf %876 : vector<1x32xf32>
    %878 = math.exp %877 : vector<1x32xf32>
    %cst_264 = arith.constant 1.000000e+00 : f32
    %879 = vector.broadcast %cst_264 : f32 to vector<1x32xf32>
    %880 = arith.addf %879, %878 : vector<1x32xf32>
    %881 = arith.divf %879, %880 : vector<1x32xf32>
    %882 = tpu.concatenate %881, %881, %881, %881, %881, %881, %881, %881 in 1 : vector<1x32xf32>, vector<1x32xf32>, vector<1x32xf32>, vector<1x32xf32>, vector<1x32xf32>, vector<1x32xf32>, vector<1x32xf32>, vector<1x32xf32> -> vector<1x256xf32>
    %883 = vector.broadcast %882 : vector<1x256xf32> to vector<8x256xf32>
    %884 = arith.mulf %837, %883 : vector<8x256xf32>
    %c11_265 = arith.constant 11 : index
    %c0_266 = arith.constant 0 : index
    %c0_267 = arith.constant 0 : index
    %885 = vector.load %arg1[%c11_265, %c0_266, %c0_267] : memref<16x8x256xf32, #tpu.memory_space<vmem>>, vector<1x8x256xf32>
    %886 = vector.shape_cast %885 : vector<1x8x256xf32> to vector<8x256xf32>
    %887 = arith.addf %884, %886 : vector<8x256xf32>
    %c11_268 = arith.constant 11 : index
    %c0_269 = arith.constant 0 : index
    %c0_270 = arith.constant 0 : index
    %888 = vector.load %arg12[%c11_268, %c0_269, %c0_270] : memref<16x8x256xf32, #tpu.memory_space<vmem>>, vector<1x8x256xf32>
    %889 = vector.shape_cast %888 : vector<1x8x256xf32> to vector<8x256xf32>
    %890 = vector.shape_cast %887 : vector<8x256xf32> to vector<1x8x256xf32>
    tpu.vector_store %arg12[%c11_268, %c0_269, %c0_270], %890 {strides = array<i32>} : memref<16x8x256xf32, #tpu.memory_space<vmem>>, vector<1x8x256xf32>,
    %891 = vector.extract_strided_slice %235 {offsets = [120, 0], sizes = [8, 256], strides = [1, 1]} : vector<160x256xf32> to vector<8x256xf32>
    %cst_271 = arith.constant dense<0.000000e+00> : vector<256xf32>
    %892 = vector.multi_reduction <add>, %891, %cst_271 [0] : vector<8x256xf32> to vector<256xf32>
    %893 = vector.shape_cast %892 : vector<256xf32> to vector<1x256xf32>
    %894 = vector.extract_strided_slice %893 {offsets = [0, 0], sizes = [1, 32], strides = [1, 1]} : vector<1x256xf32> to vector<1x32xf32>
    %895 = vector.extract_strided_slice %893 {offsets = [0, 32], sizes = [1, 32], strides = [1, 1]} : vector<1x256xf32> to vector<1x32xf32>
    %896 = arith.addf %894, %895 : vector<1x32xf32>
    %897 = vector.extract_strided_slice %893 {offsets = [0, 64], sizes = [1, 32], strides = [1, 1]} : vector<1x256xf32> to vector<1x32xf32>
    %898 = arith.addf %896, %897 : vector<1x32xf32>
    %899 = vector.extract_strided_slice %893 {offsets = [0, 96], sizes = [1, 32], strides = [1, 1]} : vector<1x256xf32> to vector<1x32xf32>
    %900 = arith.addf %898, %899 : vector<1x32xf32>
    %901 = vector.extract_strided_slice %893 {offsets = [0, 128], sizes = [1, 32], strides = [1, 1]} : vector<1x256xf32> to vector<1x32xf32>
    %902 = arith.addf %900, %901 : vector<1x32xf32>
    %903 = vector.extract_strided_slice %893 {offsets = [0, 160], sizes = [1, 32], strides = [1, 1]} : vector<1x256xf32> to vector<1x32xf32>
    %904 = arith.addf %902, %903 : vector<1x32xf32>
    %905 = vector.extract_strided_slice %893 {offsets = [0, 192], sizes = [1, 32], strides = [1, 1]} : vector<1x256xf32> to vector<1x32xf32>
    %906 = arith.addf %904, %905 : vector<1x32xf32>
    %907 = vector.extract_strided_slice %893 {offsets = [0, 224], sizes = [1, 32], strides = [1, 1]} : vector<1x256xf32> to vector<1x32xf32>
    %908 = arith.addf %906, %907 : vector<1x32xf32>
    %cst_272 = arith.constant 1.562500e-02 : f32
    %909 = vector.broadcast %cst_272 : f32 to vector<1x32xf32>
    %910 = arith.mulf %908, %909 : vector<1x32xf32>
    %911 = arith.mulf %910, %237 : vector<1x32xf32>
    %cst_273 = arith.constant dense<0.000000e+00> : vector<1xf32>
    %912 = vector.multi_reduction <add>, %911, %cst_273 [1] : vector<1x32xf32> to vector<1xf32>
    %913 = vector.shape_cast %912 : vector<1xf32> to vector<1x1xf32>
    %914 = vector.broadcast %241 : f32 to vector<1x1xf32>
    %915 = arith.addf %913, %914 : vector<1x1xf32>
    %cst_274 = arith.constant 0.000000e+00 : f32
    %916 = vector.broadcast %cst_274 : f32 to vector<1x1xf32>
    %917 = arith.maximumf %915, %916 : vector<1x1xf32>
    %918 = vector.broadcast %917 : vector<1x1xf32> to vector<1x32xf32>
    %919 = arith.mulf %918, %239 : vector<1x32xf32>
    %920 = arith.addf %236, %919 : vector<1x32xf32>
    %921 = arith.mulf %910, %238 : vector<1x32xf32>
    %cst_275 = arith.constant dense<0.000000e+00> : vector<1xf32>
    %922 = vector.multi_reduction <add>, %921, %cst_275 [1] : vector<1x32xf32> to vector<1xf32>
    %923 = vector.shape_cast %922 : vector<1xf32> to vector<1x1xf32>
    %924 = vector.broadcast %242 : f32 to vector<1x1xf32>
    %925 = arith.addf %923, %924 : vector<1x1xf32>
    %cst_276 = arith.constant 0.000000e+00 : f32
    %926 = vector.broadcast %cst_276 : f32 to vector<1x1xf32>
    %927 = arith.maximumf %925, %926 : vector<1x1xf32>
    %928 = vector.broadcast %927 : vector<1x1xf32> to vector<1x32xf32>
    %929 = arith.mulf %928, %240 : vector<1x32xf32>
    %930 = arith.addf %920, %929 : vector<1x32xf32>
    %931 = arith.negf %930 : vector<1x32xf32>
    %932 = math.exp %931 : vector<1x32xf32>
    %cst_277 = arith.constant 1.000000e+00 : f32
    %933 = vector.broadcast %cst_277 : f32 to vector<1x32xf32>
    %934 = arith.addf %933, %932 : vector<1x32xf32>
    %935 = arith.divf %933, %934 : vector<1x32xf32>
    %936 = tpu.concatenate %935, %935, %935, %935, %935, %935, %935, %935 in 1 : vector<1x32xf32>, vector<1x32xf32>, vector<1x32xf32>, vector<1x32xf32>, vector<1x32xf32>, vector<1x32xf32>, vector<1x32xf32>, vector<1x32xf32> -> vector<1x256xf32>
    %937 = vector.broadcast %936 : vector<1x256xf32> to vector<8x256xf32>
    %938 = arith.mulf %891, %937 : vector<8x256xf32>
    %c12 = arith.constant 12 : index
    %c0_278 = arith.constant 0 : index
    %c0_279 = arith.constant 0 : index
    %939 = vector.load %arg1[%c12, %c0_278, %c0_279] : memref<16x8x256xf32, #tpu.memory_space<vmem>>, vector<1x8x256xf32>
    %940 = vector.shape_cast %939 : vector<1x8x256xf32> to vector<8x256xf32>
    %941 = arith.addf %938, %940 : vector<8x256xf32>
    %c12_280 = arith.constant 12 : index
    %c0_281 = arith.constant 0 : index
    %c0_282 = arith.constant 0 : index
    %942 = vector.load %arg12[%c12_280, %c0_281, %c0_282] : memref<16x8x256xf32, #tpu.memory_space<vmem>>, vector<1x8x256xf32>
    %943 = vector.shape_cast %942 : vector<1x8x256xf32> to vector<8x256xf32>
    %944 = vector.shape_cast %941 : vector<8x256xf32> to vector<1x8x256xf32>
    tpu.vector_store %arg12[%c12_280, %c0_281, %c0_282], %944 {strides = array<i32>} : memref<16x8x256xf32, #tpu.memory_space<vmem>>, vector<1x8x256xf32>,
    %945 = vector.extract_strided_slice %235 {offsets = [130, 0], sizes = [8, 256], strides = [1, 1]} : vector<160x256xf32> to vector<8x256xf32>
    %cst_283 = arith.constant dense<0.000000e+00> : vector<256xf32>
    %946 = vector.multi_reduction <add>, %945, %cst_283 [0] : vector<8x256xf32> to vector<256xf32>
    %947 = vector.shape_cast %946 : vector<256xf32> to vector<1x256xf32>
    %948 = vector.extract_strided_slice %947 {offsets = [0, 0], sizes = [1, 32], strides = [1, 1]} : vector<1x256xf32> to vector<1x32xf32>
    %949 = vector.extract_strided_slice %947 {offsets = [0, 32], sizes = [1, 32], strides = [1, 1]} : vector<1x256xf32> to vector<1x32xf32>
    %950 = arith.addf %948, %949 : vector<1x32xf32>
    %951 = vector.extract_strided_slice %947 {offsets = [0, 64], sizes = [1, 32], strides = [1, 1]} : vector<1x256xf32> to vector<1x32xf32>
    %952 = arith.addf %950, %951 : vector<1x32xf32>
    %953 = vector.extract_strided_slice %947 {offsets = [0, 96], sizes = [1, 32], strides = [1, 1]} : vector<1x256xf32> to vector<1x32xf32>
    %954 = arith.addf %952, %953 : vector<1x32xf32>
    %955 = vector.extract_strided_slice %947 {offsets = [0, 128], sizes = [1, 32], strides = [1, 1]} : vector<1x256xf32> to vector<1x32xf32>
    %956 = arith.addf %954, %955 : vector<1x32xf32>
    %957 = vector.extract_strided_slice %947 {offsets = [0, 160], sizes = [1, 32], strides = [1, 1]} : vector<1x256xf32> to vector<1x32xf32>
    %958 = arith.addf %956, %957 : vector<1x32xf32>
    %959 = vector.extract_strided_slice %947 {offsets = [0, 192], sizes = [1, 32], strides = [1, 1]} : vector<1x256xf32> to vector<1x32xf32>
    %960 = arith.addf %958, %959 : vector<1x32xf32>
    %961 = vector.extract_strided_slice %947 {offsets = [0, 224], sizes = [1, 32], strides = [1, 1]} : vector<1x256xf32> to vector<1x32xf32>
    %962 = arith.addf %960, %961 : vector<1x32xf32>
    %cst_284 = arith.constant 1.562500e-02 : f32
    %963 = vector.broadcast %cst_284 : f32 to vector<1x32xf32>
    %964 = arith.mulf %962, %963 : vector<1x32xf32>
    %965 = arith.mulf %964, %237 : vector<1x32xf32>
    %cst_285 = arith.constant dense<0.000000e+00> : vector<1xf32>
    %966 = vector.multi_reduction <add>, %965, %cst_285 [1] : vector<1x32xf32> to vector<1xf32>
    %967 = vector.shape_cast %966 : vector<1xf32> to vector<1x1xf32>
    %968 = vector.broadcast %241 : f32 to vector<1x1xf32>
    %969 = arith.addf %967, %968 : vector<1x1xf32>
    %cst_286 = arith.constant 0.000000e+00 : f32
    %970 = vector.broadcast %cst_286 : f32 to vector<1x1xf32>
    %971 = arith.maximumf %969, %970 : vector<1x1xf32>
    %972 = vector.broadcast %971 : vector<1x1xf32> to vector<1x32xf32>
    %973 = arith.mulf %972, %239 : vector<1x32xf32>
    %974 = arith.addf %236, %973 : vector<1x32xf32>
    %975 = arith.mulf %964, %238 : vector<1x32xf32>
    %cst_287 = arith.constant dense<0.000000e+00> : vector<1xf32>
    %976 = vector.multi_reduction <add>, %975, %cst_287 [1] : vector<1x32xf32> to vector<1xf32>
    %977 = vector.shape_cast %976 : vector<1xf32> to vector<1x1xf32>
    %978 = vector.broadcast %242 : f32 to vector<1x1xf32>
    %979 = arith.addf %977, %978 : vector<1x1xf32>
    %cst_288 = arith.constant 0.000000e+00 : f32
    %980 = vector.broadcast %cst_288 : f32 to vector<1x1xf32>
    %981 = arith.maximumf %979, %980 : vector<1x1xf32>
    %982 = vector.broadcast %981 : vector<1x1xf32> to vector<1x32xf32>
    %983 = arith.mulf %982, %240 : vector<1x32xf32>
    %984 = arith.addf %974, %983 : vector<1x32xf32>
    %985 = arith.negf %984 : vector<1x32xf32>
    %986 = math.exp %985 : vector<1x32xf32>
    %cst_289 = arith.constant 1.000000e+00 : f32
    %987 = vector.broadcast %cst_289 : f32 to vector<1x32xf32>
    %988 = arith.addf %987, %986 : vector<1x32xf32>
    %989 = arith.divf %987, %988 : vector<1x32xf32>
    %990 = tpu.concatenate %989, %989, %989, %989, %989, %989, %989, %989 in 1 : vector<1x32xf32>, vector<1x32xf32>, vector<1x32xf32>, vector<1x32xf32>, vector<1x32xf32>, vector<1x32xf32>, vector<1x32xf32>, vector<1x32xf32> -> vector<1x256xf32>
    %991 = vector.broadcast %990 : vector<1x256xf32> to vector<8x256xf32>
    %992 = arith.mulf %945, %991 : vector<8x256xf32>
    %c13 = arith.constant 13 : index
    %c0_290 = arith.constant 0 : index
    %c0_291 = arith.constant 0 : index
    %993 = vector.load %arg1[%c13, %c0_290, %c0_291] : memref<16x8x256xf32, #tpu.memory_space<vmem>>, vector<1x8x256xf32>
    %994 = vector.shape_cast %993 : vector<1x8x256xf32> to vector<8x256xf32>
    %995 = arith.addf %992, %994 : vector<8x256xf32>
    %c13_292 = arith.constant 13 : index
    %c0_293 = arith.constant 0 : index
    %c0_294 = arith.constant 0 : index
    %996 = vector.load %arg12[%c13_292, %c0_293, %c0_294] : memref<16x8x256xf32, #tpu.memory_space<vmem>>, vector<1x8x256xf32>
    %997 = vector.shape_cast %996 : vector<1x8x256xf32> to vector<8x256xf32>
    %998 = vector.shape_cast %995 : vector<8x256xf32> to vector<1x8x256xf32>
    tpu.vector_store %arg12[%c13_292, %c0_293, %c0_294], %998 {strides = array<i32>} : memref<16x8x256xf32, #tpu.memory_space<vmem>>, vector<1x8x256xf32>,
    %999 = vector.extract_strided_slice %235 {offsets = [140, 0], sizes = [8, 256], strides = [1, 1]} : vector<160x256xf32> to vector<8x256xf32>
    %cst_295 = arith.constant dense<0.000000e+00> : vector<256xf32>
    %1000 = vector.multi_reduction <add>, %999, %cst_295 [0] : vector<8x256xf32> to vector<256xf32>
    %1001 = vector.shape_cast %1000 : vector<256xf32> to vector<1x256xf32>
    %1002 = vector.extract_strided_slice %1001 {offsets = [0, 0], sizes = [1, 32], strides = [1, 1]} : vector<1x256xf32> to vector<1x32xf32>
    %1003 = vector.extract_strided_slice %1001 {offsets = [0, 32], sizes = [1, 32], strides = [1, 1]} : vector<1x256xf32> to vector<1x32xf32>
    %1004 = arith.addf %1002, %1003 : vector<1x32xf32>
    %1005 = vector.extract_strided_slice %1001 {offsets = [0, 64], sizes = [1, 32], strides = [1, 1]} : vector<1x256xf32> to vector<1x32xf32>
    %1006 = arith.addf %1004, %1005 : vector<1x32xf32>
    %1007 = vector.extract_strided_slice %1001 {offsets = [0, 96], sizes = [1, 32], strides = [1, 1]} : vector<1x256xf32> to vector<1x32xf32>
    %1008 = arith.addf %1006, %1007 : vector<1x32xf32>
    %1009 = vector.extract_strided_slice %1001 {offsets = [0, 128], sizes = [1, 32], strides = [1, 1]} : vector<1x256xf32> to vector<1x32xf32>
    %1010 = arith.addf %1008, %1009 : vector<1x32xf32>
    %1011 = vector.extract_strided_slice %1001 {offsets = [0, 160], sizes = [1, 32], strides = [1, 1]} : vector<1x256xf32> to vector<1x32xf32>
    %1012 = arith.addf %1010, %1011 : vector<1x32xf32>
    %1013 = vector.extract_strided_slice %1001 {offsets = [0, 192], sizes = [1, 32], strides = [1, 1]} : vector<1x256xf32> to vector<1x32xf32>
    %1014 = arith.addf %1012, %1013 : vector<1x32xf32>
    %1015 = vector.extract_strided_slice %1001 {offsets = [0, 224], sizes = [1, 32], strides = [1, 1]} : vector<1x256xf32> to vector<1x32xf32>
    %1016 = arith.addf %1014, %1015 : vector<1x32xf32>
    %cst_296 = arith.constant 1.562500e-02 : f32
    %1017 = vector.broadcast %cst_296 : f32 to vector<1x32xf32>
    %1018 = arith.mulf %1016, %1017 : vector<1x32xf32>
    %1019 = arith.mulf %1018, %237 : vector<1x32xf32>
    %cst_297 = arith.constant dense<0.000000e+00> : vector<1xf32>
    %1020 = vector.multi_reduction <add>, %1019, %cst_297 [1] : vector<1x32xf32> to vector<1xf32>
    %1021 = vector.shape_cast %1020 : vector<1xf32> to vector<1x1xf32>
    %1022 = vector.broadcast %241 : f32 to vector<1x1xf32>
    %1023 = arith.addf %1021, %1022 : vector<1x1xf32>
    %cst_298 = arith.constant 0.000000e+00 : f32
    %1024 = vector.broadcast %cst_298 : f32 to vector<1x1xf32>
    %1025 = arith.maximumf %1023, %1024 : vector<1x1xf32>
    %1026 = vector.broadcast %1025 : vector<1x1xf32> to vector<1x32xf32>
    %1027 = arith.mulf %1026, %239 : vector<1x32xf32>
    %1028 = arith.addf %236, %1027 : vector<1x32xf32>
    %1029 = arith.mulf %1018, %238 : vector<1x32xf32>
    %cst_299 = arith.constant dense<0.000000e+00> : vector<1xf32>
    %1030 = vector.multi_reduction <add>, %1029, %cst_299 [1] : vector<1x32xf32> to vector<1xf32>
    %1031 = vector.shape_cast %1030 : vector<1xf32> to vector<1x1xf32>
    %1032 = vector.broadcast %242 : f32 to vector<1x1xf32>
    %1033 = arith.addf %1031, %1032 : vector<1x1xf32>
    %cst_300 = arith.constant 0.000000e+00 : f32
    %1034 = vector.broadcast %cst_300 : f32 to vector<1x1xf32>
    %1035 = arith.maximumf %1033, %1034 : vector<1x1xf32>
    %1036 = vector.broadcast %1035 : vector<1x1xf32> to vector<1x32xf32>
    %1037 = arith.mulf %1036, %240 : vector<1x32xf32>
    %1038 = arith.addf %1028, %1037 : vector<1x32xf32>
    %1039 = arith.negf %1038 : vector<1x32xf32>
    %1040 = math.exp %1039 : vector<1x32xf32>
    %cst_301 = arith.constant 1.000000e+00 : f32
    %1041 = vector.broadcast %cst_301 : f32 to vector<1x32xf32>
    %1042 = arith.addf %1041, %1040 : vector<1x32xf32>
    %1043 = arith.divf %1041, %1042 : vector<1x32xf32>
    %1044 = tpu.concatenate %1043, %1043, %1043, %1043, %1043, %1043, %1043, %1043 in 1 : vector<1x32xf32>, vector<1x32xf32>, vector<1x32xf32>, vector<1x32xf32>, vector<1x32xf32>, vector<1x32xf32>, vector<1x32xf32>, vector<1x32xf32> -> vector<1x256xf32>
    %1045 = vector.broadcast %1044 : vector<1x256xf32> to vector<8x256xf32>
    %1046 = arith.mulf %999, %1045 : vector<8x256xf32>
    %c14 = arith.constant 14 : index
    %c0_302 = arith.constant 0 : index
    %c0_303 = arith.constant 0 : index
    %1047 = vector.load %arg1[%c14, %c0_302, %c0_303] : memref<16x8x256xf32, #tpu.memory_space<vmem>>, vector<1x8x256xf32>
    %1048 = vector.shape_cast %1047 : vector<1x8x256xf32> to vector<8x256xf32>
    %1049 = arith.addf %1046, %1048 : vector<8x256xf32>
    %c14_304 = arith.constant 14 : index
    %c0_305 = arith.constant 0 : index
    %c0_306 = arith.constant 0 : index
    %1050 = vector.load %arg12[%c14_304, %c0_305, %c0_306] : memref<16x8x256xf32, #tpu.memory_space<vmem>>, vector<1x8x256xf32>
    %1051 = vector.shape_cast %1050 : vector<1x8x256xf32> to vector<8x256xf32>
    %1052 = vector.shape_cast %1049 : vector<8x256xf32> to vector<1x8x256xf32>
    tpu.vector_store %arg12[%c14_304, %c0_305, %c0_306], %1052 {strides = array<i32>} : memref<16x8x256xf32, #tpu.memory_space<vmem>>, vector<1x8x256xf32>,
    %1053 = vector.extract_strided_slice %235 {offsets = [150, 0], sizes = [8, 256], strides = [1, 1]} : vector<160x256xf32> to vector<8x256xf32>
    %cst_307 = arith.constant dense<0.000000e+00> : vector<256xf32>
    %1054 = vector.multi_reduction <add>, %1053, %cst_307 [0] : vector<8x256xf32> to vector<256xf32>
    %1055 = vector.shape_cast %1054 : vector<256xf32> to vector<1x256xf32>
    %1056 = vector.extract_strided_slice %1055 {offsets = [0, 0], sizes = [1, 32], strides = [1, 1]} : vector<1x256xf32> to vector<1x32xf32>
    %1057 = vector.extract_strided_slice %1055 {offsets = [0, 32], sizes = [1, 32], strides = [1, 1]} : vector<1x256xf32> to vector<1x32xf32>
    %1058 = arith.addf %1056, %1057 : vector<1x32xf32>
    %1059 = vector.extract_strided_slice %1055 {offsets = [0, 64], sizes = [1, 32], strides = [1, 1]} : vector<1x256xf32> to vector<1x32xf32>
    %1060 = arith.addf %1058, %1059 : vector<1x32xf32>
    %1061 = vector.extract_strided_slice %1055 {offsets = [0, 96], sizes = [1, 32], strides = [1, 1]} : vector<1x256xf32> to vector<1x32xf32>
    %1062 = arith.addf %1060, %1061 : vector<1x32xf32>
    %1063 = vector.extract_strided_slice %1055 {offsets = [0, 128], sizes = [1, 32], strides = [1, 1]} : vector<1x256xf32> to vector<1x32xf32>
    %1064 = arith.addf %1062, %1063 : vector<1x32xf32>
    %1065 = vector.extract_strided_slice %1055 {offsets = [0, 160], sizes = [1, 32], strides = [1, 1]} : vector<1x256xf32> to vector<1x32xf32>
    %1066 = arith.addf %1064, %1065 : vector<1x32xf32>
    %1067 = vector.extract_strided_slice %1055 {offsets = [0, 192], sizes = [1, 32], strides = [1, 1]} : vector<1x256xf32> to vector<1x32xf32>
    %1068 = arith.addf %1066, %1067 : vector<1x32xf32>
    %1069 = vector.extract_strided_slice %1055 {offsets = [0, 224], sizes = [1, 32], strides = [1, 1]} : vector<1x256xf32> to vector<1x32xf32>
    %1070 = arith.addf %1068, %1069 : vector<1x32xf32>
    %cst_308 = arith.constant 1.562500e-02 : f32
    %1071 = vector.broadcast %cst_308 : f32 to vector<1x32xf32>
    %1072 = arith.mulf %1070, %1071 : vector<1x32xf32>
    %1073 = arith.mulf %1072, %237 : vector<1x32xf32>
    %cst_309 = arith.constant dense<0.000000e+00> : vector<1xf32>
    %1074 = vector.multi_reduction <add>, %1073, %cst_309 [1] : vector<1x32xf32> to vector<1xf32>
    %1075 = vector.shape_cast %1074 : vector<1xf32> to vector<1x1xf32>
    %1076 = vector.broadcast %241 : f32 to vector<1x1xf32>
    %1077 = arith.addf %1075, %1076 : vector<1x1xf32>
    %cst_310 = arith.constant 0.000000e+00 : f32
    %1078 = vector.broadcast %cst_310 : f32 to vector<1x1xf32>
    %1079 = arith.maximumf %1077, %1078 : vector<1x1xf32>
    %1080 = vector.broadcast %1079 : vector<1x1xf32> to vector<1x32xf32>
    %1081 = arith.mulf %1080, %239 : vector<1x32xf32>
    %1082 = arith.addf %236, %1081 : vector<1x32xf32>
    %1083 = arith.mulf %1072, %238 : vector<1x32xf32>
    %cst_311 = arith.constant dense<0.000000e+00> : vector<1xf32>
    %1084 = vector.multi_reduction <add>, %1083, %cst_311 [1] : vector<1x32xf32> to vector<1xf32>
    %1085 = vector.shape_cast %1084 : vector<1xf32> to vector<1x1xf32>
    %1086 = vector.broadcast %242 : f32 to vector<1x1xf32>
    %1087 = arith.addf %1085, %1086 : vector<1x1xf32>
    %cst_312 = arith.constant 0.000000e+00 : f32
    %1088 = vector.broadcast %cst_312 : f32 to vector<1x1xf32>
    %1089 = arith.maximumf %1087, %1088 : vector<1x1xf32>
    %1090 = vector.broadcast %1089 : vector<1x1xf32> to vector<1x32xf32>
    %1091 = arith.mulf %1090, %240 : vector<1x32xf32>
    %1092 = arith.addf %1082, %1091 : vector<1x32xf32>
    %1093 = arith.negf %1092 : vector<1x32xf32>
    %1094 = math.exp %1093 : vector<1x32xf32>
    %cst_313 = arith.constant 1.000000e+00 : f32
    %1095 = vector.broadcast %cst_313 : f32 to vector<1x32xf32>
    %1096 = arith.addf %1095, %1094 : vector<1x32xf32>
    %1097 = arith.divf %1095, %1096 : vector<1x32xf32>
    %1098 = tpu.concatenate %1097, %1097, %1097, %1097, %1097, %1097, %1097, %1097 in 1 : vector<1x32xf32>, vector<1x32xf32>, vector<1x32xf32>, vector<1x32xf32>, vector<1x32xf32>, vector<1x32xf32>, vector<1x32xf32>, vector<1x32xf32> -> vector<1x256xf32>
    %1099 = vector.broadcast %1098 : vector<1x256xf32> to vector<8x256xf32>
    %1100 = arith.mulf %1053, %1099 : vector<8x256xf32>
    %c15 = arith.constant 15 : index
    %c0_314 = arith.constant 0 : index
    %c0_315 = arith.constant 0 : index
    %1101 = vector.load %arg1[%c15, %c0_314, %c0_315] : memref<16x8x256xf32, #tpu.memory_space<vmem>>, vector<1x8x256xf32>
    %1102 = vector.shape_cast %1101 : vector<1x8x256xf32> to vector<8x256xf32>
    %1103 = arith.addf %1100, %1102 : vector<8x256xf32>
    %c15_316 = arith.constant 15 : index
    %c0_317 = arith.constant 0 : index
    %c0_318 = arith.constant 0 : index
    %1104 = vector.load %arg12[%c15_316, %c0_317, %c0_318] : memref<16x8x256xf32, #tpu.memory_space<vmem>>, vector<1x8x256xf32>
    %1105 = vector.shape_cast %1104 : vector<1x8x256xf32> to vector<8x256xf32>
    %1106 = vector.shape_cast %1103 : vector<8x256xf32> to vector<1x8x256xf32>
    tpu.vector_store %arg12[%c15_316, %c0_317, %c0_318], %1106 {strides = array<i32>} : memref<16x8x256xf32, #tpu.memory_space<vmem>>, vector<1x8x256xf32>,
    return
  }
  func.func @transform_0(%arg0: i32) -> (i32, i32, i32) {
    %c0_i32 = arith.constant 0 : i32
    %c0_i32_0 = arith.constant 0 : i32
    %c0_i32_1 = arith.constant 0 : i32
    return %arg0, %c0_i32, %c0_i32_0 : i32, i32, i32
  }
  func.func @transform_1(%arg0: i32) -> (i32, i32) {
    %c0_i32 = arith.constant 0 : i32
    %c0_i32_0 = arith.constant 0 : i32
    %c0_i32_1 = arith.constant 0 : i32
    return %c0_i32, %c0_i32_0 : i32, i32
  }
  func.func @transform_2(%arg0: i32) -> (i32, i32) {
    %c0_i32 = arith.constant 0 : i32
    %c0_i32_0 = arith.constant 0 : i32
    %c0_i32_1 = arith.constant 0 : i32
    return %c0_i32, %c0_i32_0 : i32, i32
  }
  func.func @transform_3(%arg0: i32) -> (i32, i32, i32) {
    %c0_i32 = arith.constant 0 : i32
    %c0_i32_0 = arith.constant 0 : i32
    %c0_i32_1 = arith.constant 0 : i32
    %c0_i32_2 = arith.constant 0 : i32
    return %c0_i32, %c0_i32_0, %c0_i32_1 : i32, i32, i32
  }
  func.func @transform_4(%arg0: i32) -> (i32, i32) {
    %c0_i32 = arith.constant 0 : i32
    %c0_i32_0 = arith.constant 0 : i32
    %c0_i32_1 = arith.constant 0 : i32
    return %c0_i32, %c0_i32_0 : i32, i32
  }
  func.func @transform_5(%arg0: i32) -> (i32, i32) {
    %c0_i32 = arith.constant 0 : i32
    %c0_i32_0 = arith.constant 0 : i32
    %c0_i32_1 = arith.constant 0 : i32
    return %c0_i32, %c0_i32_0 : i32, i32
  }
  func.func @transform_6(%arg0: i32) -> (i32, i32, i32) {
    %c0_i32 = arith.constant 0 : i32
    %c0_i32_0 = arith.constant 0 : i32
    %c0_i32_1 = arith.constant 0 : i32
    %c0_i32_2 = arith.constant 0 : i32
    return %c0_i32, %c0_i32_0, %c0_i32_1 : i32, i32, i32
  }
  func.func @transform_7(%arg0: i32) -> (i32, i32) {
    %c0_i32 = arith.constant 0 : i32
    %c0_i32_0 = arith.constant 0 : i32
    %c0_i32_1 = arith.constant 0 : i32
    return %c0_i32, %c0_i32_0 : i32, i32
  }
  func.func @transform_8(%arg0: i32) -> i32 {
    %c0_i32 = arith.constant 0 : i32
    %c0_i32_0 = arith.constant 0 : i32
    return %c0_i32 : i32
  }
  func.func @transform_9(%arg0: i32) -> (i32, i32) {
    %c0_i32 = arith.constant 0 : i32
    %c0_i32_0 = arith.constant 0 : i32
    %c0_i32_1 = arith.constant 0 : i32
    return %c0_i32, %c0_i32_0 : i32, i32
  }
  func.func @transform_10(%arg0: i32) -> (i32, i32) {
    %c0_i32 = arith.constant 0 : i32
    %c0_i32_0 = arith.constant 0 : i32
    %c0_i32_1 = arith.constant 0 : i32
    return %c0_i32, %c0_i32_0 : i32, i32
  }
  func.func @transform_11(%arg0: i32) -> (i32, i32, i32) {
    %c0_i32 = arith.constant 0 : i32
    %c0_i32_0 = arith.constant 0 : i32
    %c0_i32_1 = arith.constant 0 : i32
    return %arg0, %c0_i32, %c0_i32_0 : i32, i32, i32
  }
}

</mosaic_0001>

<llo_original>
// kernel: tpu_custom_call.1
$region0: #{tpu_custom_call.1}
  #allocation0 [shape = 'u32[]', space=smem, size = 0x4, offset = 0x4, fixed_abs, tag = 'smem constant byte address 0x4 - core index']
  #allocation1 [shape = 'u32[144,128]{1,0:T(1,128)}', space=vmem, size = 0x12000, scoped, tag = 'internal scratch']
  #allocation2 [shape = 'bf16[168,512]{1,0:T(8,128)(2,1)}', space=vmem, size = 0x2a000, scoped, tag = 'scratch operand']
  %s0 = inlined_call_operand.hbm [shape: f32[32,8,256], index: 0, kind: input, shape index: {}]
  %s1 = inlined_call_operand.vmem [shape: f32[1,256], index: 1, kind: input, shape index: {}]
  %s2 = inlined_call_operand.vmem [shape: f32[1,256], index: 2, kind: input, shape index: {}]
  %s3 = inlined_call_operand.hbm [shape: bf16[3,512,256], index: 3, kind: input, shape index: {}]
  %s4 = inlined_call_operand.vmem [shape: f32[1,256], index: 4, kind: input, shape index: {}]
  %s5 = inlined_call_operand.vmem [shape: f32[1,256], index: 5, kind: input, shape index: {}]
  %s6 = inlined_call_operand.hbm [shape: bf16[3,512,256], index: 6, kind: input, shape index: {}]
  %s7 = inlined_call_operand.vmem [shape: f32[2,32], index: 7, kind: input, shape index: {}]
  %s8 = inlined_call_operand.vmem [shape: f32[2], index: 8, kind: input, shape index: {}]
  %s9 = inlined_call_operand.vmem [shape: f32[2,32], index: 9, kind: input, shape index: {}]
  %s10 = inlined_call_operand.vmem [shape: f32[1,32], index: 10, kind: input, shape index: {}]
  %s11 = inlined_call_operand.hbm [shape: f32[32,8,256], index: 11, kind: output, shape index: {}]
  %s12 = sld [smem:[#allocation0]]
  $region93: #{tpu_custom_call.1} parent=0
    _
  %s14 = ssub.s32 1, %s12
  %s15 = scalar_select 0, %s14, %s12
  $region1: #{tpu_custom_call.1} parent=0
    #allocation3 [shape = 'u8[262144]{0}', space=vmem, size = 0x40000, scoped, tag = 'input window, operand 0']
    #allocation4 [shape = 's32[2]{0}', space=sflag, size = 0x8, scoped, tag = 'scoped memory for tpu_custom_call.1']
    #allocation5 [shape = 's32[2]{0}', space=sflag, size = 0x8, scoped, tag = 'scoped memory for tpu_custom_call.1']
    #allocation6 [shape = 's32[2]{0}', space=sflag, size = 0x8, scoped, tag = 'scoped memory for tpu_custom_call.1']
    #allocation7 [shape = 'u8[786432]{0}', space=vmem, size = 0xc0000, scoped, tag = 'input window, operand 3, single buffered']
    #allocation8 [shape = 's32[1]{0}', space=sflag, size = 0x4, scoped, tag = 'scoped memory for tpu_custom_call.1']
    #allocation9 [shape = 'u8[786432]{0}', space=vmem, size = 0xc0000, scoped, tag = 'input window, operand 6, single buffered']
    #allocation10 [shape = 'u8[512]{0}', space=smem, size = 0x200, scoped, tag = 'input window, operand 8, single buffered']
    #allocation11 [shape = 'u8[262144]{0}', space=vmem, size = 0x40000, scoped, tag = 'output window, operand 0']
    %16 = vsyncpa [#allocation4], 0
    %s17 = scalar_lea.sflag [#allocation4], 1
    %18 = vsyncpa %s17, 0
    %19 = vsyncpa [#allocation8], 0
    %20 = vsyncpa [#allocation6], 0
    %21 = vsyncpa [#allocation5], 0
    %s22 = scalar_lea.sflag [#allocation5], 1
    %23 = vsyncpa %s22, 0
    loop: start=0, step=1, limit=4
    $region2: #{tpu_custom_call.1} parent=1 // loop_pre_header
      _
    $region3: #{tpu_custom_call.1} parent=1 // loop_header
      %s25 = sphi 0, %s29
      %p26 = scmp.ge.s32.totalorder %s25, 4
      %s35 = sphi 0, %s37
      %s38 = sphi 0, %s35
      %s39 = sphi 0, %s38
      %s55 = sphi 0, %s39
      %s59 = sphi 0, %s59
      %s61 = sphi 0, %s59
      %s62 = sphi 0, %s61
      %s76 = sphi 0, %s62
      %s80 = sphi 0, %s80
      %s82 = sphi 0, %s80
      %s83 = sphi 0, %s82
      %s97 = sphi 0, %s83
      %s101 = sphi 0, %s101
      %s103 = sphi 0, %s101
      %s104 = sphi 0, %s103
      %s118 = sphi 0, %s104
      %s122 = sphi 0, %s122
      %s124 = sphi 0, %s122
      %s125 = sphi 0, %s124
      %s139 = sphi 0, %s125
      %s143 = sphi 0, %s143
      %s145 = sphi 0, %s143
      %s146 = sphi 0, %s145
      %s160 = sphi 0, %s146
      %s164 = sphi 0, %s164
      %s166 = sphi 0, %s164
      %s167 = sphi 0, %s166
      %s181 = sphi 0, %s167
      %s185 = sphi 0, %s185
      %s187 = sphi 0, %s185
      %s188 = sphi 0, %s187
      %s202 = sphi 0, %s188
      %s206 = sphi 0, %s206
      %s208 = sphi 0, %s206
      %s209 = sphi 0, %s208
      %s223 = sphi 0, %s209
      %s227 = sphi 0, %s227
      %s229 = sphi 0, %s227
      %s230 = sphi 0, %s229
      %s244 = sphi 0, %s230
      %s248 = sphi 0, %s248
      %s250 = sphi 0, %s248
      %s251 = sphi 0, %s250
      %s265 = sphi 0, %s251
      %s271 = sphi 0, %s273
      %s274 = sphi 0, %s271
      %s275 = sphi 0, %s274
      %s291 = sphi 0, %s275
    $region4: #{tpu_custom_call.1} parent=1 // loop_header_branch
      %28 = sbr.rel (%p26) target = $region8
    $region5: #{tpu_custom_call.1} parent=1 // loop_body
      %s30 = ssub.s32 %s25, 1
      %s31 = ssub.s32 %s25, 2
      %s32 = sadd.s32 %s25, 1
      %s33 = ssub.s32 %s25, %s32
      %p34 = scmp.eq.s32.totalorder %s33, 0
      %s36 = sadd.s32 %s35, 1
      %s37 = scalar_select %p34, %s35, %s36
      %p40 = pneg %p34
      %p41 = scmp.eq.s32.totalorder %s25, 1
      %p42 = por %p40, %p41
      %p43 = scmp.ne.s32.totalorder %s35, %s38
      %p44 = scmp.eq.s32.totalorder %s25, 0
      %p45 = por %p43, %p44
      %p46 = scmp.ne.s32.totalorder %s35, %s38
      %p47 = scmp.eq.s32.totalorder %s30, 1
      %p48 = por %p46, %p47
      %p49 = scmp.ne.s32.totalorder %s38, %s39
      %p50 = scmp.eq.s32.totalorder %s30, 0
      %p51 = por %p49, %p50
      %p52 = scmp.ne.s32.totalorder %s38, %s39
      %p53 = scmp.eq.s32.totalorder %s31, 1
      %p54 = por %p52, %p53
      %p56 = scmp.ne.s32.totalorder %s39, %s55
      %p57 = scmp.eq.s32.totalorder %s31, 0
      %p58 = por %p56, %p57
      %s60 = sadd.s32 %s59, 1
      %p63 = scmp.eq.s32.totalorder %s25, 1
      %p64 = scmp.ne.s32.totalorder %s59, %s61
      %p65 = scmp.eq.s32.totalorder %s25, 0
      %p66 = por %p64, %p65
      %p67 = scmp.ne.s32.totalorder %s59, %s61
      %p68 = scmp.eq.s32.totalorder %s30, 1
      %p69 = por %p67, %p68
      %p70 = scmp.ne.s32.totalorder %s61, %s62
      %p71 = scmp.eq.s32.totalorder %s30, 0
      %p72 = por %p70, %p71
      %p73 = scmp.ne.s32.totalorder %s61, %s62
      %p74 = scmp.eq.s32.totalorder %s31, 1
      %p75 = por %p73, %p74
      %p77 = scmp.ne.s32.totalorder %s62, %s76
      %p78 = scmp.eq.s32.totalorder %s31, 0
      %p79 = por %p77, %p78
      %s81 = sadd.s32 %s80, 1
      %p84 = scmp.eq.s32.totalorder %s25, 1
      %p85 = scmp.ne.s32.totalorder %s80, %s82
      %p86 = scmp.eq.s32.totalorder %s25, 0
      %p87 = por %p85, %p86
      %p88 = scmp.ne.s32.totalorder %s80, %s82
      %p89 = scmp.eq.s32.totalorder %s30, 1
      %p90 = por %p88, %p89
      %p91 = scmp.ne.s32.totalorder %s82, %s83
      %p92 = scmp.eq.s32.totalorder %s30, 0
      %p93 = por %p91, %p92
      %p94 = scmp.ne.s32.totalorder %s82, %s83
      %p95 = scmp.eq.s32.totalorder %s31, 1
      %p96 = por %p94, %p95
      %p98 = scmp.ne.s32.totalorder %s83, %s97
      %p99 = scmp.eq.s32.totalorder %s31, 0
      %p100 = por %p98, %p99
      %s102 = sadd.s32 %s101, 1
      %p105 = scmp.eq.s32.totalorder %s25, 1
      %p106 = scmp.ne.s32.totalorder %s101, %s103
      %p107 = scmp.eq.s32.totalorder %s25, 0
      %p108 = por %p106, %p107
      %p109 = scmp.ne.s32.totalorder %s101, %s103
      %p110 = scmp.eq.s32.totalorder %s30, 1
      %p111 = por %p109, %p110
      %p112 = scmp.ne.s32.totalorder %s103, %s104
      %p113 = scmp.eq.s32.totalorder %s30, 0
      %p114 = por %p112, %p113
      %p115 = scmp.ne.s32.totalorder %s103, %s104
      %p116 = scmp.eq.s32.totalorder %s31, 1
      %p117 = por %p115, %p116
      %p119 = scmp.ne.s32.totalorder %s104, %s118
      %p120 = scmp.eq.s32.totalorder %s31, 0
      %p121 = por %p119, %p120
      %s123 = sadd.s32 %s122, 1
      %p126 = scmp.eq.s32.totalorder %s25, 1
      %p127 = scmp.ne.s32.totalorder %s122, %s124
      %p128 = scmp.eq.s32.totalorder %s25, 0
      %p129 = por %p127, %p128
      %p130 = scmp.ne.s32.totalorder %s122, %s124
      %p131 = scmp.eq.s32.totalorder %s30, 1
      %p132 = por %p130, %p131
      %p133 = scmp.ne.s32.totalorder %s124, %s125
      %p134 = scmp.eq.s32.totalorder %s30, 0
      %p135 = por %p133, %p134
      %p136 = scmp.ne.s32.totalorder %s124, %s125
      %p137 = scmp.eq.s32.totalorder %s31, 1
      %p138 = por %p136, %p137
      %p140 = scmp.ne.s32.totalorder %s125, %s139
      %p141 = scmp.eq.s32.totalorder %s31, 0
      %p142 = por %p140, %p141
      %s144 = sadd.s32 %s143, 1
      %p147 = scmp.eq.s32.totalorder %s25, 1
      %p148 = scmp.ne.s32.totalorder %s143, %s145
      %p149 = scmp.eq.s32.totalorder %s25, 0
      %p150 = por %p148, %p149
      %p151 = scmp.ne.s32.totalorder %s143, %s145
      %p152 = scmp.eq.s32.totalorder %s30, 1
      %p153 = por %p151, %p152
      %p154 = scmp.ne.s32.totalorder %s145, %s146
      %p155 = scmp.eq.s32.totalorder %s30, 0
      %p156 = por %p154, %p155
      %p157 = scmp.ne.s32.totalorder %s145, %s146
      %p158 = scmp.eq.s32.totalorder %s31, 1
      %p159 = por %p157, %p158
      %p161 = scmp.ne.s32.totalorder %s146, %s160
      %p162 = scmp.eq.s32.totalorder %s31, 0
      %p163 = por %p161, %p162
      %s165 = sadd.s32 %s164, 1
      %p168 = scmp.eq.s32.totalorder %s25, 1
      %p169 = scmp.ne.s32.totalorder %s164, %s166
      %p170 = scmp.eq.s32.totalorder %s25, 0
      %p171 = por %p169, %p170
      %p172 = scmp.ne.s32.totalorder %s164, %s166
      %p173 = scmp.eq.s32.totalorder %s30, 1
      %p174 = por %p172, %p173
      %p175 = scmp.ne.s32.totalorder %s166, %s167
      %p176 = scmp.eq.s32.totalorder %s30, 0
      %p177 = por %p175, %p176
      %p178 = scmp.ne.s32.totalorder %s166, %s167
      %p179 = scmp.eq.s32.totalorder %s31, 1
      %p180 = por %p178, %p179
      %p182 = scmp.ne.s32.totalorder %s167, %s181
      %p183 = scmp.eq.s32.totalorder %s31, 0
      %p184 = por %p182, %p183
      %s186 = sadd.s32 %s185, 1
      %p189 = scmp.eq.s32.totalorder %s25, 1
      %p190 = scmp.ne.s32.totalorder %s185, %s187
      %p191 = scmp.eq.s32.totalorder %s25, 0
      %p192 = por %p190, %p191
      %p193 = scmp.ne.s32.totalorder %s185, %s187
      %p194 = scmp.eq.s32.totalorder %s30, 1
      %p195 = por %p193, %p194
      %p196 = scmp.ne.s32.totalorder %s187, %s188
      %p197 = scmp.eq.s32.totalorder %s30, 0
      %p198 = por %p196, %p197
      %p199 = scmp.ne.s32.totalorder %s187, %s188
      %p200 = scmp.eq.s32.totalorder %s31, 1
      %p201 = por %p199, %p200
      %p203 = scmp.ne.s32.totalorder %s188, %s202
      %p204 = scmp.eq.s32.totalorder %s31, 0
      %p205 = por %p203, %p204
      %s207 = sadd.s32 %s206, 1
      %p210 = scmp.eq.s32.totalorder %s25, 1
      %p211 = scmp.ne.s32.totalorder %s206, %s208
      %p212 = scmp.eq.s32.totalorder %s25, 0
      %p213 = por %p211, %p212
      %p214 = scmp.ne.s32.totalorder %s206, %s208
      %p215 = scmp.eq.s32.totalorder %s30, 1
      %p216 = por %p214, %p215
      %p217 = scmp.ne.s32.totalorder %s208, %s209
      %p218 = scmp.eq.s32.totalorder %s30, 0
      %p219 = por %p217, %p218
      %p220 = scmp.ne.s32.totalorder %s208, %s209
      %p221 = scmp.eq.s32.totalorder %s31, 1
      %p222 = por %p220, %p221
      %p224 = scmp.ne.s32.totalorder %s209, %s223
      %p225 = scmp.eq.s32.totalorder %s31, 0
      %p226 = por %p224, %p225
      %s228 = sadd.s32 %s227, 1
      %p231 = scmp.eq.s32.totalorder %s25, 1
      %p232 = scmp.ne.s32.totalorder %s227, %s229
      %p233 = scmp.eq.s32.totalorder %s25, 0
      %p234 = por %p232, %p233
      %p235 = scmp.ne.s32.totalorder %s227, %s229
      %p236 = scmp.eq.s32.totalorder %s30, 1
      %p237 = por %p235, %p236
      %p238 = scmp.ne.s32.totalorder %s229, %s230
      %p239 = scmp.eq.s32.totalorder %s30, 0
      %p240 = por %p238, %p239
      %p241 = scmp.ne.s32.totalorder %s229, %s230
      %p242 = scmp.eq.s32.totalorder %s31, 1
      %p243 = por %p241, %p242
      %p245 = scmp.ne.s32.totalorder %s230, %s244
      %p246 = scmp.eq.s32.totalorder %s31, 0
      %p247 = por %p245, %p246
      %s249 = sadd.s32 %s248, 1
      %p252 = scmp.eq.s32.totalorder %s25, 1
      %p253 = scmp.ne.s32.totalorder %s248, %s250
      %p254 = scmp.eq.s32.totalorder %s25, 0
      %p255 = por %p253, %p254
      %p256 = scmp.ne.s32.totalorder %s248, %s250
      %p257 = scmp.eq.s32.totalorder %s30, 1
      %p258 = por %p256, %p257
      %p259 = scmp.ne.s32.totalorder %s250, %s251
      %p260 = scmp.eq.s32.totalorder %s30, 0
      %p261 = por %p259, %p260
      %p262 = scmp.ne.s32.totalorder %s250, %s251
      %p263 = scmp.eq.s32.totalorder %s31, 1
      %p264 = por %p262, %p263
      %p266 = scmp.ne.s32.totalorder %s251, %s265
      %p267 = scmp.eq.s32.totalorder %s31, 0
      %p268 = por %p266, %p267
      %s269 = ssub.s32 %s25, %s32
      %p270 = scmp.eq.s32.totalorder %s269, 0
      %s272 = sadd.s32 %s271, 1
      %s273 = scalar_select %p270, %s271, %s272
      %p276 = pneg %p270
      %p277 = scmp.eq.s32.totalorder %s25, 1
      %p278 = por %p276, %p277
      %p279 = scmp.ne.s32.totalorder %s271, %s274
      %p280 = scmp.eq.s32.totalorder %s25, 0
      %p281 = por %p279, %p280
      %p282 = scmp.ne.s32.totalorder %s271, %s274
      %p283 = scmp.eq.s32.totalorder %s30, 1
      %p284 = por %p282, %p283
      %p285 = scmp.ne.s32.totalorder %s274, %s275
      %p286 = scmp.eq.s32.totalorder %s30, 0
      %p287 = por %p285, %p286
      %p288 = scmp.ne.s32.totalorder %s274, %s275
      %p289 = scmp.eq.s32.totalorder %s31, 1
      %p290 = por %p288, %p289
      %p292 = scmp.ne.s32.totalorder %s275, %s291
      %p293 = scmp.eq.s32.totalorder %s31, 0
      %p294 = por %p292, %p293
      %p295 = scmp.le.s32.totalorder 1, %s25
      %p296 = scmp.lt.s32.totalorder %s25, 3
      %p297 = pnand %p295, %p296
      %p298 = pneg %p297
      // Predicated region
      $region9: #{tpu_custom_call.1} parent=5 // pred_check
        _
      $region10: #{tpu_custom_call.1} parent=5 // pred_check_branch
        %300 = sbr.rel (%p297) target = $region12
      $region11: #{tpu_custom_call.1} parent=5 // pred_region
        %s301 = ssub.s32 %s25, 1
        // Predicated region
        $region13: #{tpu_custom_call.1} parent=11 // pred_check
          %p302 = pneg %p72
        $region14: #{tpu_custom_call.1} parent=11 // pred_check_branch
          %304 = sbr.rel (%p302) target = $region16
        $region15: #{tpu_custom_call.1} parent=11 // pred_region
          _
        $region16: #{tpu_custom_call.1} parent=11 // pred_fallthru
          _
        // Predicated region
        $region17: #{tpu_custom_call.1} parent=11 // pred_check
          %p305 = pneg %p93
        $region18: #{tpu_custom_call.1} parent=11 // pred_check_branch
          %307 = sbr.rel (%p305) target = $region20
        $region19: #{tpu_custom_call.1} parent=11 // pred_region
          _
        $region20: #{tpu_custom_call.1} parent=11 // pred_fallthru
          _
        // Predicated region
        $region21: #{tpu_custom_call.1} parent=11 // pred_check
          %p308 = pneg %p114
        $region22: #{tpu_custom_call.1} parent=11 // pred_check_branch
          %310 = sbr.rel (%p308) target = $region24
        $region23: #{tpu_custom_call.1} parent=11 // pred_region
          %s312 = ssub.s32 24576, 24576
          %313 = vsyncadd [#allocation8], %s312
          %s314 = sshll.u32 [#allocation7], 4
          %s315 = int_to_ptr.vmem [resolvable:$true] %s314
          %320 = dma.hbm_to_vmem [thread:$0]  %s3, 24576, %s315, [#allocation8], 128, 128, 8
        $region24: #{tpu_custom_call.1} parent=11 // pred_fallthru
          _
        // Predicated region
        $region25: #{tpu_custom_call.1} parent=11 // pred_check
          %p321 = pneg %p135
        $region26: #{tpu_custom_call.1} parent=11 // pred_check_branch
          %323 = sbr.rel (%p321) target = $region28
        $region27: #{tpu_custom_call.1} parent=11 // pred_region
          _
        $region28: #{tpu_custom_call.1} parent=11 // pred_fallthru
          _
        // Predicated region
        $region29: #{tpu_custom_call.1} parent=11 // pred_check
          %p324 = pneg %p156
        $region30: #{tpu_custom_call.1} parent=11 // pred_check_branch
          %326 = sbr.rel (%p324) target = $region32
        $region31: #{tpu_custom_call.1} parent=11 // pred_region
          _
        $region32: #{tpu_custom_call.1} parent=11 // pred_fallthru
          _
        // Predicated region
        $region33: #{tpu_custom_call.1} parent=11 // pred_check
          %p327 = pneg %p177
        $region34: #{tpu_custom_call.1} parent=11 // pred_check_branch
          %329 = sbr.rel (%p327) target = $region36
        $region35: #{tpu_custom_call.1} parent=11 // pred_region
          %s331 = ssub.s32 24576, 24576
          %332 = vsyncadd [#allocation8], %s331
          %s333 = sshll.u32 [#allocation9], 4
          %s334 = int_to_ptr.vmem [resolvable:$true] %s333
          %339 = dma.hbm_to_vmem [thread:$0]  %s6, 24576, %s334, [#allocation8], 128, 128, 8
        $region36: #{tpu_custom_call.1} parent=11 // pred_fallthru
          _
        // Predicated region
        $region37: #{tpu_custom_call.1} parent=11 // pred_check
          %p340 = pneg %p198
        $region38: #{tpu_custom_call.1} parent=11 // pred_check_branch
          %342 = sbr.rel (%p340) target = $region40
        $region39: #{tpu_custom_call.1} parent=11 // pred_region
          _
        $region40: #{tpu_custom_call.1} parent=11 // pred_fallthru
          _
        // Predicated region
        $region41: #{tpu_custom_call.1} parent=11 // pred_check
          %p343 = pneg %p219
        $region42: #{tpu_custom_call.1} parent=11 // pred_check_branch
          %345 = sbr.rel (%p343) target = $region44
        $region43: #{tpu_custom_call.1} parent=11 // pred_region
          %s347 = ssub.s32 16, 16
          %348 = vsyncadd [#allocation6], %s347
          %s350 = sshll.u32 %s8, 4
          %s351 = int_to_ptr.vmem [resolvable:$true] %s350
          %353 = dma.vmem_to_smem %s351, 16, [#allocation10], [#allocation6]
        $region44: #{tpu_custom_call.1} parent=11 // pred_fallthru
          _
        // Predicated region
        $region45: #{tpu_custom_call.1} parent=11 // pred_check
          %p354 = pneg %p240
        $region46: #{tpu_custom_call.1} parent=11 // pred_check_branch
          %356 = sbr.rel (%p354) target = $region48
        $region47: #{tpu_custom_call.1} parent=11 // pred_region
          _
        $region48: #{tpu_custom_call.1} parent=11 // pred_fallthru
          _
        // Predicated region
        $region49: #{tpu_custom_call.1} parent=11 // pred_check
          %p357 = pneg %p261
        $region50: #{tpu_custom_call.1} parent=11 // pred_check_branch
          %359 = sbr.rel (%p357) target = $region52
        $region51: #{tpu_custom_call.1} parent=11 // pred_region
          _
        $region52: #{tpu_custom_call.1} parent=11 // pred_fallthru
          _
      $region12: #{tpu_custom_call.1} parent=5 // pred_fallthru
        _
      %p360 = scmp.lt.s32.totalorder %s25, 2
      // Predicated region
      $region53: #{tpu_custom_call.1} parent=5 // pred_check
        %p361 = pneg %p360
      $region54: #{tpu_custom_call.1} parent=5 // pred_check_branch
        %363 = sbr.rel (%p361) target = $region56
      $region55: #{tpu_custom_call.1} parent=5 // pred_region
        // Predicated region
        $region57: #{tpu_custom_call.1} parent=55 // pred_check
          %p364 = pneg %p45
        $region58: #{tpu_custom_call.1} parent=55 // pred_check_branch
          %366 = sbr.rel (%p364) target = $region60
        $region59: #{tpu_custom_call.1} parent=55 // pred_region
          %s367 = sand.u32 %s35, 1
          %s368 = scalar_lea.sflag [#allocation4], %s367
          %s369 = sand.u32 %s35, 1
          %s370 = smul.addr %s369, 256
          %s371 = scalar_lea.vmem [#allocation3], %s370
          %s372 = smul.u32 16, %s25
          %s374 = ssub.s32 4096, 4096
          %375 = vsyncadd %s368, %s374
          %s376 = smul.addr %s372, 2
          %s377 = smul.addr %s376, 128
          %s378 = scalar_lea.hbm %s0, %s377
          %s379 = sshll.u32 %s371, 4
          %s380 = int_to_ptr.vmem [resolvable:$true] %s379
          %385 = dma.hbm_to_vmem [thread:$0]  %s378, 4096, %s380, %s368, 256, 256, 16
        $region60: #{tpu_custom_call.1} parent=55 // pred_fallthru
          _
      $region56: #{tpu_custom_call.1} parent=5 // pred_fallthru
        _
      %p386 = scmp.le.s32.totalorder 1, %s25
      %p387 = scmp.lt.s32.totalorder %s25, 3
      %p388 = pnand %p386, %p387
      %p389 = pneg %p388
      // Predicated region
      $region61: #{tpu_custom_call.1} parent=5 // pred_check
        _
      $region62: #{tpu_custom_call.1} parent=5 // pred_check_branch
        %391 = sbr.rel (%p388) target = $region64
      $region63: #{tpu_custom_call.1} parent=5 // pred_region
        %s392 = ssub.s32 %s25, 1
        %s393 = sand.u32 %s38, 1
        %s394 = scalar_lea.sflag [#allocation4], %s393
        %s395 = sand.u32 %s38, 1
        %s396 = smul.addr %s395, 256
        %s397 = scalar_lea.vmem [#allocation3], %s396
        // Predicated region
        $region65: #{tpu_custom_call.1} parent=63 // pred_check
          %p398 = pneg %p51
        $region66: #{tpu_custom_call.1} parent=63 // pred_check_branch
          %400 = sbr.rel (%p398) target = $region68
        $region67: #{tpu_custom_call.1} parent=63 // pred_region
          %401 = dma.done %s394, 4096
        $region68: #{tpu_custom_call.1} parent=63 // pred_fallthru
          _
        // Predicated region
        $region69: #{tpu_custom_call.1} parent=63 // pred_check
          %p402 = pneg %p114
        $region70: #{tpu_custom_call.1} parent=63 // pred_check_branch
          %404 = sbr.rel (%p402) target = $region72
        $region71: #{tpu_custom_call.1} parent=63 // pred_region
          %405 = dma.done [#allocation8], 24576
        $region72: #{tpu_custom_call.1} parent=63 // pred_fallthru
          _
        // Predicated region
        $region73: #{tpu_custom_call.1} parent=63 // pred_check
          %p406 = pneg %p177
        $region74: #{tpu_custom_call.1} parent=63 // pred_check_branch
          %408 = sbr.rel (%p406) target = $region76
        $region75: #{tpu_custom_call.1} parent=63 // pred_region
          %409 = dma.done [#allocation8], 24576
        $region76: #{tpu_custom_call.1} parent=63 // pred_fallthru
          _
        // Predicated region
        $region77: #{tpu_custom_call.1} parent=63 // pred_check
          %p410 = pneg %p219
        $region78: #{tpu_custom_call.1} parent=63 // pred_check_branch
          %412 = sbr.rel (%p410) target = $region80
        $region79: #{tpu_custom_call.1} parent=63 // pred_region
          %413 = dma.done [#allocation6], 16
        $region80: #{tpu_custom_call.1} parent=63 // pred_fallthru
          _
        %414 = sfence
        %s415 = sand.u32 %s38, 1
        %s416 = scalar_lea.sflag [#allocation4], %s415
        %s417 = sand.u32 %s38, 1
        %s418 = smul.addr %s417, 256
        %s419 = scalar_lea.vmem [#allocation3], %s418
        %p420 = pneg %p51
        %p421 = pneg %p48
        %p422 = pneg %p72
        %p423 = pneg %p69
        %p424 = pneg %p93
        %p425 = pneg %p90
        %p426 = pneg %p114
        %p427 = pneg %p111
        %p428 = pneg %p135
        %p429 = pneg %p132
        %p430 = pneg %p156
        %p431 = pneg %p153
        %p432 = pneg %p177
        %p433 = pneg %p174
        %p434 = pneg %p198
        %p435 = pneg %p195
        %p436 = pneg %p219
        %p437 = pneg %p216
        %p438 = pneg %p240
        %p439 = pneg %p237
        %p440 = pneg %p261
        %p441 = pneg %p258
        %p442 = pneg %p287
        %p443 = pneg %p284
        %s444 = sand.u32 %s274, 1
        %s445 = scalar_lea.sflag [#allocation5], %s444
        %s446 = sand.u32 %s274, 1
        %s447 = smul.addr %s446, 256
        %s448 = scalar_lea.vmem [#allocation11], %s447
        %s449 = smul.u32 16, %s30
        %s450 = smul.u32 16, %s30
        %452 = vst [vmem:[#allocation2] sm:$0xff] 0
        %453 = vst [vmem:[#allocation2 + $0x8] sm:$0xff] 0
        %454 = vst [vmem:[#allocation2 + $0x10] sm:$0xff] 0
        %455 = vst [vmem:[#allocation2 + $0x18] sm:$0xff] 0
        %456 = vst [vmem:[#allocation2 + $0x20] sm:$0xff] 0
        %457 = vst [vmem:[#allocation2 + $0x28] sm:$0xff] 0
        %458 = vst [vmem:[#allocation2 + $0x30] sm:$0xff] 0
        %459 = vst [vmem:[#allocation2 + $0x38] sm:$0xff] 0
        %460 = vst [vmem:[#allocation2 + $0x40] sm:$0xff] 0
        %461 = vst [vmem:[#allocation2 + $0x48] sm:$0xff] 0
        %462 = vst [vmem:[#allocation2 + $0x50] sm:$0xff] 0
        %463 = vst [vmem:[#allocation2 + $0x58] sm:$0xff] 0
        %464 = vst [vmem:[#allocation2 + $0x60] sm:$0xff] 0
        %465 = vst [vmem:[#allocation2 + $0x68] sm:$0xff] 0
        %466 = vst [vmem:[#allocation2 + $0x70] sm:$0xff] 0
        %467 = vst [vmem:[#allocation2 + $0x78] sm:$0xff] 0
        %468 = vst [vmem:[#allocation2 + $0x80] sm:$0xff] 0
        %469 = vst [vmem:[#allocation2 + $0x88] sm:$0xff] 0
        %470 = vst [vmem:[#allocation2 + $0x90] sm:$0xff] 0
        %471 = vst [vmem:[#allocation2 + $0x98] sm:$0xff] 0
        %472 = vst [vmem:[#allocation2 + $0xa0] sm:$0xff] 0
        %473 = vst [vmem:[#allocation2 + $0xa8] sm:$0xff] 0
        %474 = vst [vmem:[#allocation2 + $0xb0] sm:$0xff] 0
        %475 = vst [vmem:[#allocation2 + $0xb8] sm:$0xff] 0
        %476 = vst [vmem:[#allocation2 + $0xc0] sm:$0xff] 0
        %477 = vst [vmem:[#allocation2 + $0xc8] sm:$0xff] 0
        %478 = vst [vmem:[#allocation2 + $0xd0] sm:$0xff] 0
        %479 = vst [vmem:[#allocation2 + $0xd8] sm:$0xff] 0
        %480 = vst [vmem:[#allocation2 + $0xe0] sm:$0xff] 0
        %481 = vst [vmem:[#allocation2 + $0xe8] sm:$0xff] 0
        %482 = vst [vmem:[#allocation2 + $0xf0] sm:$0xff] 0
        %483 = vst [vmem:[#allocation2 + $0xf8] sm:$0xff] 0
        %484 = vst [vmem:[#allocation2 + $0x100] sm:$0xff] 0
        %485 = vst [vmem:[#allocation2 + $0x108] sm:$0xff] 0
        %486 = vst [vmem:[#allocation2 + $0x110] sm:$0xff] 0
        %487 = vst [vmem:[#allocation2 + $0x118] sm:$0xff] 0
        %488 = vst [vmem:[#allocation2 + $0x120] sm:$0xff] 0
        %489 = vst [vmem:[#allocation2 + $0x128] sm:$0xff] 0
        %490 = vst [vmem:[#allocation2 + $0x130] sm:$0xff] 0
        %491 = vst [vmem:[#allocation2 + $0x138] sm:$0xff] 0
        %492 = vst [vmem:[#allocation2 + $0x140] sm:$0xff] 0
        %493 = vst [vmem:[#allocation2 + $0x148] sm:$0xff] 0
        %v494 = vld [vmem:[%s397] sm:$0xff]
        %v495 = vld [vmem:[%s397 + $0x8] sm:$0xff]
        %v496 = vld [vmem:[%s397 + $0x10] sm:$0xff]
        %v497 = vld [vmem:[%s397 + $0x18] sm:$0xff]
        %v498 = vld [vmem:[%s397 + $0x20] sm:$0xff]
        %v499 = vld [vmem:[%s397 + $0x28] sm:$0xff]
        %v500 = vld [vmem:[%s397 + $0x30] sm:$0xff]
        %v501 = vld [vmem:[%s397 + $0x38] sm:$0xff]
        %v502 = vld [vmem:[%s397 + $0x40] sm:$0xff]
        %v503 = vld [vmem:[%s397 + $0x48] sm:$0xff]
        %v504 = vld [vmem:[%s397 + $0x50] sm:$0xff]
        %v505 = vld [vmem:[%s397 + $0x58] sm:$0xff]
        %v506 = vld [vmem:[%s397 + $0x60] sm:$0xff]
        %v507 = vld [vmem:[%s397 + $0x68] sm:$0xff]
        %v508 = vld [vmem:[%s397 + $0x70] sm:$0xff]
        %v509 = vld [vmem:[%s397 + $0x78] sm:$0xff]
        %v510 = vld [vmem:[%s397 + $0x80] sm:$0xff]
        %v511 = vld [vmem:[%s397 + $0x88] sm:$0xff]
        %v512 = vld [vmem:[%s397 + $0x90] sm:$0xff]
        %v513 = vld [vmem:[%s397 + $0x98] sm:$0xff]
        %v514 = vld [vmem:[%s397 + $0xa0] sm:$0xff]
        %v515 = vld [vmem:[%s397 + $0xa8] sm:$0xff]
        %v516 = vld [vmem:[%s397 + $0xb0] sm:$0xff]
        %v517 = vld [vmem:[%s397 + $0xb8] sm:$0xff]
        %v518 = vld [vmem:[%s397 + $0xc0] sm:$0xff]
        %v519 = vld [vmem:[%s397 + $0xc8] sm:$0xff]
        %v520 = vld [vmem:[%s397 + $0xd0] sm:$0xff]
        %v521 = vld [vmem:[%s397 + $0xd8] sm:$0xff]
        %v522 = vld [vmem:[%s397 + $0xe0] sm:$0xff]
        %v523 = vld [vmem:[%s397 + $0xe8] sm:$0xff]
        %v524 = vld [vmem:[%s397 + $0xf0] sm:$0xff]
        %v525 = vld [vmem:[%s397 + $0xf8] sm:$0xff]
        %v526 = vld [vmem:[%s1] sm:$0x3]
        %v528 = vlaneseq
        %v529 = vshrl.u32 %v528, 7
        %v530 = vsub.s32 0, %v529
        %v531 = vrot.slane %v526, %v530
        %v532 = vlaneseq
        %v533 = vshrl.u32 %v532, 7
        %v534 = vsub.s32 1, %v533
        %v535 = vrot.slane %v526, %v534
        %v538 = vmul.f32 %v494, %v531
        %v539 = vmul.f32 %v495, %v535
        %v540 = vmul.f32 %v496, %v531
        %v541 = vmul.f32 %v497, %v535
        %v542 = vmul.f32 %v498, %v531
        %v543 = vmul.f32 %v499, %v535
        %v544 = vmul.f32 %v500, %v531
        %v545 = vmul.f32 %v501, %v535
        %v546 = vmul.f32 %v502, %v531
        %v547 = vmul.f32 %v503, %v535
        %v548 = vmul.f32 %v504, %v531
        %v549 = vmul.f32 %v505, %v535
        %v550 = vmul.f32 %v506, %v531
        %v551 = vmul.f32 %v507, %v535
        %v552 = vmul.f32 %v508, %v531
        %v553 = vmul.f32 %v509, %v535
        %v554 = vmul.f32 %v510, %v531
        %v555 = vmul.f32 %v511, %v535
        %v556 = vmul.f32 %v512, %v531
        %v557 = vmul.f32 %v513, %v535
        %v558 = vmul.f32 %v514, %v531
        %v559 = vmul.f32 %v515, %v535
        %v560 = vmul.f32 %v516, %v531
        %v561 = vmul.f32 %v517, %v535
        %v562 = vmul.f32 %v518, %v531
        %v563 = vmul.f32 %v519, %v535
        %v564 = vmul.f32 %v520, %v531
        %v565 = vmul.f32 %v521, %v535
        %v566 = vmul.f32 %v522, %v531
        %v567 = vmul.f32 %v523, %v535
        %v568 = vmul.f32 %v524, %v531
        %v569 = vmul.f32 %v525, %v535
        %v570 = vld [vmem:[%s2] sm:$0x3]
        %v572 = vlaneseq
        %v573 = vshrl.u32 %v572, 7
        %v574 = vsub.s32 0, %v573
        %v575 = vrot.slane %v570, %v574
        %v576 = vlaneseq
        %v577 = vshrl.u32 %v576, 7
        %v578 = vsub.s32 1, %v577
        %v579 = vrot.slane %v570, %v578
        %v582 = vadd.f32 %v538, %v575
        %v583 = vadd.f32 %v539, %v579
        %v584 = vadd.f32 %v540, %v575
        %v585 = vadd.f32 %v541, %v579
        %v586 = vadd.f32 %v542, %v575
        %v587 = vadd.f32 %v543, %v579
        %v588 = vadd.f32 %v544, %v575
        %v589 = vadd.f32 %v545, %v579
        %v590 = vadd.f32 %v546, %v575
        %v591 = vadd.f32 %v547, %v579
        %v592 = vadd.f32 %v548, %v575
        %v593 = vadd.f32 %v549, %v579
        %v594 = vadd.f32 %v550, %v575
        %v595 = vadd.f32 %v551, %v579
        %v596 = vadd.f32 %v552, %v575
        %v597 = vadd.f32 %v553, %v579
        %v598 = vadd.f32 %v554, %v575
        %v599 = vadd.f32 %v555, %v579
        %v600 = vadd.f32 %v556, %v575
        %v601 = vadd.f32 %v557, %v579
        %v602 = vadd.f32 %v558, %v575
        %v603 = vadd.f32 %v559, %v579
        %v604 = vadd.f32 %v560, %v575
        %v605 = vadd.f32 %v561, %v579
        %v606 = vadd.f32 %v562, %v575
        %v607 = vadd.f32 %v563, %v579
        %v608 = vadd.f32 %v564, %v575
        %v609 = vadd.f32 %v565, %v579
        %v610 = vadd.f32 %v566, %v575
        %v611 = vadd.f32 %v567, %v579
        %v612 = vadd.f32 %v568, %v575
        %v613 = vadd.f32 %v569, %v579
        %v614 = vmax.f32 %v582, 0.0
        %v615 = vmax.f32 %v583, 0.0
        %v616 = vmax.f32 %v584, 0.0
        %v617 = vmax.f32 %v585, 0.0
        %v618 = vmax.f32 %v586, 0.0
        %v619 = vmax.f32 %v587, 0.0
        %v620 = vmax.f32 %v588, 0.0
        %v621 = vmax.f32 %v589, 0.0
        %v622 = vmax.f32 %v590, 0.0
        %v623 = vmax.f32 %v591, 0.0
        %v624 = vmax.f32 %v592, 0.0
        %v625 = vmax.f32 %v593, 0.0
        %v626 = vmax.f32 %v594, 0.0
        %v627 = vmax.f32 %v595, 0.0
        %v628 = vmax.f32 %v596, 0.0
        %v629 = vmax.f32 %v597, 0.0
        %v630 = vmax.f32 %v598, 0.0
        %v631 = vmax.f32 %v599, 0.0
        %v632 = vmax.f32 %v600, 0.0
        %v633 = vmax.f32 %v601, 0.0
        %v634 = vmax.f32 %v602, 0.0
        %v635 = vmax.f32 %v603, 0.0
        %v636 = vmax.f32 %v604, 0.0
        %v637 = vmax.f32 %v605, 0.0
        %v638 = vmax.f32 %v606, 0.0
        %v639 = vmax.f32 %v607, 0.0
        %v640 = vmax.f32 %v608, 0.0
        %v641 = vmax.f32 %v609, 0.0
        %v642 = vmax.f32 %v610, 0.0
        %v643 = vmax.f32 %v611, 0.0
        %v644 = vmax.f32 %v612, 0.0
        %v645 = vmax.f32 %v613, 0.0
        %v646 = vpack.c.bf16 %v614, %v614
        %v647 = vpack.c.bf16 %v615, %v615
        %v648 = vpack.c.bf16 %v616, %v616
        %v649 = vpack.c.bf16 %v617, %v617
        %v650 = vpack.c.bf16 %v618, %v618
        %v651 = vpack.c.bf16 %v619, %v619
        %v652 = vpack.c.bf16 %v620, %v620
        %v653 = vpack.c.bf16 %v621, %v621
        %v654 = vpack.c.bf16 %v622, %v622
        %v655 = vpack.c.bf16 %v623, %v623
        %v656 = vpack.c.bf16 %v624, %v624
        %v657 = vpack.c.bf16 %v625, %v625
        %v658 = vpack.c.bf16 %v626, %v626
        %v659 = vpack.c.bf16 %v627, %v627
        %v660 = vpack.c.bf16 %v628, %v628
        %v661 = vpack.c.bf16 %v629, %v629
        %v662 = vpack.c.bf16 %v630, %v630
        %v663 = vpack.c.bf16 %v631, %v631
        %v664 = vpack.c.bf16 %v632, %v632
        %v665 = vpack.c.bf16 %v633, %v633
        %v666 = vpack.c.bf16 %v634, %v634
        %v667 = vpack.c.bf16 %v635, %v635
        %v668 = vpack.c.bf16 %v636, %v636
        %v669 = vpack.c.bf16 %v637, %v637
        %v670 = vpack.c.bf16 %v638, %v638
        %v671 = vpack.c.bf16 %v639, %v639
        %v672 = vpack.c.bf16 %v640, %v640
        %v673 = vpack.c.bf16 %v641, %v641
        %v674 = vpack.c.bf16 %v642, %v642
        %v675 = vpack.c.bf16 %v643, %v643
        %v676 = vpack.c.bf16 %v644, %v644
        %v677 = vpack.c.bf16 %v645, %v645
        %v680 = vunpack.c.l.b16 %v646
        %v681 = vunpack.c.l.b16 %v647
        %v682 = vpack.c.b16 %v681, %v680
        %v684 = vshrl.u32 %v682, 16
        %v686 = vrot.slane %v684, 7
        %v687 = vshll.u32 %v682, 16
        %v689 = vor.u32 %v686, %v687
        %v690 = vrot.slane %v686, 4
        %vm693 = vcmask 1043456
        %vm694 = vsmask.f32 7938
        %vm695 = vmand %vm693, %vm694
        %vm696 = vcmask 1047556
        %vm697 = vsmask.f32 7954
        %vm698 = vmand %vm696, %vm697
        %vm699 = vmor %vm698, %vm695
        %v700 = vld [vmem:[#allocation2 + $0x4] sm:$0xff]
        %v701 = vsel %vm699, %v689, %v700
        %702 = vst [vmem:[#allocation2 + $0x4] sm:$0xff] %v701
        %vm703 = vcmask 1040384
        %vm704 = vsmask.f32 256
        %vm705 = vmand %vm703, %vm704
        %vm706 = vcmask 1044484
        %vm707 = vsmask.f32 4352
        %vm708 = vmand %vm706, %vm707
        %vm709 = vmor %vm708, %vm705
        %v710 = vld [vmem:[#allocation2 + $0x14] sm:$0x11]
        %v711 = vsel %vm709, %v690, %v710
        %712 = vst [vmem:[#allocation2 + $0x14] sm:$0x11] %v711
        %v715 = vunpack.c.l.b16 %v648
        %v716 = vunpack.c.l.b16 %v649
        %v717 = vpack.c.b16 %v716, %v715
        %v719 = vshrl.u32 %v717, 16
        %v721 = vrot.slane %v719, 6
        %v722 = vshll.u32 %v717, 16
        %v724 = vrot.slane %v722, 7
        %v725 = vor.u32 %v721, %v724
        %v726 = vrot.slane %v725, 4
        %vm729 = vcmask 1043457
        %vm730 = vsmask.f32 7942
        %vm731 = vmand %vm729, %vm730
        %vm732 = vcmask 1047557
        %vm733 = vsmask.f32 7958
        %vm734 = vmand %vm732, %vm733
        %vm735 = vmor %vm734, %vm731
        %v736 = vld [vmem:[#allocation2 + $0x14] sm:$0xee]
        %v737 = vsel %vm735, %v725, %v736
        %738 = vst [vmem:[#allocation2 + $0x14] sm:$0xee] %v737
        %vm739 = vcmask 1041408
        %vm740 = vsmask.f32 1280
        %vm741 = vmand %vm739, %vm740
        %vm742 = vcmask 1045508
        %vm743 = vsmask.f32 5376
        %vm744 = vmand %vm742, %vm743
        %vm745 = vmor %vm744, %vm741
        %v746 = vld [vmem:[#allocation2 + $0x24] sm:$0x33]
        %v747 = vsel %vm745, %v726, %v746
        %748 = vst [vmem:[#allocation2 + $0x24] sm:$0x33] %v747
        %v751 = vunpack.c.l.b16 %v650
        %v752 = vunpack.c.l.b16 %v651
        %v753 = vpack.c.b16 %v752, %v751
        %v755 = vshrl.u32 %v753, 16
        %v757 = vrot.slane %v755, 5
        %v758 = vshll.u32 %v753, 16
        %v760 = vrot.slane %v758, 6
        %v761 = vor.u32 %v757, %v760
        %v762 = vrot.slane %v761, 4
        %vm765 = vcmask 1043458
        %vm766 = vsmask.f32 7946
        %vm767 = vmand %vm765, %vm766
        %vm768 = vcmask 1047558
        %vm769 = vsmask.f32 7962
        %vm770 = vmand %vm768, %vm769
        %vm771 = vmor %vm770, %vm767
        %v772 = vld [vmem:[#allocation2 + $0x24] sm:$0xcc]
        %v773 = vsel %vm771, %v761, %v772
        %774 = vst [vmem:[#allocation2 + $0x24] sm:$0xcc] %v773
        %vm775 = vcmask 1042432
        %vm776 = vsmask.f32 2304
        %vm777 = vmand %vm775, %vm776
        %vm778 = vcmask 1046532
        %vm779 = vsmask.f32 6400
        %vm780 = vmand %vm778, %vm779
        %vm781 = vmor %vm780, %vm777
        %v782 = vld [vmem:[#allocation2 + $0x34] sm:$0x77]
        %v783 = vsel %vm781, %v762, %v782
        %784 = vst [vmem:[#allocation2 + $0x34] sm:$0x77] %v783
        %v787 = vunpack.c.l.b16 %v652
        %v788 = vunpack.c.l.b16 %v653
        %v789 = vpack.c.b16 %v788, %v787
        %v791 = vshll.u32 %v789, 16
        %v793 = vrot.slane %v791, 5
        %v794 = vshrl.u32 %v789, 16
        %v796 = vrot.slane %v794, 4
        %v797 = vor.u32 %v796, %v793
        %v798 = vrot.slane %v797, 4
        %vm801 = vcmask 1043459
        %vm802 = vsmask.f32 7950
        %vm803 = vmand %vm801, %vm802
        %vm804 = vcmask 1047559
        %vm805 = vsmask.f32 7966
        %vm806 = vmand %vm804, %vm805
        %vm807 = vmor %vm806, %vm803
        %v808 = vld [vmem:[#allocation2 + $0x34] sm:$0x88]
        %v809 = vsel %vm807, %v793, %v808
        %810 = vst [vmem:[#allocation2 + $0x34] sm:$0x88] %v809
        %vm811 = vsmask.f32 3328
        %vm812 = vmand %vm693, %vm811
        %vm813 = vsmask.f32 7424
        %vm814 = vmand %vm696, %vm813
        %vm815 = vmor %vm814, %vm812
        %v816 = vld [vmem:[#allocation2 + $0x44] sm:$0xff]
        %v817 = vsel %vm815, %v798, %v816
        %818 = vst [vmem:[#allocation2 + $0x44] sm:$0xff] %v817
        %v821 = vunpack.c.l.b16 %v654
        %v822 = vunpack.c.l.b16 %v655
        %v823 = vpack.c.b16 %v822, %v821
        %v825 = vshrl.u32 %v823, 16
        %v827 = vrot.slane %v825, 7
        %v828 = vshll.u32 %v823, 16
        %v830 = vor.u32 %v827, %v828
        %v831 = vrot.slane %v827, 4
        %v834 = vld [vmem:[#allocation2 + $0x54] sm:$0xff]
        %v835 = vsel %vm699, %v830, %v834
        %836 = vst [vmem:[#allocation2 + $0x54] sm:$0xff] %v835
        %v837 = vld [vmem:[#allocation2 + $0x64] sm:$0x11]
        %v838 = vsel %vm709, %v831, %v837
        %839 = vst [vmem:[#allocation2 + $0x64] sm:$0x11] %v838
        %v842 = vunpack.c.l.b16 %v656
        %v843 = vunpack.c.l.b16 %v657
        %v844 = vpack.c.b16 %v843, %v842
        %v846 = vshrl.u32 %v844, 16
        %v848 = vrot.slane %v846, 6
        %v849 = vshll.u32 %v844, 16
        %v851 = vrot.slane %v849, 7
        %v852 = vor.u32 %v848, %v851
        %v853 = vrot.slane %v852, 4
        %v856 = vld [vmem:[#allocation2 + $0x64] sm:$0xee]
        %v857 = vsel %vm735, %v852, %v856
        %858 = vst [vmem:[#allocation2 + $0x64] sm:$0xee] %v857
        %v859 = vld [vmem:[#allocation2 + $0x74] sm:$0x33]
        %v860 = vsel %vm745, %v853, %v859
        %861 = vst [vmem:[#allocation2 + $0x74] sm:$0x33] %v860
        %v864 = vunpack.c.l.b16 %v658
        %v865 = vunpack.c.l.b16 %v659
        %v866 = vpack.c.b16 %v865, %v864
        %v868 = vshrl.u32 %v866, 16
        %v870 = vrot.slane %v868, 5
        %v871 = vshll.u32 %v866, 16
        %v873 = vrot.slane %v871, 6
        %v874 = vor.u32 %v870, %v873
        %v875 = vrot.slane %v874, 4
        %v878 = vld [vmem:[#allocation2 + $0x74] sm:$0xcc]
        %v879 = vsel %vm771, %v874, %v878
        %880 = vst [vmem:[#allocation2 + $0x74] sm:$0xcc] %v879
        %v881 = vld [vmem:[#allocation2 + $0x84] sm:$0x77]
        %v882 = vsel %vm781, %v875, %v881
        %883 = vst [vmem:[#allocation2 + $0x84] sm:$0x77] %v882
        %v886 = vunpack.c.l.b16 %v660
        %v887 = vunpack.c.l.b16 %v661
        %v888 = vpack.c.b16 %v887, %v886
        %v890 = vshll.u32 %v888, 16
        %v892 = vrot.slane %v890, 5
        %v893 = vshrl.u32 %v888, 16
        %v895 = vrot.slane %v893, 4
        %v896 = vor.u32 %v895, %v892
        %v897 = vrot.slane %v896, 4
        %v900 = vld [vmem:[#allocation2 + $0x84] sm:$0x88]
        %v901 = vsel %vm807, %v892, %v900
        %902 = vst [vmem:[#allocation2 + $0x84] sm:$0x88] %v901
        %v903 = vld [vmem:[#allocation2 + $0x94] sm:$0xff]
        %v904 = vsel %vm815, %v897, %v903
        %905 = vst [vmem:[#allocation2 + $0x94] sm:$0xff] %v904
        %v908 = vunpack.c.l.b16 %v662
        %v909 = vunpack.c.l.b16 %v663
        %v910 = vpack.c.b16 %v909, %v908
        %v912 = vshrl.u32 %v910, 16
        %v914 = vrot.slane %v912, 7
        %v915 = vshll.u32 %v910, 16
        %v917 = vor.u32 %v914, %v915
        %v918 = vrot.slane %v914, 4
        %v921 = vld [vmem:[#allocation2 + $0xa4] sm:$0xff]
        %v922 = vsel %vm699, %v917, %v921
        %923 = vst [vmem:[#allocation2 + $0xa4] sm:$0xff] %v922
        %v924 = vld [vmem:[#allocation2 + $0xb4] sm:$0x11]
        %v925 = vsel %vm709, %v918, %v924
        %926 = vst [vmem:[#allocation2 + $0xb4] sm:$0x11] %v925
        %v929 = vunpack.c.l.b16 %v664
        %v930 = vunpack.c.l.b16 %v665
        %v931 = vpack.c.b16 %v930, %v929
        %v933 = vshrl.u32 %v931, 16
        %v935 = vrot.slane %v933, 6
        %v936 = vshll.u32 %v931, 16
        %v938 = vrot.slane %v936, 7
        %v939 = vor.u32 %v935, %v938
        %v940 = vrot.slane %v939, 4
        %v943 = vld [vmem:[#allocation2 + $0xb4] sm:$0xee]
        %v944 = vsel %vm735, %v939, %v943
        %945 = vst [vmem:[#allocation2 + $0xb4] sm:$0xee] %v944
        %v946 = vld [vmem:[#allocation2 + $0xc4] sm:$0x33]
        %v947 = vsel %vm745, %v940, %v946
        %948 = vst [vmem:[#allocation2 + $0xc4] sm:$0x33] %v947
        %v951 = vunpack.c.l.b16 %v666
        %v952 = vunpack.c.l.b16 %v667
        %v953 = vpack.c.b16 %v952, %v951
        %v955 = vshrl.u32 %v953, 16
        %v957 = vrot.slane %v955, 5
        %v958 = vshll.u32 %v953, 16
        %v960 = vrot.slane %v958, 6
        %v961 = vor.u32 %v957, %v960
        %v962 = vrot.slane %v961, 4
        %v965 = vld [vmem:[#allocation2 + $0xc4] sm:$0xcc]
        %v966 = vsel %vm771, %v961, %v965
        %967 = vst [vmem:[#allocation2 + $0xc4] sm:$0xcc] %v966
        %v968 = vld [vmem:[#allocation2 + $0xd4] sm:$0x77]
        %v969 = vsel %vm781, %v962, %v968
        %970 = vst [vmem:[#allocation2 + $0xd4] sm:$0x77] %v969
        %v973 = vunpack.c.l.b16 %v668
        %v974 = vunpack.c.l.b16 %v669
        %v975 = vpack.c.b16 %v974, %v973
        %v977 = vshll.u32 %v975, 16
        %v979 = vrot.slane %v977, 5
        %v980 = vshrl.u32 %v975, 16
        %v982 = vrot.slane %v980, 4
        %v983 = vor.u32 %v982, %v979
        %v984 = vrot.slane %v983, 4
        %v987 = vld [vmem:[#allocation2 + $0xd4] sm:$0x88]
        %v988 = vsel %vm807, %v979, %v987
        %989 = vst [vmem:[#allocation2 + $0xd4] sm:$0x88] %v988
        %v990 = vld [vmem:[#allocation2 + $0xe4] sm:$0xff]
        %v991 = vsel %vm815, %v984, %v990
        %992 = vst [vmem:[#allocation2 + $0xe4] sm:$0xff] %v991
        %v995 = vunpack.c.l.b16 %v670
        %v996 = vunpack.c.l.b16 %v671
        %v997 = vpack.c.b16 %v996, %v995
        %v999 = vshrl.u32 %v997, 16
        %v1001 = vrot.slane %v999, 7
        %v1002 = vshll.u32 %v997, 16
        %v1004 = vor.u32 %v1001, %v1002
        %v1005 = vrot.slane %v1001, 4
        %v1008 = vld [vmem:[#allocation2 + $0xf4] sm:$0xff]
        %v1009 = vsel %vm699, %v1004, %v1008
        %1010 = vst [vmem:[#allocation2 + $0xf4] sm:$0xff] %v1009
        %v1011 = vld [vmem:[#allocation2 + $0x104] sm:$0x11]
        %v1012 = vsel %vm709, %v1005, %v1011
        %1013 = vst [vmem:[#allocation2 + $0x104] sm:$0x11] %v1012
        %v1016 = vunpack.c.l.b16 %v672
        %v1017 = vunpack.c.l.b16 %v673
        %v1018 = vpack.c.b16 %v1017, %v1016
        %v1020 = vshrl.u32 %v1018, 16
        %v1022 = vrot.slane %v1020, 6
        %v1023 = vshll.u32 %v1018, 16
        %v1025 = vrot.slane %v1023, 7
        %v1026 = vor.u32 %v1022, %v1025
        %v1027 = vrot.slane %v1026, 4
        %v1030 = vld [vmem:[#allocation2 + $0x104] sm:$0xee]
        %v1031 = vsel %vm735, %v1026, %v1030
        %1032 = vst [vmem:[#allocation2 + $0x104] sm:$0xee] %v1031
        %v1033 = vld [vmem:[#allocation2 + $0x114] sm:$0x33]
        %v1034 = vsel %vm745, %v1027, %v1033
        %1035 = vst [vmem:[#allocation2 + $0x114] sm:$0x33] %v1034
        %v1038 = vunpack.c.l.b16 %v674
        %v1039 = vunpack.c.l.b16 %v675
        %v1040 = vpack.c.b16 %v1039, %v1038
        %v1042 = vshrl.u32 %v1040, 16
        %v1044 = vrot.slane %v1042, 5
        %v1045 = vshll.u32 %v1040, 16
        %v1047 = vrot.slane %v1045, 6
        %v1048 = vor.u32 %v1044, %v1047
        %v1049 = vrot.slane %v1048, 4
        %v1052 = vld [vmem:[#allocation2 + $0x114] sm:$0xcc]
        %v1053 = vsel %vm771, %v1048, %v1052
        %1054 = vst [vmem:[#allocation2 + $0x114] sm:$0xcc] %v1053
        %v1055 = vld [vmem:[#allocation2 + $0x124] sm:$0x77]
        %v1056 = vsel %vm781, %v1049, %v1055
        %1057 = vst [vmem:[#allocation2 + $0x124] sm:$0x77] %v1056
        %v1060 = vunpack.c.l.b16 %v676
        %v1061 = vunpack.c.l.b16 %v677
        %v1062 = vpack.c.b16 %v1061, %v1060
        %v1064 = vshll.u32 %v1062, 16
        %v1066 = vrot.slane %v1064, 5
        %v1067 = vshrl.u32 %v1062, 16
        %v1069 = vrot.slane %v1067, 4
        %v1070 = vor.u32 %v1069, %v1066
        %v1071 = vrot.slane %v1070, 4
        %v1074 = vld [vmem:[#allocation2 + $0x124] sm:$0x88]
        %v1075 = vsel %vm807, %v1066, %v1074
        %1076 = vst [vmem:[#allocation2 + $0x124] sm:$0x88] %v1075
        %v1077 = vld [vmem:[#allocation2 + $0x134] sm:$0xff]
        %v1078 = vsel %vm815, %v1071, %v1077
        %1079 = vst [vmem:[#allocation2 + $0x134] sm:$0xff] %v1078
        %v1080 = vld [vmem:[#allocation2] sm:$0xff]
        %v1081 = vld [vmem:[#allocation2 + $0x8] sm:$0xff]
        %v1082 = vld [vmem:[#allocation2 + $0x10] sm:$0xff]
        %v1083 = vld [vmem:[#allocation2 + $0x18] sm:$0xff]
        %v1084 = vld [vmem:[#allocation2 + $0x20] sm:$0xff]
        %v1085 = vld [vmem:[#allocation2 + $0x28] sm:$0xff]
        %v1086 = vld [vmem:[#allocation2 + $0x30] sm:$0xff]
        %v1087 = vld [vmem:[#allocation2 + $0x38] sm:$0xff]
        %v1088 = vld [vmem:[#allocation2 + $0x40] sm:$0xff]
        %v1089 = vld [vmem:[#allocation2 + $0x48] sm:$0xff]
        %v1090 = vld [vmem:[#allocation2 + $0x50] sm:$0xff]
        %v1091 = vld [vmem:[#allocation2 + $0x58] sm:$0xff]
        %v1092 = vld [vmem:[#allocation2 + $0x60] sm:$0xff]
        %v1093 = vld [vmem:[#allocation2 + $0x68] sm:$0xff]
        %v1094 = vld [vmem:[#allocation2 + $0x70] sm:$0xff]
        %v1095 = vld [vmem:[#allocation2 + $0x78] sm:$0xff]
        %v1096 = vld [vmem:[#allocation2 + $0x80] sm:$0xff]
        %v1097 = vld [vmem:[#allocation2 + $0x88] sm:$0xff]
        %v1098 = vld [vmem:[#allocation2 + $0x90] sm:$0xff]
        %v1099 = vld [vmem:[#allocation2 + $0x98] sm:$0xff]
        %v1100 = vld [vmem:[#allocation2 + $0xa0] sm:$0xff]
        %v1101 = vld [vmem:[#allocation2 + $0xa8] sm:$0xff]
        %v1102 = vld [vmem:[#allocation2 + $0xb0] sm:$0xff]
        %v1103 = vld [vmem:[#allocation2 + $0xb8] sm:$0xff]
        %v1104 = vld [vmem:[#allocation2 + $0xc0] sm:$0xff]
        %v1105 = vld [vmem:[#allocation2 + $0xc8] sm:$0xff]
        %v1106 = vld [vmem:[#allocation2 + $0xd0] sm:$0xff]
        %v1107 = vld [vmem:[#allocation2 + $0xd8] sm:$0xff]
        %v1108 = vld [vmem:[#allocation2 + $0xe0] sm:$0xff]
        %v1109 = vld [vmem:[#allocation2 + $0xe8] sm:$0xff]
        %v1110 = vld [vmem:[#allocation2 + $0xf0] sm:$0xff]
        %v1111 = vld [vmem:[#allocation2 + $0xf8] sm:$0xff]
        %v1112 = vld [vmem:[#allocation2 + $0x100] sm:$0xff]
        %v1113 = vld [vmem:[#allocation2 + $0x108] sm:$0xff]
        %v1114 = vld [vmem:[#allocation2 + $0x110] sm:$0xff]
        %v1115 = vld [vmem:[#allocation2 + $0x118] sm:$0xff]
        %v1116 = vld [vmem:[#allocation2 + $0x120] sm:$0xff]
        %v1117 = vld [vmem:[#allocation2 + $0x128] sm:$0xff]
        %v1118 = vld [vmem:[#allocation2 + $0x130] sm:$0xff]
        %v1119 = vld [vmem:[#allocation2 + $0x138] sm:$0xff]
        %v1120 = vld [vmem:[#allocation7] sm:$0xff]
        %v1121 = vld [vmem:[#allocation7 + $0x8] sm:$0xff]
        %v1122 = vld [vmem:[#allocation7 + $0x10] sm:$0xff]
        %v1123 = vld [vmem:[#allocation7 + $0x18] sm:$0xff]
        %v1124 = vld [vmem:[#allocation7 + $0x20] sm:$0xff]
        %v1125 = vld [vmem:[#allocation7 + $0x28] sm:$0xff]
        %v1126 = vld [vmem:[#allocation7 + $0x30] sm:$0xff]
        %v1127 = vld [vmem:[#allocation7 + $0x38] sm:$0xff]
        %v1128 = vld [vmem:[#allocation7 + $0x40] sm:$0xff]
        %v1129 = vld [vmem:[#allocation7 + $0x48] sm:$0xff]
        %v1130 = vld [vmem:[#allocation7 + $0x50] sm:$0xff]
        %v1131 = vld [vmem:[#allocation7 + $0x58] sm:$0xff]
        %v1132 = vld [vmem:[#allocation7 + $0x60] sm:$0xff]
        %v1133 = vld [vmem:[#allocation7 + $0x68] sm:$0xff]
        %v1134 = vld [vmem:[#allocation7 + $0x70] sm:$0xff]
        %v1135 = vld [vmem:[#allocation7 + $0x78] sm:$0xff]
        %v1136 = vld [vmem:[#allocation7 + $0x80] sm:$0xff]
        %v1137 = vld [vmem:[#allocation7 + $0x88] sm:$0xff]
        %v1138 = vld [vmem:[#allocation7 + $0x90] sm:$0xff]
        %v1139 = vld [vmem:[#allocation7 + $0x98] sm:$0xff]
        %v1140 = vld [vmem:[#allocation7 + $0xa0] sm:$0xff]
        %v1141 = vld [vmem:[#allocation7 + $0xa8] sm:$0xff]
        %v1142 = vld [vmem:[#allocation7 + $0xb0] sm:$0xff]
        %v1143 = vld [vmem:[#allocation7 + $0xb8] sm:$0xff]
        %v1144 = vld [vmem:[#allocation7 + $0xc0] sm:$0xff]
        %v1145 = vld [vmem:[#allocation7 + $0xc8] sm:$0xff]
        %v1146 = vld [vmem:[#allocation7 + $0xd0] sm:$0xff]
        %v1147 = vld [vmem:[#allocation7 + $0xd8] sm:$0xff]
        %v1148 = vld [vmem:[#allocation7 + $0xe0] sm:$0xff]
        %v1149 = vld [vmem:[#allocation7 + $0xe8] sm:$0xff]
        %v1150 = vld [vmem:[#allocation7 + $0xf0] sm:$0xff]
        %v1151 = vld [vmem:[#allocation7 + $0xf8] sm:$0xff]
        %v1152 = vld [vmem:[#allocation7 + $0x100] sm:$0xff]
        %v1153 = vld [vmem:[#allocation7 + $0x108] sm:$0xff]
        %v1154 = vld [vmem:[#allocation7 + $0x110] sm:$0xff]
        %v1155 = vld [vmem:[#allocation7 + $0x118] sm:$0xff]
        %v1156 = vld [vmem:[#allocation7 + $0x120] sm:$0xff]
        %v1157 = vld [vmem:[#allocation7 + $0x128] sm:$0xff]
        %v1158 = vld [vmem:[#allocation7 + $0x130] sm:$0xff]
        %v1159 = vld [vmem:[#allocation7 + $0x138] sm:$0xff]
        %v1160 = vld [vmem:[#allocation7 + $0x140] sm:$0xff]
        %v1161 = vld [vmem:[#allocation7 + $0x148] sm:$0xff]
        %v1162 = vld [vmem:[#allocation7 + $0x150] sm:$0xff]
        %v1163 = vld [vmem:[#allocation7 + $0x158] sm:$0xff]
        %v1164 = vld [vmem:[#allocation7 + $0x160] sm:$0xff]
        %v1165 = vld [vmem:[#allocation7 + $0x168] sm:$0xff]
        %v1166 = vld [vmem:[#allocation7 + $0x170] sm:$0xff]
        %v1167 = vld [vmem:[#allocation7 + $0x178] sm:$0xff]
        %v1168 = vld [vmem:[#allocation7 + $0x180] sm:$0xff]
        %v1169 = vld [vmem:[#allocation7 + $0x188] sm:$0xff]
        %v1170 = vld [vmem:[#allocation7 + $0x190] sm:$0xff]
        %v1171 = vld [vmem:[#allocation7 + $0x198] sm:$0xff]
        %v1172 = vld [vmem:[#allocation7 + $0x1a0] sm:$0xff]
        %v1173 = vld [vmem:[#allocation7 + $0x1a8] sm:$0xff]
        %v1174 = vld [vmem:[#allocation7 + $0x1b0] sm:$0xff]
        %v1175 = vld [vmem:[#allocation7 + $0x1b8] sm:$0xff]
        %v1176 = vld [vmem:[#allocation7 + $0x1c0] sm:$0xff]
        %v1177 = vld [vmem:[#allocation7 + $0x1c8] sm:$0xff]
        %v1178 = vld [vmem:[#allocation7 + $0x1d0] sm:$0xff]
        %v1179 = vld [vmem:[#allocation7 + $0x1d8] sm:$0xff]
        %v1180 = vld [vmem:[#allocation7 + $0x1e0] sm:$0xff]
        %v1181 = vld [vmem:[#allocation7 + $0x1e8] sm:$0xff]
        %v1182 = vld [vmem:[#allocation7 + $0x1f0] sm:$0xff]
        %v1183 = vld [vmem:[#allocation7 + $0x1f8] sm:$0xff]
        %v1184 = vld [vmem:[#allocation2] sm:$0xff]
        %v1185 = vld [vmem:[#allocation2 + $0x8] sm:$0xff]
        %v1186 = vld [vmem:[#allocation2 + $0x10] sm:$0xff]
        %v1187 = vld [vmem:[#allocation2 + $0x18] sm:$0xff]
        %v1188 = vld [vmem:[#allocation2 + $0x20] sm:$0xff]
        %v1189 = vld [vmem:[#allocation2 + $0x28] sm:$0xff]
        %v1190 = vld [vmem:[#allocation2 + $0x30] sm:$0xff]
        %v1191 = vld [vmem:[#allocation2 + $0x38] sm:$0xff]
        %v1192 = vld [vmem:[#allocation2 + $0x40] sm:$0xff]
        %v1193 = vld [vmem:[#allocation2 + $0x48] sm:$0xff]
        %v1194 = vld [vmem:[#allocation2 + $0x50] sm:$0xff]
        %v1195 = vld [vmem:[#allocation2 + $0x58] sm:$0xff]
        %v1196 = vld [vmem:[#allocation2 + $0x60] sm:$0xff]
        %v1197 = vld [vmem:[#allocation2 + $0x68] sm:$0xff]
        %v1198 = vld [vmem:[#allocation2 + $0x70] sm:$0xff]
        %v1199 = vld [vmem:[#allocation2 + $0x78] sm:$0xff]
        %v1200 = vld [vmem:[#allocation2 + $0x80] sm:$0xff]
        %v1201 = vld [vmem:[#allocation2 + $0x88] sm:$0xff]
        %v1202 = vld [vmem:[#allocation2 + $0x90] sm:$0xff]
        %v1203 = vld [vmem:[#allocation2 + $0x98] sm:$0xff]
        %v1204 = vld [vmem:[#allocation2 + $0xa0] sm:$0xff]
        %v1205 = vld [vmem:[#allocation2 + $0xa8] sm:$0xff]
        %v1206 = vld [vmem:[#allocation2 + $0xb0] sm:$0xff]
        %v1207 = vld [vmem:[#allocation2 + $0xb8] sm:$0xff]
        %v1208 = vld [vmem:[#allocation2 + $0xc0] sm:$0xff]
        %v1209 = vld [vmem:[#allocation2 + $0xc8] sm:$0xff]
        %v1210 = vld [vmem:[#allocation2 + $0xd0] sm:$0xff]
        %v1211 = vld [vmem:[#allocation2 + $0xd8] sm:$0xff]
        %v1212 = vld [vmem:[#allocation2 + $0xe0] sm:$0xff]
        %v1213 = vld [vmem:[#allocation2 + $0xe8] sm:$0xff]
        %v1214 = vld [vmem:[#allocation2 + $0xf0] sm:$0xff]
        %v1215 = vld [vmem:[#allocation2 + $0xf8] sm:$0xff]
        %v1216 = vld [vmem:[#allocation2 + $0x100] sm:$0xff]
        %v1217 = vld [vmem:[#allocation2 + $0x108] sm:$0xff]
        %v1218 = vld [vmem:[#allocation2 + $0x110] sm:$0xff]
        %v1219 = vld [vmem:[#allocation2 + $0x118] sm:$0xff]
        %v1220 = vld [vmem:[#allocation2 + $0x120] sm:$0xff]
        %v1221 = vld [vmem:[#allocation2 + $0x128] sm:$0xff]
        %v1222 = vld [vmem:[#allocation2 + $0x130] sm:$0xff]
        %v1223 = vld [vmem:[#allocation2 + $0x138] sm:$0xff]
        %v1224 = vld [vmem:[#allocation2 + $0x140] sm:$0x11]
        %v1225 = vld [vmem:[#allocation2 + $0x148] sm:$0x11]
        %s1226 = scalar_lea.vmem [#allocation7], 512
        %v1227 = vld [vmem:[%s1226] sm:$0xff]
        %v1228 = vld [vmem:[%s1226 + $0x8] sm:$0xff]
        %v1229 = vld [vmem:[%s1226 + $0x10] sm:$0xff]
        %v1230 = vld [vmem:[%s1226 + $0x18] sm:$0xff]
        %v1231 = vld [vmem:[%s1226 + $0x20] sm:$0xff]
        %v1232 = vld [vmem:[%s1226 + $0x28] sm:$0xff]
        %v1233 = vld [vmem:[%s1226 + $0x30] sm:$0xff]
        %v1234 = vld [vmem:[%s1226 + $0x38] sm:$0xff]
        %v1235 = vld [vmem:[%s1226 + $0x40] sm:$0xff]
        %v1236 = vld [vmem:[%s1226 + $0x48] sm:$0xff]
        %v1237 = vld [vmem:[%s1226 + $0x50] sm:$0xff]
        %v1238 = vld [vmem:[%s1226 + $0x58] sm:$0xff]
        %v1239 = vld [vmem:[%s1226 + $0x60] sm:$0xff]
        %v1240 = vld [vmem:[%s1226 + $0x68] sm:$0xff]
        %v1241 = vld [vmem:[%s1226 + $0x70] sm:$0xff]
        %v1242 = vld [vmem:[%s1226 + $0x78] sm:$0xff]
        %v1243 = vld [vmem:[%s1226 + $0x80] sm:$0xff]
        %v1244 = vld [vmem:[%s1226 + $0x88] sm:$0xff]
        %v1245 = vld [vmem:[%s1226 + $0x90] sm:$0xff]
        %v1246 = vld [vmem:[%s1226 + $0x98] sm:$0xff]
        %v1247 = vld [vmem:[%s1226 + $0xa0] sm:$0xff]
        %v1248 = vld [vmem:[%s1226 + $0xa8] sm:$0xff]
        %v1249 = vld [vmem:[%s1226 + $0xb0] sm:$0xff]
        %v1250 = vld [vmem:[%s1226 + $0xb8] sm:$0xff]
        %v1251 = vld [vmem:[%s1226 + $0xc0] sm:$0xff]
        %v1252 = vld [vmem:[%s1226 + $0xc8] sm:$0xff]
        %v1253 = vld [vmem:[%s1226 + $0xd0] sm:$0xff]
        %v1254 = vld [vmem:[%s1226 + $0xd8] sm:$0xff]
        %v1255 = vld [vmem:[%s1226 + $0xe0] sm:$0xff]
        %v1256 = vld [vmem:[%s1226 + $0xe8] sm:$0xff]
        %v1257 = vld [vmem:[%s1226 + $0xf0] sm:$0xff]
        %v1258 = vld [vmem:[%s1226 + $0xf8] sm:$0xff]
        %v1259 = vld [vmem:[%s1226 + $0x100] sm:$0xff]
        %v1260 = vld [vmem:[%s1226 + $0x108] sm:$0xff]
        %v1261 = vld [vmem:[%s1226 + $0x110] sm:$0xff]
        %v1262 = vld [vmem:[%s1226 + $0x118] sm:$0xff]
        %v1263 = vld [vmem:[%s1226 + $0x120] sm:$0xff]
        %v1264 = vld [vmem:[%s1226 + $0x128] sm:$0xff]
        %v1265 = vld [vmem:[%s1226 + $0x130] sm:$0xff]
        %v1266 = vld [vmem:[%s1226 + $0x138] sm:$0xff]
        %v1267 = vld [vmem:[%s1226 + $0x140] sm:$0xff]
        %v1268 = vld [vmem:[%s1226 + $0x148] sm:$0xff]
        %v1269 = vld [vmem:[%s1226 + $0x150] sm:$0xff]
        %v1270 = vld [vmem:[%s1226 + $0x158] sm:$0xff]
        %v1271 = vld [vmem:[%s1226 + $0x160] sm:$0xff]
        %v1272 = vld [vmem:[%s1226 + $0x168] sm:$0xff]
        %v1273 = vld [vmem:[%s1226 + $0x170] sm:$0xff]
        %v1274 = vld [vmem:[%s1226 + $0x178] sm:$0xff]
        %v1275 = vld [vmem:[%s1226 + $0x180] sm:$0xff]
        %v1276 = vld [vmem:[%s1226 + $0x188] sm:$0xff]
        %v1277 = vld [vmem:[%s1226 + $0x190] sm:$0xff]
        %v1278 = vld [vmem:[%s1226 + $0x198] sm:$0xff]
        %v1279 = vld [vmem:[%s1226 + $0x1a0] sm:$0xff]
        %v1280 = vld [vmem:[%s1226 + $0x1a8] sm:$0xff]
        %v1281 = vld [vmem:[%s1226 + $0x1b0] sm:$0xff]
        %v1282 = vld [vmem:[%s1226 + $0x1b8] sm:$0xff]
        %v1283 = vld [vmem:[%s1226 + $0x1c0] sm:$0xff]
        %v1284 = vld [vmem:[%s1226 + $0x1c8] sm:$0xff]
        %v1285 = vld [vmem:[%s1226 + $0x1d0] sm:$0xff]
        %v1286 = vld [vmem:[%s1226 + $0x1d8] sm:$0xff]
        %v1287 = vld [vmem:[%s1226 + $0x1e0] sm:$0xff]
        %v1288 = vld [vmem:[%s1226 + $0x1e8] sm:$0xff]
        %v1289 = vld [vmem:[%s1226 + $0x1f0] sm:$0xff]
        %v1290 = vld [vmem:[%s1226 + $0x1f8] sm:$0xff]
        %v1333 = vunpack.c.l.b16 %v1184
        %v1334 = vunpack.c.h.b16 %v1184
        %v1335 = vunpack.c.l.b16 %v1185
        %v1336 = vunpack.c.h.b16 %v1185
        %v1337 = vunpack.c.l.b16 %v1186
        %v1338 = vunpack.c.h.b16 %v1186
        %v1339 = vunpack.c.l.b16 %v1187
        %v1340 = vunpack.c.h.b16 %v1187
        %v1341 = vunpack.c.l.b16 %v1188
        %v1342 = vunpack.c.h.b16 %v1188
        %v1343 = vunpack.c.l.b16 %v1189
        %v1344 = vunpack.c.h.b16 %v1189
        %v1345 = vunpack.c.l.b16 %v1190
        %v1346 = vunpack.c.h.b16 %v1190
        %v1347 = vunpack.c.l.b16 %v1191
        %v1348 = vunpack.c.h.b16 %v1191
        %v1349 = vunpack.c.l.b16 %v1192
        %v1350 = vunpack.c.h.b16 %v1192
        %v1351 = vunpack.c.l.b16 %v1193
        %v1352 = vunpack.c.h.b16 %v1193
        %v1353 = vunpack.c.l.b16 %v1194
        %v1354 = vunpack.c.h.b16 %v1194
        %v1355 = vunpack.c.l.b16 %v1195
        %v1356 = vunpack.c.h.b16 %v1195
        %v1357 = vunpack.c.l.b16 %v1196
        %v1358 = vunpack.c.h.b16 %v1196
        %v1359 = vunpack.c.l.b16 %v1197
        %v1360 = vunpack.c.h.b16 %v1197
        %v1361 = vunpack.c.l.b16 %v1198
        %v1362 = vunpack.c.h.b16 %v1198
        %v1363 = vunpack.c.l.b16 %v1199
        %v1364 = vunpack.c.h.b16 %v1199
        %v1365 = vunpack.c.l.b16 %v1200
        %v1366 = vunpack.c.h.b16 %v1200
        %v1367 = vunpack.c.l.b16 %v1201
        %v1368 = vunpack.c.h.b16 %v1201
        %v1369 = vunpack.c.l.b16 %v1202
        %v1370 = vunpack.c.h.b16 %v1202
        %v1371 = vunpack.c.l.b16 %v1203
        %v1372 = vunpack.c.h.b16 %v1203
        %v1373 = vunpack.c.l.b16 %v1204
        %v1374 = vunpack.c.h.b16 %v1204
        %v1375 = vunpack.c.l.b16 %v1205
        %v1376 = vunpack.c.h.b16 %v1205
        %v1377 = vunpack.c.l.b16 %v1206
        %v1378 = vunpack.c.h.b16 %v1206
        %v1379 = vunpack.c.l.b16 %v1207
        %v1380 = vunpack.c.h.b16 %v1207
        %v1381 = vunpack.c.l.b16 %v1208
        %v1382 = vunpack.c.h.b16 %v1208
        %v1383 = vunpack.c.l.b16 %v1209
        %v1384 = vunpack.c.h.b16 %v1209
        %v1385 = vunpack.c.l.b16 %v1210
        %v1386 = vunpack.c.h.b16 %v1210
        %v1387 = vunpack.c.l.b16 %v1211
        %v1388 = vunpack.c.h.b16 %v1211
        %v1389 = vunpack.c.l.b16 %v1212
        %v1390 = vunpack.c.h.b16 %v1212
        %v1391 = vunpack.c.l.b16 %v1213
        %v1392 = vunpack.c.h.b16 %v1213
        %v1393 = vunpack.c.l.b16 %v1214
        %v1394 = vunpack.c.h.b16 %v1214
        %v1395 = vunpack.c.l.b16 %v1215
        %v1396 = vunpack.c.h.b16 %v1215
        %v1397 = vunpack.c.l.b16 %v1216
        %v1398 = vunpack.c.h.b16 %v1216
        %v1399 = vunpack.c.l.b16 %v1217
        %v1400 = vunpack.c.h.b16 %v1217
        %v1401 = vunpack.c.l.b16 %v1218
        %v1402 = vunpack.c.h.b16 %v1218
        %v1403 = vunpack.c.l.b16 %v1219
        %v1404 = vunpack.c.h.b16 %v1219
        %v1405 = vunpack.c.l.b16 %v1220
        %v1406 = vunpack.c.h.b16 %v1220
        %v1407 = vunpack.c.l.b16 %v1221
        %v1408 = vunpack.c.h.b16 %v1221
        %v1409 = vunpack.c.l.b16 %v1222
        %v1410 = vunpack.c.h.b16 %v1222
        %v1411 = vunpack.c.l.b16 %v1223
        %v1412 = vunpack.c.h.b16 %v1223
        %v1413 = vunpack.c.l.b16 %v1224
        %v1414 = vunpack.c.h.b16 %v1224
        %v1415 = vunpack.c.l.b16 %v1225
        %v1416 = vunpack.c.h.b16 %v1225
        %v1417 = vpack.c.b16 %v1337, %v1333
        %v1418 = vpack.c.b16 %v1338, %v1334
        %v1419 = vpack.c.b16 %v1339, %v1335
        %v1420 = vpack.c.b16 %v1340, %v1336
        %v1421 = vpack.c.b16 %v1345, %v1341
        %v1422 = vpack.c.b16 %v1346, %v1342
        %v1423 = vpack.c.b16 %v1347, %v1343
        %v1424 = vpack.c.b16 %v1348, %v1344
        %v1425 = vpack.c.b16 %v1353, %v1349
        %v1426 = vpack.c.b16 %v1354, %v1350
        %v1427 = vpack.c.b16 %v1355, %v1351
        %v1428 = vpack.c.b16 %v1356, %v1352
        %v1429 = vpack.c.b16 %v1361, %v1357
        %v1430 = vpack.c.b16 %v1362, %v1358
        %v1431 = vpack.c.b16 %v1363, %v1359
        %v1432 = vpack.c.b16 %v1364, %v1360
        %v1433 = vpack.c.b16 %v1369, %v1365
        %v1434 = vpack.c.b16 %v1370, %v1366
        %v1435 = vpack.c.b16 %v1371, %v1367
        %v1436 = vpack.c.b16 %v1372, %v1368
        %v1437 = vpack.c.b16 %v1377, %v1373
        %v1438 = vpack.c.b16 %v1378, %v1374
        %v1439 = vpack.c.b16 %v1379, %v1375
        %v1440 = vpack.c.b16 %v1380, %v1376
        %v1441 = vpack.c.b16 %v1385, %v1381
        %v1442 = vpack.c.b16 %v1386, %v1382
        %v1443 = vpack.c.b16 %v1387, %v1383
        %v1444 = vpack.c.b16 %v1388, %v1384
        %v1445 = vpack.c.b16 %v1393, %v1389
        %v1446 = vpack.c.b16 %v1394, %v1390
        %v1447 = vpack.c.b16 %v1395, %v1391
        %v1448 = vpack.c.b16 %v1396, %v1392
        %v1449 = vpack.c.b16 %v1401, %v1397
        %v1450 = vpack.c.b16 %v1402, %v1398
        %v1451 = vpack.c.b16 %v1403, %v1399
        %v1452 = vpack.c.b16 %v1404, %v1400
        %v1453 = vpack.c.b16 %v1409, %v1405
        %v1454 = vpack.c.b16 %v1410, %v1406
        %v1455 = vpack.c.b16 %v1411, %v1407
        %v1456 = vpack.c.b16 %v1412, %v1408
        %v1457 = vpack.c.b16 %v1413, %v1413
        %v1458 = vpack.c.b16 %v1414, %v1414
        %v1459 = vpack.c.b16 %v1415, %v1415
        %v1460 = vpack.c.b16 %v1416, %v1416
        %v1462 = vshrl.u32 %v1417, 16
        %v1464 = vshll.u32 %v1417, 16
        %v1466 = vrot.slane %v1464, 1
        %v1467 = vor.u32 %v1462, %v1466
        %v1469 = vshll.u32 %v1421, 16
        %v1471 = vrot.slane %v1469, 1
        %v1472 = vsel %vm813, %v1467, %v1471
        %v1474 = vshrl.u32 %v1418, 16
        %v1476 = vshll.u32 %v1418, 16
        %v1478 = vrot.slane %v1476, 1
        %v1479 = vor.u32 %v1474, %v1478
        %v1481 = vshll.u32 %v1422, 16
        %v1483 = vrot.slane %v1481, 1
        %v1484 = vsel %vm813, %v1479, %v1483
        %v1486 = vshrl.u32 %v1419, 16
        %v1488 = vshll.u32 %v1419, 16
        %v1490 = vrot.slane %v1488, 1
        %v1491 = vor.u32 %v1486, %v1490
        %v1493 = vshll.u32 %v1423, 16
        %v1495 = vrot.slane %v1493, 1
        %v1496 = vsel %vm813, %v1491, %v1495
        %v1498 = vshrl.u32 %v1420, 16
        %v1500 = vshll.u32 %v1420, 16
        %v1502 = vrot.slane %v1500, 1
        %v1503 = vor.u32 %v1498, %v1502
        %v1505 = vshll.u32 %v1424, 16
        %v1507 = vrot.slane %v1505, 1
        %v1508 = vsel %vm813, %v1503, %v1507
        %v1509 = vshrl.u32 %v1421, 16
        %v1511 = vor.u32 %v1509, %v1471
        %v1513 = vshll.u32 %v1425, 16
        %v1515 = vrot.slane %v1513, 1
        %v1516 = vsel %vm813, %v1511, %v1515
        %v1517 = vshrl.u32 %v1422, 16
        %v1519 = vor.u32 %v1517, %v1483
        %v1521 = vshll.u32 %v1426, 16
        %v1523 = vrot.slane %v1521, 1
        %v1524 = vsel %vm813, %v1519, %v1523
        %v1525 = vshrl.u32 %v1423, 16
        %v1527 = vor.u32 %v1525, %v1495
        %v1529 = vshll.u32 %v1427, 16
        %v1531 = vrot.slane %v1529, 1
        %v1532 = vsel %vm813, %v1527, %v1531
        %v1533 = vshrl.u32 %v1424, 16
        %v1535 = vor.u32 %v1533, %v1507
        %v1537 = vshll.u32 %v1428, 16
        %v1539 = vrot.slane %v1537, 1
        %v1540 = vsel %vm813, %v1535, %v1539
        %v1541 = vshrl.u32 %v1425, 16
        %v1543 = vor.u32 %v1541, %v1515
        %v1545 = vshll.u32 %v1429, 16
        %v1547 = vrot.slane %v1545, 1
        %v1548 = vsel %vm813, %v1543, %v1547
        %v1549 = vshrl.u32 %v1426, 16
        %v1551 = vor.u32 %v1549, %v1523
        %v1553 = vshll.u32 %v1430, 16
        %v1555 = vrot.slane %v1553, 1
        %v1556 = vsel %vm813, %v1551, %v1555
        %v1557 = vshrl.u32 %v1427, 16
        %v1559 = vor.u32 %v1557, %v1531
        %v1561 = vshll.u32 %v1431, 16
        %v1563 = vrot.slane %v1561, 1
        %v1564 = vsel %vm813, %v1559, %v1563
        %v1565 = vshrl.u32 %v1428, 16
        %v1567 = vor.u32 %v1565, %v1539
        %v1569 = vshll.u32 %v1432, 16
        %v1571 = vrot.slane %v1569, 1
        %v1572 = vsel %vm813, %v1567, %v1571
        %v1573 = vshrl.u32 %v1429, 16
        %v1575 = vor.u32 %v1573, %v1547
        %v1577 = vshll.u32 %v1433, 16
        %v1579 = vrot.slane %v1577, 1
        %v1580 = vsel %vm813, %v1575, %v1579
        %v1581 = vshrl.u32 %v1430, 16
        %v1583 = vor.u32 %v1581, %v1555
        %v1585 = vshll.u32 %v1434, 16
        %v1587 = vrot.slane %v1585, 1
        %v1588 = vsel %vm813, %v1583, %v1587
        %v1589 = vshrl.u32 %v1431, 16
        %v1591 = vor.u32 %v1589, %v1563
        %v1593 = vshll.u32 %v1435, 16
        %v1595 = vrot.slane %v1593, 1
        %v1596 = vsel %vm813, %v1591, %v1595
        %v1597 = vshrl.u32 %v1432, 16
        %v1599 = vor.u32 %v1597, %v1571
        %v1601 = vshll.u32 %v1436, 16
        %v1603 = vrot.slane %v1601, 1
        %v1604 = vsel %vm813, %v1599, %v1603
        %v1605 = vshrl.u32 %v1433, 16
        %v1607 = vor.u32 %v1605, %v1579
        %v1609 = vshll.u32 %v1437, 16
        %v1611 = vrot.slane %v1609, 1
        %v1612 = vsel %vm813, %v1607, %v1611
        %v1613 = vshrl.u32 %v1434, 16
        %v1615 = vor.u32 %v1613, %v1587
        %v1617 = vshll.u32 %v1438, 16
        %v1619 = vrot.slane %v1617, 1
        %v1620 = vsel %vm813, %v1615, %v1619
        %v1621 = vshrl.u32 %v1435, 16
        %v1623 = vor.u32 %v1621, %v1595
        %v1625 = vshll.u32 %v1439, 16
        %v1627 = vrot.slane %v1625, 1
        %v1628 = vsel %vm813, %v1623, %v1627
        %v1629 = vshrl.u32 %v1436, 16
        %v1631 = vor.u32 %v1629, %v1603
        %v1633 = vshll.u32 %v1440, 16
        %v1635 = vrot.slane %v1633, 1
        %v1636 = vsel %vm813, %v1631, %v1635
        %v1637 = vshrl.u32 %v1437, 16
        %v1639 = vor.u32 %v1637, %v1611
        %v1641 = vshll.u32 %v1441, 16
        %v1643 = vrot.slane %v1641, 1
        %v1644 = vsel %vm813, %v1639, %v1643
        %v1645 = vshrl.u32 %v1438, 16
        %v1647 = vor.u32 %v1645, %v1619
        %v1649 = vshll.u32 %v1442, 16
        %v1651 = vrot.slane %v1649, 1
        %v1652 = vsel %vm813, %v1647, %v1651
        %v1653 = vshrl.u32 %v1439, 16
        %v1655 = vor.u32 %v1653, %v1627
        %v1657 = vshll.u32 %v1443, 16
        %v1659 = vrot.slane %v1657, 1
        %v1660 = vsel %vm813, %v1655, %v1659
        %v1661 = vshrl.u32 %v1440, 16
        %v1663 = vor.u32 %v1661, %v1635
        %v1665 = vshll.u32 %v1444, 16
        %v1667 = vrot.slane %v1665, 1
        %v1668 = vsel %vm813, %v1663, %v1667
        %v1669 = vshrl.u32 %v1441, 16
        %v1671 = vor.u32 %v1669, %v1643
        %v1673 = vshll.u32 %v1445, 16
        %v1675 = vrot.slane %v1673, 1
        %v1676 = vsel %vm813, %v1671, %v1675
        %v1677 = vshrl.u32 %v1442, 16
        %v1679 = vor.u32 %v1677, %v1651
        %v1681 = vshll.u32 %v1446, 16
        %v1683 = vrot.slane %v1681, 1
        %v1684 = vsel %vm813, %v1679, %v1683
        %v1685 = vshrl.u32 %v1443, 16
        %v1687 = vor.u32 %v1685, %v1659
        %v1689 = vshll.u32 %v1447, 16
        %v1691 = vrot.slane %v1689, 1
        %v1692 = vsel %vm813, %v1687, %v1691
        %v1693 = vshrl.u32 %v1444, 16
        %v1695 = vor.u32 %v1693, %v1667
        %v1697 = vshll.u32 %v1448, 16
        %v1699 = vrot.slane %v1697, 1
        %v1700 = vsel %vm813, %v1695, %v1699
        %v1701 = vshrl.u32 %v1445, 16
        %v1703 = vor.u32 %v1701, %v1675
        %v1705 = vshll.u32 %v1449, 16
        %v1707 = vrot.slane %v1705, 1
        %v1708 = vsel %vm813, %v1703, %v1707
        %v1709 = vshrl.u32 %v1446, 16
        %v1711 = vor.u32 %v1709, %v1683
        %v1713 = vshll.u32 %v1450, 16
        %v1715 = vrot.slane %v1713, 1
        %v1716 = vsel %vm813, %v1711, %v1715
        %v1717 = vshrl.u32 %v1447, 16
        %v1719 = vor.u32 %v1717, %v1691
        %v1721 = vshll.u32 %v1451, 16
        %v1723 = vrot.slane %v1721, 1
        %v1724 = vsel %vm813, %v1719, %v1723
        %v1725 = vshrl.u32 %v1448, 16
        %v1727 = vor.u32 %v1725, %v1699
        %v1729 = vshll.u32 %v1452, 16
        %v1731 = vrot.slane %v1729, 1
        %v1732 = vsel %vm813, %v1727, %v1731
        %v1733 = vshrl.u32 %v1449, 16
        %v1735 = vor.u32 %v1733, %v1707
        %v1737 = vshll.u32 %v1453, 16
        %v1739 = vrot.slane %v1737, 1
        %v1740 = vsel %vm813, %v1735, %v1739
        %v1741 = vshrl.u32 %v1450, 16
        %v1743 = vor.u32 %v1741, %v1715
        %v1745 = vshll.u32 %v1454, 16
        %v1747 = vrot.slane %v1745, 1
        %v1748 = vsel %vm813, %v1743, %v1747
        %v1749 = vshrl.u32 %v1451, 16
        %v1751 = vor.u32 %v1749, %v1723
        %v1753 = vshll.u32 %v1455, 16
        %v1755 = vrot.slane %v1753, 1
        %v1756 = vsel %vm813, %v1751, %v1755
        %v1757 = vshrl.u32 %v1452, 16
        %v1759 = vor.u32 %v1757, %v1731
        %v1761 = vshll.u32 %v1456, 16
        %v1763 = vrot.slane %v1761, 1
        %v1764 = vsel %vm813, %v1759, %v1763
        %v1765 = vshrl.u32 %v1453, 16
        %v1767 = vor.u32 %v1765, %v1739
        %v1769 = vshll.u32 %v1457, 16
        %v1771 = vrot.slane %v1769, 1
        %v1772 = vsel %vm813, %v1767, %v1771
        %v1773 = vshrl.u32 %v1454, 16
        %v1775 = vor.u32 %v1773, %v1747
        %v1777 = vshll.u32 %v1458, 16
        %v1779 = vrot.slane %v1777, 1
        %v1780 = vsel %vm813, %v1775, %v1779
        %v1781 = vshrl.u32 %v1455, 16
        %v1783 = vor.u32 %v1781, %v1755
        %v1785 = vshll.u32 %v1459, 16
        %v1787 = vrot.slane %v1785, 1
        %v1788 = vsel %vm813, %v1783, %v1787
        %v1789 = vshrl.u32 %v1456, 16
        %v1791 = vor.u32 %v1789, %v1763
        %v1793 = vshll.u32 %v1460, 16
        %v1795 = vrot.slane %v1793, 1
        %v1796 = vsel %vm813, %v1791, %v1795
        %v1901 = vunpack.c.l.b16 %v1227
        %v1902 = vunpack.c.h.b16 %v1227
        %v1903 = vunpack.c.l.b16 %v1228
        %v1904 = vunpack.c.h.b16 %v1228
        %v1905 = vunpack.c.l.b16 %v1229
        %v1906 = vunpack.c.h.b16 %v1229
        %v1907 = vunpack.c.l.b16 %v1230
        %v1908 = vunpack.c.h.b16 %v1230
        %v1909 = vunpack.c.l.b16 %v1231
        %v1910 = vunpack.c.h.b16 %v1231
        %v1911 = vunpack.c.l.b16 %v1232
        %v1912 = vunpack.c.h.b16 %v1232
        %v1913 = vunpack.c.l.b16 %v1233
        %v1914 = vunpack.c.h.b16 %v1233
        %v1915 = vunpack.c.l.b16 %v1234
        %v1916 = vunpack.c.h.b16 %v1234
        %v1917 = vunpack.c.l.b16 %v1235
        %v1918 = vunpack.c.h.b16 %v1235
        %v1919 = vunpack.c.l.b16 %v1236
        %v1920 = vunpack.c.h.b16 %v1236
        %v1921 = vunpack.c.l.b16 %v1237
        %v1922 = vunpack.c.h.b16 %v1237
        %v1923 = vunpack.c.l.b16 %v1238
        %v1924 = vunpack.c.h.b16 %v1238
        %v1925 = vunpack.c.l.b16 %v1239
        %v1926 = vunpack.c.h.b16 %v1239
        %v1927 = vunpack.c.l.b16 %v1240
        %v1928 = vunpack.c.h.b16 %v1240
        %v1929 = vunpack.c.l.b16 %v1241
        %v1930 = vunpack.c.h.b16 %v1241
        %v1931 = vunpack.c.l.b16 %v1242
        %v1932 = vunpack.c.h.b16 %v1242
        %v1933 = vunpack.c.l.b16 %v1243
        %v1934 = vunpack.c.h.b16 %v1243
        %v1935 = vunpack.c.l.b16 %v1244
        %v1936 = vunpack.c.h.b16 %v1244
        %v1937 = vunpack.c.l.b16 %v1245
        %v1938 = vunpack.c.h.b16 %v1245
        %v1939 = vunpack.c.l.b16 %v1246
        %v1940 = vunpack.c.h.b16 %v1246
        %v1941 = vunpack.c.l.b16 %v1247
        %v1942 = vunpack.c.h.b16 %v1247
        %v1943 = vunpack.c.l.b16 %v1248
        %v1944 = vunpack.c.h.b16 %v1248
        %v1945 = vunpack.c.l.b16 %v1249
        %v1946 = vunpack.c.h.b16 %v1249
        %v1947 = vunpack.c.l.b16 %v1250
        %v1948 = vunpack.c.h.b16 %v1250
        %v1949 = vunpack.c.l.b16 %v1251
        %v1950 = vunpack.c.h.b16 %v1251
        %v1951 = vunpack.c.l.b16 %v1252
        %v1952 = vunpack.c.h.b16 %v1252
        %v1953 = vunpack.c.l.b16 %v1253
        %v1954 = vunpack.c.h.b16 %v1253
        %v1955 = vunpack.c.l.b16 %v1254
        %v1956 = vunpack.c.h.b16 %v1254
        %v1957 = vunpack.c.l.b16 %v1255
        %v1958 = vunpack.c.h.b16 %v1255
        %v1959 = vunpack.c.l.b16 %v1256
        %v1960 = vunpack.c.h.b16 %v1256
        %v1961 = vunpack.c.l.b16 %v1257
        %v1962 = vunpack.c.h.b16 %v1257
        %v1963 = vunpack.c.l.b16 %v1258
        %v1964 = vunpack.c.h.b16 %v1258
        %v1965 = vunpack.c.l.b16 %v1259
        %v1966 = vunpack.c.h.b16 %v1259
        %v1967 = vunpack.c.l.b16 %v1260
        %v1968 = vunpack.c.h.b16 %v1260
        %v1969 = vunpack.c.l.b16 %v1261
        %v1970 = vunpack.c.h.b16 %v1261
        %v1971 = vunpack.c.l.b16 %v1262
        %v1972 = vunpack.c.h.b16 %v1262
        %v1973 = vunpack.c.l.b16 %v1263
        %v1974 = vunpack.c.h.b16 %v1263
        %v1975 = vunpack.c.l.b16 %v1264
        %v1976 = vunpack.c.h.b16 %v1264
        %v1977 = vunpack.c.l.b16 %v1265
        %v1978 = vunpack.c.h.b16 %v1265
        %v1979 = vunpack.c.l.b16 %v1266
        %v1980 = vunpack.c.h.b16 %v1266
        %v1981 = vunpack.c.l.b16 %v1267
        %v1982 = vunpack.c.h.b16 %v1267
        %v1983 = vunpack.c.l.b16 %v1268
        %v1984 = vunpack.c.h.b16 %v1268
        %v1985 = vunpack.c.l.b16 %v1269
        %v1986 = vunpack.c.h.b16 %v1269
        %v1987 = vunpack.c.l.b16 %v1270
        %v1988 = vunpack.c.h.b16 %v1270
        %v1989 = vunpack.c.l.b16 %v1271
        %v1990 = vunpack.c.h.b16 %v1271
        %v1991 = vunpack.c.l.b16 %v1272
        %v1992 = vunpack.c.h.b16 %v1272
        %v1993 = vunpack.c.l.b16 %v1273
        %v1994 = vunpack.c.h.b16 %v1273
        %v1995 = vunpack.c.l.b16 %v1274
        %v1996 = vunpack.c.h.b16 %v1274
        %v1997 = vunpack.c.l.b16 %v1275
        %v1998 = vunpack.c.h.b16 %v1275
        %v1999 = vunpack.c.l.b16 %v1276
        %v2000 = vunpack.c.h.b16 %v1276
        %v2001 = vunpack.c.l.b16 %v1277
        %v2002 = vunpack.c.h.b16 %v1277
        %v2003 = vunpack.c.l.b16 %v1278
        %v2004 = vunpack.c.h.b16 %v1278
        %v2005 = vunpack.c.l.b16 %v1279
        %v2006 = vunpack.c.h.b16 %v1279
        %v2007 = vunpack.c.l.b16 %v1280
        %v2008 = vunpack.c.h.b16 %v1280
        %v2009 = vunpack.c.l.b16 %v1281
        %v2010 = vunpack.c.h.b16 %v1281
        %v2011 = vunpack.c.l.b16 %v1282
        %v2012 = vunpack.c.h.b16 %v1282
        %v2013 = vunpack.c.l.b16 %v1283
        %v2014 = vunpack.c.h.b16 %v1283
        %v2015 = vunpack.c.l.b16 %v1284
        %v2016 = vunpack.c.h.b16 %v1284
        %v2017 = vunpack.c.l.b16 %v1285
        %v2018 = vunpack.c.h.b16 %v1285
        %v2019 = vunpack.c.l.b16 %v1286
        %v2020 = vunpack.c.h.b16 %v1286
        %v2021 = vunpack.c.l.b16 %v1287
        %v2022 = vunpack.c.h.b16 %v1287
        %v2023 = vunpack.c.l.b16 %v1288
        %v2024 = vunpack.c.h.b16 %v1288
        %v2025 = vunpack.c.l.b16 %v1289
        %v2026 = vunpack.c.h.b16 %v1289
        %v2027 = vunpack.c.l.b16 %v1290
        %v2028 = vunpack.c.h.b16 %v1290
        %v2029 = vpack.c.b16 %v1903, %v1901
        %v2030 = vpack.c.b16 %v1904, %v1902
        %v2031 = vpack.c.b16 %v1907, %v1905
        %v2032 = vpack.c.b16 %v1908, %v1906
        %v2033 = vpack.c.b16 %v1911, %v1909
        %v2034 = vpack.c.b16 %v1912, %v1910
        %v2035 = vpack.c.b16 %v1915, %v1913
        %v2036 = vpack.c.b16 %v1916, %v1914
        %v2037 = vpack.c.b16 %v1919, %v1917
        %v2038 = vpack.c.b16 %v1920, %v1918
        %v2039 = vpack.c.b16 %v1923, %v1921
        %v2040 = vpack.c.b16 %v1924, %v1922
        %v2041 = vpack.c.b16 %v1927, %v1925
        %v2042 = vpack.c.b16 %v1928, %v1926
        %v2043 = vpack.c.b16 %v1931, %v1929
        %v2044 = vpack.c.b16 %v1932, %v1930
        %v2045 = vpack.c.b16 %v1935, %v1933
        %v2046 = vpack.c.b16 %v1936, %v1934
        %v2047 = vpack.c.b16 %v1939, %v1937
        %v2048 = vpack.c.b16 %v1940, %v1938
        %v2049 = vpack.c.b16 %v1943, %v1941
        %v2050 = vpack.c.b16 %v1944, %v1942
        %v2051 = vpack.c.b16 %v1947, %v1945
        %v2052 = vpack.c.b16 %v1948, %v1946
        %v2053 = vpack.c.b16 %v1951, %v1949
        %v2054 = vpack.c.b16 %v1952, %v1950
        %v2055 = vpack.c.b16 %v1955, %v1953
        %v2056 = vpack.c.b16 %v1956, %v1954
        %v2057 = vpack.c.b16 %v1959, %v1957
        %v2058 = vpack.c.b16 %v1960, %v1958
        %v2059 = vpack.c.b16 %v1963, %v1961
        %v2060 = vpack.c.b16 %v1964, %v1962
        %v2061 = vpack.c.b16 %v1967, %v1965
        %v2062 = vpack.c.b16 %v1968, %v1966
        %v2063 = vpack.c.b16 %v1971, %v1969
        %v2064 = vpack.c.b16 %v1972, %v1970
        %v2065 = vpack.c.b16 %v1975, %v1973
        %v2066 = vpack.c.b16 %v1976, %v1974
        %v2067 = vpack.c.b16 %v1979, %v1977
        %v2068 = vpack.c.b16 %v1980, %v1978
        %v2069 = vpack.c.b16 %v1983, %v1981
        %v2070 = vpack.c.b16 %v1984, %v1982
        %v2071 = vpack.c.b16 %v1987, %v1985
        %v2072 = vpack.c.b16 %v1988, %v1986
        %v2073 = vpack.c.b16 %v1991, %v1989
        %v2074 = vpack.c.b16 %v1992, %v1990
        %v2075 = vpack.c.b16 %v1995, %v1993
        %v2076 = vpack.c.b16 %v1996, %v1994
        %v2077 = vpack.c.b16 %v1999, %v1997
        %v2078 = vpack.c.b16 %v2000, %v1998
        %v2079 = vpack.c.b16 %v2003, %v2001
        %v2080 = vpack.c.b16 %v2004, %v2002
        %v2081 = vpack.c.b16 %v2007, %v2005
        %v2082 = vpack.c.b16 %v2008, %v2006
        %v2083 = vpack.c.b16 %v2011, %v2009
        %v2084 = vpack.c.b16 %v2012, %v2010
        %v2085 = vpack.c.b16 %v2015, %v2013
        %v2086 = vpack.c.b16 %v2016, %v2014
        %v2087 = vpack.c.b16 %v2019, %v2017
        %v2088 = vpack.c.b16 %v2020, %v2018
        %v2089 = vpack.c.b16 %v2023, %v2021
        %v2090 = vpack.c.b16 %v2024, %v2022
        %v2091 = vpack.c.b16 %v2027, %v2025
        %v2092 = vpack.c.b16 %v2028, %v2026
        %2157 = vmatprep.subr.bf16.mxu0 %v2030
        %2158 = vmatpush1.bf16.msra.mxu0 %v2029
        %2159 = vmatprep.subr.bf16.mxu0 %v2032
        %2160 = vmatpush1.bf16.msra.mxu0 %v2031
        %2161 = vmatprep.subr.bf16.mxu0 %v2034
        %2162 = vmatpush1.bf16.msra.mxu0 %v2033
        %2163 = vmatprep.subr.bf16.mxu0 %v2036
        %2164 = vmatpush1.bf16.msra.mxu0 %v2035
        %2165 = vmatprep.subr.bf16.mxu0 %v2038
        %2166 = vmatpush1.bf16.msra.mxu0 %v2037
        %2167 = vmatprep.subr.bf16.mxu0 %v2040
        %2168 = vmatpush1.bf16.msra.mxu0 %v2039
        %2169 = vmatprep.subr.bf16.mxu0 %v2042
        %2170 = vmatpush1.bf16.msra.mxu0 %v2041
        %2171 = vmatprep.subr.bf16.mxu0 %v2044
        %2172 = vmatpush1.bf16.msra.mxu0 %v2043
        %2173 = vmatprep.subr.bf16.mxu0 %v2046
        %2174 = vmatpush1.bf16.msra.mxu0 %v2045
        %2175 = vmatprep.subr.bf16.mxu0 %v2048
        %2176 = vmatpush1.bf16.msra.mxu0 %v2047
        %2177 = vmatprep.subr.bf16.mxu0 %v2050
        %2178 = vmatpush1.bf16.msra.mxu0 %v2049
        %2179 = vmatprep.subr.bf16.mxu0 %v2052
        %2180 = vmatpush1.bf16.msra.mxu0 %v2051
        %2181 = vmatprep.subr.bf16.mxu0 %v2054
        %2182 = vmatpush1.bf16.msra.mxu0 %v2053
        %2183 = vmatprep.subr.bf16.mxu0 %v2056
        %2184 = vmatpush1.bf16.msra.mxu0 %v2055
        %2185 = vmatprep.subr.bf16.mxu0 %v2058
        %2186 = vmatpush1.bf16.msra.mxu0 %v2057
        %2187 = vmatprep.subr.bf16.mxu0 %v2060
        %2188 = vmatpush1.bf16.msra.mxu0 %v2059
        %2189 = vmatprep.mubr.bf16.mxu0 %v1484
        %2190 = vmatmul.mubr.bf16.gmra.mrb[0].mxu0 %v1472
        %v2191 = vpop.f32.mrb[0].mxu0
        %v2192 = vadd.f32 0.0, %v2191
        %v2193 = vpop.f32.mrb[0].mxu0
        %v2194 = vadd.f32 0.0, %v2193
        %v2195 = vpop.f32.mrb[0].mxu0
        %v2196 = vadd.f32 0.0, %v2195
        %v2197 = vpop.f32.mrb[0].mxu0
        %v2198 = vadd.f32 0.0, %v2197
        %2199 = vmatprep.mubr.bf16.mxu0 %v1524
        %2200 = vmatmul.mubr.bf16.gmra.mrb[0].mxu0 %v1516
        %v2201 = vpop.f32.mrb[0].mxu0
        %v2202 = vadd.f32 0.0, %v2201
        %v2203 = vpop.f32.mrb[0].mxu0
        %v2204 = vadd.f32 0.0, %v2203
        %v2205 = vpop.f32.mrb[0].mxu0
        %v2206 = vadd.f32 0.0, %v2205
        %v2207 = vpop.f32.mrb[0].mxu0
        %v2208 = vadd.f32 0.0, %v2207
        %2209 = vmatprep.mubr.bf16.mxu0 %v1556
        %2210 = vmatmul.mubr.bf16.gmra.mrb[0].mxu0 %v1548
        %v2211 = vpop.f32.mrb[0].mxu0
        %v2212 = vadd.f32 0.0, %v2211
        %v2213 = vpop.f32.mrb[0].mxu0
        %v2214 = vadd.f32 0.0, %v2213
        %v2215 = vpop.f32.mrb[0].mxu0
        %v2216 = vadd.f32 0.0, %v2215
        %v2217 = vpop.f32.mrb[0].mxu0
        %v2218 = vadd.f32 0.0, %v2217
        %2219 = vmatprep.mubr.bf16.mxu0 %v1588
        %2220 = vmatmul.mubr.bf16.gmra.mrb[0].mxu0 %v1580
        %v2221 = vpop.f32.mrb[0].mxu0
        %v2222 = vadd.f32 0.0, %v2221
        %v2223 = vpop.f32.mrb[0].mxu0
        %v2224 = vadd.f32 0.0, %v2223
        %v2225 = vpop.f32.mrb[0].mxu0
        %v2226 = vadd.f32 0.0, %v2225
        %v2227 = vpop.f32.mrb[0].mxu0
        %v2228 = vadd.f32 0.0, %v2227
        %2229 = vmatprep.mubr.bf16.mxu0 %v1620
        %2230 = vmatmul.mubr.bf16.gmra.mrb[0].mxu0 %v1612
        %v2231 = vpop.f32.mrb[0].mxu0
        %v2232 = vadd.f32 0.0, %v2231
        %v2233 = vpop.f32.mrb[0].mxu0
        %v2234 = vadd.f32 0.0, %v2233
        %v2235 = vpop.f32.mrb[0].mxu0
        %v2236 = vadd.f32 0.0, %v2235
        %v2237 = vpop.f32.mrb[0].mxu0
        %v2238 = vadd.f32 0.0, %v2237
        %2239 = vmatprep.mubr.bf16.mxu0 %v1652
        %2240 = vmatmul.mubr.bf16.gmra.mrb[0].mxu0 %v1644
        %v2241 = vpop.f32.mrb[0].mxu0
        %v2242 = vadd.f32 0.0, %v2241
        %v2243 = vpop.f32.mrb[0].mxu0
        %v2244 = vadd.f32 0.0, %v2243
        %v2245 = vpop.f32.mrb[0].mxu0
        %v2246 = vadd.f32 0.0, %v2245
        %v2247 = vpop.f32.mrb[0].mxu0
        %v2248 = vadd.f32 0.0, %v2247
        %2249 = vmatprep.mubr.bf16.mxu0 %v1684
        %2250 = vmatmul.mubr.bf16.gmra.mrb[0].mxu0 %v1676
        %v2251 = vpop.f32.mrb[0].mxu0
        %v2252 = vadd.f32 0.0, %v2251
        %v2253 = vpop.f32.mrb[0].mxu0
        %v2254 = vadd.f32 0.0, %v2253
        %v2255 = vpop.f32.mrb[0].mxu0
        %v2256 = vadd.f32 0.0, %v2255
        %v2257 = vpop.f32.mrb[0].mxu0
        %v2258 = vadd.f32 0.0, %v2257
        %2259 = vmatprep.mubr.bf16.mxu0 %v1716
        %2260 = vmatmul.mubr.bf16.gmra.mrb[0].mxu0 %v1708
        %v2261 = vpop.f32.mrb[0].mxu0
        %v2262 = vadd.f32 0.0, %v2261
        %v2263 = vpop.f32.mrb[0].mxu0
        %v2264 = vadd.f32 0.0, %v2263
        %v2265 = vpop.f32.mrb[0].mxu0
        %v2266 = vadd.f32 0.0, %v2265
        %v2267 = vpop.f32.mrb[0].mxu0
        %v2268 = vadd.f32 0.0, %v2267
        %2269 = vmatprep.mubr.bf16.mxu0 %v1748
        %2270 = vmatmul.mubr.bf16.gmra.mrb[0].mxu0 %v1740
        %v2271 = vpop.f32.mrb[0].mxu0
        %v2272 = vadd.f32 0.0, %v2271
        %v2273 = vpop.f32.mrb[0].mxu0
        %v2274 = vadd.f32 0.0, %v2273
        %v2275 = vpop.f32.mrb[0].mxu0
        %v2276 = vadd.f32 0.0, %v2275
        %v2277 = vpop.f32.mrb[0].mxu0
        %v2278 = vadd.f32 0.0, %v2277
        %2279 = vmatprep.mubr.bf16.mxu0 %v1780
        %2280 = vmatmul.mubr.bf16.gmra.mrb[0].mxu0 %v1772
        %v2281 = vpop.f32.mrb[0].mxu0
        %v2282 = vadd.f32 0.0, %v2281
        %v2283 = vpop.f32.mrb[0].mxu0
        %v2284 = vadd.f32 0.0, %v2283
        %v2285 = vpop.f32.mrb[0].mxu0
        %v2286 = vadd.f32 0.0, %v2285
        %v2287 = vpop.f32.mrb[0].mxu0
        %v2288 = vadd.f32 0.0, %v2287
        %2289 = vdwg.mxu0
        %2290 = vmatprep.subr.bf16.mxu0 %v2062
        %2291 = vmatpush1.bf16.msra.mxu0 %v2061
        %2292 = vmatprep.subr.bf16.mxu0 %v2064
        %2293 = vmatpush1.bf16.msra.mxu0 %v2063
        %2294 = vmatprep.subr.bf16.mxu0 %v2066
        %2295 = vmatpush1.bf16.msra.mxu0 %v2065
        %2296 = vmatprep.subr.bf16.mxu0 %v2068
        %2297 = vmatpush1.bf16.msra.mxu0 %v2067
        %2298 = vmatprep.subr.bf16.mxu0 %v2070
        %2299 = vmatpush1.bf16.msra.mxu0 %v2069
        %2300 = vmatprep.subr.bf16.mxu0 %v2072
        %2301 = vmatpush1.bf16.msra.mxu0 %v2071
        %2302 = vmatprep.subr.bf16.mxu0 %v2074
        %2303 = vmatpush1.bf16.msra.mxu0 %v2073
        %2304 = vmatprep.subr.bf16.mxu0 %v2076
        %2305 = vmatpush1.bf16.msra.mxu0 %v2075
        %2306 = vmatprep.subr.bf16.mxu0 %v2078
        %2307 = vmatpush1.bf16.msra.mxu0 %v2077
        %2308 = vmatprep.subr.bf16.mxu0 %v2080
        %2309 = vmatpush1.bf16.msra.mxu0 %v2079
        %2310 = vmatprep.subr.bf16.mxu0 %v2082
        %2311 = vmatpush1.bf16.msra.mxu0 %v2081
        %2312 = vmatprep.subr.bf16.mxu0 %v2084
        %2313 = vmatpush1.bf16.msra.mxu0 %v2083
        %2314 = vmatprep.subr.bf16.mxu0 %v2086
        %2315 = vmatpush1.bf16.msra.mxu0 %v2085
        %2316 = vmatprep.subr.bf16.mxu0 %v2088
        %2317 = vmatpush1.bf16.msra.mxu0 %v2087
        %2318 = vmatprep.subr.bf16.mxu0 %v2090
        %2319 = vmatpush1.bf16.msra.mxu0 %v2089
        %2320 = vmatprep.subr.bf16.mxu0 %v2092
        %2321 = vmatpush1.bf16.msra.mxu0 %v2091
        %2322 = vmatprep.mubr.bf16.mxu0 %v1508
        %2323 = vmatmul.mubr.bf16.gmra.mrb[0].mxu0 %v1496
        %v2324 = vpop.f32.mrb[0].mxu0
        %v2325 = vadd.f32 %v2192, %v2324
        %v2326 = vpop.f32.mrb[0].mxu0
        %v2327 = vadd.f32 %v2194, %v2326
        %v2328 = vpop.f32.mrb[0].mxu0
        %v2329 = vadd.f32 %v2196, %v2328
        %v2330 = vpop.f32.mrb[0].mxu0
        %v2331 = vadd.f32 %v2198, %v2330
        %2332 = vmatprep.mubr.bf16.mxu0 %v1540
        %2333 = vmatmul.mubr.bf16.gmra.mrb[0].mxu0 %v1532
        %v2334 = vpop.f32.mrb[0].mxu0
        %v2335 = vadd.f32 %v2202, %v2334
        %v2336 = vpop.f32.mrb[0].mxu0
        %v2337 = vadd.f32 %v2204, %v2336
        %v2338 = vpop.f32.mrb[0].mxu0
        %v2339 = vadd.f32 %v2206, %v2338
        %v2340 = vpop.f32.mrb[0].mxu0
        %v2341 = vadd.f32 %v2208, %v2340
        %2342 = vmatprep.mubr.bf16.mxu0 %v1572
        %2343 = vmatmul.mubr.bf16.gmra.mrb[0].mxu0 %v1564
        %v2344 = vpop.f32.mrb[0].mxu0
        %v2345 = vadd.f32 %v2212, %v2344
        %v2346 = vpop.f32.mrb[0].mxu0
        %v2347 = vadd.f32 %v2214, %v2346
        %v2348 = vpop.f32.mrb[0].mxu0
        %v2349 = vadd.f32 %v2216, %v2348
        %v2350 = vpop.f32.mrb[0].mxu0
        %v2351 = vadd.f32 %v2218, %v2350
        %2352 = vmatprep.mubr.bf16.mxu0 %v1604
        %2353 = vmatmul.mubr.bf16.gmra.mrb[0].mxu0 %v1596
        %v2354 = vpop.f32.mrb[0].mxu0
        %v2355 = vadd.f32 %v2222, %v2354
        %v2356 = vpop.f32.mrb[0].mxu0
        %v2357 = vadd.f32 %v2224, %v2356
        %v2358 = vpop.f32.mrb[0].mxu0
        %v2359 = vadd.f32 %v2226, %v2358
        %v2360 = vpop.f32.mrb[0].mxu0
        %v2361 = vadd.f32 %v2228, %v2360
        %2362 = vmatprep.mubr.bf16.mxu0 %v1636
        %2363 = vmatmul.mubr.bf16.gmra.mrb[0].mxu0 %v1628
        %v2364 = vpop.f32.mrb[0].mxu0
        %v2365 = vadd.f32 %v2232, %v2364
        %v2366 = vpop.f32.mrb[0].mxu0
        %v2367 = vadd.f32 %v2234, %v2366
        %v2368 = vpop.f32.mrb[0].mxu0
        %v2369 = vadd.f32 %v2236, %v2368
        %v2370 = vpop.f32.mrb[0].mxu0
        %v2371 = vadd.f32 %v2238, %v2370
        %2372 = vmatprep.mubr.bf16.mxu0 %v1668
        %2373 = vmatmul.mubr.bf16.gmra.mrb[0].mxu0 %v1660
        %v2374 = vpop.f32.mrb[0].mxu0
        %v2375 = vadd.f32 %v2242, %v2374
        %v2376 = vpop.f32.mrb[0].mxu0
        %v2377 = vadd.f32 %v2244, %v2376
        %v2378 = vpop.f32.mrb[0].mxu0
        %v2379 = vadd.f32 %v2246, %v2378
        %v2380 = vpop.f32.mrb[0].mxu0
        %v2381 = vadd.f32 %v2248, %v2380
        %2382 = vmatprep.mubr.bf16.mxu0 %v1700
        %2383 = vmatmul.mubr.bf16.gmra.mrb[0].mxu0 %v1692
        %v2384 = vpop.f32.mrb[0].mxu0
        %v2385 = vadd.f32 %v2252, %v2384
        %v2386 = vpop.f32.mrb[0].mxu0
        %v2387 = vadd.f32 %v2254, %v2386
        %v2388 = vpop.f32.mrb[0].mxu0
        %v2389 = vadd.f32 %v2256, %v2388
        %v2390 = vpop.f32.mrb[0].mxu0
        %v2391 = vadd.f32 %v2258, %v2390
        %2392 = vmatprep.mubr.bf16.mxu0 %v1732
        %2393 = vmatmul.mubr.bf16.gmra.mrb[0].mxu0 %v1724
        %v2394 = vpop.f32.mrb[0].mxu0
        %v2395 = vadd.f32 %v2262, %v2394
        %v2396 = vpop.f32.mrb[0].mxu0
        %v2397 = vadd.f32 %v2264, %v2396
        %v2398 = vpop.f32.mrb[0].mxu0
        %v2399 = vadd.f32 %v2266, %v2398
        %v2400 = vpop.f32.mrb[0].mxu0
        %v2401 = vadd.f32 %v2268, %v2400
        %2402 = vmatprep.mubr.bf16.mxu0 %v1764
        %2403 = vmatmul.mubr.bf16.gmra.mrb[0].mxu0 %v1756
        %v2404 = vpop.f32.mrb[0].mxu0
        %v2405 = vadd.f32 %v2272, %v2404
        %v2406 = vpop.f32.mrb[0].mxu0
        %v2407 = vadd.f32 %v2274, %v2406
        %v2408 = vpop.f32.mrb[0].mxu0
        %v2409 = vadd.f32 %v2276, %v2408
        %v2410 = vpop.f32.mrb[0].mxu0
        %v2411 = vadd.f32 %v2278, %v2410
        %2412 = vmatprep.mubr.bf16.mxu0 %v1796
        %2413 = vmatmul.mubr.bf16.gmra.mrb[0].mxu0 %v1788
        %v2414 = vpop.f32.mrb[0].mxu0
        %v2415 = vadd.f32 %v2282, %v2414
        %v2416 = vpop.f32.mrb[0].mxu0
        %v2417 = vadd.f32 %v2284, %v2416
        %v2418 = vpop.f32.mrb[0].mxu0
        %v2419 = vadd.f32 %v2286, %v2418
        %v2420 = vpop.f32.mrb[0].mxu0
        %v2421 = vadd.f32 %v2288, %v2420
        %2422 = vdwg.mxu0
        %v2463 = vunpack.c.l.b16 %v1080
        %v2464 = vunpack.c.h.b16 %v1080
        %v2465 = vunpack.c.l.b16 %v1081
        %v2466 = vunpack.c.h.b16 %v1081
        %v2467 = vunpack.c.l.b16 %v1082
        %v2468 = vunpack.c.h.b16 %v1082
        %v2469 = vunpack.c.l.b16 %v1083
        %v2470 = vunpack.c.h.b16 %v1083
        %v2471 = vunpack.c.l.b16 %v1084
        %v2472 = vunpack.c.h.b16 %v1084
        %v2473 = vunpack.c.l.b16 %v1085
        %v2474 = vunpack.c.h.b16 %v1085
        %v2475 = vunpack.c.l.b16 %v1086
        %v2476 = vunpack.c.h.b16 %v1086
        %v2477 = vunpack.c.l.b16 %v1087
        %v2478 = vunpack.c.h.b16 %v1087
        %v2479 = vunpack.c.l.b16 %v1088
        %v2480 = vunpack.c.h.b16 %v1088
        %v2481 = vunpack.c.l.b16 %v1089
        %v2482 = vunpack.c.h.b16 %v1089
        %v2483 = vunpack.c.l.b16 %v1090
        %v2484 = vunpack.c.h.b16 %v1090
        %v2485 = vunpack.c.l.b16 %v1091
        %v2486 = vunpack.c.h.b16 %v1091
        %v2487 = vunpack.c.l.b16 %v1092
        %v2488 = vunpack.c.h.b16 %v1092
        %v2489 = vunpack.c.l.b16 %v1093
        %v2490 = vunpack.c.h.b16 %v1093
        %v2491 = vunpack.c.l.b16 %v1094
        %v2492 = vunpack.c.h.b16 %v1094
        %v2493 = vunpack.c.l.b16 %v1095
        %v2494 = vunpack.c.h.b16 %v1095
        %v2495 = vunpack.c.l.b16 %v1096
        %v2496 = vunpack.c.h.b16 %v1096
        %v2497 = vunpack.c.l.b16 %v1097
        %v2498 = vunpack.c.h.b16 %v1097
        %v2499 = vunpack.c.l.b16 %v1098
        %v2500 = vunpack.c.h.b16 %v1098
        %v2501 = vunpack.c.l.b16 %v1099
        %v2502 = vunpack.c.h.b16 %v1099
        %v2503 = vunpack.c.l.b16 %v1100
        %v2504 = vunpack.c.h.b16 %v1100
        %v2505 = vunpack.c.l.b16 %v1101
        %v2506 = vunpack.c.h.b16 %v1101
        %v2507 = vunpack.c.l.b16 %v1102
        %v2508 = vunpack.c.h.b16 %v1102
        %v2509 = vunpack.c.l.b16 %v1103
        %v2510 = vunpack.c.h.b16 %v1103
        %v2511 = vunpack.c.l.b16 %v1104
        %v2512 = vunpack.c.h.b16 %v1104
        %v2513 = vunpack.c.l.b16 %v1105
        %v2514 = vunpack.c.h.b16 %v1105
        %v2515 = vunpack.c.l.b16 %v1106
        %v2516 = vunpack.c.h.b16 %v1106
        %v2517 = vunpack.c.l.b16 %v1107
        %v2518 = vunpack.c.h.b16 %v1107
        %v2519 = vunpack.c.l.b16 %v1108
        %v2520 = vunpack.c.h.b16 %v1108
        %v2521 = vunpack.c.l.b16 %v1109
        %v2522 = vunpack.c.h.b16 %v1109
        %v2523 = vunpack.c.l.b16 %v1110
        %v2524 = vunpack.c.h.b16 %v1110
        %v2525 = vunpack.c.l.b16 %v1111
        %v2526 = vunpack.c.h.b16 %v1111
        %v2527 = vunpack.c.l.b16 %v1112
        %v2528 = vunpack.c.h.b16 %v1112
        %v2529 = vunpack.c.l.b16 %v1113
        %v2530 = vunpack.c.h.b16 %v1113
        %v2531 = vunpack.c.l.b16 %v1114
        %v2532 = vunpack.c.h.b16 %v1114
        %v2533 = vunpack.c.l.b16 %v1115
        %v2534 = vunpack.c.h.b16 %v1115
        %v2535 = vunpack.c.l.b16 %v1116
        %v2536 = vunpack.c.h.b16 %v1116
        %v2537 = vunpack.c.l.b16 %v1117
        %v2538 = vunpack.c.h.b16 %v1117
        %v2539 = vunpack.c.l.b16 %v1118
        %v2540 = vunpack.c.h.b16 %v1118
        %v2541 = vunpack.c.l.b16 %v1119
        %v2542 = vunpack.c.h.b16 %v1119
        %v2543 = vpack.c.b16 %v2467, %v2463
        %v2544 = vpack.c.b16 %v2468, %v2464
        %v2545 = vpack.c.b16 %v2469, %v2465
        %v2546 = vpack.c.b16 %v2470, %v2466
        %v2547 = vpack.c.b16 %v2475, %v2471
        %v2548 = vpack.c.b16 %v2476, %v2472
        %v2549 = vpack.c.b16 %v2477, %v2473
        %v2550 = vpack.c.b16 %v2478, %v2474
        %v2551 = vpack.c.b16 %v2483, %v2479
        %v2552 = vpack.c.b16 %v2484, %v2480
        %v2553 = vpack.c.b16 %v2485, %v2481
        %v2554 = vpack.c.b16 %v2486, %v2482
        %v2555 = vpack.c.b16 %v2491, %v2487
        %v2556 = vpack.c.b16 %v2492, %v2488
        %v2557 = vpack.c.b16 %v2493, %v2489
        %v2558 = vpack.c.b16 %v2494, %v2490
        %v2559 = vpack.c.b16 %v2499, %v2495
        %v2560 = vpack.c.b16 %v2500, %v2496
        %v2561 = vpack.c.b16 %v2501, %v2497
        %v2562 = vpack.c.b16 %v2502, %v2498
        %v2563 = vpack.c.b16 %v2507, %v2503
        %v2564 = vpack.c.b16 %v2508, %v2504
        %v2565 = vpack.c.b16 %v2509, %v2505
        %v2566 = vpack.c.b16 %v2510, %v2506
        %v2567 = vpack.c.b16 %v2515, %v2511
        %v2568 = vpack.c.b16 %v2516, %v2512
        %v2569 = vpack.c.b16 %v2517, %v2513
        %v2570 = vpack.c.b16 %v2518, %v2514
        %v2571 = vpack.c.b16 %v2523, %v2519
        %v2572 = vpack.c.b16 %v2524, %v2520
        %v2573 = vpack.c.b16 %v2525, %v2521
        %v2574 = vpack.c.b16 %v2526, %v2522
        %v2575 = vpack.c.b16 %v2531, %v2527
        %v2576 = vpack.c.b16 %v2532, %v2528
        %v2577 = vpack.c.b16 %v2533, %v2529
        %v2578 = vpack.c.b16 %v2534, %v2530
        %v2579 = vpack.c.b16 %v2539, %v2535
        %v2580 = vpack.c.b16 %v2540, %v2536
        %v2581 = vpack.c.b16 %v2541, %v2537
        %v2582 = vpack.c.b16 %v2542, %v2538
        %v2687 = vunpack.c.l.b16 %v1120
        %v2688 = vunpack.c.h.b16 %v1120
        %v2689 = vunpack.c.l.b16 %v1121
        %v2690 = vunpack.c.h.b16 %v1121
        %v2691 = vunpack.c.l.b16 %v1122
        %v2692 = vunpack.c.h.b16 %v1122
        %v2693 = vunpack.c.l.b16 %v1123
        %v2694 = vunpack.c.h.b16 %v1123
        %v2695 = vunpack.c.l.b16 %v1124
        %v2696 = vunpack.c.h.b16 %v1124
        %v2697 = vunpack.c.l.b16 %v1125
        %v2698 = vunpack.c.h.b16 %v1125
        %v2699 = vunpack.c.l.b16 %v1126
        %v2700 = vunpack.c.h.b16 %v1126
        %v2701 = vunpack.c.l.b16 %v1127
        %v2702 = vunpack.c.h.b16 %v1127
        %v2703 = vunpack.c.l.b16 %v1128
        %v2704 = vunpack.c.h.b16 %v1128
        %v2705 = vunpack.c.l.b16 %v1129
        %v2706 = vunpack.c.h.b16 %v1129
        %v2707 = vunpack.c.l.b16 %v1130
        %v2708 = vunpack.c.h.b16 %v1130
        %v2709 = vunpack.c.l.b16 %v1131
        %v2710 = vunpack.c.h.b16 %v1131
        %v2711 = vunpack.c.l.b16 %v1132
        %v2712 = vunpack.c.h.b16 %v1132
        %v2713 = vunpack.c.l.b16 %v1133
        %v2714 = vunpack.c.h.b16 %v1133
        %v2715 = vunpack.c.l.b16 %v1134
        %v2716 = vunpack.c.h.b16 %v1134
        %v2717 = vunpack.c.l.b16 %v1135
        %v2718 = vunpack.c.h.b16 %v1135
        %v2719 = vunpack.c.l.b16 %v1136
        %v2720 = vunpack.c.h.b16 %v1136
        %v2721 = vunpack.c.l.b16 %v1137
        %v2722 = vunpack.c.h.b16 %v1137
        %v2723 = vunpack.c.l.b16 %v1138
        %v2724 = vunpack.c.h.b16 %v1138
        %v2725 = vunpack.c.l.b16 %v1139
        %v2726 = vunpack.c.h.b16 %v1139
        %v2727 = vunpack.c.l.b16 %v1140
        %v2728 = vunpack.c.h.b16 %v1140
        %v2729 = vunpack.c.l.b16 %v1141
        %v2730 = vunpack.c.h.b16 %v1141
        %v2731 = vunpack.c.l.b16 %v1142
        %v2732 = vunpack.c.h.b16 %v1142
        %v2733 = vunpack.c.l.b16 %v1143
        %v2734 = vunpack.c.h.b16 %v1143
        %v2735 = vunpack.c.l.b16 %v1144
        %v2736 = vunpack.c.h.b16 %v1144
        %v2737 = vunpack.c.l.b16 %v1145
        %v2738 = vunpack.c.h.b16 %v1145
        %v2739 = vunpack.c.l.b16 %v1146
        %v2740 = vunpack.c.h.b16 %v1146
        %v2741 = vunpack.c.l.b16 %v1147
        %v2742 = vunpack.c.h.b16 %v1147
        %v2743 = vunpack.c.l.b16 %v1148
        %v2744 = vunpack.c.h.b16 %v1148
        %v2745 = vunpack.c.l.b16 %v1149
        %v2746 = vunpack.c.h.b16 %v1149
        %v2747 = vunpack.c.l.b16 %v1150
        %v2748 = vunpack.c.h.b16 %v1150
        %v2749 = vunpack.c.l.b16 %v1151
        %v2750 = vunpack.c.h.b16 %v1151
        %v2751 = vunpack.c.l.b16 %v1152
        %v2752 = vunpack.c.h.b16 %v1152
        %v2753 = vunpack.c.l.b16 %v1153
        %v2754 = vunpack.c.h.b16 %v1153
        %v2755 = vunpack.c.l.b16 %v1154
        %v2756 = vunpack.c.h.b16 %v1154
        %v2757 = vunpack.c.l.b16 %v1155
        %v2758 = vunpack.c.h.b16 %v1155
        %v2759 = vunpack.c.l.b16 %v1156
        %v2760 = vunpack.c.h.b16 %v1156
        %v2761 = vunpack.c.l.b16 %v1157
        %v2762 = vunpack.c.h.b16 %v1157
        %v2763 = vunpack.c.l.b16 %v1158
        %v2764 = vunpack.c.h.b16 %v1158
        %v2765 = vunpack.c.l.b16 %v1159
        %v2766 = vunpack.c.h.b16 %v1159
        %v2767 = vunpack.c.l.b16 %v1160
        %v2768 = vunpack.c.h.b16 %v1160
        %v2769 = vunpack.c.l.b16 %v1161
        %v2770 = vunpack.c.h.b16 %v1161
        %v2771 = vunpack.c.l.b16 %v1162
        %v2772 = vunpack.c.h.b16 %v1162
        %v2773 = vunpack.c.l.b16 %v1163
        %v2774 = vunpack.c.h.b16 %v1163
        %v2775 = vunpack.c.l.b16 %v1164
        %v2776 = vunpack.c.h.b16 %v1164
        %v2777 = vunpack.c.l.b16 %v1165
        %v2778 = vunpack.c.h.b16 %v1165
        %v2779 = vunpack.c.l.b16 %v1166
        %v2780 = vunpack.c.h.b16 %v1166
        %v2781 = vunpack.c.l.b16 %v1167
        %v2782 = vunpack.c.h.b16 %v1167
        %v2783 = vunpack.c.l.b16 %v1168
        %v2784 = vunpack.c.h.b16 %v1168
        %v2785 = vunpack.c.l.b16 %v1169
        %v2786 = vunpack.c.h.b16 %v1169
        %v2787 = vunpack.c.l.b16 %v1170
        %v2788 = vunpack.c.h.b16 %v1170
        %v2789 = vunpack.c.l.b16 %v1171
        %v2790 = vunpack.c.h.b16 %v1171
        %v2791 = vunpack.c.l.b16 %v1172
        %v2792 = vunpack.c.h.b16 %v1172
        %v2793 = vunpack.c.l.b16 %v1173
        %v2794 = vunpack.c.h.b16 %v1173
        %v2795 = vunpack.c.l.b16 %v1174
        %v2796 = vunpack.c.h.b16 %v1174
        %v2797 = vunpack.c.l.b16 %v1175
        %v2798 = vunpack.c.h.b16 %v1175
        %v2799 = vunpack.c.l.b16 %v1176
        %v2800 = vunpack.c.h.b16 %v1176
        %v2801 = vunpack.c.l.b16 %v1177
        %v2802 = vunpack.c.h.b16 %v1177
        %v2803 = vunpack.c.l.b16 %v1178
        %v2804 = vunpack.c.h.b16 %v1178
        %v2805 = vunpack.c.l.b16 %v1179
        %v2806 = vunpack.c.h.b16 %v1179
        %v2807 = vunpack.c.l.b16 %v1180
        %v2808 = vunpack.c.h.b16 %v1180
        %v2809 = vunpack.c.l.b16 %v1181
        %v2810 = vunpack.c.h.b16 %v1181
        %v2811 = vunpack.c.l.b16 %v1182
        %v2812 = vunpack.c.h.b16 %v1182
        %v2813 = vunpack.c.l.b16 %v1183
        %v2814 = vunpack.c.h.b16 %v1183
        %v2815 = vpack.c.b16 %v2689, %v2687
        %v2816 = vpack.c.b16 %v2690, %v2688
        %v2817 = vpack.c.b16 %v2693, %v2691
        %v2818 = vpack.c.b16 %v2694, %v2692
        %v2819 = vpack.c.b16 %v2697, %v2695
        %v2820 = vpack.c.b16 %v2698, %v2696
        %v2821 = vpack.c.b16 %v2701, %v2699
        %v2822 = vpack.c.b16 %v2702, %v2700
        %v2823 = vpack.c.b16 %v2705, %v2703
        %v2824 = vpack.c.b16 %v2706, %v2704
        %v2825 = vpack.c.b16 %v2709, %v2707
        %v2826 = vpack.c.b16 %v2710, %v2708
        %v2827 = vpack.c.b16 %v2713, %v2711
        %v2828 = vpack.c.b16 %v2714, %v2712
        %v2829 = vpack.c.b16 %v2717, %v2715
        %v2830 = vpack.c.b16 %v2718, %v2716
        %v2831 = vpack.c.b16 %v2721, %v2719
        %v2832 = vpack.c.b16 %v2722, %v2720
        %v2833 = vpack.c.b16 %v2725, %v2723
        %v2834 = vpack.c.b16 %v2726, %v2724
        %v2835 = vpack.c.b16 %v2729, %v2727
        %v2836 = vpack.c.b16 %v2730, %v2728
        %v2837 = vpack.c.b16 %v2733, %v2731
        %v2838 = vpack.c.b16 %v2734, %v2732
        %v2839 = vpack.c.b16 %v2737, %v2735
        %v2840 = vpack.c.b16 %v2738, %v2736
        %v2841 = vpack.c.b16 %v2741, %v2739
        %v2842 = vpack.c.b16 %v2742, %v2740
        %v2843 = vpack.c.b16 %v2745, %v2743
        %v2844 = vpack.c.b16 %v2746, %v2744
        %v2845 = vpack.c.b16 %v2749, %v2747
        %v2846 = vpack.c.b16 %v2750, %v2748
        %v2847 = vpack.c.b16 %v2753, %v2751
        %v2848 = vpack.c.b16 %v2754, %v2752
        %v2849 = vpack.c.b16 %v2757, %v2755
        %v2850 = vpack.c.b16 %v2758, %v2756
        %v2851 = vpack.c.b16 %v2761, %v2759
        %v2852 = vpack.c.b16 %v2762, %v2760
        %v2853 = vpack.c.b16 %v2765, %v2763
        %v2854 = vpack.c.b16 %v2766, %v2764
        %v2855 = vpack.c.b16 %v2769, %v2767
        %v2856 = vpack.c.b16 %v2770, %v2768
        %v2857 = vpack.c.b16 %v2773, %v2771
        %v2858 = vpack.c.b16 %v2774, %v2772
        %v2859 = vpack.c.b16 %v2777, %v2775
        %v2860 = vpack.c.b16 %v2778, %v2776
        %v2861 = vpack.c.b16 %v2781, %v2779
        %v2862 = vpack.c.b16 %v2782, %v2780
        %v2863 = vpack.c.b16 %v2785, %v2783
        %v2864 = vpack.c.b16 %v2786, %v2784
        %v2865 = vpack.c.b16 %v2789, %v2787
        %v2866 = vpack.c.b16 %v2790, %v2788
        %v2867 = vpack.c.b16 %v2793, %v2791
        %v2868 = vpack.c.b16 %v2794, %v2792
        %v2869 = vpack.c.b16 %v2797, %v2795
        %v2870 = vpack.c.b16 %v2798, %v2796
        %v2871 = vpack.c.b16 %v2801, %v2799
        %v2872 = vpack.c.b16 %v2802, %v2800
        %v2873 = vpack.c.b16 %v2805, %v2803
        %v2874 = vpack.c.b16 %v2806, %v2804
        %v2875 = vpack.c.b16 %v2809, %v2807
        %v2876 = vpack.c.b16 %v2810, %v2808
        %v2877 = vpack.c.b16 %v2813, %v2811
        %v2878 = vpack.c.b16 %v2814, %v2812
        %2943 = vmatprep.subr.bf16.mxu0 %v2816
        %2944 = vmatpush1.bf16.msra.mxu0 %v2815
        %2945 = vmatprep.subr.bf16.mxu0 %v2818
        %2946 = vmatpush1.bf16.msra.mxu0 %v2817
        %2947 = vmatprep.subr.bf16.mxu0 %v2820
        %2948 = vmatpush1.bf16.msra.mxu0 %v2819
        %2949 = vmatprep.subr.bf16.mxu0 %v2822
        %2950 = vmatpush1.bf16.msra.mxu0 %v2821
        %2951 = vmatprep.subr.bf16.mxu0 %v2824
        %2952 = vmatpush1.bf16.msra.mxu0 %v2823
        %2953 = vmatprep.subr.bf16.mxu0 %v2826
        %2954 = vmatpush1.bf16.msra.mxu0 %v2825
        %2955 = vmatprep.subr.bf16.mxu0 %v2828
        %2956 = vmatpush1.bf16.msra.mxu0 %v2827
        %2957 = vmatprep.subr.bf16.mxu0 %v2830
        %2958 = vmatpush1.bf16.msra.mxu0 %v2829
        %2959 = vmatprep.subr.bf16.mxu0 %v2832
        %2960 = vmatpush1.bf16.msra.mxu0 %v2831
        %2961 = vmatprep.subr.bf16.mxu0 %v2834
        %2962 = vmatpush1.bf16.msra.mxu0 %v2833
        %2963 = vmatprep.subr.bf16.mxu0 %v2836
        %2964 = vmatpush1.bf16.msra.mxu0 %v2835
        %2965 = vmatprep.subr.bf16.mxu0 %v2838
        %2966 = vmatpush1.bf16.msra.mxu0 %v2837
        %2967 = vmatprep.subr.bf16.mxu0 %v2840
        %2968 = vmatpush1.bf16.msra.mxu0 %v2839
        %2969 = vmatprep.subr.bf16.mxu0 %v2842
        %2970 = vmatpush1.bf16.msra.mxu0 %v2841
        %2971 = vmatprep.subr.bf16.mxu0 %v2844
        %2972 = vmatpush1.bf16.msra.mxu0 %v2843
        %2973 = vmatprep.subr.bf16.mxu0 %v2846
        %2974 = vmatpush1.bf16.msra.mxu0 %v2845
        %2975 = vmatprep.mubr.bf16.mxu0 %v2544
        %2976 = vmatmul.mubr.bf16.gmra.mrb[0].mxu0 %v2543
        %v2977 = vpop.f32.mrb[0].mxu0
        %v2978 = vadd.f32 %v2325, %v2977
        %v2979 = vpop.f32.mrb[0].mxu0
        %v2980 = vadd.f32 %v2327, %v2979
        %v2981 = vpop.f32.mrb[0].mxu0
        %v2982 = vadd.f32 %v2329, %v2981
        %v2983 = vpop.f32.mrb[0].mxu0
        %v2984 = vadd.f32 %v2331, %v2983
        %2985 = vmatprep.mubr.bf16.mxu0 %v2548
        %2986 = vmatmul.mubr.bf16.gmra.mrb[0].mxu0 %v2547
        %v2987 = vpop.f32.mrb[0].mxu0
        %v2988 = vadd.f32 %v2335, %v2987
        %v2989 = vpop.f32.mrb[0].mxu0
        %v2990 = vadd.f32 %v2337, %v2989
        %v2991 = vpop.f32.mrb[0].mxu0
        %v2992 = vadd.f32 %v2339, %v2991
        %v2993 = vpop.f32.mrb[0].mxu0
        %v2994 = vadd.f32 %v2341, %v2993
        %2995 = vmatprep.mubr.bf16.mxu0 %v2552
        %2996 = vmatmul.mubr.bf16.gmra.mrb[0].mxu0 %v2551
        %v2997 = vpop.f32.mrb[0].mxu0
        %v2998 = vadd.f32 %v2345, %v2997
        %v2999 = vpop.f32.mrb[0].mxu0
        %v3000 = vadd.f32 %v2347, %v2999
        %v3001 = vpop.f32.mrb[0].mxu0
        %v3002 = vadd.f32 %v2349, %v3001
        %v3003 = vpop.f32.mrb[0].mxu0
        %v3004 = vadd.f32 %v2351, %v3003
        %3005 = vmatprep.mubr.bf16.mxu0 %v2556
        %3006 = vmatmul.mubr.bf16.gmra.mrb[0].mxu0 %v2555
        %v3007 = vpop.f32.mrb[0].mxu0
        %v3008 = vadd.f32 %v2355, %v3007
        %v3009 = vpop.f32.mrb[0].mxu0
        %v3010 = vadd.f32 %v2357, %v3009
        %v3011 = vpop.f32.mrb[0].mxu0
        %v3012 = vadd.f32 %v2359, %v3011
        %v3013 = vpop.f32.mrb[0].mxu0
        %v3014 = vadd.f32 %v2361, %v3013
        %3015 = vmatprep.mubr.bf16.mxu0 %v2560
        %3016 = vmatmul.mubr.bf16.gmra.mrb[0].mxu0 %v2559
        %v3017 = vpop.f32.mrb[0].mxu0
        %v3018 = vadd.f32 %v2365, %v3017
        %v3019 = vpop.f32.mrb[0].mxu0
        %v3020 = vadd.f32 %v2367, %v3019
        %v3021 = vpop.f32.mrb[0].mxu0
        %v3022 = vadd.f32 %v2369, %v3021
        %v3023 = vpop.f32.mrb[0].mxu0
        %v3024 = vadd.f32 %v2371, %v3023
        %3025 = vmatprep.mubr.bf16.mxu0 %v2564
        %3026 = vmatmul.mubr.bf16.gmra.mrb[0].mxu0 %v2563
        %v3027 = vpop.f32.mrb[0].mxu0
        %v3028 = vadd.f32 %v2375, %v3027
        %v3029 = vpop.f32.mrb[0].mxu0
        %v3030 = vadd.f32 %v2377, %v3029
        %v3031 = vpop.f32.mrb[0].mxu0
        %v3032 = vadd.f32 %v2379, %v3031
        %v3033 = vpop.f32.mrb[0].mxu0
        %v3034 = vadd.f32 %v2381, %v3033
        %3035 = vmatprep.mubr.bf16.mxu0 %v2568
        %3036 = vmatmul.mubr.bf16.gmra.mrb[0].mxu0 %v2567
        %v3037 = vpop.f32.mrb[0].mxu0
        %v3038 = vadd.f32 %v2385, %v3037
        %v3039 = vpop.f32.mrb[0].mxu0
        %v3040 = vadd.f32 %v2387, %v3039
        %v3041 = vpop.f32.mrb[0].mxu0
        %v3042 = vadd.f32 %v2389, %v3041
        %v3043 = vpop.f32.mrb[0].mxu0
        %v3044 = vadd.f32 %v2391, %v3043
        %3045 = vmatprep.mubr.bf16.mxu0 %v2572
        %3046 = vmatmul.mubr.bf16.gmra.mrb[0].mxu0 %v2571
        %v3047 = vpop.f32.mrb[0].mxu0
        %v3048 = vadd.f32 %v2395, %v3047
        %v3049 = vpop.f32.mrb[0].mxu0
        %v3050 = vadd.f32 %v2397, %v3049
        %v3051 = vpop.f32.mrb[0].mxu0
        %v3052 = vadd.f32 %v2399, %v3051
        %v3053 = vpop.f32.mrb[0].mxu0
        %v3054 = vadd.f32 %v2401, %v3053
        %3055 = vmatprep.mubr.bf16.mxu0 %v2576
        %3056 = vmatmul.mubr.bf16.gmra.mrb[0].mxu0 %v2575
        %v3057 = vpop.f32.mrb[0].mxu0
        %v3058 = vadd.f32 %v2405, %v3057
        %v3059 = vpop.f32.mrb[0].mxu0
        %v3060 = vadd.f32 %v2407, %v3059
        %v3061 = vpop.f32.mrb[0].mxu0
        %v3062 = vadd.f32 %v2409, %v3061
        %v3063 = vpop.f32.mrb[0].mxu0
        %v3064 = vadd.f32 %v2411, %v3063
        %3065 = vmatprep.mubr.bf16.mxu0 %v2580
        %3066 = vmatmul.mubr.bf16.gmra.mrb[0].mxu0 %v2579
        %v3067 = vpop.f32.mrb[0].mxu0
        %v3068 = vadd.f32 %v2415, %v3067
        %v3069 = vpop.f32.mrb[0].mxu0
        %v3070 = vadd.f32 %v2417, %v3069
        %v3071 = vpop.f32.mrb[0].mxu0
        %v3072 = vadd.f32 %v2419, %v3071
        %v3073 = vpop.f32.mrb[0].mxu0
        %v3074 = vadd.f32 %v2421, %v3073
        %3075 = vdwg.mxu0
        %3076 = vmatprep.subr.bf16.mxu0 %v2848
        %3077 = vmatpush1.bf16.msra.mxu0 %v2847
        %3078 = vmatprep.subr.bf16.mxu0 %v2850
        %3079 = vmatpush1.bf16.msra.mxu0 %v2849
        %3080 = vmatprep.subr.bf16.mxu0 %v2852
        %3081 = vmatpush1.bf16.msra.mxu0 %v2851
        %3082 = vmatprep.subr.bf16.mxu0 %v2854
        %3083 = vmatpush1.bf16.msra.mxu0 %v2853
        %3084 = vmatprep.subr.bf16.mxu0 %v2856
        %3085 = vmatpush1.bf16.msra.mxu0 %v2855
        %3086 = vmatprep.subr.bf16.mxu0 %v2858
        %3087 = vmatpush1.bf16.msra.mxu0 %v2857
        %3088 = vmatprep.subr.bf16.mxu0 %v2860
        %3089 = vmatpush1.bf16.msra.mxu0 %v2859
        %3090 = vmatprep.subr.bf16.mxu0 %v2862
        %3091 = vmatpush1.bf16.msra.mxu0 %v2861
        %3092 = vmatprep.subr.bf16.mxu0 %v2864
        %3093 = vmatpush1.bf16.msra.mxu0 %v2863
        %3094 = vmatprep.subr.bf16.mxu0 %v2866
        %3095 = vmatpush1.bf16.msra.mxu0 %v2865
        %3096 = vmatprep.subr.bf16.mxu0 %v2868
        %3097 = vmatpush1.bf16.msra.mxu0 %v2867
        %3098 = vmatprep.subr.bf16.mxu0 %v2870
        %3099 = vmatpush1.bf16.msra.mxu0 %v2869
        %3100 = vmatprep.subr.bf16.mxu0 %v2872
        %3101 = vmatpush1.bf16.msra.mxu0 %v2871
        %3102 = vmatprep.subr.bf16.mxu0 %v2874
        %3103 = vmatpush1.bf16.msra.mxu0 %v2873
        %3104 = vmatprep.subr.bf16.mxu0 %v2876
        %3105 = vmatpush1.bf16.msra.mxu0 %v2875
        %3106 = vmatprep.subr.bf16.mxu0 %v2878
        %3107 = vmatpush1.bf16.msra.mxu0 %v2877
        %3108 = vmatprep.mubr.bf16.mxu0 %v2546
        %3109 = vmatmul.mubr.bf16.gmra.mrb[0].mxu0 %v2545
        %v3110 = vpop.f32.mrb[0].mxu0
        %v3111 = vadd.f32 %v2978, %v3110
        %v3112 = vpop.f32.mrb[0].mxu0
        %v3113 = vadd.f32 %v2980, %v3112
        %v3114 = vpop.f32.mrb[0].mxu0
        %v3115 = vadd.f32 %v2982, %v3114
        %v3116 = vpop.f32.mrb[0].mxu0
        %v3117 = vadd.f32 %v2984, %v3116
        %3118 = vmatprep.mubr.bf16.mxu0 %v2550
        %3119 = vmatmul.mubr.bf16.gmra.mrb[0].mxu0 %v2549
        %v3120 = vpop.f32.mrb[0].mxu0
        %v3121 = vadd.f32 %v2988, %v3120
        %v3122 = vpop.f32.mrb[0].mxu0
        %v3123 = vadd.f32 %v2990, %v3122
        %v3124 = vpop.f32.mrb[0].mxu0
        %v3125 = vadd.f32 %v2992, %v3124
        %v3126 = vpop.f32.mrb[0].mxu0
        %v3127 = vadd.f32 %v2994, %v3126
        %3128 = vmatprep.mubr.bf16.mxu0 %v2554
        %3129 = vmatmul.mubr.bf16.gmra.mrb[0].mxu0 %v2553
        %v3130 = vpop.f32.mrb[0].mxu0
        %v3131 = vadd.f32 %v2998, %v3130
        %v3132 = vpop.f32.mrb[0].mxu0
        %v3133 = vadd.f32 %v3000, %v3132
        %v3134 = vpop.f32.mrb[0].mxu0
        %v3135 = vadd.f32 %v3002, %v3134
        %v3136 = vpop.f32.mrb[0].mxu0
        %v3137 = vadd.f32 %v3004, %v3136
        %3138 = vmatprep.mubr.bf16.mxu0 %v2558
        %3139 = vmatmul.mubr.bf16.gmra.mrb[0].mxu0 %v2557
        %v3140 = vpop.f32.mrb[0].mxu0
        %v3141 = vadd.f32 %v3008, %v3140
        %v3142 = vpop.f32.mrb[0].mxu0
        %v3143 = vadd.f32 %v3010, %v3142
        %v3144 = vpop.f32.mrb[0].mxu0
        %v3145 = vadd.f32 %v3012, %v3144
        %v3146 = vpop.f32.mrb[0].mxu0
        %v3147 = vadd.f32 %v3014, %v3146
        %3148 = vmatprep.mubr.bf16.mxu0 %v2562
        %3149 = vmatmul.mubr.bf16.gmra.mrb[0].mxu0 %v2561
        %v3150 = vpop.f32.mrb[0].mxu0
        %v3151 = vadd.f32 %v3018, %v3150
        %v3152 = vpop.f32.mrb[0].mxu0
        %v3153 = vadd.f32 %v3020, %v3152
        %v3154 = vpop.f32.mrb[0].mxu0
        %v3155 = vadd.f32 %v3022, %v3154
        %v3156 = vpop.f32.mrb[0].mxu0
        %v3157 = vadd.f32 %v3024, %v3156
        %3158 = vmatprep.mubr.bf16.mxu0 %v2566
        %3159 = vmatmul.mubr.bf16.gmra.mrb[0].mxu0 %v2565
        %v3160 = vpop.f32.mrb[0].mxu0
        %v3161 = vadd.f32 %v3028, %v3160
        %v3162 = vpop.f32.mrb[0].mxu0
        %v3163 = vadd.f32 %v3030, %v3162
        %v3164 = vpop.f32.mrb[0].mxu0
        %v3165 = vadd.f32 %v3032, %v3164
        %v3166 = vpop.f32.mrb[0].mxu0
        %v3167 = vadd.f32 %v3034, %v3166
        %3168 = vmatprep.mubr.bf16.mxu0 %v2570
        %3169 = vmatmul.mubr.bf16.gmra.mrb[0].mxu0 %v2569
        %v3170 = vpop.f32.mrb[0].mxu0
        %v3171 = vadd.f32 %v3038, %v3170
        %v3172 = vpop.f32.mrb[0].mxu0
        %v3173 = vadd.f32 %v3040, %v3172
        %v3174 = vpop.f32.mrb[0].mxu0
        %v3175 = vadd.f32 %v3042, %v3174
        %v3176 = vpop.f32.mrb[0].mxu0
        %v3177 = vadd.f32 %v3044, %v3176
        %3178 = vmatprep.mubr.bf16.mxu0 %v2574
        %3179 = vmatmul.mubr.bf16.gmra.mrb[0].mxu0 %v2573
        %v3180 = vpop.f32.mrb[0].mxu0
        %v3181 = vadd.f32 %v3048, %v3180
        %v3182 = vpop.f32.mrb[0].mxu0
        %v3183 = vadd.f32 %v3050, %v3182
        %v3184 = vpop.f32.mrb[0].mxu0
        %v3185 = vadd.f32 %v3052, %v3184
        %v3186 = vpop.f32.mrb[0].mxu0
        %v3187 = vadd.f32 %v3054, %v3186
        %3188 = vmatprep.mubr.bf16.mxu0 %v2578
        %3189 = vmatmul.mubr.bf16.gmra.mrb[0].mxu0 %v2577
        %v3190 = vpop.f32.mrb[0].mxu0
        %v3191 = vadd.f32 %v3058, %v3190
        %v3192 = vpop.f32.mrb[0].mxu0
        %v3193 = vadd.f32 %v3060, %v3192
        %v3194 = vpop.f32.mrb[0].mxu0
        %v3195 = vadd.f32 %v3062, %v3194
        %v3196 = vpop.f32.mrb[0].mxu0
        %v3197 = vadd.f32 %v3064, %v3196
        %3198 = vmatprep.mubr.bf16.mxu0 %v2582
        %3199 = vmatmul.mubr.bf16.gmra.mrb[0].mxu0 %v2581
        %v3200 = vpop.f32.mrb[0].mxu0
        %v3201 = vadd.f32 %v3068, %v3200
        %v3202 = vpop.f32.mrb[0].mxu0
        %v3203 = vadd.f32 %v3070, %v3202
        %v3204 = vpop.f32.mrb[0].mxu0
        %v3205 = vadd.f32 %v3072, %v3204
        %v3206 = vpop.f32.mrb[0].mxu0
        %v3207 = vadd.f32 %v3074, %v3206
        %3208 = vdwg.mxu0
        %v3209 = vld [vmem:[#allocation2] sm:$0xee]
        %v3210 = vld [vmem:[#allocation2 + $0x8] sm:$0xee]
        %s3211 = scalar_lea.vmem [#allocation7], 1024
        %v3212 = vld [vmem:[%s3211] sm:$0xff]
        %v3213 = vld [vmem:[%s3211 + $0x8] sm:$0xff]
        %v3214 = vld [vmem:[%s3211 + $0x10] sm:$0xff]
        %v3215 = vld [vmem:[%s3211 + $0x18] sm:$0xff]
        %v3216 = vld [vmem:[%s3211 + $0x20] sm:$0xff]
        %v3217 = vld [vmem:[%s3211 + $0x28] sm:$0xff]
        %v3218 = vld [vmem:[%s3211 + $0x30] sm:$0xff]
        %v3219 = vld [vmem:[%s3211 + $0x38] sm:$0xff]
        %v3220 = vld [vmem:[%s3211 + $0x40] sm:$0xff]
        %v3221 = vld [vmem:[%s3211 + $0x48] sm:$0xff]
        %v3222 = vld [vmem:[%s3211 + $0x50] sm:$0xff]
        %v3223 = vld [vmem:[%s3211 + $0x58] sm:$0xff]
        %v3224 = vld [vmem:[%s3211 + $0x60] sm:$0xff]
        %v3225 = vld [vmem:[%s3211 + $0x68] sm:$0xff]
        %v3226 = vld [vmem:[%s3211 + $0x70] sm:$0xff]
        %v3227 = vld [vmem:[%s3211 + $0x78] sm:$0xff]
        %v3228 = vld [vmem:[%s3211 + $0x80] sm:$0xff]
        %v3229 = vld [vmem:[%s3211 + $0x88] sm:$0xff]
        %v3230 = vld [vmem:[%s3211 + $0x90] sm:$0xff]
        %v3231 = vld [vmem:[%s3211 + $0x98] sm:$0xff]
        %v3232 = vld [vmem:[%s3211 + $0xa0] sm:$0xff]
        %v3233 = vld [vmem:[%s3211 + $0xa8] sm:$0xff]
        %v3234 = vld [vmem:[%s3211 + $0xb0] sm:$0xff]
        %v3235 = vld [vmem:[%s3211 + $0xb8] sm:$0xff]
        %v3236 = vld [vmem:[%s3211 + $0xc0] sm:$0xff]
        %v3237 = vld [vmem:[%s3211 + $0xc8] sm:$0xff]
        %v3238 = vld [vmem:[%s3211 + $0xd0] sm:$0xff]
        %v3239 = vld [vmem:[%s3211 + $0xd8] sm:$0xff]
        %v3240 = vld [vmem:[%s3211 + $0xe0] sm:$0xff]
        %v3241 = vld [vmem:[%s3211 + $0xe8] sm:$0xff]
        %v3242 = vld [vmem:[%s3211 + $0xf0] sm:$0xff]
        %v3243 = vld [vmem:[%s3211 + $0xf8] sm:$0xff]
        %v3244 = vld [vmem:[%s3211 + $0x100] sm:$0xff]
        %v3245 = vld [vmem:[%s3211 + $0x108] sm:$0xff]
        %v3246 = vld [vmem:[%s3211 + $0x110] sm:$0xff]
        %v3247 = vld [vmem:[%s3211 + $0x118] sm:$0xff]
        %v3248 = vld [vmem:[%s3211 + $0x120] sm:$0xff]
        %v3249 = vld [vmem:[%s3211 + $0x128] sm:$0xff]
        %v3250 = vld [vmem:[%s3211 + $0x130] sm:$0xff]
        %v3251 = vld [vmem:[%s3211 + $0x138] sm:$0xff]
        %v3252 = vld [vmem:[%s3211 + $0x140] sm:$0xff]
        %v3253 = vld [vmem:[%s3211 + $0x148] sm:$0xff]
        %v3254 = vld [vmem:[%s3211 + $0x150] sm:$0xff]
        %v3255 = vld [vmem:[%s3211 + $0x158] sm:$0xff]
        %v3256 = vld [vmem:[%s3211 + $0x160] sm:$0xff]
        %v3257 = vld [vmem:[%s3211 + $0x168] sm:$0xff]
        %v3258 = vld [vmem:[%s3211 + $0x170] sm:$0xff]
        %v3259 = vld [vmem:[%s3211 + $0x178] sm:$0xff]
        %v3260 = vld [vmem:[%s3211 + $0x180] sm:$0xff]
        %v3261 = vld [vmem:[%s3211 + $0x188] sm:$0xff]
        %v3262 = vld [vmem:[%s3211 + $0x190] sm:$0xff]
        %v3263 = vld [vmem:[%s3211 + $0x198] sm:$0xff]
        %v3264 = vld [vmem:[%s3211 + $0x1a0] sm:$0xff]
        %v3265 = vld [vmem:[%s3211 + $0x1a8] sm:$0xff]
        %v3266 = vld [vmem:[%s3211 + $0x1b0] sm:$0xff]
        %v3267 = vld [vmem:[%s3211 + $0x1b8] sm:$0xff]
        %v3268 = vld [vmem:[%s3211 + $0x1c0] sm:$0xff]
        %v3269 = vld [vmem:[%s3211 + $0x1c8] sm:$0xff]
        %v3270 = vld [vmem:[%s3211 + $0x1d0] sm:$0xff]
        %v3271 = vld [vmem:[%s3211 + $0x1d8] sm:$0xff]
        %v3272 = vld [vmem:[%s3211 + $0x1e0] sm:$0xff]
        %v3273 = vld [vmem:[%s3211 + $0x1e8] sm:$0xff]
        %v3274 = vld [vmem:[%s3211 + $0x1f0] sm:$0xff]
        %v3275 = vld [vmem:[%s3211 + $0x1f8] sm:$0xff]
        %v3278 = vunpack.c.l.b16 %v3209
        %v3279 = vunpack.c.h.b16 %v3209
        %v3280 = vunpack.c.l.b16 %v3210
        %v3281 = vunpack.c.h.b16 %v3210
        %v3282 = vpack.c.b16 %v1337, %v3278
        %v3283 = vpack.c.b16 %v1338, %v3279
        %v3284 = vpack.c.b16 %v1339, %v3280
        %v3285 = vpack.c.b16 %v1340, %v3281
        %vm3286 = vcmask 1046528
        %v3287 = vrot.slane %v3282, 1
        %v3288 = vrot.slane %v1421, 1
        %v3289 = vsel %vm3286, %v3287, %v3288
        %v3290 = vrot.slane %v3283, 1
        %v3291 = vrot.slane %v1422, 1
        %v3292 = vsel %vm3286, %v3290, %v3291
        %v3293 = vrot.slane %v3284, 1
        %v3294 = vrot.slane %v1423, 1
        %v3295 = vsel %vm3286, %v3293, %v3294
        %v3296 = vrot.slane %v3285, 1
        %v3297 = vrot.slane %v1424, 1
        %v3298 = vsel %vm3286, %v3296, %v3297
        %v3299 = vrot.slane %v1425, 1
        %v3300 = vsel %vm3286, %v3288, %v3299
        %v3301 = vrot.slane %v1426, 1
        %v3302 = vsel %vm3286, %v3291, %v3301
        %v3303 = vrot.slane %v1427, 1
        %v3304 = vsel %vm3286, %v3294, %v3303
        %v3305 = vrot.slane %v1428, 1
        %v3306 = vsel %vm3286, %v3297, %v3305
        %v3307 = vrot.slane %v1429, 1
        %v3308 = vsel %vm3286, %v3299, %v3307
        %v3309 = vrot.slane %v1430, 1
        %v3310 = vsel %vm3286, %v3301, %v3309
        %v3311 = vrot.slane %v1431, 1
        %v3312 = vsel %vm3286, %v3303, %v3311
        %v3313 = vrot.slane %v1432, 1
        %v3314 = vsel %vm3286, %v3305, %v3313
        %v3315 = vrot.slane %v1433, 1
        %v3316 = vsel %vm3286, %v3307, %v3315
        %v3317 = vrot.slane %v1434, 1
        %v3318 = vsel %vm3286, %v3309, %v3317
        %v3319 = vrot.slane %v1435, 1
        %v3320 = vsel %vm3286, %v3311, %v3319
        %v3321 = vrot.slane %v1436, 1
        %v3322 = vsel %vm3286, %v3313, %v3321
        %v3323 = vrot.slane %v1437, 1
        %v3324 = vsel %vm3286, %v3315, %v3323
        %v3325 = vrot.slane %v1438, 1
        %v3326 = vsel %vm3286, %v3317, %v3325
        %v3327 = vrot.slane %v1439, 1
        %v3328 = vsel %vm3286, %v3319, %v3327
        %v3329 = vrot.slane %v1440, 1
        %v3330 = vsel %vm3286, %v3321, %v3329
        %v3331 = vrot.slane %v1441, 1
        %v3332 = vsel %vm3286, %v3323, %v3331
        %v3333 = vrot.slane %v1442, 1
        %v3334 = vsel %vm3286, %v3325, %v3333
        %v3335 = vrot.slane %v1443, 1
        %v3336 = vsel %vm3286, %v3327, %v3335
        %v3337 = vrot.slane %v1444, 1
        %v3338 = vsel %vm3286, %v3329, %v3337
        %v3339 = vrot.slane %v1445, 1
        %v3340 = vsel %vm3286, %v3331, %v3339
        %v3341 = vrot.slane %v1446, 1
        %v3342 = vsel %vm3286, %v3333, %v3341
        %v3343 = vrot.slane %v1447, 1
        %v3344 = vsel %vm3286, %v3335, %v3343
        %v3345 = vrot.slane %v1448, 1
        %v3346 = vsel %vm3286, %v3337, %v3345
        %v3347 = vrot.slane %v1449, 1
        %v3348 = vsel %vm3286, %v3339, %v3347
        %v3349 = vrot.slane %v1450, 1
        %v3350 = vsel %vm3286, %v3341, %v3349
        %v3351 = vrot.slane %v1451, 1
        %v3352 = vsel %vm3286, %v3343, %v3351
        %v3353 = vrot.slane %v1452, 1
        %v3354 = vsel %vm3286, %v3345, %v3353
        %v3355 = vrot.slane %v1453, 1
        %v3356 = vsel %vm3286, %v3347, %v3355
        %v3357 = vrot.slane %v1454, 1
        %v3358 = vsel %vm3286, %v3349, %v3357
        %v3359 = vrot.slane %v1455, 1
        %v3360 = vsel %vm3286, %v3351, %v3359
        %v3361 = vrot.slane %v1456, 1
        %v3362 = vsel %vm3286, %v3353, %v3361
        %v3363 = vrot.slane %v1457, 1
        %v3364 = vsel %vm3286, %v3355, %v3363
        %v3365 = vrot.slane %v1458, 1
        %v3366 = vsel %vm3286, %v3357, %v3365
        %v3367 = vrot.slane %v1459, 1
        %v3368 = vsel %vm3286, %v3359, %v3367
        %v3369 = vrot.slane %v1460, 1
        %v3370 = vsel %vm3286, %v3361, %v3369
        %v3475 = vunpack.c.l.b16 %v3212
        %v3476 = vunpack.c.h.b16 %v3212
        %v3477 = vunpack.c.l.b16 %v3213
        %v3478 = vunpack.c.h.b16 %v3213
        %v3479 = vunpack.c.l.b16 %v3214
        %v3480 = vunpack.c.h.b16 %v3214
        %v3481 = vunpack.c.l.b16 %v3215
        %v3482 = vunpack.c.h.b16 %v3215
        %v3483 = vunpack.c.l.b16 %v3216
        %v3484 = vunpack.c.h.b16 %v3216
        %v3485 = vunpack.c.l.b16 %v3217
        %v3486 = vunpack.c.h.b16 %v3217
        %v3487 = vunpack.c.l.b16 %v3218
        %v3488 = vunpack.c.h.b16 %v3218
        %v3489 = vunpack.c.l.b16 %v3219
        %v3490 = vunpack.c.h.b16 %v3219
        %v3491 = vunpack.c.l.b16 %v3220
        %v3492 = vunpack.c.h.b16 %v3220
        %v3493 = vunpack.c.l.b16 %v3221
        %v3494 = vunpack.c.h.b16 %v3221
        %v3495 = vunpack.c.l.b16 %v3222
        %v3496 = vunpack.c.h.b16 %v3222
        %v3497 = vunpack.c.l.b16 %v3223
        %v3498 = vunpack.c.h.b16 %v3223
        %v3499 = vunpack.c.l.b16 %v3224
        %v3500 = vunpack.c.h.b16 %v3224
        %v3501 = vunpack.c.l.b16 %v3225
        %v3502 = vunpack.c.h.b16 %v3225
        %v3503 = vunpack.c.l.b16 %v3226
        %v3504 = vunpack.c.h.b16 %v3226
        %v3505 = vunpack.c.l.b16 %v3227
        %v3506 = vunpack.c.h.b16 %v3227
        %v3507 = vunpack.c.l.b16 %v3228
        %v3508 = vunpack.c.h.b16 %v3228
        %v3509 = vunpack.c.l.b16 %v3229
        %v3510 = vunpack.c.h.b16 %v3229
        %v3511 = vunpack.c.l.b16 %v3230
        %v3512 = vunpack.c.h.b16 %v3230
        %v3513 = vunpack.c.l.b16 %v3231
        %v3514 = vunpack.c.h.b16 %v3231
        %v3515 = vunpack.c.l.b16 %v3232
        %v3516 = vunpack.c.h.b16 %v3232
        %v3517 = vunpack.c.l.b16 %v3233
        %v3518 = vunpack.c.h.b16 %v3233
        %v3519 = vunpack.c.l.b16 %v3234
        %v3520 = vunpack.c.h.b16 %v3234
        %v3521 = vunpack.c.l.b16 %v3235
        %v3522 = vunpack.c.h.b16 %v3235
        %v3523 = vunpack.c.l.b16 %v3236
        %v3524 = vunpack.c.h.b16 %v3236
        %v3525 = vunpack.c.l.b16 %v3237
        %v3526 = vunpack.c.h.b16 %v3237
        %v3527 = vunpack.c.l.b16 %v3238
        %v3528 = vunpack.c.h.b16 %v3238
        %v3529 = vunpack.c.l.b16 %v3239
        %v3530 = vunpack.c.h.b16 %v3239
        %v3531 = vunpack.c.l.b16 %v3240
        %v3532 = vunpack.c.h.b16 %v3240
        %v3533 = vunpack.c.l.b16 %v3241
        %v3534 = vunpack.c.h.b16 %v3241
        %v3535 = vunpack.c.l.b16 %v3242
        %v3536 = vunpack.c.h.b16 %v3242
        %v3537 = vunpack.c.l.b16 %v3243
        %v3538 = vunpack.c.h.b16 %v3243
        %v3539 = vunpack.c.l.b16 %v3244
        %v3540 = vunpack.c.h.b16 %v3244
        %v3541 = vunpack.c.l.b16 %v3245
        %v3542 = vunpack.c.h.b16 %v3245
        %v3543 = vunpack.c.l.b16 %v3246
        %v3544 = vunpack.c.h.b16 %v3246
        %v3545 = vunpack.c.l.b16 %v3247
        %v3546 = vunpack.c.h.b16 %v3247
        %v3547 = vunpack.c.l.b16 %v3248
        %v3548 = vunpack.c.h.b16 %v3248
        %v3549 = vunpack.c.l.b16 %v3249
        %v3550 = vunpack.c.h.b16 %v3249
        %v3551 = vunpack.c.l.b16 %v3250
        %v3552 = vunpack.c.h.b16 %v3250
        %v3553 = vunpack.c.l.b16 %v3251
        %v3554 = vunpack.c.h.b16 %v3251
        %v3555 = vunpack.c.l.b16 %v3252
        %v3556 = vunpack.c.h.b16 %v3252
        %v3557 = vunpack.c.l.b16 %v3253
        %v3558 = vunpack.c.h.b16 %v3253
        %v3559 = vunpack.c.l.b16 %v3254
        %v3560 = vunpack.c.h.b16 %v3254
        %v3561 = vunpack.c.l.b16 %v3255
        %v3562 = vunpack.c.h.b16 %v3255
        %v3563 = vunpack.c.l.b16 %v3256
        %v3564 = vunpack.c.h.b16 %v3256
        %v3565 = vunpack.c.l.b16 %v3257
        %v3566 = vunpack.c.h.b16 %v3257
        %v3567 = vunpack.c.l.b16 %v3258
        %v3568 = vunpack.c.h.b16 %v3258
        %v3569 = vunpack.c.l.b16 %v3259
        %v3570 = vunpack.c.h.b16 %v3259
        %v3571 = vunpack.c.l.b16 %v3260
        %v3572 = vunpack.c.h.b16 %v3260
        %v3573 = vunpack.c.l.b16 %v3261
        %v3574 = vunpack.c.h.b16 %v3261
        %v3575 = vunpack.c.l.b16 %v3262
        %v3576 = vunpack.c.h.b16 %v3262
        %v3577 = vunpack.c.l.b16 %v3263
        %v3578 = vunpack.c.h.b16 %v3263
        %v3579 = vunpack.c.l.b16 %v3264
        %v3580 = vunpack.c.h.b16 %v3264
        %v3581 = vunpack.c.l.b16 %v3265
        %v3582 = vunpack.c.h.b16 %v3265
        %v3583 = vunpack.c.l.b16 %v3266
        %v3584 = vunpack.c.h.b16 %v3266
        %v3585 = vunpack.c.l.b16 %v3267
        %v3586 = vunpack.c.h.b16 %v3267
        %v3587 = vunpack.c.l.b16 %v3268
        %v3588 = vunpack.c.h.b16 %v3268
        %v3589 = vunpack.c.l.b16 %v3269
        %v3590 = vunpack.c.h.b16 %v3269
        %v3591 = vunpack.c.l.b16 %v3270
        %v3592 = vunpack.c.h.b16 %v3270
        %v3593 = vunpack.c.l.b16 %v3271
        %v3594 = vunpack.c.h.b16 %v3271
        %v3595 = vunpack.c.l.b16 %v3272
        %v3596 = vunpack.c.h.b16 %v3272
        %v3597 = vunpack.c.l.b16 %v3273
        %v3598 = vunpack.c.h.b16 %v3273
        %v3599 = vunpack.c.l.b16 %v3274
        %v3600 = vunpack.c.h.b16 %v3274
        %v3601 = vunpack.c.l.b16 %v3275
        %v3602 = vunpack.c.h.b16 %v3275
        %v3603 = vpack.c.b16 %v3477, %v3475
        %v3604 = vpack.c.b16 %v3478, %v3476
        %v3605 = vpack.c.b16 %v3481, %v3479
        %v3606 = vpack.c.b16 %v3482, %v3480
        %v3607 = vpack.c.b16 %v3485, %v3483
        %v3608 = vpack.c.b16 %v3486, %v3484
        %v3609 = vpack.c.b16 %v3489, %v3487
        %v3610 = vpack.c.b16 %v3490, %v3488
        %v3611 = vpack.c.b16 %v3493, %v3491
        %v3612 = vpack.c.b16 %v3494, %v3492
        %v3613 = vpack.c.b16 %v3497, %v3495
        %v3614 = vpack.c.b16 %v3498, %v3496
        %v3615 = vpack.c.b16 %v3501, %v3499
        %v3616 = vpack.c.b16 %v3502, %v3500
        %v3617 = vpack.c.b16 %v3505, %v3503
        %v3618 = vpack.c.b16 %v3506, %v3504
        %v3619 = vpack.c.b16 %v3509, %v3507
        %v3620 = vpack.c.b16 %v3510, %v3508
        %v3621 = vpack.c.b16 %v3513, %v3511
        %v3622 = vpack.c.b16 %v3514, %v3512
        %v3623 = vpack.c.b16 %v3517, %v3515
        %v3624 = vpack.c.b16 %v3518, %v3516
        %v3625 = vpack.c.b16 %v3521, %v3519
        %v3626 = vpack.c.b16 %v3522, %v3520
        %v3627 = vpack.c.b16 %v3525, %v3523
        %v3628 = vpack.c.b16 %v3526, %v3524
        %v3629 = vpack.c.b16 %v3529, %v3527
        %v3630 = vpack.c.b16 %v3530, %v3528
        %v3631 = vpack.c.b16 %v3533, %v3531
        %v3632 = vpack.c.b16 %v3534, %v3532
        %v3633 = vpack.c.b16 %v3537, %v3535
        %v3634 = vpack.c.b16 %v3538, %v3536
        %v3635 = vpack.c.b16 %v3541, %v3539
        %v3636 = vpack.c.b16 %v3542, %v3540
        %v3637 = vpack.c.b16 %v3545, %v3543
        %v3638 = vpack.c.b16 %v3546, %v3544
        %v3639 = vpack.c.b16 %v3549, %v3547
        %v3640 = vpack.c.b16 %v3550, %v3548
        %v3641 = vpack.c.b16 %v3553, %v3551
        %v3642 = vpack.c.b16 %v3554, %v3552
        %v3643 = vpack.c.b16 %v3557, %v3555
        %v3644 = vpack.c.b16 %v3558, %v3556
        %v3645 = vpack.c.b16 %v3561, %v3559
        %v3646 = vpack.c.b16 %v3562, %v3560
        %v3647 = vpack.c.b16 %v3565, %v3563
        %v3648 = vpack.c.b16 %v3566, %v3564
        %v3649 = vpack.c.b16 %v3569, %v3567
        %v3650 = vpack.c.b16 %v3570, %v3568
        %v3651 = vpack.c.b16 %v3573, %v3571
        %v3652 = vpack.c.b16 %v3574, %v3572
        %v3653 = vpack.c.b16 %v3577, %v3575
        %v3654 = vpack.c.b16 %v3578, %v3576
        %v3655 = vpack.c.b16 %v3581, %v3579
        %v3656 = vpack.c.b16 %v3582, %v3580
        %v3657 = vpack.c.b16 %v3585, %v3583
        %v3658 = vpack.c.b16 %v3586, %v3584
        %v3659 = vpack.c.b16 %v3589, %v3587
        %v3660 = vpack.c.b16 %v3590, %v3588
        %v3661 = vpack.c.b16 %v3593, %v3591
        %v3662 = vpack.c.b16 %v3594, %v3592
        %v3663 = vpack.c.b16 %v3597, %v3595
        %v3664 = vpack.c.b16 %v3598, %v3596
        %v3665 = vpack.c.b16 %v3601, %v3599
        %v3666 = vpack.c.b16 %v3602, %v3600
        %3731 = vmatprep.subr.bf16.mxu0 %v3604
        %3732 = vmatpush1.bf16.msra.mxu0 %v3603
        %3733 = vmatprep.subr.bf16.mxu0 %v3606
        %3734 = vmatpush1.bf16.msra.mxu0 %v3605
        %3735 = vmatprep.subr.bf16.mxu0 %v3608
        %3736 = vmatpush1.bf16.msra.mxu0 %v3607
        %3737 = vmatprep.subr.bf16.mxu0 %v3610
        %3738 = vmatpush1.bf16.msra.mxu0 %v3609
        %3739 = vmatprep.subr.bf16.mxu0 %v3612
        %3740 = vmatpush1.bf16.msra.mxu0 %v3611
        %3741 = vmatprep.subr.bf16.mxu0 %v3614
        %3742 = vmatpush1.bf16.msra.mxu0 %v3613
        %3743 = vmatprep.subr.bf16.mxu0 %v3616
        %3744 = vmatpush1.bf16.msra.mxu0 %v3615
        %3745 = vmatprep.subr.bf16.mxu0 %v3618
        %3746 = vmatpush1.bf16.msra.mxu0 %v3617
        %3747 = vmatprep.subr.bf16.mxu0 %v3620
        %3748 = vmatpush1.bf16.msra.mxu0 %v3619
        %3749 = vmatprep.subr.bf16.mxu0 %v3622
        %3750 = vmatpush1.bf16.msra.mxu0 %v3621
        %3751 = vmatprep.subr.bf16.mxu0 %v3624
        %3752 = vmatpush1.bf16.msra.mxu0 %v3623
        %3753 = vmatprep.subr.bf16.mxu0 %v3626
        %3754 = vmatpush1.bf16.msra.mxu0 %v3625
        %3755 = vmatprep.subr.bf16.mxu0 %v3628
        %3756 = vmatpush1.bf16.msra.mxu0 %v3627
        %3757 = vmatprep.subr.bf16.mxu0 %v3630
        %3758 = vmatpush1.bf16.msra.mxu0 %v3629
        %3759 = vmatprep.subr.bf16.mxu0 %v3632
        %3760 = vmatpush1.bf16.msra.mxu0 %v3631
        %3761 = vmatprep.subr.bf16.mxu0 %v3634
        %3762 = vmatpush1.bf16.msra.mxu0 %v3633
        %3763 = vmatprep.mubr.bf16.mxu0 %v3292
        %3764 = vmatmul.mubr.bf16.gmra.mrb[0].mxu0 %v3289
        %v3765 = vpop.f32.mrb[0].mxu0
        %v3766 = vadd.f32 0.0, %v3765
        %v3767 = vpop.f32.mrb[0].mxu0
        %v3768 = vadd.f32 0.0, %v3767
        %v3769 = vpop.f32.mrb[0].mxu0
        %v3770 = vadd.f32 0.0, %v3769
        %v3771 = vpop.f32.mrb[0].mxu0
        %v3772 = vadd.f32 0.0, %v3771
        %3773 = vmatprep.mubr.bf16.mxu0 %v3302
        %3774 = vmatmul.mubr.bf16.gmra.mrb[0].mxu0 %v3300
        %v3775 = vpop.f32.mrb[0].mxu0
        %v3776 = vadd.f32 0.0, %v3775
        %v3777 = vpop.f32.mrb[0].mxu0
        %v3778 = vadd.f32 0.0, %v3777
        %v3779 = vpop.f32.mrb[0].mxu0
        %v3780 = vadd.f32 0.0, %v3779
        %v3781 = vpop.f32.mrb[0].mxu0
        %v3782 = vadd.f32 0.0, %v3781
        %3783 = vmatprep.mubr.bf16.mxu0 %v3310
        %3784 = vmatmul.mubr.bf16.gmra.mrb[0].mxu0 %v3308
        %v3785 = vpop.f32.mrb[0].mxu0
        %v3786 = vadd.f32 0.0, %v3785
        %v3787 = vpop.f32.mrb[0].mxu0
        %v3788 = vadd.f32 0.0, %v3787
        %v3789 = vpop.f32.mrb[0].mxu0
        %v3790 = vadd.f32 0.0, %v3789
        %v3791 = vpop.f32.mrb[0].mxu0
        %v3792 = vadd.f32 0.0, %v3791
        %3793 = vmatprep.mubr.bf16.mxu0 %v3318
        %3794 = vmatmul.mubr.bf16.gmra.mrb[0].mxu0 %v3316
        %v3795 = vpop.f32.mrb[0].mxu0
        %v3796 = vadd.f32 0.0, %v3795
        %v3797 = vpop.f32.mrb[0].mxu0
        %v3798 = vadd.f32 0.0, %v3797
        %v3799 = vpop.f32.mrb[0].mxu0
        %v3800 = vadd.f32 0.0, %v3799
        %v3801 = vpop.f32.mrb[0].mxu0
        %v3802 = vadd.f32 0.0, %v3801
        %3803 = vmatprep.mubr.bf16.mxu0 %v3326
        %3804 = vmatmul.mubr.bf16.gmra.mrb[0].mxu0 %v3324
        %v3805 = vpop.f32.mrb[0].mxu0
        %v3806 = vadd.f32 0.0, %v3805
        %v3807 = vpop.f32.mrb[0].mxu0
        %v3808 = vadd.f32 0.0, %v3807
        %v3809 = vpop.f32.mrb[0].mxu0
        %v3810 = vadd.f32 0.0, %v3809
        %v3811 = vpop.f32.mrb[0].mxu0
        %v3812 = vadd.f32 0.0, %v3811
        %3813 = vmatprep.mubr.bf16.mxu0 %v3334
        %3814 = vmatmul.mubr.bf16.gmra.mrb[0].mxu0 %v3332
        %v3815 = vpop.f32.mrb[0].mxu0
        %v3816 = vadd.f32 0.0, %v3815
        %v3817 = vpop.f32.mrb[0].mxu0
        %v3818 = vadd.f32 0.0, %v3817
        %v3819 = vpop.f32.mrb[0].mxu0
        %v3820 = vadd.f32 0.0, %v3819
        %v3821 = vpop.f32.mrb[0].mxu0
        %v3822 = vadd.f32 0.0, %v3821
        %3823 = vmatprep.mubr.bf16.mxu0 %v3342
        %3824 = vmatmul.mubr.bf16.gmra.mrb[0].mxu0 %v3340
        %v3825 = vpop.f32.mrb[0].mxu0
        %v3826 = vadd.f32 0.0, %v3825
        %v3827 = vpop.f32.mrb[0].mxu0
        %v3828 = vadd.f32 0.0, %v3827
        %v3829 = vpop.f32.mrb[0].mxu0
        %v3830 = vadd.f32 0.0, %v3829
        %v3831 = vpop.f32.mrb[0].mxu0
        %v3832 = vadd.f32 0.0, %v3831
        %3833 = vmatprep.mubr.bf16.mxu0 %v3350
        %3834 = vmatmul.mubr.bf16.gmra.mrb[0].mxu0 %v3348
        %v3835 = vpop.f32.mrb[0].mxu0
        %v3836 = vadd.f32 0.0, %v3835
        %v3837 = vpop.f32.mrb[0].mxu0
        %v3838 = vadd.f32 0.0, %v3837
        %v3839 = vpop.f32.mrb[0].mxu0
        %v3840 = vadd.f32 0.0, %v3839
        %v3841 = vpop.f32.mrb[0].mxu0
        %v3842 = vadd.f32 0.0, %v3841
        %3843 = vmatprep.mubr.bf16.mxu0 %v3358
        %3844 = vmatmul.mubr.bf16.gmra.mrb[0].mxu0 %v3356
        %v3845 = vpop.f32.mrb[0].mxu0
        %v3846 = vadd.f32 0.0, %v3845
        %v3847 = vpop.f32.mrb[0].mxu0
        %v3848 = vadd.f32 0.0, %v3847
        %v3849 = vpop.f32.mrb[0].mxu0
        %v3850 = vadd.f32 0.0, %v3849
        %v3851 = vpop.f32.mrb[0].mxu0
        %v3852 = vadd.f32 0.0, %v3851
        %3853 = vmatprep.mubr.bf16.mxu0 %v3366
        %3854 = vmatmul.mubr.bf16.gmra.mrb[0].mxu0 %v3364
        %v3855 = vpop.f32.mrb[0].mxu0
        %v3856 = vadd.f32 0.0, %v3855
        %v3857 = vpop.f32.mrb[0].mxu0
        %v3858 = vadd.f32 0.0, %v3857
        %v3859 = vpop.f32.mrb[0].mxu0
        %v3860 = vadd.f32 0.0, %v3859
        %v3861 = vpop.f32.mrb[0].mxu0
        %v3862 = vadd.f32 0.0, %v3861
        %3863 = vdwg.mxu0
        %3864 = vmatprep.subr.bf16.mxu0 %v3636
        %3865 = vmatpush1.bf16.msra.mxu0 %v3635
        %3866 = vmatprep.subr.bf16.mxu0 %v3638
        %3867 = vmatpush1.bf16.msra.mxu0 %v3637
        %3868 = vmatprep.subr.bf16.mxu0 %v3640
        %3869 = vmatpush1.bf16.msra.mxu0 %v3639
        %3870 = vmatprep.subr.bf16.mxu0 %v3642
        %3871 = vmatpush1.bf16.msra.mxu0 %v3641
        %3872 = vmatprep.subr.bf16.mxu0 %v3644
        %3873 = vmatpush1.bf16.msra.mxu0 %v3643
        %3874 = vmatprep.subr.bf16.mxu0 %v3646
        %3875 = vmatpush1.bf16.msra.mxu0 %v3645
        %3876 = vmatprep.subr.bf16.mxu0 %v3648
        %3877 = vmatpush1.bf16.msra.mxu0 %v3647
        %3878 = vmatprep.subr.bf16.mxu0 %v3650
        %3879 = vmatpush1.bf16.msra.mxu0 %v3649
        %3880 = vmatprep.subr.bf16.mxu0 %v3652
        %3881 = vmatpush1.bf16.msra.mxu0 %v3651
        %3882 = vmatprep.subr.bf16.mxu0 %v3654
        %3883 = vmatpush1.bf16.msra.mxu0 %v3653
        %3884 = vmatprep.subr.bf16.mxu0 %v3656
        %3885 = vmatpush1.bf16.msra.mxu0 %v3655
        %3886 = vmatprep.subr.bf16.mxu0 %v3658
        %3887 = vmatpush1.bf16.msra.mxu0 %v3657
        %3888 = vmatprep.subr.bf16.mxu0 %v3660
        %3889 = vmatpush1.bf16.msra.mxu0 %v3659
        %3890 = vmatprep.subr.bf16.mxu0 %v3662
        %3891 = vmatpush1.bf16.msra.mxu0 %v3661
        %3892 = vmatprep.subr.bf16.mxu0 %v3664
        %3893 = vmatpush1.bf16.msra.mxu0 %v3663
        %3894 = vmatprep.subr.bf16.mxu0 %v3666
        %3895 = vmatpush1.bf16.msra.mxu0 %v3665
        %3896 = vmatprep.mubr.bf16.mxu0 %v3298
        %3897 = vmatmul.mubr.bf16.gmra.mrb[0].mxu0 %v3295
        %v3898 = vpop.f32.mrb[0].mxu0
        %v3899 = vadd.f32 %v3766, %v3898
        %v3900 = vpop.f32.mrb[0].mxu0
        %v3901 = vadd.f32 %v3768, %v3900
        %v3902 = vpop.f32.mrb[0].mxu0
        %v3903 = vadd.f32 %v3770, %v3902
        %v3904 = vpop.f32.mrb[0].mxu0
        %v3905 = vadd.f32 %v3772, %v3904
        %3906 = vmatprep.mubr.bf16.mxu0 %v3306
        %3907 = vmatmul.mubr.bf16.gmra.mrb[0].mxu0 %v3304
        %v3908 = vpop.f32.mrb[0].mxu0
        %v3909 = vadd.f32 %v3776, %v3908
        %v3910 = vpop.f32.mrb[0].mxu0
        %v3911 = vadd.f32 %v3778, %v3910
        %v3912 = vpop.f32.mrb[0].mxu0
        %v3913 = vadd.f32 %v3780, %v3912
        %v3914 = vpop.f32.mrb[0].mxu0
        %v3915 = vadd.f32 %v3782, %v3914
        %3916 = vmatprep.mubr.bf16.mxu0 %v3314
        %3917 = vmatmul.mubr.bf16.gmra.mrb[0].mxu0 %v3312
        %v3918 = vpop.f32.mrb[0].mxu0
        %v3919 = vadd.f32 %v3786, %v3918
        %v3920 = vpop.f32.mrb[0].mxu0
        %v3921 = vadd.f32 %v3788, %v3920
        %v3922 = vpop.f32.mrb[0].mxu0
        %v3923 = vadd.f32 %v3790, %v3922
        %v3924 = vpop.f32.mrb[0].mxu0
        %v3925 = vadd.f32 %v3792, %v3924
        %3926 = vmatprep.mubr.bf16.mxu0 %v3322
        %3927 = vmatmul.mubr.bf16.gmra.mrb[0].mxu0 %v3320
        %v3928 = vpop.f32.mrb[0].mxu0
        %v3929 = vadd.f32 %v3796, %v3928
        %v3930 = vpop.f32.mrb[0].mxu0
        %v3931 = vadd.f32 %v3798, %v3930
        %v3932 = vpop.f32.mrb[0].mxu0
        %v3933 = vadd.f32 %v3800, %v3932
        %v3934 = vpop.f32.mrb[0].mxu0
        %v3935 = vadd.f32 %v3802, %v3934
        %3936 = vmatprep.mubr.bf16.mxu0 %v3330
        %3937 = vmatmul.mubr.bf16.gmra.mrb[0].mxu0 %v3328
        %v3938 = vpop.f32.mrb[0].mxu0
        %v3939 = vadd.f32 %v3806, %v3938
        %v3940 = vpop.f32.mrb[0].mxu0
        %v3941 = vadd.f32 %v3808, %v3940
        %v3942 = vpop.f32.mrb[0].mxu0
        %v3943 = vadd.f32 %v3810, %v3942
        %v3944 = vpop.f32.mrb[0].mxu0
        %v3945 = vadd.f32 %v3812, %v3944
        %3946 = vmatprep.mubr.bf16.mxu0 %v3338
        %3947 = vmatmul.mubr.bf16.gmra.mrb[0].mxu0 %v3336
        %v3948 = vpop.f32.mrb[0].mxu0
        %v3949 = vadd.f32 %v3816, %v3948
        %v3950 = vpop.f32.mrb[0].mxu0
        %v3951 = vadd.f32 %v3818, %v3950
        %v3952 = vpop.f32.mrb[0].mxu0
        %v3953 = vadd.f32 %v3820, %v3952
        %v3954 = vpop.f32.mrb[0].mxu0
        %v3955 = vadd.f32 %v3822, %v3954
        %3956 = vmatprep.mubr.bf16.mxu0 %v3346
        %3957 = vmatmul.mubr.bf16.gmra.mrb[0].mxu0 %v3344
        %v3958 = vpop.f32.mrb[0].mxu0
        %v3959 = vadd.f32 %v3826, %v3958
        %v3960 = vpop.f32.mrb[0].mxu0
        %v3961 = vadd.f32 %v3828, %v3960
        %v3962 = vpop.f32.mrb[0].mxu0
        %v3963 = vadd.f32 %v3830, %v3962
        %v3964 = vpop.f32.mrb[0].mxu0
        %v3965 = vadd.f32 %v3832, %v3964
        %3966 = vmatprep.mubr.bf16.mxu0 %v3354
        %3967 = vmatmul.mubr.bf16.gmra.mrb[0].mxu0 %v3352
        %v3968 = vpop.f32.mrb[0].mxu0
        %v3969 = vadd.f32 %v3836, %v3968
        %v3970 = vpop.f32.mrb[0].mxu0
        %v3971 = vadd.f32 %v3838, %v3970
        %v3972 = vpop.f32.mrb[0].mxu0
        %v3973 = vadd.f32 %v3840, %v3972
        %v3974 = vpop.f32.mrb[0].mxu0
        %v3975 = vadd.f32 %v3842, %v3974
        %3976 = vmatprep.mubr.bf16.mxu0 %v3362
        %3977 = vmatmul.mubr.bf16.gmra.mrb[0].mxu0 %v3360
        %v3978 = vpop.f32.mrb[0].mxu0
        %v3979 = vadd.f32 %v3846, %v3978
        %v3980 = vpop.f32.mrb[0].mxu0
        %v3981 = vadd.f32 %v3848, %v3980
        %v3982 = vpop.f32.mrb[0].mxu0
        %v3983 = vadd.f32 %v3850, %v3982
        %v3984 = vpop.f32.mrb[0].mxu0
        %v3985 = vadd.f32 %v3852, %v3984
        %3986 = vmatprep.mubr.bf16.mxu0 %v3370
        %3987 = vmatmul.mubr.bf16.gmra.mrb[0].mxu0 %v3368
        %v3988 = vpop.f32.mrb[0].mxu0
        %v3989 = vadd.f32 %v3856, %v3988
        %v3990 = vpop.f32.mrb[0].mxu0
        %v3991 = vadd.f32 %v3858, %v3990
        %v3992 = vpop.f32.mrb[0].mxu0
        %v3993 = vadd.f32 %v3860, %v3992
        %v3994 = vpop.f32.mrb[0].mxu0
        %v3995 = vadd.f32 %v3862, %v3994
        %3996 = vdwg.mxu0
        %v3997 = vadd.f32 %v3111, %v3899
        %v3998 = vadd.f32 %v3113, %v3901
        %v3999 = vadd.f32 %v3115, %v3903
        %v4000 = vadd.f32 %v3117, %v3905
        %v4001 = vadd.f32 %v3121, %v3909
        %v4002 = vadd.f32 %v3123, %v3911
        %v4003 = vadd.f32 %v3125, %v3913
        %v4004 = vadd.f32 %v3127, %v3915
        %v4005 = vadd.f32 %v3131, %v3919
        %v4006 = vadd.f32 %v3133, %v3921
        %v4007 = vadd.f32 %v3135, %v3923
        %v4008 = vadd.f32 %v3137, %v3925
        %v4009 = vadd.f32 %v3141, %v3929
        %v4010 = vadd.f32 %v3143, %v3931
        %v4011 = vadd.f32 %v3145, %v3933
        %v4012 = vadd.f32 %v3147, %v3935
        %v4013 = vadd.f32 %v3151, %v3939
        %v4014 = vadd.f32 %v3153, %v3941
        %v4015 = vadd.f32 %v3155, %v3943
        %v4016 = vadd.f32 %v3157, %v3945
        %v4017 = vadd.f32 %v3161, %v3949
        %v4018 = vadd.f32 %v3163, %v3951
        %v4019 = vadd.f32 %v3165, %v3953
        %v4020 = vadd.f32 %v3167, %v3955
        %v4021 = vadd.f32 %v3171, %v3959
        %v4022 = vadd.f32 %v3173, %v3961
        %v4023 = vadd.f32 %v3175, %v3963
        %v4024 = vadd.f32 %v3177, %v3965
        %v4025 = vadd.f32 %v3181, %v3969
        %v4026 = vadd.f32 %v3183, %v3971
        %v4027 = vadd.f32 %v3185, %v3973
        %v4028 = vadd.f32 %v3187, %v3975
        %v4029 = vadd.f32 %v3191, %v3979
        %v4030 = vadd.f32 %v3193, %v3981
        %v4031 = vadd.f32 %v3195, %v3983
        %v4032 = vadd.f32 %v3197, %v3985
        %v4033 = vadd.f32 %v3201, %v3989
        %v4034 = vadd.f32 %v3203, %v3991
        %v4035 = vadd.f32 %v3205, %v3993
        %v4036 = vadd.f32 %v3207, %v3995
        %v4037 = vld [vmem:[%s4] sm:$0x3]
        %v4038 = vld [vmem:[%s5] sm:$0x3]
        %v4040 = vlaneseq
        %v4041 = vshrl.u32 %v4040, 7
        %v4042 = vsub.s32 0, %v4041
        %v4043 = vrot.slane %v4037, %v4042
        %v4044 = vlaneseq
        %v4045 = vshrl.u32 %v4044, 7
        %v4046 = vsub.s32 1, %v4045
        %v4047 = vrot.slane %v4037, %v4046
        %v4050 = vmul.f32 %v3997, %v4043
        %v4051 = vmul.f32 %v3998, %v4047
        %v4053 = vlaneseq
        %v4054 = vshrl.u32 %v4053, 7
        %v4055 = vsub.s32 0, %v4054
        %v4056 = vrot.slane %v4038, %v4055
        %v4057 = vlaneseq
        %v4058 = vshrl.u32 %v4057, 7
        %v4059 = vsub.s32 1, %v4058
        %v4060 = vrot.slane %v4038, %v4059
        %v4063 = vadd.f32 %v4050, %v4056
        %v4064 = vadd.f32 %v4051, %v4060
        %v4065 = vmax.f32 %v4063, 0.0
        %v4066 = vmax.f32 %v4064, 0.0
        %v4067 = vpack.c.bf16 %v4065, %v4065
        %v4068 = vpack.c.bf16 %v4066, %v4066
        %v4071 = vunpack.c.l.b16 %v4067
        %v4072 = vunpack.c.l.b16 %v4068
        %v4073 = vpack.c.b16 %v4072, %v4071
        %v4075 = vshrl.u32 %v4073, 16
        %v4077 = vrot.slane %v4075, 7
        %v4078 = vshll.u32 %v4073, 16
        %v4080 = vor.u32 %v4077, %v4078
        %v4081 = vrot.slane %v4077, 4
        %v4084 = vld [vmem:[#allocation2 + $0x4] sm:$0xff]
        %v4085 = vsel %vm699, %v4080, %v4084
        %4086 = vst [vmem:[#allocation2 + $0x4] sm:$0xff] %v4085
        %v4087 = vld [vmem:[#allocation2 + $0x14] sm:$0x11]
        %v4088 = vsel %vm709, %v4081, %v4087
        %4089 = vst [vmem:[#allocation2 + $0x14] sm:$0x11] %v4088
        %v4090 = vmul.f32 %v3999, %v4043
        %v4091 = vmul.f32 %v4000, %v4047
        %v4092 = vmul.f32 %v4001, %v4043
        %v4093 = vmul.f32 %v4002, %v4047
        %v4094 = vadd.f32 %v4090, %v4056
        %v4095 = vadd.f32 %v4091, %v4060
        %v4096 = vadd.f32 %v4092, %v4056
        %v4097 = vadd.f32 %v4093, %v4060
        %v4098 = vmax.f32 %v4094, 0.0
        %v4099 = vmax.f32 %v4095, 0.0
        %v4100 = vmax.f32 %v4096, 0.0
        %v4101 = vmax.f32 %v4097, 0.0
        %v4102 = vpack.c.bf16 %v4100, %v4098
        %v4103 = vpack.c.bf16 %v4101, %v4099
        %v4106 = vunpack.c.l.b16 %v4102
        %v4107 = vunpack.c.l.b16 %v4103
        %v4108 = vunpack.c.h.b16 %v4102
        %v4109 = vunpack.c.h.b16 %v4103
        %v4110 = vpack.c.b16 %v4107, %v4106
        %v4111 = vpack.c.b16 %v4109, %v4108
        %vm4112 = vsmask.f32 4368
        %vm4113 = vmor %vm704, %vm4112
        %v4115 = vshrl.u32 %v4110, 16
        %v4117 = vrot.slane %v4115, 7
        %v4118 = vshll.u32 %v4110, 16
        %v4120 = vor.u32 %v4117, %v4118
        %v4121 = vrot.slane %v4117, 4
        %v4123 = vshrl.u32 %v4111, 16
        %v4125 = vrot.slane %v4123, 7
        %v4126 = vshll.u32 %v4111, 16
        %v4128 = vor.u32 %v4125, %v4126
        %v4129 = vsel %vm4113, %v4121, %v4128
        %v4132 = vld [vmem:[#allocation2 + $0x14] sm:$0xee]
        %v4133 = vsel %vm735, %v4120, %v4132
        %4134 = vst [vmem:[#allocation2 + $0x14] sm:$0xee] %v4133
        %v4135 = vld [vmem:[#allocation2 + $0x24] sm:$0x33]
        %v4136 = vsel %vm745, %v4129, %v4135
        %4137 = vst [vmem:[#allocation2 + $0x24] sm:$0x33] %v4136
        %v4138 = vmul.f32 %v4003, %v4043
        %v4139 = vmul.f32 %v4004, %v4047
        %v4140 = vadd.f32 %v4138, %v4056
        %v4141 = vadd.f32 %v4139, %v4060
        %v4142 = vmax.f32 %v4140, 0.0
        %v4143 = vmax.f32 %v4141, 0.0
        %v4144 = vpack.c.bf16 %v4142, %v4100
        %v4145 = vpack.c.bf16 %v4143, %v4101
        %v4148 = vunpack.c.l.b16 %v4144
        %v4149 = vunpack.c.l.b16 %v4145
        %v4150 = vunpack.c.h.b16 %v4144
        %v4151 = vunpack.c.h.b16 %v4145
        %v4152 = vpack.c.b16 %v4149, %v4148
        %v4153 = vpack.c.b16 %v4151, %v4150
        %v4155 = vshrl.u32 %v4152, 16
        %v4157 = vrot.slane %v4155, 7
        %v4158 = vshll.u32 %v4152, 16
        %v4160 = vor.u32 %v4157, %v4158
        %v4161 = vrot.slane %v4157, 4
        %v4163 = vshrl.u32 %v4153, 16
        %v4165 = vrot.slane %v4163, 7
        %v4166 = vshll.u32 %v4153, 16
        %v4168 = vor.u32 %v4165, %v4166
        %v4169 = vsel %vm4113, %v4161, %v4168
        %v4172 = vld [vmem:[#allocation2 + $0x24] sm:$0xcc]
        %v4173 = vsel %vm771, %v4160, %v4172
        %4174 = vst [vmem:[#allocation2 + $0x24] sm:$0xcc] %v4173
        %v4175 = vld [vmem:[#allocation2 + $0x34] sm:$0x77]
        %v4176 = vsel %vm781, %v4169, %v4175
        %4177 = vst [vmem:[#allocation2 + $0x34] sm:$0x77] %v4176
        %v4178 = vmul.f32 %v4005, %v4043
        %v4179 = vmul.f32 %v4006, %v4047
        %v4180 = vadd.f32 %v4178, %v4056
        %v4181 = vadd.f32 %v4179, %v4060
        %v4182 = vmax.f32 %v4180, 0.0
        %v4183 = vmax.f32 %v4181, 0.0
        %v4184 = vpack.c.bf16 %v4182, %v4142
        %v4185 = vpack.c.bf16 %v4183, %v4143
        %v4188 = vunpack.c.l.b16 %v4184
        %v4189 = vunpack.c.l.b16 %v4185
        %v4190 = vunpack.c.h.b16 %v4184
        %v4191 = vunpack.c.h.b16 %v4185
        %v4192 = vpack.c.b16 %v4189, %v4188
        %v4193 = vpack.c.b16 %v4191, %v4190
        %v4195 = vshll.u32 %v4192, 16
        %v4197 = vshrl.u32 %v4192, 16
        %v4199 = vrot.slane %v4197, 7
        %v4200 = vrot.slane %v4199, 4
        %v4202 = vshrl.u32 %v4193, 16
        %v4204 = vrot.slane %v4202, 7
        %v4205 = vshll.u32 %v4193, 16
        %v4207 = vor.u32 %v4204, %v4205
        %v4208 = vsel %vm4113, %v4200, %v4207
        %v4211 = vld [vmem:[#allocation2 + $0x34] sm:$0x88]
        %v4212 = vsel %vm807, %v4195, %v4211
        %4213 = vst [vmem:[#allocation2 + $0x34] sm:$0x88] %v4212
        %v4214 = vld [vmem:[#allocation2 + $0x44] sm:$0xff]
        %v4215 = vsel %vm815, %v4208, %v4214
        %4216 = vst [vmem:[#allocation2 + $0x44] sm:$0xff] %v4215
        %v4217 = vmul.f32 %v4007, %v4043
        %v4218 = vmul.f32 %v4008, %v4047
        %v4219 = vadd.f32 %v4217, %v4056
        %v4220 = vadd.f32 %v4218, %v4060
        %v4221 = vmax.f32 %v4219, 0.0
        %v4222 = vmax.f32 %v4220, 0.0
        %v4223 = vpack.c.bf16 %v4221, %v4221
        %v4224 = vpack.c.bf16 %v4222, %v4222
        %v4227 = vunpack.c.l.b16 %v4223
        %v4228 = vunpack.c.l.b16 %v4224
        %v4229 = vpack.c.b16 %v4228, %v4227
        %v4231 = vshrl.u32 %v4229, 16
        %v4233 = vrot.slane %v4231, 7
        %v4234 = vshll.u32 %v4229, 16
        %v4236 = vor.u32 %v4233, %v4234
        %v4237 = vrot.slane %v4233, 4
        %v4240 = vld [vmem:[#allocation2 + $0x54] sm:$0xff]
        %v4241 = vsel %vm699, %v4236, %v4240
        %4242 = vst [vmem:[#allocation2 + $0x54] sm:$0xff] %v4241
        %v4243 = vld [vmem:[#allocation2 + $0x64] sm:$0x11]
        %v4244 = vsel %vm709, %v4237, %v4243
        %4245 = vst [vmem:[#allocation2 + $0x64] sm:$0x11] %v4244
        %v4246 = vmul.f32 %v4009, %v4043
        %v4247 = vmul.f32 %v4010, %v4047
        %v4248 = vmul.f32 %v4011, %v4043
        %v4249 = vmul.f32 %v4012, %v4047
        %v4250 = vadd.f32 %v4246, %v4056
        %v4251 = vadd.f32 %v4247, %v4060
        %v4252 = vadd.f32 %v4248, %v4056
        %v4253 = vadd.f32 %v4249, %v4060
        %v4254 = vmax.f32 %v4250, 0.0
        %v4255 = vmax.f32 %v4251, 0.0
        %v4256 = vmax.f32 %v4252, 0.0
        %v4257 = vmax.f32 %v4253, 0.0
        %v4258 = vpack.c.bf16 %v4256, %v4254
        %v4259 = vpack.c.bf16 %v4257, %v4255
        %v4262 = vunpack.c.l.b16 %v4258
        %v4263 = vunpack.c.l.b16 %v4259
        %v4264 = vunpack.c.h.b16 %v4258
        %v4265 = vunpack.c.h.b16 %v4259
        %v4266 = vpack.c.b16 %v4263, %v4262
        %v4267 = vpack.c.b16 %v4265, %v4264
        %v4269 = vshrl.u32 %v4266, 16
        %v4271 = vrot.slane %v4269, 7
        %v4272 = vshll.u32 %v4266, 16
        %v4274 = vor.u32 %v4271, %v4272
        %v4275 = vrot.slane %v4271, 4
        %v4277 = vshrl.u32 %v4267, 16
        %v4279 = vrot.slane %v4277, 7
        %v4280 = vshll.u32 %v4267, 16
        %v4282 = vor.u32 %v4279, %v4280
        %v4283 = vsel %vm4113, %v4275, %v4282
        %v4286 = vld [vmem:[#allocation2 + $0x64] sm:$0xee]
        %v4287 = vsel %vm735, %v4274, %v4286
        %4288 = vst [vmem:[#allocation2 + $0x64] sm:$0xee] %v4287
        %v4289 = vld [vmem:[#allocation2 + $0x74] sm:$0x33]
        %v4290 = vsel %vm745, %v4283, %v4289
        %4291 = vst [vmem:[#allocation2 + $0x74] sm:$0x33] %v4290
        %v4292 = vmul.f32 %v4013, %v4043
        %v4293 = vmul.f32 %v4014, %v4047
        %v4294 = vadd.f32 %v4292, %v4056
        %v4295 = vadd.f32 %v4293, %v4060
        %v4296 = vmax.f32 %v4294, 0.0
        %v4297 = vmax.f32 %v4295, 0.0
        %v4298 = vpack.c.bf16 %v4296, %v4256
        %v4299 = vpack.c.bf16 %v4297, %v4257
        %v4302 = vunpack.c.l.b16 %v4298
        %v4303 = vunpack.c.l.b16 %v4299
        %v4304 = vunpack.c.h.b16 %v4298
        %v4305 = vunpack.c.h.b16 %v4299
        %v4306 = vpack.c.b16 %v4303, %v4302
        %v4307 = vpack.c.b16 %v4305, %v4304
        %v4309 = vshrl.u32 %v4306, 16
        %v4311 = vrot.slane %v4309, 7
        %v4312 = vshll.u32 %v4306, 16
        %v4314 = vor.u32 %v4311, %v4312
        %v4315 = vrot.slane %v4311, 4
        %v4317 = vshrl.u32 %v4307, 16
        %v4319 = vrot.slane %v4317, 7
        %v4320 = vshll.u32 %v4307, 16
        %v4322 = vor.u32 %v4319, %v4320
        %v4323 = vsel %vm4113, %v4315, %v4322
        %v4326 = vld [vmem:[#allocation2 + $0x74] sm:$0xcc]
        %v4327 = vsel %vm771, %v4314, %v4326
        %4328 = vst [vmem:[#allocation2 + $0x74] sm:$0xcc] %v4327
        %v4329 = vld [vmem:[#allocation2 + $0x84] sm:$0x77]
        %v4330 = vsel %vm781, %v4323, %v4329
        %4331 = vst [vmem:[#allocation2 + $0x84] sm:$0x77] %v4330
        %v4332 = vmul.f32 %v4015, %v4043
        %v4333 = vmul.f32 %v4016, %v4047
        %v4334 = vadd.f32 %v4332, %v4056
        %v4335 = vadd.f32 %v4333, %v4060
        %v4336 = vmax.f32 %v4334, 0.0
        %v4337 = vmax.f32 %v4335, 0.0
        %v4338 = vpack.c.bf16 %v4336, %v4296
        %v4339 = vpack.c.bf16 %v4337, %v4297
        %v4342 = vunpack.c.l.b16 %v4338
        %v4343 = vunpack.c.l.b16 %v4339
        %v4344 = vunpack.c.h.b16 %v4338
        %v4345 = vunpack.c.h.b16 %v4339
        %v4346 = vpack.c.b16 %v4343, %v4342
        %v4347 = vpack.c.b16 %v4345, %v4344
        %v4349 = vshll.u32 %v4346, 16
        %v4351 = vshrl.u32 %v4346, 16
        %v4353 = vrot.slane %v4351, 7
        %v4354 = vrot.slane %v4353, 4
        %v4356 = vshrl.u32 %v4347, 16
        %v4358 = vrot.slane %v4356, 7
        %v4359 = vshll.u32 %v4347, 16
        %v4361 = vor.u32 %v4358, %v4359
        %v4362 = vsel %vm4113, %v4354, %v4361
        %v4365 = vld [vmem:[#allocation2 + $0x84] sm:$0x88]
        %v4366 = vsel %vm807, %v4349, %v4365
        %4367 = vst [vmem:[#allocation2 + $0x84] sm:$0x88] %v4366
        %v4368 = vld [vmem:[#allocation2 + $0x94] sm:$0xff]
        %v4369 = vsel %vm815, %v4362, %v4368
        %4370 = vst [vmem:[#allocation2 + $0x94] sm:$0xff] %v4369
        %v4371 = vmul.f32 %v4017, %v4043
        %v4372 = vmul.f32 %v4018, %v4047
        %v4373 = vadd.f32 %v4371, %v4056
        %v4374 = vadd.f32 %v4372, %v4060
        %v4375 = vmax.f32 %v4373, 0.0
        %v4376 = vmax.f32 %v4374, 0.0
        %v4377 = vpack.c.bf16 %v4375, %v4375
        %v4378 = vpack.c.bf16 %v4376, %v4376
        %v4381 = vunpack.c.l.b16 %v4377
        %v4382 = vunpack.c.l.b16 %v4378
        %v4383 = vpack.c.b16 %v4382, %v4381
        %v4385 = vshrl.u32 %v4383, 16
        %v4387 = vrot.slane %v4385, 7
        %v4388 = vshll.u32 %v4383, 16
        %v4390 = vor.u32 %v4387, %v4388
        %v4391 = vrot.slane %v4387, 4
        %v4394 = vld [vmem:[#allocation2 + $0xa4] sm:$0xff]
        %v4395 = vsel %vm699, %v4390, %v4394
        %4396 = vst [vmem:[#allocation2 + $0xa4] sm:$0xff] %v4395
        %v4397 = vld [vmem:[#allocation2 + $0xb4] sm:$0x11]
        %v4398 = vsel %vm709, %v4391, %v4397
        %4399 = vst [vmem:[#allocation2 + $0xb4] sm:$0x11] %v4398
        %v4400 = vmul.f32 %v4019, %v4043
        %v4401 = vmul.f32 %v4020, %v4047
        %v4402 = vmul.f32 %v4021, %v4043
        %v4403 = vmul.f32 %v4022, %v4047
        %v4404 = vadd.f32 %v4400, %v4056
        %v4405 = vadd.f32 %v4401, %v4060
        %v4406 = vadd.f32 %v4402, %v4056
        %v4407 = vadd.f32 %v4403, %v4060
        %v4408 = vmax.f32 %v4404, 0.0
        %v4409 = vmax.f32 %v4405, 0.0
        %v4410 = vmax.f32 %v4406, 0.0
        %v4411 = vmax.f32 %v4407, 0.0
        %v4412 = vpack.c.bf16 %v4410, %v4408
        %v4413 = vpack.c.bf16 %v4411, %v4409
        %v4416 = vunpack.c.l.b16 %v4412
        %v4417 = vunpack.c.l.b16 %v4413
        %v4418 = vunpack.c.h.b16 %v4412
        %v4419 = vunpack.c.h.b16 %v4413
        %v4420 = vpack.c.b16 %v4417, %v4416
        %v4421 = vpack.c.b16 %v4419, %v4418
        %v4423 = vshrl.u32 %v4420, 16
        %v4425 = vrot.slane %v4423, 7
        %v4426 = vshll.u32 %v4420, 16
        %v4428 = vor.u32 %v4425, %v4426
        %v4429 = vrot.slane %v4425, 4
        %v4431 = vshrl.u32 %v4421, 16
        %v4433 = vrot.slane %v4431, 7
        %v4434 = vshll.u32 %v4421, 16
        %v4436 = vor.u32 %v4433, %v4434
        %v4437 = vsel %vm4113, %v4429, %v4436
        %v4440 = vld [vmem:[#allocation2 + $0xb4] sm:$0xee]
        %v4441 = vsel %vm735, %v4428, %v4440
        %4442 = vst [vmem:[#allocation2 + $0xb4] sm:$0xee] %v4441
        %v4443 = vld [vmem:[#allocation2 + $0xc4] sm:$0x33]
        %v4444 = vsel %vm745, %v4437, %v4443
        %4445 = vst [vmem:[#allocation2 + $0xc4] sm:$0x33] %v4444
        %v4446 = vmul.f32 %v4023, %v4043
        %v4447 = vmul.f32 %v4024, %v4047
        %v4448 = vadd.f32 %v4446, %v4056
        %v4449 = vadd.f32 %v4447, %v4060
        %v4450 = vmax.f32 %v4448, 0.0
        %v4451 = vmax.f32 %v4449, 0.0
        %v4452 = vpack.c.bf16 %v4450, %v4410
        %v4453 = vpack.c.bf16 %v4451, %v4411
        %v4456 = vunpack.c.l.b16 %v4452
        %v4457 = vunpack.c.l.b16 %v4453
        %v4458 = vunpack.c.h.b16 %v4452
        %v4459 = vunpack.c.h.b16 %v4453
        %v4460 = vpack.c.b16 %v4457, %v4456
        %v4461 = vpack.c.b16 %v4459, %v4458
        %v4463 = vshrl.u32 %v4460, 16
        %v4465 = vrot.slane %v4463, 7
        %v4466 = vshll.u32 %v4460, 16
        %v4468 = vor.u32 %v4465, %v4466
        %v4469 = vrot.slane %v4465, 4
        %v4471 = vshrl.u32 %v4461, 16
        %v4473 = vrot.slane %v4471, 7
        %v4474 = vshll.u32 %v4461, 16
        %v4476 = vor.u32 %v4473, %v4474
        %v4477 = vsel %vm4113, %v4469, %v4476
        %v4480 = vld [vmem:[#allocation2 + $0xc4] sm:$0xcc]
        %v4481 = vsel %vm771, %v4468, %v4480
        %4482 = vst [vmem:[#allocation2 + $0xc4] sm:$0xcc] %v4481
        %v4483 = vld [vmem:[#allocation2 + $0xd4] sm:$0x77]
        %v4484 = vsel %vm781, %v4477, %v4483
        %4485 = vst [vmem:[#allocation2 + $0xd4] sm:$0x77] %v4484
        %v4486 = vmul.f32 %v4025, %v4043
        %v4487 = vmul.f32 %v4026, %v4047
        %v4488 = vadd.f32 %v4486, %v4056
        %v4489 = vadd.f32 %v4487, %v4060
        %v4490 = vmax.f32 %v4488, 0.0
        %v4491 = vmax.f32 %v4489, 0.0
        %v4492 = vpack.c.bf16 %v4490, %v4450
        %v4493 = vpack.c.bf16 %v4491, %v4451
        %v4496 = vunpack.c.l.b16 %v4492
        %v4497 = vunpack.c.l.b16 %v4493
        %v4498 = vunpack.c.h.b16 %v4492
        %v4499 = vunpack.c.h.b16 %v4493
        %v4500 = vpack.c.b16 %v4497, %v4496
        %v4501 = vpack.c.b16 %v4499, %v4498
        %v4503 = vshll.u32 %v4500, 16
        %v4505 = vshrl.u32 %v4500, 16
        %v4507 = vrot.slane %v4505, 7
        %v4508 = vrot.slane %v4507, 4
        %v4510 = vshrl.u32 %v4501, 16
        %v4512 = vrot.slane %v4510, 7
        %v4513 = vshll.u32 %v4501, 16
        %v4515 = vor.u32 %v4512, %v4513
        %v4516 = vsel %vm4113, %v4508, %v4515
        %v4519 = vld [vmem:[#allocation2 + $0xd4] sm:$0x88]
        %v4520 = vsel %vm807, %v4503, %v4519
        %4521 = vst [vmem:[#allocation2 + $0xd4] sm:$0x88] %v4520
        %v4522 = vld [vmem:[#allocation2 + $0xe4] sm:$0xff]
        %v4523 = vsel %vm815, %v4516, %v4522
        %4524 = vst [vmem:[#allocation2 + $0xe4] sm:$0xff] %v4523
        %v4525 = vmul.f32 %v4027, %v4043
        %v4526 = vmul.f32 %v4028, %v4047
        %v4527 = vadd.f32 %v4525, %v4056
        %v4528 = vadd.f32 %v4526, %v4060
        %v4529 = vmax.f32 %v4527, 0.0
        %v4530 = vmax.f32 %v4528, 0.0
        %v4531 = vpack.c.bf16 %v4529, %v4529
        %v4532 = vpack.c.bf16 %v4530, %v4530
        %v4535 = vunpack.c.l.b16 %v4531
        %v4536 = vunpack.c.l.b16 %v4532
        %v4537 = vpack.c.b16 %v4536, %v4535
        %v4539 = vshrl.u32 %v4537, 16
        %v4541 = vrot.slane %v4539, 7
        %v4542 = vshll.u32 %v4537, 16
        %v4544 = vor.u32 %v4541, %v4542
        %v4545 = vrot.slane %v4541, 4
        %v4548 = vld [vmem:[#allocation2 + $0xf4] sm:$0xff]
        %v4549 = vsel %vm699, %v4544, %v4548
        %4550 = vst [vmem:[#allocation2 + $0xf4] sm:$0xff] %v4549
        %v4551 = vld [vmem:[#allocation2 + $0x104] sm:$0x11]
        %v4552 = vsel %vm709, %v4545, %v4551
        %4553 = vst [vmem:[#allocation2 + $0x104] sm:$0x11] %v4552
        %v4554 = vmul.f32 %v4029, %v4043
        %v4555 = vmul.f32 %v4030, %v4047
        %v4556 = vmul.f32 %v4031, %v4043
        %v4557 = vmul.f32 %v4032, %v4047
        %v4558 = vadd.f32 %v4554, %v4056
        %v4559 = vadd.f32 %v4555, %v4060
        %v4560 = vadd.f32 %v4556, %v4056
        %v4561 = vadd.f32 %v4557, %v4060
        %v4562 = vmax.f32 %v4558, 0.0
        %v4563 = vmax.f32 %v4559, 0.0
        %v4564 = vmax.f32 %v4560, 0.0
        %v4565 = vmax.f32 %v4561, 0.0
        %v4566 = vpack.c.bf16 %v4564, %v4562
        %v4567 = vpack.c.bf16 %v4565, %v4563
        %v4570 = vunpack.c.l.b16 %v4566
        %v4571 = vunpack.c.l.b16 %v4567
        %v4572 = vunpack.c.h.b16 %v4566
        %v4573 = vunpack.c.h.b16 %v4567
        %v4574 = vpack.c.b16 %v4571, %v4570
        %v4575 = vpack.c.b16 %v4573, %v4572
        %v4577 = vshrl.u32 %v4574, 16
        %v4579 = vrot.slane %v4577, 7
        %v4580 = vshll.u32 %v4574, 16
        %v4582 = vor.u32 %v4579, %v4580
        %v4583 = vrot.slane %v4579, 4
        %v4585 = vshrl.u32 %v4575, 16
        %v4587 = vrot.slane %v4585, 7
        %v4588 = vshll.u32 %v4575, 16
        %v4590 = vor.u32 %v4587, %v4588
        %v4591 = vsel %vm4113, %v4583, %v4590
        %v4594 = vld [vmem:[#allocation2 + $0x104] sm:$0xee]
        %v4595 = vsel %vm735, %v4582, %v4594
        %4596 = vst [vmem:[#allocation2 + $0x104] sm:$0xee] %v4595
        %v4597 = vld [vmem:[#allocation2 + $0x114] sm:$0x33]
        %v4598 = vsel %vm745, %v4591, %v4597
        %4599 = vst [vmem:[#allocation2 + $0x114] sm:$0x33] %v4598
        %v4600 = vmul.f32 %v4033, %v4043
        %v4601 = vmul.f32 %v4034, %v4047
        %v4602 = vadd.f32 %v4600, %v4056
        %v4603 = vadd.f32 %v4601, %v4060
        %v4604 = vmax.f32 %v4602, 0.0
        %v4605 = vmax.f32 %v4603, 0.0
        %v4606 = vpack.c.bf16 %v4604, %v4564
        %v4607 = vpack.c.bf16 %v4605, %v4565
        %v4610 = vunpack.c.l.b16 %v4606
        %v4611 = vunpack.c.l.b16 %v4607
        %v4612 = vunpack.c.h.b16 %v4606
        %v4613 = vunpack.c.h.b16 %v4607
        %v4614 = vpack.c.b16 %v4611, %v4610
        %v4615 = vpack.c.b16 %v4613, %v4612
        %v4617 = vshrl.u32 %v4614, 16
        %v4619 = vrot.slane %v4617, 7
        %v4620 = vshll.u32 %v4614, 16
        %v4622 = vor.u32 %v4619, %v4620
        %v4623 = vrot.slane %v4619, 4
        %v4625 = vshrl.u32 %v4615, 16
        %v4627 = vrot.slane %v4625, 7
        %v4628 = vshll.u32 %v4615, 16
        %v4630 = vor.u32 %v4627, %v4628
        %v4631 = vsel %vm4113, %v4623, %v4630
        %v4634 = vld [vmem:[#allocation2 + $0x114] sm:$0xcc]
        %v4635 = vsel %vm771, %v4622, %v4634
        %4636 = vst [vmem:[#allocation2 + $0x114] sm:$0xcc] %v4635
        %v4637 = vld [vmem:[#allocation2 + $0x124] sm:$0x77]
        %v4638 = vsel %vm781, %v4631, %v4637
        %4639 = vst [vmem:[#allocation2 + $0x124] sm:$0x77] %v4638
        %v4640 = vmul.f32 %v4035, %v4043
        %v4641 = vmul.f32 %v4036, %v4047
        %v4642 = vadd.f32 %v4640, %v4056
        %v4643 = vadd.f32 %v4641, %v4060
        %v4644 = vmax.f32 %v4642, 0.0
        %v4645 = vmax.f32 %v4643, 0.0
        %v4646 = vpack.c.bf16 %v4644, %v4604
        %v4647 = vpack.c.bf16 %v4645, %v4605
        %v4650 = vunpack.c.l.b16 %v4646
        %v4651 = vunpack.c.l.b16 %v4647
        %v4652 = vunpack.c.h.b16 %v4646
        %v4653 = vunpack.c.h.b16 %v4647
        %v4654 = vpack.c.b16 %v4651, %v4650
        %v4655 = vpack.c.b16 %v4653, %v4652
        %v4657 = vshll.u32 %v4654, 16
        %v4659 = vshrl.u32 %v4654, 16
        %v4661 = vrot.slane %v4659, 7
        %v4662 = vrot.slane %v4661, 4
        %v4664 = vshrl.u32 %v4655, 16
        %v4666 = vrot.slane %v4664, 7
        %v4667 = vshll.u32 %v4655, 16
        %v4669 = vor.u32 %v4666, %v4667
        %v4670 = vsel %vm4113, %v4662, %v4669
        %v4673 = vld [vmem:[#allocation2 + $0x124] sm:$0x88]
        %v4674 = vsel %vm807, %v4657, %v4673
        %4675 = vst [vmem:[#allocation2 + $0x124] sm:$0x88] %v4674
        %v4676 = vld [vmem:[#allocation2 + $0x134] sm:$0xff]
        %v4677 = vsel %vm815, %v4670, %v4676
        %4678 = vst [vmem:[#allocation2 + $0x134] sm:$0xff] %v4677
        %v4679 = vld [vmem:[#allocation2] sm:$0xff]
        %v4680 = vld [vmem:[#allocation2 + $0x8] sm:$0xff]
        %v4681 = vld [vmem:[#allocation2 + $0x10] sm:$0xff]
        %v4682 = vld [vmem:[#allocation2 + $0x18] sm:$0xff]
        %v4683 = vld [vmem:[#allocation2 + $0x20] sm:$0xff]
        %v4684 = vld [vmem:[#allocation2 + $0x28] sm:$0xff]
        %v4685 = vld [vmem:[#allocation2 + $0x30] sm:$0xff]
        %v4686 = vld [vmem:[#allocation2 + $0x38] sm:$0xff]
        %v4687 = vld [vmem:[#allocation2 + $0x40] sm:$0xff]
        %v4688 = vld [vmem:[#allocation2 + $0x48] sm:$0xff]
        %v4689 = vld [vmem:[#allocation2 + $0x50] sm:$0xff]
        %v4690 = vld [vmem:[#allocation2 + $0x58] sm:$0xff]
        %v4691 = vld [vmem:[#allocation2 + $0x60] sm:$0xff]
        %v4692 = vld [vmem:[#allocation2 + $0x68] sm:$0xff]
        %v4693 = vld [vmem:[#allocation2 + $0x70] sm:$0xff]
        %v4694 = vld [vmem:[#allocation2 + $0x78] sm:$0xff]
        %v4695 = vld [vmem:[#allocation2 + $0x80] sm:$0xff]
        %v4696 = vld [vmem:[#allocation2 + $0x88] sm:$0xff]
        %v4697 = vld [vmem:[#allocation2 + $0x90] sm:$0xff]
        %v4698 = vld [vmem:[#allocation2 + $0x98] sm:$0xff]
        %v4699 = vld [vmem:[#allocation2 + $0xa0] sm:$0xff]
        %v4700 = vld [vmem:[#allocation2 + $0xa8] sm:$0xff]
        %v4701 = vld [vmem:[#allocation2 + $0xb0] sm:$0xff]
        %v4702 = vld [vmem:[#allocation2 + $0xb8] sm:$0xff]
        %v4703 = vld [vmem:[#allocation2 + $0xc0] sm:$0xff]
        %v4704 = vld [vmem:[#allocation2 + $0xc8] sm:$0xff]
        %v4705 = vld [vmem:[#allocation2 + $0xd0] sm:$0xff]
        %v4706 = vld [vmem:[#allocation2 + $0xd8] sm:$0xff]
        %v4707 = vld [vmem:[#allocation2 + $0xe0] sm:$0xff]
        %v4708 = vld [vmem:[#allocation2 + $0xe8] sm:$0xff]
        %v4709 = vld [vmem:[#allocation2 + $0xf0] sm:$0xff]
        %v4710 = vld [vmem:[#allocation2 + $0xf8] sm:$0xff]
        %v4711 = vld [vmem:[#allocation2 + $0x100] sm:$0xff]
        %v4712 = vld [vmem:[#allocation2 + $0x108] sm:$0xff]
        %v4713 = vld [vmem:[#allocation2 + $0x110] sm:$0xff]
        %v4714 = vld [vmem:[#allocation2 + $0x118] sm:$0xff]
        %v4715 = vld [vmem:[#allocation2 + $0x120] sm:$0xff]
        %v4716 = vld [vmem:[#allocation2 + $0x128] sm:$0xff]
        %v4717 = vld [vmem:[#allocation2 + $0x130] sm:$0xff]
        %v4718 = vld [vmem:[#allocation2 + $0x138] sm:$0xff]
        %v4719 = vld [vmem:[#allocation9] sm:$0xff]
        %v4720 = vld [vmem:[#allocation9 + $0x8] sm:$0xff]
        %v4721 = vld [vmem:[#allocation9 + $0x10] sm:$0xff]
        %v4722 = vld [vmem:[#allocation9 + $0x18] sm:$0xff]
        %v4723 = vld [vmem:[#allocation9 + $0x20] sm:$0xff]
        %v4724 = vld [vmem:[#allocation9 + $0x28] sm:$0xff]
        %v4725 = vld [vmem:[#allocation9 + $0x30] sm:$0xff]
        %v4726 = vld [vmem:[#allocation9 + $0x38] sm:$0xff]
        %v4727 = vld [vmem:[#allocation9 + $0x40] sm:$0xff]
        %v4728 = vld [vmem:[#allocation9 + $0x48] sm:$0xff]
        %v4729 = vld [vmem:[#allocation9 + $0x50] sm:$0xff]
        %v4730 = vld [vmem:[#allocation9 + $0x58] sm:$0xff]
        %v4731 = vld [vmem:[#allocation9 + $0x60] sm:$0xff]
        %v4732 = vld [vmem:[#allocation9 + $0x68] sm:$0xff]
        %v4733 = vld [vmem:[#allocation9 + $0x70] sm:$0xff]
        %v4734 = vld [vmem:[#allocation9 + $0x78] sm:$0xff]
        %v4735 = vld [vmem:[#allocation9 + $0x80] sm:$0xff]
        %v4736 = vld [vmem:[#allocation9 + $0x88] sm:$0xff]
        %v4737 = vld [vmem:[#allocation9 + $0x90] sm:$0xff]
        %v4738 = vld [vmem:[#allocation9 + $0x98] sm:$0xff]
        %v4739 = vld [vmem:[#allocation9 + $0xa0] sm:$0xff]
        %v4740 = vld [vmem:[#allocation9 + $0xa8] sm:$0xff]
        %v4741 = vld [vmem:[#allocation9 + $0xb0] sm:$0xff]
        %v4742 = vld [vmem:[#allocation9 + $0xb8] sm:$0xff]
        %v4743 = vld [vmem:[#allocation9 + $0xc0] sm:$0xff]
        %v4744 = vld [vmem:[#allocation9 + $0xc8] sm:$0xff]
        %v4745 = vld [vmem:[#allocation9 + $0xd0] sm:$0xff]
        %v4746 = vld [vmem:[#allocation9 + $0xd8] sm:$0xff]
        %v4747 = vld [vmem:[#allocation9 + $0xe0] sm:$0xff]
        %v4748 = vld [vmem:[#allocation9 + $0xe8] sm:$0xff]
        %v4749 = vld [vmem:[#allocation9 + $0xf0] sm:$0xff]
        %v4750 = vld [vmem:[#allocation9 + $0xf8] sm:$0xff]
        %v4751 = vld [vmem:[#allocation9 + $0x100] sm:$0xff]
        %v4752 = vld [vmem:[#allocation9 + $0x108] sm:$0xff]
        %v4753 = vld [vmem:[#allocation9 + $0x110] sm:$0xff]
        %v4754 = vld [vmem:[#allocation9 + $0x118] sm:$0xff]
        %v4755 = vld [vmem:[#allocation9 + $0x120] sm:$0xff]
        %v4756 = vld [vmem:[#allocation9 + $0x128] sm:$0xff]
        %v4757 = vld [vmem:[#allocation9 + $0x130] sm:$0xff]
        %v4758 = vld [vmem:[#allocation9 + $0x138] sm:$0xff]
        %v4759 = vld [vmem:[#allocation9 + $0x140] sm:$0xff]
        %v4760 = vld [vmem:[#allocation9 + $0x148] sm:$0xff]
        %v4761 = vld [vmem:[#allocation9 + $0x150] sm:$0xff]
        %v4762 = vld [vmem:[#allocation9 + $0x158] sm:$0xff]
        %v4763 = vld [vmem:[#allocation9 + $0x160] sm:$0xff]
        %v4764 = vld [vmem:[#allocation9 + $0x168] sm:$0xff]
        %v4765 = vld [vmem:[#allocation9 + $0x170] sm:$0xff]
        %v4766 = vld [vmem:[#allocation9 + $0x178] sm:$0xff]
        %v4767 = vld [vmem:[#allocation9 + $0x180] sm:$0xff]
        %v4768 = vld [vmem:[#allocation9 + $0x188] sm:$0xff]
        %v4769 = vld [vmem:[#allocation9 + $0x190] sm:$0xff]
        %v4770 = vld [vmem:[#allocation9 + $0x198] sm:$0xff]
        %v4771 = vld [vmem:[#allocation9 + $0x1a0] sm:$0xff]
        %v4772 = vld [vmem:[#allocation9 + $0x1a8] sm:$0xff]
        %v4773 = vld [vmem:[#allocation9 + $0x1b0] sm:$0xff]
        %v4774 = vld [vmem:[#allocation9 + $0x1b8] sm:$0xff]
        %v4775 = vld [vmem:[#allocation9 + $0x1c0] sm:$0xff]
        %v4776 = vld [vmem:[#allocation9 + $0x1c8] sm:$0xff]
        %v4777 = vld [vmem:[#allocation9 + $0x1d0] sm:$0xff]
        %v4778 = vld [vmem:[#allocation9 + $0x1d8] sm:$0xff]
        %v4779 = vld [vmem:[#allocation9 + $0x1e0] sm:$0xff]
        %v4780 = vld [vmem:[#allocation9 + $0x1e8] sm:$0xff]
        %v4781 = vld [vmem:[#allocation9 + $0x1f0] sm:$0xff]
        %v4782 = vld [vmem:[#allocation9 + $0x1f8] sm:$0xff]
        %v4783 = vld [vmem:[#allocation2] sm:$0xff]
        %v4784 = vld [vmem:[#allocation2 + $0x8] sm:$0xff]
        %v4785 = vld [vmem:[#allocation2 + $0x10] sm:$0xff]
        %v4786 = vld [vmem:[#allocation2 + $0x18] sm:$0xff]
        %v4787 = vld [vmem:[#allocation2 + $0x20] sm:$0xff]
        %v4788 = vld [vmem:[#allocation2 + $0x28] sm:$0xff]
        %v4789 = vld [vmem:[#allocation2 + $0x30] sm:$0xff]
        %v4790 = vld [vmem:[#allocation2 + $0x38] sm:$0xff]
        %v4791 = vld [vmem:[#allocation2 + $0x40] sm:$0xff]
        %v4792 = vld [vmem:[#allocation2 + $0x48] sm:$0xff]
        %v4793 = vld [vmem:[#allocation2 + $0x50] sm:$0xff]
        %v4794 = vld [vmem:[#allocation2 + $0x58] sm:$0xff]
        %v4795 = vld [vmem:[#allocation2 + $0x60] sm:$0xff]
        %v4796 = vld [vmem:[#allocation2 + $0x68] sm:$0xff]
        %v4797 = vld [vmem:[#allocation2 + $0x70] sm:$0xff]
        %v4798 = vld [vmem:[#allocation2 + $0x78] sm:$0xff]
        %v4799 = vld [vmem:[#allocation2 + $0x80] sm:$0xff]
        %v4800 = vld [vmem:[#allocation2 + $0x88] sm:$0xff]
        %v4801 = vld [vmem:[#allocation2 + $0x90] sm:$0xff]
        %v4802 = vld [vmem:[#allocation2 + $0x98] sm:$0xff]
        %v4803 = vld [vmem:[#allocation2 + $0xa0] sm:$0xff]
        %v4804 = vld [vmem:[#allocation2 + $0xa8] sm:$0xff]
        %v4805 = vld [vmem:[#allocation2 + $0xb0] sm:$0xff]
        %v4806 = vld [vmem:[#allocation2 + $0xb8] sm:$0xff]
        %v4807 = vld [vmem:[#allocation2 + $0xc0] sm:$0xff]
        %v4808 = vld [vmem:[#allocation2 + $0xc8] sm:$0xff]
        %v4809 = vld [vmem:[#allocation2 + $0xd0] sm:$0xff]
        %v4810 = vld [vmem:[#allocation2 + $0xd8] sm:$0xff]
        %v4811 = vld [vmem:[#allocation2 + $0xe0] sm:$0xff]
        %v4812 = vld [vmem:[#allocation2 + $0xe8] sm:$0xff]
        %v4813 = vld [vmem:[#allocation2 + $0xf0] sm:$0xff]
        %v4814 = vld [vmem:[#allocation2 + $0xf8] sm:$0xff]
        %v4815 = vld [vmem:[#allocation2 + $0x100] sm:$0xff]
        %v4816 = vld [vmem:[#allocation2 + $0x108] sm:$0xff]
        %v4817 = vld [vmem:[#allocation2 + $0x110] sm:$0xff]
        %v4818 = vld [vmem:[#allocation2 + $0x118] sm:$0xff]
        %v4819 = vld [vmem:[#allocation2 + $0x120] sm:$0xff]
        %v4820 = vld [vmem:[#allocation2 + $0x128] sm:$0xff]
        %v4821 = vld [vmem:[#allocation2 + $0x130] sm:$0xff]
        %v4822 = vld [vmem:[#allocation2 + $0x138] sm:$0xff]
        %v4823 = vld [vmem:[#allocation2 + $0x140] sm:$0x11]
        %v4824 = vld [vmem:[#allocation2 + $0x148] sm:$0x11]
        %s4825 = scalar_lea.vmem [#allocation9], 512
        %v4826 = vld [vmem:[%s4825] sm:$0xff]
        %v4827 = vld [vmem:[%s4825 + $0x8] sm:$0xff]
        %v4828 = vld [vmem:[%s4825 + $0x10] sm:$0xff]
        %v4829 = vld [vmem:[%s4825 + $0x18] sm:$0xff]
        %v4830 = vld [vmem:[%s4825 + $0x20] sm:$0xff]
        %v4831 = vld [vmem:[%s4825 + $0x28] sm:$0xff]
        %v4832 = vld [vmem:[%s4825 + $0x30] sm:$0xff]
        %v4833 = vld [vmem:[%s4825 + $0x38] sm:$0xff]
        %v4834 = vld [vmem:[%s4825 + $0x40] sm:$0xff]
        %v4835 = vld [vmem:[%s4825 + $0x48] sm:$0xff]
        %v4836 = vld [vmem:[%s4825 + $0x50] sm:$0xff]
        %v4837 = vld [vmem:[%s4825 + $0x58] sm:$0xff]
        %v4838 = vld [vmem:[%s4825 + $0x60] sm:$0xff]
        %v4839 = vld [vmem:[%s4825 + $0x68] sm:$0xff]
        %v4840 = vld [vmem:[%s4825 + $0x70] sm:$0xff]
        %v4841 = vld [vmem:[%s4825 + $0x78] sm:$0xff]
        %v4842 = vld [vmem:[%s4825 + $0x80] sm:$0xff]
        %v4843 = vld [vmem:[%s4825 + $0x88] sm:$0xff]
        %v4844 = vld [vmem:[%s4825 + $0x90] sm:$0xff]
        %v4845 = vld [vmem:[%s4825 + $0x98] sm:$0xff]
        %v4846 = vld [vmem:[%s4825 + $0xa0] sm:$0xff]
        %v4847 = vld [vmem:[%s4825 + $0xa8] sm:$0xff]
        %v4848 = vld [vmem:[%s4825 + $0xb0] sm:$0xff]
        %v4849 = vld [vmem:[%s4825 + $0xb8] sm:$0xff]
        %v4850 = vld [vmem:[%s4825 + $0xc0] sm:$0xff]
        %v4851 = vld [vmem:[%s4825 + $0xc8] sm:$0xff]
        %v4852 = vld [vmem:[%s4825 + $0xd0] sm:$0xff]
        %v4853 = vld [vmem:[%s4825 + $0xd8] sm:$0xff]
        %v4854 = vld [vmem:[%s4825 + $0xe0] sm:$0xff]
        %v4855 = vld [vmem:[%s4825 + $0xe8] sm:$0xff]
        %v4856 = vld [vmem:[%s4825 + $0xf0] sm:$0xff]
        %v4857 = vld [vmem:[%s4825 + $0xf8] sm:$0xff]
        %v4858 = vld [vmem:[%s4825 + $0x100] sm:$0xff]
        %v4859 = vld [vmem:[%s4825 + $0x108] sm:$0xff]
        %v4860 = vld [vmem:[%s4825 + $0x110] sm:$0xff]
        %v4861 = vld [vmem:[%s4825 + $0x118] sm:$0xff]
        %v4862 = vld [vmem:[%s4825 + $0x120] sm:$0xff]
        %v4863 = vld [vmem:[%s4825 + $0x128] sm:$0xff]
        %v4864 = vld [vmem:[%s4825 + $0x130] sm:$0xff]
        %v4865 = vld [vmem:[%s4825 + $0x138] sm:$0xff]
        %v4866 = vld [vmem:[%s4825 + $0x140] sm:$0xff]
        %v4867 = vld [vmem:[%s4825 + $0x148] sm:$0xff]
        %v4868 = vld [vmem:[%s4825 + $0x150] sm:$0xff]
        %v4869 = vld [vmem:[%s4825 + $0x158] sm:$0xff]
        %v4870 = vld [vmem:[%s4825 + $0x160] sm:$0xff]
        %v4871 = vld [vmem:[%s4825 + $0x168] sm:$0xff]
        %v4872 = vld [vmem:[%s4825 + $0x170] sm:$0xff]
        %v4873 = vld [vmem:[%s4825 + $0x178] sm:$0xff]
        %v4874 = vld [vmem:[%s4825 + $0x180] sm:$0xff]
        %v4875 = vld [vmem:[%s4825 + $0x188] sm:$0xff]
        %v4876 = vld [vmem:[%s4825 + $0x190] sm:$0xff]
        %v4877 = vld [vmem:[%s4825 + $0x198] sm:$0xff]
        %v4878 = vld [vmem:[%s4825 + $0x1a0] sm:$0xff]
        %v4879 = vld [vmem:[%s4825 + $0x1a8] sm:$0xff]
        %v4880 = vld [vmem:[%s4825 + $0x1b0] sm:$0xff]
        %v4881 = vld [vmem:[%s4825 + $0x1b8] sm:$0xff]
        %v4882 = vld [vmem:[%s4825 + $0x1c0] sm:$0xff]
        %v4883 = vld [vmem:[%s4825 + $0x1c8] sm:$0xff]
        %v4884 = vld [vmem:[%s4825 + $0x1d0] sm:$0xff]
        %v4885 = vld [vmem:[%s4825 + $0x1d8] sm:$0xff]
        %v4886 = vld [vmem:[%s4825 + $0x1e0] sm:$0xff]
        %v4887 = vld [vmem:[%s4825 + $0x1e8] sm:$0xff]
        %v4888 = vld [vmem:[%s4825 + $0x1f0] sm:$0xff]
        %v4889 = vld [vmem:[%s4825 + $0x1f8] sm:$0xff]
        %v4932 = vunpack.c.l.b16 %v4783
        %v4933 = vunpack.c.h.b16 %v4783
        %v4934 = vunpack.c.l.b16 %v4784
        %v4935 = vunpack.c.h.b16 %v4784
        %v4936 = vunpack.c.l.b16 %v4785
        %v4937 = vunpack.c.h.b16 %v4785
        %v4938 = vunpack.c.l.b16 %v4786
        %v4939 = vunpack.c.h.b16 %v4786
        %v4940 = vunpack.c.l.b16 %v4787
        %v4941 = vunpack.c.h.b16 %v4787
        %v4942 = vunpack.c.l.b16 %v4788
        %v4943 = vunpack.c.h.b16 %v4788
        %v4944 = vunpack.c.l.b16 %v4789
        %v4945 = vunpack.c.h.b16 %v4789
        %v4946 = vunpack.c.l.b16 %v4790
        %v4947 = vunpack.c.h.b16 %v4790
        %v4948 = vunpack.c.l.b16 %v4791
        %v4949 = vunpack.c.h.b16 %v4791
        %v4950 = vunpack.c.l.b16 %v4792
        %v4951 = vunpack.c.h.b16 %v4792
        %v4952 = vunpack.c.l.b16 %v4793
        %v4953 = vunpack.c.h.b16 %v4793
        %v4954 = vunpack.c.l.b16 %v4794
        %v4955 = vunpack.c.h.b16 %v4794
        %v4956 = vunpack.c.l.b16 %v4795
        %v4957 = vunpack.c.h.b16 %v4795
        %v4958 = vunpack.c.l.b16 %v4796
        %v4959 = vunpack.c.h.b16 %v4796
        %v4960 = vunpack.c.l.b16 %v4797
        %v4961 = vunpack.c.h.b16 %v4797
        %v4962 = vunpack.c.l.b16 %v4798
        %v4963 = vunpack.c.h.b16 %v4798
        %v4964 = vunpack.c.l.b16 %v4799
        %v4965 = vunpack.c.h.b16 %v4799
        %v4966 = vunpack.c.l.b16 %v4800
        %v4967 = vunpack.c.h.b16 %v4800
        %v4968 = vunpack.c.l.b16 %v4801
        %v4969 = vunpack.c.h.b16 %v4801
        %v4970 = vunpack.c.l.b16 %v4802
        %v4971 = vunpack.c.h.b16 %v4802
        %v4972 = vunpack.c.l.b16 %v4803
        %v4973 = vunpack.c.h.b16 %v4803
        %v4974 = vunpack.c.l.b16 %v4804
        %v4975 = vunpack.c.h.b16 %v4804
        %v4976 = vunpack.c.l.b16 %v4805
        %v4977 = vunpack.c.h.b16 %v4805
        %v4978 = vunpack.c.l.b16 %v4806
        %v4979 = vunpack.c.h.b16 %v4806
        %v4980 = vunpack.c.l.b16 %v4807
        %v4981 = vunpack.c.h.b16 %v4807
        %v4982 = vunpack.c.l.b16 %v4808
        %v4983 = vunpack.c.h.b16 %v4808
        %v4984 = vunpack.c.l.b16 %v4809
        %v4985 = vunpack.c.h.b16 %v4809
        %v4986 = vunpack.c.l.b16 %v4810
        %v4987 = vunpack.c.h.b16 %v4810
        %v4988 = vunpack.c.l.b16 %v4811
        %v4989 = vunpack.c.h.b16 %v4811
        %v4990 = vunpack.c.l.b16 %v4812
        %v4991 = vunpack.c.h.b16 %v4812
        %v4992 = vunpack.c.l.b16 %v4813
        %v4993 = vunpack.c.h.b16 %v4813
        %v4994 = vunpack.c.l.b16 %v4814
        %v4995 = vunpack.c.h.b16 %v4814
        %v4996 = vunpack.c.l.b16 %v4815
        %v4997 = vunpack.c.h.b16 %v4815
        %v4998 = vunpack.c.l.b16 %v4816
        %v4999 = vunpack.c.h.b16 %v4816
        %v5000 = vunpack.c.l.b16 %v4817
        %v5001 = vunpack.c.h.b16 %v4817
        %v5002 = vunpack.c.l.b16 %v4818
        %v5003 = vunpack.c.h.b16 %v4818
        %v5004 = vunpack.c.l.b16 %v4819
        %v5005 = vunpack.c.h.b16 %v4819
        %v5006 = vunpack.c.l.b16 %v4820
        %v5007 = vunpack.c.h.b16 %v4820
        %v5008 = vunpack.c.l.b16 %v4821
        %v5009 = vunpack.c.h.b16 %v4821
        %v5010 = vunpack.c.l.b16 %v4822
        %v5011 = vunpack.c.h.b16 %v4822
        %v5012 = vunpack.c.l.b16 %v4823
        %v5013 = vunpack.c.h.b16 %v4823
        %v5014 = vunpack.c.l.b16 %v4824
        %v5015 = vunpack.c.h.b16 %v4824
        %v5016 = vpack.c.b16 %v4936, %v4932
        %v5017 = vpack.c.b16 %v4937, %v4933
        %v5018 = vpack.c.b16 %v4938, %v4934
        %v5019 = vpack.c.b16 %v4939, %v4935
        %v5020 = vpack.c.b16 %v4944, %v4940
        %v5021 = vpack.c.b16 %v4945, %v4941
        %v5022 = vpack.c.b16 %v4946, %v4942
        %v5023 = vpack.c.b16 %v4947, %v4943
        %v5024 = vpack.c.b16 %v4952, %v4948
        %v5025 = vpack.c.b16 %v4953, %v4949
        %v5026 = vpack.c.b16 %v4954, %v4950
        %v5027 = vpack.c.b16 %v4955, %v4951
        %v5028 = vpack.c.b16 %v4960, %v4956
        %v5029 = vpack.c.b16 %v4961, %v4957
        %v5030 = vpack.c.b16 %v4962, %v4958
        %v5031 = vpack.c.b16 %v4963, %v4959
        %v5032 = vpack.c.b16 %v4968, %v4964
        %v5033 = vpack.c.b16 %v4969, %v4965
        %v5034 = vpack.c.b16 %v4970, %v4966
        %v5035 = vpack.c.b16 %v4971, %v4967
        %v5036 = vpack.c.b16 %v4976, %v4972
        %v5037 = vpack.c.b16 %v4977, %v4973
        %v5038 = vpack.c.b16 %v4978, %v4974
        %v5039 = vpack.c.b16 %v4979, %v4975
        %v5040 = vpack.c.b16 %v4984, %v4980
        %v5041 = vpack.c.b16 %v4985, %v4981
        %v5042 = vpack.c.b16 %v4986, %v4982
        %v5043 = vpack.c.b16 %v4987, %v4983
        %v5044 = vpack.c.b16 %v4992, %v4988
        %v5045 = vpack.c.b16 %v4993, %v4989
        %v5046 = vpack.c.b16 %v4994, %v4990
        %v5047 = vpack.c.b16 %v4995, %v4991
        %v5048 = vpack.c.b16 %v5000, %v4996
        %v5049 = vpack.c.b16 %v5001, %v4997
        %v5050 = vpack.c.b16 %v5002, %v4998
        %v5051 = vpack.c.b16 %v5003, %v4999
        %v5052 = vpack.c.b16 %v5008, %v5004
        %v5053 = vpack.c.b16 %v5009, %v5005
        %v5054 = vpack.c.b16 %v5010, %v5006
        %v5055 = vpack.c.b16 %v5011, %v5007
        %v5056 = vpack.c.b16 %v5012, %v5012
        %v5057 = vpack.c.b16 %v5013, %v5013
        %v5058 = vpack.c.b16 %v5014, %v5014
        %v5059 = vpack.c.b16 %v5015, %v5015
        %v5061 = vshrl.u32 %v5016, 16
        %v5063 = vshll.u32 %v5016, 16
        %v5065 = vrot.slane %v5063, 1
        %v5066 = vor.u32 %v5061, %v5065
        %v5068 = vshll.u32 %v5020, 16
        %v5070 = vrot.slane %v5068, 1
        %v5071 = vsel %vm813, %v5066, %v5070
        %v5073 = vshrl.u32 %v5017, 16
        %v5075 = vshll.u32 %v5017, 16
        %v5077 = vrot.slane %v5075, 1
        %v5078 = vor.u32 %v5073, %v5077
        %v5080 = vshll.u32 %v5021, 16
        %v5082 = vrot.slane %v5080, 1
        %v5083 = vsel %vm813, %v5078, %v5082
        %v5085 = vshrl.u32 %v5018, 16
        %v5087 = vshll.u32 %v5018, 16
        %v5089 = vrot.slane %v5087, 1
        %v5090 = vor.u32 %v5085, %v5089
        %v5092 = vshll.u32 %v5022, 16
        %v5094 = vrot.slane %v5092, 1
        %v5095 = vsel %vm813, %v5090, %v5094
        %v5097 = vshrl.u32 %v5019, 16
        %v5099 = vshll.u32 %v5019, 16
        %v5101 = vrot.slane %v5099, 1
        %v5102 = vor.u32 %v5097, %v5101
        %v5104 = vshll.u32 %v5023, 16
        %v5106 = vrot.slane %v5104, 1
        %v5107 = vsel %vm813, %v5102, %v5106
        %v5108 = vshrl.u32 %v5020, 16
        %v5110 = vor.u32 %v5108, %v5070
        %v5112 = vshll.u32 %v5024, 16
        %v5114 = vrot.slane %v5112, 1
        %v5115 = vsel %vm813, %v5110, %v5114
        %v5116 = vshrl.u32 %v5021, 16
        %v5118 = vor.u32 %v5116, %v5082
        %v5120 = vshll.u32 %v5025, 16
        %v5122 = vrot.slane %v5120, 1
        %v5123 = vsel %vm813, %v5118, %v5122
        %v5124 = vshrl.u32 %v5022, 16
        %v5126 = vor.u32 %v5124, %v5094
        %v5128 = vshll.u32 %v5026, 16
        %v5130 = vrot.slane %v5128, 1
        %v5131 = vsel %vm813, %v5126, %v5130
        %v5132 = vshrl.u32 %v5023, 16
        %v5134 = vor.u32 %v5132, %v5106
        %v5136 = vshll.u32 %v5027, 16
        %v5138 = vrot.slane %v5136, 1
        %v5139 = vsel %vm813, %v5134, %v5138
        %v5140 = vshrl.u32 %v5024, 16
        %v5142 = vor.u32 %v5140, %v5114
        %v5144 = vshll.u32 %v5028, 16
        %v5146 = vrot.slane %v5144, 1
        %v5147 = vsel %vm813, %v5142, %v5146
        %v5148 = vshrl.u32 %v5025, 16
        %v5150 = vor.u32 %v5148, %v5122
        %v5152 = vshll.u32 %v5029, 16
        %v5154 = vrot.slane %v5152, 1
        %v5155 = vsel %vm813, %v5150, %v5154
        %v5156 = vshrl.u32 %v5026, 16
        %v5158 = vor.u32 %v5156, %v5130
        %v5160 = vshll.u32 %v5030, 16
        %v5162 = vrot.slane %v5160, 1
        %v5163 = vsel %vm813, %v5158, %v5162
        %v5164 = vshrl.u32 %v5027, 16
        %v5166 = vor.u32 %v5164, %v5138
        %v5168 = vshll.u32 %v5031, 16
        %v5170 = vrot.slane %v5168, 1
        %v5171 = vsel %vm813, %v5166, %v5170
        %v5172 = vshrl.u32 %v5028, 16
        %v5174 = vor.u32 %v5172, %v5146
        %v5176 = vshll.u32 %v5032, 16
        %v5178 = vrot.slane %v5176, 1
        %v5179 = vsel %vm813, %v5174, %v5178
        %v5180 = vshrl.u32 %v5029, 16
        %v5182 = vor.u32 %v5180, %v5154
        %v5184 = vshll.u32 %v5033, 16
        %v5186 = vrot.slane %v5184, 1
        %v5187 = vsel %vm813, %v5182, %v5186
        %v5188 = vshrl.u32 %v5030, 16
        %v5190 = vor.u32 %v5188, %v5162
        %v5192 = vshll.u32 %v5034, 16
        %v5194 = vrot.slane %v5192, 1
        %v5195 = vsel %vm813, %v5190, %v5194
        %v5196 = vshrl.u32 %v5031, 16
        %v5198 = vor.u32 %v5196, %v5170
        %v5200 = vshll.u32 %v5035, 16
        %v5202 = vrot.slane %v5200, 1
        %v5203 = vsel %vm813, %v5198, %v5202
        %v5204 = vshrl.u32 %v5032, 16
        %v5206 = vor.u32 %v5204, %v5178
        %v5208 = vshll.u32 %v5036, 16
        %v5210 = vrot.slane %v5208, 1
        %v5211 = vsel %vm813, %v5206, %v5210
        %v5212 = vshrl.u32 %v5033, 16
        %v5214 = vor.u32 %v5212, %v5186
        %v5216 = vshll.u32 %v5037, 16
        %v5218 = vrot.slane %v5216, 1
        %v5219 = vsel %vm813, %v5214, %v5218
        %v5220 = vshrl.u32 %v5034, 16
        %v5222 = vor.u32 %v5220, %v5194
        %v5224 = vshll.u32 %v5038, 16
        %v5226 = vrot.slane %v5224, 1
        %v5227 = vsel %vm813, %v5222, %v5226
        %v5228 = vshrl.u32 %v5035, 16
        %v5230 = vor.u32 %v5228, %v5202
        %v5232 = vshll.u32 %v5039, 16
        %v5234 = vrot.slane %v5232, 1
        %v5235 = vsel %vm813, %v5230, %v5234
        %v5236 = vshrl.u32 %v5036, 16
        %v5238 = vor.u32 %v5236, %v5210
        %v5240 = vshll.u32 %v5040, 16
        %v5242 = vrot.slane %v5240, 1
        %v5243 = vsel %vm813, %v5238, %v5242
        %v5244 = vshrl.u32 %v5037, 16
        %v5246 = vor.u32 %v5244, %v5218
        %v5248 = vshll.u32 %v5041, 16
        %v5250 = vrot.slane %v5248, 1
        %v5251 = vsel %vm813, %v5246, %v5250
        %v5252 = vshrl.u32 %v5038, 16
        %v5254 = vor.u32 %v5252, %v5226
        %v5256 = vshll.u32 %v5042, 16
        %v5258 = vrot.slane %v5256, 1
        %v5259 = vsel %vm813, %v5254, %v5258
        %v5260 = vshrl.u32 %v5039, 16
        %v5262 = vor.u32 %v5260, %v5234
        %v5264 = vshll.u32 %v5043, 16
        %v5266 = vrot.slane %v5264, 1
        %v5267 = vsel %vm813, %v5262, %v5266
        %v5268 = vshrl.u32 %v5040, 16
        %v5270 = vor.u32 %v5268, %v5242
        %v5272 = vshll.u32 %v5044, 16
        %v5274 = vrot.slane %v5272, 1
        %v5275 = vsel %vm813, %v5270, %v5274
        %v5276 = vshrl.u32 %v5041, 16
        %v5278 = vor.u32 %v5276, %v5250
        %v5280 = vshll.u32 %v5045, 16
        %v5282 = vrot.slane %v5280, 1
        %v5283 = vsel %vm813, %v5278, %v5282
        %v5284 = vshrl.u32 %v5042, 16
        %v5286 = vor.u32 %v5284, %v5258
        %v5288 = vshll.u32 %v5046, 16
        %v5290 = vrot.slane %v5288, 1
        %v5291 = vsel %vm813, %v5286, %v5290
        %v5292 = vshrl.u32 %v5043, 16
        %v5294 = vor.u32 %v5292, %v5266
        %v5296 = vshll.u32 %v5047, 16
        %v5298 = vrot.slane %v5296, 1
        %v5299 = vsel %vm813, %v5294, %v5298
        %v5300 = vshrl.u32 %v5044, 16
        %v5302 = vor.u32 %v5300, %v5274
        %v5304 = vshll.u32 %v5048, 16
        %v5306 = vrot.slane %v5304, 1
        %v5307 = vsel %vm813, %v5302, %v5306
        %v5308 = vshrl.u32 %v5045, 16
        %v5310 = vor.u32 %v5308, %v5282
        %v5312 = vshll.u32 %v5049, 16
        %v5314 = vrot.slane %v5312, 1
        %v5315 = vsel %vm813, %v5310, %v5314
        %v5316 = vshrl.u32 %v5046, 16
        %v5318 = vor.u32 %v5316, %v5290
        %v5320 = vshll.u32 %v5050, 16
        %v5322 = vrot.slane %v5320, 1
        %v5323 = vsel %vm813, %v5318, %v5322
        %v5324 = vshrl.u32 %v5047, 16
        %v5326 = vor.u32 %v5324, %v5298
        %v5328 = vshll.u32 %v5051, 16
        %v5330 = vrot.slane %v5328, 1
        %v5331 = vsel %vm813, %v5326, %v5330
        %v5332 = vshrl.u32 %v5048, 16
        %v5334 = vor.u32 %v5332, %v5306
        %v5336 = vshll.u32 %v5052, 16
        %v5338 = vrot.slane %v5336, 1
        %v5339 = vsel %vm813, %v5334, %v5338
        %v5340 = vshrl.u32 %v5049, 16
        %v5342 = vor.u32 %v5340, %v5314
        %v5344 = vshll.u32 %v5053, 16
        %v5346 = vrot.slane %v5344, 1
        %v5347 = vsel %vm813, %v5342, %v5346
        %v5348 = vshrl.u32 %v5050, 16
        %v5350 = vor.u32 %v5348, %v5322
        %v5352 = vshll.u32 %v5054, 16
        %v5354 = vrot.slane %v5352, 1
        %v5355 = vsel %vm813, %v5350, %v5354
        %v5356 = vshrl.u32 %v5051, 16
        %v5358 = vor.u32 %v5356, %v5330
        %v5360 = vshll.u32 %v5055, 16
        %v5362 = vrot.slane %v5360, 1
        %v5363 = vsel %vm813, %v5358, %v5362
        %v5364 = vshrl.u32 %v5052, 16
        %v5366 = vor.u32 %v5364, %v5338
        %v5368 = vshll.u32 %v5056, 16
        %v5370 = vrot.slane %v5368, 1
        %v5371 = vsel %vm813, %v5366, %v5370
        %v5372 = vshrl.u32 %v5053, 16
        %v5374 = vor.u32 %v5372, %v5346
        %v5376 = vshll.u32 %v5057, 16
        %v5378 = vrot.slane %v5376, 1
        %v5379 = vsel %vm813, %v5374, %v5378
        %v5380 = vshrl.u32 %v5054, 16
        %v5382 = vor.u32 %v5380, %v5354
        %v5384 = vshll.u32 %v5058, 16
        %v5386 = vrot.slane %v5384, 1
        %v5387 = vsel %vm813, %v5382, %v5386
        %v5388 = vshrl.u32 %v5055, 16
        %v5390 = vor.u32 %v5388, %v5362
        %v5392 = vshll.u32 %v5059, 16
        %v5394 = vrot.slane %v5392, 1
        %v5395 = vsel %vm813, %v5390, %v5394
        %v5500 = vunpack.c.l.b16 %v4826
        %v5501 = vunpack.c.h.b16 %v4826
        %v5502 = vunpack.c.l.b16 %v4827
        %v5503 = vunpack.c.h.b16 %v4827
        %v5504 = vunpack.c.l.b16 %v4828
        %v5505 = vunpack.c.h.b16 %v4828
        %v5506 = vunpack.c.l.b16 %v4829
        %v5507 = vunpack.c.h.b16 %v4829
        %v5508 = vunpack.c.l.b16 %v4830
        %v5509 = vunpack.c.h.b16 %v4830
        %v5510 = vunpack.c.l.b16 %v4831
        %v5511 = vunpack.c.h.b16 %v4831
        %v5512 = vunpack.c.l.b16 %v4832
        %v5513 = vunpack.c.h.b16 %v4832
        %v5514 = vunpack.c.l.b16 %v4833
        %v5515 = vunpack.c.h.b16 %v4833
        %v5516 = vunpack.c.l.b16 %v4834
        %v5517 = vunpack.c.h.b16 %v4834
        %v5518 = vunpack.c.l.b16 %v4835
        %v5519 = vunpack.c.h.b16 %v4835
        %v5520 = vunpack.c.l.b16 %v4836
        %v5521 = vunpack.c.h.b16 %v4836
        %v5522 = vunpack.c.l.b16 %v4837
        %v5523 = vunpack.c.h.b16 %v4837
        %v5524 = vunpack.c.l.b16 %v4838
        %v5525 = vunpack.c.h.b16 %v4838
        %v5526 = vunpack.c.l.b16 %v4839
        %v5527 = vunpack.c.h.b16 %v4839
        %v5528 = vunpack.c.l.b16 %v4840
        %v5529 = vunpack.c.h.b16 %v4840
        %v5530 = vunpack.c.l.b16 %v4841
        %v5531 = vunpack.c.h.b16 %v4841
        %v5532 = vunpack.c.l.b16 %v4842
        %v5533 = vunpack.c.h.b16 %v4842
        %v5534 = vunpack.c.l.b16 %v4843
        %v5535 = vunpack.c.h.b16 %v4843
        %v5536 = vunpack.c.l.b16 %v4844
        %v5537 = vunpack.c.h.b16 %v4844
        %v5538 = vunpack.c.l.b16 %v4845
        %v5539 = vunpack.c.h.b16 %v4845
        %v5540 = vunpack.c.l.b16 %v4846
        %v5541 = vunpack.c.h.b16 %v4846
        %v5542 = vunpack.c.l.b16 %v4847
        %v5543 = vunpack.c.h.b16 %v4847
        %v5544 = vunpack.c.l.b16 %v4848
        %v5545 = vunpack.c.h.b16 %v4848
        %v5546 = vunpack.c.l.b16 %v4849
        %v5547 = vunpack.c.h.b16 %v4849
        %v5548 = vunpack.c.l.b16 %v4850
        %v5549 = vunpack.c.h.b16 %v4850
        %v5550 = vunpack.c.l.b16 %v4851
        %v5551 = vunpack.c.h.b16 %v4851
        %v5552 = vunpack.c.l.b16 %v4852
        %v5553 = vunpack.c.h.b16 %v4852
        %v5554 = vunpack.c.l.b16 %v4853
        %v5555 = vunpack.c.h.b16 %v4853
        %v5556 = vunpack.c.l.b16 %v4854
        %v5557 = vunpack.c.h.b16 %v4854
        %v5558 = vunpack.c.l.b16 %v4855
        %v5559 = vunpack.c.h.b16 %v4855
        %v5560 = vunpack.c.l.b16 %v4856
        %v5561 = vunpack.c.h.b16 %v4856
        %v5562 = vunpack.c.l.b16 %v4857
        %v5563 = vunpack.c.h.b16 %v4857
        %v5564 = vunpack.c.l.b16 %v4858
        %v5565 = vunpack.c.h.b16 %v4858
        %v5566 = vunpack.c.l.b16 %v4859
        %v5567 = vunpack.c.h.b16 %v4859
        %v5568 = vunpack.c.l.b16 %v4860
        %v5569 = vunpack.c.h.b16 %v4860
        %v5570 = vunpack.c.l.b16 %v4861
        %v5571 = vunpack.c.h.b16 %v4861
        %v5572 = vunpack.c.l.b16 %v4862
        %v5573 = vunpack.c.h.b16 %v4862
        %v5574 = vunpack.c.l.b16 %v4863
        %v5575 = vunpack.c.h.b16 %v4863
        %v5576 = vunpack.c.l.b16 %v4864
        %v5577 = vunpack.c.h.b16 %v4864
        %v5578 = vunpack.c.l.b16 %v4865
        %v5579 = vunpack.c.h.b16 %v4865
        %v5580 = vunpack.c.l.b16 %v4866
        %v5581 = vunpack.c.h.b16 %v4866
        %v5582 = vunpack.c.l.b16 %v4867
        %v5583 = vunpack.c.h.b16 %v4867
        %v5584 = vunpack.c.l.b16 %v4868
        %v5585 = vunpack.c.h.b16 %v4868
        %v5586 = vunpack.c.l.b16 %v4869
        %v5587 = vunpack.c.h.b16 %v4869
        %v5588 = vunpack.c.l.b16 %v4870
        %v5589 = vunpack.c.h.b16 %v4870
        %v5590 = vunpack.c.l.b16 %v4871
        %v5591 = vunpack.c.h.b16 %v4871
        %v5592 = vunpack.c.l.b16 %v4872
        %v5593 = vunpack.c.h.b16 %v4872
        %v5594 = vunpack.c.l.b16 %v4873
        %v5595 = vunpack.c.h.b16 %v4873
        %v5596 = vunpack.c.l.b16 %v4874
        %v5597 = vunpack.c.h.b16 %v4874
        %v5598 = vunpack.c.l.b16 %v4875
        %v5599 = vunpack.c.h.b16 %v4875
        %v5600 = vunpack.c.l.b16 %v4876
        %v5601 = vunpack.c.h.b16 %v4876
        %v5602 = vunpack.c.l.b16 %v4877
        %v5603 = vunpack.c.h.b16 %v4877
        %v5604 = vunpack.c.l.b16 %v4878
        %v5605 = vunpack.c.h.b16 %v4878
        %v5606 = vunpack.c.l.b16 %v4879
        %v5607 = vunpack.c.h.b16 %v4879
        %v5608 = vunpack.c.l.b16 %v4880
        %v5609 = vunpack.c.h.b16 %v4880
        %v5610 = vunpack.c.l.b16 %v4881
        %v5611 = vunpack.c.h.b16 %v4881
        %v5612 = vunpack.c.l.b16 %v4882
        %v5613 = vunpack.c.h.b16 %v4882
        %v5614 = vunpack.c.l.b16 %v4883
        %v5615 = vunpack.c.h.b16 %v4883
        %v5616 = vunpack.c.l.b16 %v4884
        %v5617 = vunpack.c.h.b16 %v4884
        %v5618 = vunpack.c.l.b16 %v4885
        %v5619 = vunpack.c.h.b16 %v4885
        %v5620 = vunpack.c.l.b16 %v4886
        %v5621 = vunpack.c.h.b16 %v4886
        %v5622 = vunpack.c.l.b16 %v4887
        %v5623 = vunpack.c.h.b16 %v4887
        %v5624 = vunpack.c.l.b16 %v4888
        %v5625 = vunpack.c.h.b16 %v4888
        %v5626 = vunpack.c.l.b16 %v4889
        %v5627 = vunpack.c.h.b16 %v4889
        %v5628 = vpack.c.b16 %v5502, %v5500
        %v5629 = vpack.c.b16 %v5503, %v5501
        %v5630 = vpack.c.b16 %v5506, %v5504
        %v5631 = vpack.c.b16 %v5507, %v5505
        %v5632 = vpack.c.b16 %v5510, %v5508
        %v5633 = vpack.c.b16 %v5511, %v5509
        %v5634 = vpack.c.b16 %v5514, %v5512
        %v5635 = vpack.c.b16 %v5515, %v5513
        %v5636 = vpack.c.b16 %v5518, %v5516
        %v5637 = vpack.c.b16 %v5519, %v5517
        %v5638 = vpack.c.b16 %v5522, %v5520
        %v5639 = vpack.c.b16 %v5523, %v5521
        %v5640 = vpack.c.b16 %v5526, %v5524
        %v5641 = vpack.c.b16 %v5527, %v5525
        %v5642 = vpack.c.b16 %v5530, %v5528
        %v5643 = vpack.c.b16 %v5531, %v5529
        %v5644 = vpack.c.b16 %v5534, %v5532
        %v5645 = vpack.c.b16 %v5535, %v5533
        %v5646 = vpack.c.b16 %v5538, %v5536
        %v5647 = vpack.c.b16 %v5539, %v5537
        %v5648 = vpack.c.b16 %v5542, %v5540
        %v5649 = vpack.c.b16 %v5543, %v5541
        %v5650 = vpack.c.b16 %v5546, %v5544
        %v5651 = vpack.c.b16 %v5547, %v5545
        %v5652 = vpack.c.b16 %v5550, %v5548
        %v5653 = vpack.c.b16 %v5551, %v5549
        %v5654 = vpack.c.b16 %v5554, %v5552
        %v5655 = vpack.c.b16 %v5555, %v5553
        %v5656 = vpack.c.b16 %v5558, %v5556
        %v5657 = vpack.c.b16 %v5559, %v5557
        %v5658 = vpack.c.b16 %v5562, %v5560
        %v5659 = vpack.c.b16 %v5563, %v5561
        %v5660 = vpack.c.b16 %v5566, %v5564
        %v5661 = vpack.c.b16 %v5567, %v5565
        %v5662 = vpack.c.b16 %v5570, %v5568
        %v5663 = vpack.c.b16 %v5571, %v5569
        %v5664 = vpack.c.b16 %v5574, %v5572
        %v5665 = vpack.c.b16 %v5575, %v5573
        %v5666 = vpack.c.b16 %v5578, %v5576
        %v5667 = vpack.c.b16 %v5579, %v5577
        %v5668 = vpack.c.b16 %v5582, %v5580
        %v5669 = vpack.c.b16 %v5583, %v5581
        %v5670 = vpack.c.b16 %v5586, %v5584
        %v5671 = vpack.c.b16 %v5587, %v5585
        %v5672 = vpack.c.b16 %v5590, %v5588
        %v5673 = vpack.c.b16 %v5591, %v5589
        %v5674 = vpack.c.b16 %v5594, %v5592
        %v5675 = vpack.c.b16 %v5595, %v5593
        %v5676 = vpack.c.b16 %v5598, %v5596
        %v5677 = vpack.c.b16 %v5599, %v5597
        %v5678 = vpack.c.b16 %v5602, %v5600
        %v5679 = vpack.c.b16 %v5603, %v5601
        %v5680 = vpack.c.b16 %v5606, %v5604
        %v5681 = vpack.c.b16 %v5607, %v5605
        %v5682 = vpack.c.b16 %v5610, %v5608
        %v5683 = vpack.c.b16 %v5611, %v5609
        %v5684 = vpack.c.b16 %v5614, %v5612
        %v5685 = vpack.c.b16 %v5615, %v5613
        %v5686 = vpack.c.b16 %v5618, %v5616
        %v5687 = vpack.c.b16 %v5619, %v5617
        %v5688 = vpack.c.b16 %v5622, %v5620
        %v5689 = vpack.c.b16 %v5623, %v5621
        %v5690 = vpack.c.b16 %v5626, %v5624
        %v5691 = vpack.c.b16 %v5627, %v5625
        %5756 = vmatprep.subr.bf16.mxu0 %v5629
        %5757 = vmatpush1.bf16.msra.mxu0 %v5628
        %5758 = vmatprep.subr.bf16.mxu0 %v5631
        %5759 = vmatpush1.bf16.msra.mxu0 %v5630
        %5760 = vmatprep.subr.bf16.mxu0 %v5633
        %5761 = vmatpush1.bf16.msra.mxu0 %v5632
        %5762 = vmatprep.subr.bf16.mxu0 %v5635
        %5763 = vmatpush1.bf16.msra.mxu0 %v5634
        %5764 = vmatprep.subr.bf16.mxu0 %v5637
        %5765 = vmatpush1.bf16.msra.mxu0 %v5636
        %5766 = vmatprep.subr.bf16.mxu0 %v5639
        %5767 = vmatpush1.bf16.msra.mxu0 %v5638
        %5768 = vmatprep.subr.bf16.mxu0 %v5641
        %5769 = vmatpush1.bf16.msra.mxu0 %v5640
        %5770 = vmatprep.subr.bf16.mxu0 %v5643
        %5771 = vmatpush1.bf16.msra.mxu0 %v5642
        %5772 = vmatprep.subr.bf16.mxu0 %v5645
        %5773 = vmatpush1.bf16.msra.mxu0 %v5644
        %5774 = vmatprep.subr.bf16.mxu0 %v5647
        %5775 = vmatpush1.bf16.msra.mxu0 %v5646
        %5776 = vmatprep.subr.bf16.mxu0 %v5649
        %5777 = vmatpush1.bf16.msra.mxu0 %v5648
        %5778 = vmatprep.subr.bf16.mxu0 %v5651
        %5779 = vmatpush1.bf16.msra.mxu0 %v5650
        %5780 = vmatprep.subr.bf16.mxu0 %v5653
        %5781 = vmatpush1.bf16.msra.mxu0 %v5652
        %5782 = vmatprep.subr.bf16.mxu0 %v5655
        %5783 = vmatpush1.bf16.msra.mxu0 %v5654
        %5784 = vmatprep.subr.bf16.mxu0 %v5657
        %5785 = vmatpush1.bf16.msra.mxu0 %v5656
        %5786 = vmatprep.subr.bf16.mxu0 %v5659
        %5787 = vmatpush1.bf16.msra.mxu0 %v5658
        %5788 = vmatprep.mubr.bf16.mxu0 %v5083
        %5789 = vmatmul.mubr.bf16.gmra.mrb[0].mxu0 %v5071
        %v5790 = vpop.f32.mrb[0].mxu0
        %v5791 = vadd.f32 0.0, %v5790
        %v5792 = vpop.f32.mrb[0].mxu0
        %v5793 = vadd.f32 0.0, %v5792
        %v5794 = vpop.f32.mrb[0].mxu0
        %v5795 = vadd.f32 0.0, %v5794
        %v5796 = vpop.f32.mrb[0].mxu0
        %v5797 = vadd.f32 0.0, %v5796
        %5798 = vmatprep.mubr.bf16.mxu0 %v5123
        %5799 = vmatmul.mubr.bf16.gmra.mrb[0].mxu0 %v5115
        %v5800 = vpop.f32.mrb[0].mxu0
        %v5801 = vadd.f32 0.0, %v5800
        %v5802 = vpop.f32.mrb[0].mxu0
        %v5803 = vadd.f32 0.0, %v5802
        %v5804 = vpop.f32.mrb[0].mxu0
        %v5805 = vadd.f32 0.0, %v5804
        %v5806 = vpop.f32.mrb[0].mxu0
        %v5807 = vadd.f32 0.0, %v5806
        %5808 = vmatprep.mubr.bf16.mxu0 %v5155
        %5809 = vmatmul.mubr.bf16.gmra.mrb[0].mxu0 %v5147
        %v5810 = vpop.f32.mrb[0].mxu0
        %v5811 = vadd.f32 0.0, %v5810
        %v5812 = vpop.f32.mrb[0].mxu0
        %v5813 = vadd.f32 0.0, %v5812
        %v5814 = vpop.f32.mrb[0].mxu0
        %v5815 = vadd.f32 0.0, %v5814
        %v5816 = vpop.f32.mrb[0].mxu0
        %v5817 = vadd.f32 0.0, %v5816
        %5818 = vmatprep.mubr.bf16.mxu0 %v5187
        %5819 = vmatmul.mubr.bf16.gmra.mrb[0].mxu0 %v5179
        %v5820 = vpop.f32.mrb[0].mxu0
        %v5821 = vadd.f32 0.0, %v5820
        %v5822 = vpop.f32.mrb[0].mxu0
        %v5823 = vadd.f32 0.0, %v5822
        %v5824 = vpop.f32.mrb[0].mxu0
        %v5825 = vadd.f32 0.0, %v5824
        %v5826 = vpop.f32.mrb[0].mxu0
        %v5827 = vadd.f32 0.0, %v5826
        %5828 = vmatprep.mubr.bf16.mxu0 %v5219
        %5829 = vmatmul.mubr.bf16.gmra.mrb[0].mxu0 %v5211
        %v5830 = vpop.f32.mrb[0].mxu0
        %v5831 = vadd.f32 0.0, %v5830
        %v5832 = vpop.f32.mrb[0].mxu0
        %v5833 = vadd.f32 0.0, %v5832
        %v5834 = vpop.f32.mrb[0].mxu0
        %v5835 = vadd.f32 0.0, %v5834
        %v5836 = vpop.f32.mrb[0].mxu0
        %v5837 = vadd.f32 0.0, %v5836
        %5838 = vmatprep.mubr.bf16.mxu0 %v5251
        %5839 = vmatmul.mubr.bf16.gmra.mrb[0].mxu0 %v5243
        %v5840 = vpop.f32.mrb[0].mxu0
        %v5841 = vadd.f32 0.0, %v5840
        %v5842 = vpop.f32.mrb[0].mxu0
        %v5843 = vadd.f32 0.0, %v5842
        %v5844 = vpop.f32.mrb[0].mxu0
        %v5845 = vadd.f32 0.0, %v5844
        %v5846 = vpop.f32.mrb[0].mxu0
        %v5847 = vadd.f32 0.0, %v5846
        %5848 = vmatprep.mubr.bf16.mxu0 %v5283
        %5849 = vmatmul.mubr.bf16.gmra.mrb[0].mxu0 %v5275
        %v5850 = vpop.f32.mrb[0].mxu0
        %v5851 = vadd.f32 0.0, %v5850
        %v5852 = vpop.f32.mrb[0].mxu0
        %v5853 = vadd.f32 0.0, %v5852
        %v5854 = vpop.f32.mrb[0].mxu0
        %v5855 = vadd.f32 0.0, %v5854
        %v5856 = vpop.f32.mrb[0].mxu0
        %v5857 = vadd.f32 0.0, %v5856
        %5858 = vmatprep.mubr.bf16.mxu0 %v5315
        %5859 = vmatmul.mubr.bf16.gmra.mrb[0].mxu0 %v5307
        %v5860 = vpop.f32.mrb[0].mxu0
        %v5861 = vadd.f32 0.0, %v5860
        %v5862 = vpop.f32.mrb[0].mxu0
        %v5863 = vadd.f32 0.0, %v5862
        %v5864 = vpop.f32.mrb[0].mxu0
        %v5865 = vadd.f32 0.0, %v5864
        %v5866 = vpop.f32.mrb[0].mxu0
        %v5867 = vadd.f32 0.0, %v5866
        %5868 = vmatprep.mubr.bf16.mxu0 %v5347
        %5869 = vmatmul.mubr.bf16.gmra.mrb[0].mxu0 %v5339
        %v5870 = vpop.f32.mrb[0].mxu0
        %v5871 = vadd.f32 0.0, %v5870
        %v5872 = vpop.f32.mrb[0].mxu0
        %v5873 = vadd.f32 0.0, %v5872
        %v5874 = vpop.f32.mrb[0].mxu0
        %v5875 = vadd.f32 0.0, %v5874
        %v5876 = vpop.f32.mrb[0].mxu0
        %v5877 = vadd.f32 0.0, %v5876
        %5878 = vmatprep.mubr.bf16.mxu0 %v5379
        %5879 = vmatmul.mubr.bf16.gmra.mrb[0].mxu0 %v5371
        %v5880 = vpop.f32.mrb[0].mxu0
        %v5881 = vadd.f32 0.0, %v5880
        %v5882 = vpop.f32.mrb[0].mxu0
        %v5883 = vadd.f32 0.0, %v5882
        %v5884 = vpop.f32.mrb[0].mxu0
        %v5885 = vadd.f32 0.0, %v5884
        %v5886 = vpop.f32.mrb[0].mxu0
        %v5887 = vadd.f32 0.0, %v5886
        %5888 = vdwg.mxu0
        %5889 = vmatprep.subr.bf16.mxu0 %v5661
        %5890 = vmatpush1.bf16.msra.mxu0 %v5660
        %5891 = vmatprep.subr.bf16.mxu0 %v5663
        %5892 = vmatpush1.bf16.msra.mxu0 %v5662
        %5893 = vmatprep.subr.bf16.mxu0 %v5665
        %5894 = vmatpush1.bf16.msra.mxu0 %v5664
        %5895 = vmatprep.subr.bf16.mxu0 %v5667
        %5896 = vmatpush1.bf16.msra.mxu0 %v5666
        %5897 = vmatprep.subr.bf16.mxu0 %v5669
        %5898 = vmatpush1.bf16.msra.mxu0 %v5668
        %5899 = vmatprep.subr.bf16.mxu0 %v5671
        %5900 = vmatpush1.bf16.msra.mxu0 %v5670
        %5901 = vmatprep.subr.bf16.mxu0 %v5673
        %5902 = vmatpush1.bf16.msra.mxu0 %v5672
        %5903 = vmatprep.subr.bf16.mxu0 %v5675
        %5904 = vmatpush1.bf16.msra.mxu0 %v5674
        %5905 = vmatprep.subr.bf16.mxu0 %v5677
        %5906 = vmatpush1.bf16.msra.mxu0 %v5676
        %5907 = vmatprep.subr.bf16.mxu0 %v5679
        %5908 = vmatpush1.bf16.msra.mxu0 %v5678
        %5909 = vmatprep.subr.bf16.mxu0 %v5681
        %5910 = vmatpush1.bf16.msra.mxu0 %v5680
        %5911 = vmatprep.subr.bf16.mxu0 %v5683
        %5912 = vmatpush1.bf16.msra.mxu0 %v5682
        %5913 = vmatprep.subr.bf16.mxu0 %v5685
        %5914 = vmatpush1.bf16.msra.mxu0 %v5684
        %5915 = vmatprep.subr.bf16.mxu0 %v5687
        %5916 = vmatpush1.bf16.msra.mxu0 %v5686
        %5917 = vmatprep.subr.bf16.mxu0 %v5689
        %5918 = vmatpush1.bf16.msra.mxu0 %v5688
        %5919 = vmatprep.subr.bf16.mxu0 %v5691
        %5920 = vmatpush1.bf16.msra.mxu0 %v5690
        %5921 = vmatprep.mubr.bf16.mxu0 %v5107
        %5922 = vmatmul.mubr.bf16.gmra.mrb[0].mxu0 %v5095
        %v5923 = vpop.f32.mrb[0].mxu0
        %v5924 = vadd.f32 %v5791, %v5923
        %v5925 = vpop.f32.mrb[0].mxu0
        %v5926 = vadd.f32 %v5793, %v5925
        %v5927 = vpop.f32.mrb[0].mxu0
        %v5928 = vadd.f32 %v5795, %v5927
        %v5929 = vpop.f32.mrb[0].mxu0
        %v5930 = vadd.f32 %v5797, %v5929
        %5931 = vmatprep.mubr.bf16.mxu0 %v5139
        %5932 = vmatmul.mubr.bf16.gmra.mrb[0].mxu0 %v5131
        %v5933 = vpop.f32.mrb[0].mxu0
        %v5934 = vadd.f32 %v5801, %v5933
        %v5935 = vpop.f32.mrb[0].mxu0
        %v5936 = vadd.f32 %v5803, %v5935
        %v5937 = vpop.f32.mrb[0].mxu0
        %v5938 = vadd.f32 %v5805, %v5937
        %v5939 = vpop.f32.mrb[0].mxu0
        %v5940 = vadd.f32 %v5807, %v5939
        %5941 = vmatprep.mubr.bf16.mxu0 %v5171
        %5942 = vmatmul.mubr.bf16.gmra.mrb[0].mxu0 %v5163
        %v5943 = vpop.f32.mrb[0].mxu0
        %v5944 = vadd.f32 %v5811, %v5943
        %v5945 = vpop.f32.mrb[0].mxu0
        %v5946 = vadd.f32 %v5813, %v5945
        %v5947 = vpop.f32.mrb[0].mxu0
        %v5948 = vadd.f32 %v5815, %v5947
        %v5949 = vpop.f32.mrb[0].mxu0
        %v5950 = vadd.f32 %v5817, %v5949
        %5951 = vmatprep.mubr.bf16.mxu0 %v5203
        %5952 = vmatmul.mubr.bf16.gmra.mrb[0].mxu0 %v5195
        %v5953 = vpop.f32.mrb[0].mxu0
        %v5954 = vadd.f32 %v5821, %v5953
        %v5955 = vpop.f32.mrb[0].mxu0
        %v5956 = vadd.f32 %v5823, %v5955
        %v5957 = vpop.f32.mrb[0].mxu0
        %v5958 = vadd.f32 %v5825, %v5957
        %v5959 = vpop.f32.mrb[0].mxu0
        %v5960 = vadd.f32 %v5827, %v5959
        %5961 = vmatprep.mubr.bf16.mxu0 %v5235
        %5962 = vmatmul.mubr.bf16.gmra.mrb[0].mxu0 %v5227
        %v5963 = vpop.f32.mrb[0].mxu0
        %v5964 = vadd.f32 %v5831, %v5963
        %v5965 = vpop.f32.mrb[0].mxu0
        %v5966 = vadd.f32 %v5833, %v5965
        %v5967 = vpop.f32.mrb[0].mxu0
        %v5968 = vadd.f32 %v5835, %v5967
        %v5969 = vpop.f32.mrb[0].mxu0
        %v5970 = vadd.f32 %v5837, %v5969
        %5971 = vmatprep.mubr.bf16.mxu0 %v5267
        %5972 = vmatmul.mubr.bf16.gmra.mrb[0].mxu0 %v5259
        %v5973 = vpop.f32.mrb[0].mxu0
        %v5974 = vadd.f32 %v5841, %v5973
        %v5975 = vpop.f32.mrb[0].mxu0
        %v5976 = vadd.f32 %v5843, %v5975
        %v5977 = vpop.f32.mrb[0].mxu0
        %v5978 = vadd.f32 %v5845, %v5977
        %v5979 = vpop.f32.mrb[0].mxu0
        %v5980 = vadd.f32 %v5847, %v5979
        %5981 = vmatprep.mubr.bf16.mxu0 %v5299
        %5982 = vmatmul.mubr.bf16.gmra.mrb[0].mxu0 %v5291
        %v5983 = vpop.f32.mrb[0].mxu0
        %v5984 = vadd.f32 %v5851, %v5983
        %v5985 = vpop.f32.mrb[0].mxu0
        %v5986 = vadd.f32 %v5853, %v5985
        %v5987 = vpop.f32.mrb[0].mxu0
        %v5988 = vadd.f32 %v5855, %v5987
        %v5989 = vpop.f32.mrb[0].mxu0
        %v5990 = vadd.f32 %v5857, %v5989
        %5991 = vmatprep.mubr.bf16.mxu0 %v5331
        %5992 = vmatmul.mubr.bf16.gmra.mrb[0].mxu0 %v5323
        %v5993 = vpop.f32.mrb[0].mxu0
        %v5994 = vadd.f32 %v5861, %v5993
        %v5995 = vpop.f32.mrb[0].mxu0
        %v5996 = vadd.f32 %v5863, %v5995
        %v5997 = vpop.f32.mrb[0].mxu0
        %v5998 = vadd.f32 %v5865, %v5997
        %v5999 = vpop.f32.mrb[0].mxu0
        %v6000 = vadd.f32 %v5867, %v5999
        %6001 = vmatprep.mubr.bf16.mxu0 %v5363
        %6002 = vmatmul.mubr.bf16.gmra.mrb[0].mxu0 %v5355
        %v6003 = vpop.f32.mrb[0].mxu0
        %v6004 = vadd.f32 %v5871, %v6003
        %v6005 = vpop.f32.mrb[0].mxu0
        %v6006 = vadd.f32 %v5873, %v6005
        %v6007 = vpop.f32.mrb[0].mxu0
        %v6008 = vadd.f32 %v5875, %v6007
        %v6009 = vpop.f32.mrb[0].mxu0
        %v6010 = vadd.f32 %v5877, %v6009
        %6011 = vmatprep.mubr.bf16.mxu0 %v5395
        %6012 = vmatmul.mubr.bf16.gmra.mrb[0].mxu0 %v5387
        %v6013 = vpop.f32.mrb[0].mxu0
        %v6014 = vadd.f32 %v5881, %v6013
        %v6015 = vpop.f32.mrb[0].mxu0
        %v6016 = vadd.f32 %v5883, %v6015
        %v6017 = vpop.f32.mrb[0].mxu0
        %v6018 = vadd.f32 %v5885, %v6017
        %v6019 = vpop.f32.mrb[0].mxu0
        %v6020 = vadd.f32 %v5887, %v6019
        %6021 = vdwg.mxu0
        %v6062 = vunpack.c.l.b16 %v4679
        %v6063 = vunpack.c.h.b16 %v4679
        %v6064 = vunpack.c.l.b16 %v4680
        %v6065 = vunpack.c.h.b16 %v4680
        %v6066 = vunpack.c.l.b16 %v4681
        %v6067 = vunpack.c.h.b16 %v4681
        %v6068 = vunpack.c.l.b16 %v4682
        %v6069 = vunpack.c.h.b16 %v4682
        %v6070 = vunpack.c.l.b16 %v4683
        %v6071 = vunpack.c.h.b16 %v4683
        %v6072 = vunpack.c.l.b16 %v4684
        %v6073 = vunpack.c.h.b16 %v4684
        %v6074 = vunpack.c.l.b16 %v4685
        %v6075 = vunpack.c.h.b16 %v4685
        %v6076 = vunpack.c.l.b16 %v4686
        %v6077 = vunpack.c.h.b16 %v4686
        %v6078 = vunpack.c.l.b16 %v4687
        %v6079 = vunpack.c.h.b16 %v4687
        %v6080 = vunpack.c.l.b16 %v4688
        %v6081 = vunpack.c.h.b16 %v4688
        %v6082 = vunpack.c.l.b16 %v4689
        %v6083 = vunpack.c.h.b16 %v4689
        %v6084 = vunpack.c.l.b16 %v4690
        %v6085 = vunpack.c.h.b16 %v4690
        %v6086 = vunpack.c.l.b16 %v4691
        %v6087 = vunpack.c.h.b16 %v4691
        %v6088 = vunpack.c.l.b16 %v4692
        %v6089 = vunpack.c.h.b16 %v4692
        %v6090 = vunpack.c.l.b16 %v4693
        %v6091 = vunpack.c.h.b16 %v4693
        %v6092 = vunpack.c.l.b16 %v4694
        %v6093 = vunpack.c.h.b16 %v4694
        %v6094 = vunpack.c.l.b16 %v4695
        %v6095 = vunpack.c.h.b16 %v4695
        %v6096 = vunpack.c.l.b16 %v4696
        %v6097 = vunpack.c.h.b16 %v4696
        %v6098 = vunpack.c.l.b16 %v4697
        %v6099 = vunpack.c.h.b16 %v4697
        %v6100 = vunpack.c.l.b16 %v4698
        %v6101 = vunpack.c.h.b16 %v4698
        %v6102 = vunpack.c.l.b16 %v4699
        %v6103 = vunpack.c.h.b16 %v4699
        %v6104 = vunpack.c.l.b16 %v4700
        %v6105 = vunpack.c.h.b16 %v4700
        %v6106 = vunpack.c.l.b16 %v4701
        %v6107 = vunpack.c.h.b16 %v4701
        %v6108 = vunpack.c.l.b16 %v4702
        %v6109 = vunpack.c.h.b16 %v4702
        %v6110 = vunpack.c.l.b16 %v4703
        %v6111 = vunpack.c.h.b16 %v4703
        %v6112 = vunpack.c.l.b16 %v4704
        %v6113 = vunpack.c.h.b16 %v4704
        %v6114 = vunpack.c.l.b16 %v4705
        %v6115 = vunpack.c.h.b16 %v4705
        %v6116 = vunpack.c.l.b16 %v4706
        %v6117 = vunpack.c.h.b16 %v4706
        %v6118 = vunpack.c.l.b16 %v4707
        %v6119 = vunpack.c.h.b16 %v4707
        %v6120 = vunpack.c.l.b16 %v4708
        %v6121 = vunpack.c.h.b16 %v4708
        %v6122 = vunpack.c.l.b16 %v4709
        %v6123 = vunpack.c.h.b16 %v4709
        %v6124 = vunpack.c.l.b16 %v4710
        %v6125 = vunpack.c.h.b16 %v4710
        %v6126 = vunpack.c.l.b16 %v4711
        %v6127 = vunpack.c.h.b16 %v4711
        %v6128 = vunpack.c.l.b16 %v4712
        %v6129 = vunpack.c.h.b16 %v4712
        %v6130 = vunpack.c.l.b16 %v4713
        %v6131 = vunpack.c.h.b16 %v4713
        %v6132 = vunpack.c.l.b16 %v4714
        %v6133 = vunpack.c.h.b16 %v4714
        %v6134 = vunpack.c.l.b16 %v4715
        %v6135 = vunpack.c.h.b16 %v4715
        %v6136 = vunpack.c.l.b16 %v4716
        %v6137 = vunpack.c.h.b16 %v4716
        %v6138 = vunpack.c.l.b16 %v4717
        %v6139 = vunpack.c.h.b16 %v4717
        %v6140 = vunpack.c.l.b16 %v4718
        %v6141 = vunpack.c.h.b16 %v4718
        %v6142 = vpack.c.b16 %v6066, %v6062
        %v6143 = vpack.c.b16 %v6067, %v6063
        %v6144 = vpack.c.b16 %v6068, %v6064
        %v6145 = vpack.c.b16 %v6069, %v6065
        %v6146 = vpack.c.b16 %v6074, %v6070
        %v6147 = vpack.c.b16 %v6075, %v6071
        %v6148 = vpack.c.b16 %v6076, %v6072
        %v6149 = vpack.c.b16 %v6077, %v6073
        %v6150 = vpack.c.b16 %v6082, %v6078
        %v6151 = vpack.c.b16 %v6083, %v6079
        %v6152 = vpack.c.b16 %v6084, %v6080
        %v6153 = vpack.c.b16 %v6085, %v6081
        %v6154 = vpack.c.b16 %v6090, %v6086
        %v6155 = vpack.c.b16 %v6091, %v6087
        %v6156 = vpack.c.b16 %v6092, %v6088
        %v6157 = vpack.c.b16 %v6093, %v6089
        %v6158 = vpack.c.b16 %v6098, %v6094
        %v6159 = vpack.c.b16 %v6099, %v6095
        %v6160 = vpack.c.b16 %v6100, %v6096
        %v6161 = vpack.c.b16 %v6101, %v6097
        %v6162 = vpack.c.b16 %v6106, %v6102
        %v6163 = vpack.c.b16 %v6107, %v6103
        %v6164 = vpack.c.b16 %v6108, %v6104
        %v6165 = vpack.c.b16 %v6109, %v6105
        %v6166 = vpack.c.b16 %v6114, %v6110
        %v6167 = vpack.c.b16 %v6115, %v6111
        %v6168 = vpack.c.b16 %v6116, %v6112
        %v6169 = vpack.c.b16 %v6117, %v6113
        %v6170 = vpack.c.b16 %v6122, %v6118
        %v6171 = vpack.c.b16 %v6123, %v6119
        %v6172 = vpack.c.b16 %v6124, %v6120
        %v6173 = vpack.c.b16 %v6125, %v6121
        %v6174 = vpack.c.b16 %v6130, %v6126
        %v6175 = vpack.c.b16 %v6131, %v6127
        %v6176 = vpack.c.b16 %v6132, %v6128
        %v6177 = vpack.c.b16 %v6133, %v6129
        %v6178 = vpack.c.b16 %v6138, %v6134
        %v6179 = vpack.c.b16 %v6139, %v6135
        %v6180 = vpack.c.b16 %v6140, %v6136
        %v6181 = vpack.c.b16 %v6141, %v6137
        %v6286 = vunpack.c.l.b16 %v4719
        %v6287 = vunpack.c.h.b16 %v4719
        %v6288 = vunpack.c.l.b16 %v4720
        %v6289 = vunpack.c.h.b16 %v4720
        %v6290 = vunpack.c.l.b16 %v4721
        %v6291 = vunpack.c.h.b16 %v4721
        %v6292 = vunpack.c.l.b16 %v4722
        %v6293 = vunpack.c.h.b16 %v4722
        %v6294 = vunpack.c.l.b16 %v4723
        %v6295 = vunpack.c.h.b16 %v4723
        %v6296 = vunpack.c.l.b16 %v4724
        %v6297 = vunpack.c.h.b16 %v4724
        %v6298 = vunpack.c.l.b16 %v4725
        %v6299 = vunpack.c.h.b16 %v4725
        %v6300 = vunpack.c.l.b16 %v4726
        %v6301 = vunpack.c.h.b16 %v4726
        %v6302 = vunpack.c.l.b16 %v4727
        %v6303 = vunpack.c.h.b16 %v4727
        %v6304 = vunpack.c.l.b16 %v4728
        %v6305 = vunpack.c.h.b16 %v4728
        %v6306 = vunpack.c.l.b16 %v4729
        %v6307 = vunpack.c.h.b16 %v4729
        %v6308 = vunpack.c.l.b16 %v4730
        %v6309 = vunpack.c.h.b16 %v4730
        %v6310 = vunpack.c.l.b16 %v4731
        %v6311 = vunpack.c.h.b16 %v4731
        %v6312 = vunpack.c.l.b16 %v4732
        %v6313 = vunpack.c.h.b16 %v4732
        %v6314 = vunpack.c.l.b16 %v4733
        %v6315 = vunpack.c.h.b16 %v4733
        %v6316 = vunpack.c.l.b16 %v4734
        %v6317 = vunpack.c.h.b16 %v4734
        %v6318 = vunpack.c.l.b16 %v4735
        %v6319 = vunpack.c.h.b16 %v4735
        %v6320 = vunpack.c.l.b16 %v4736
        %v6321 = vunpack.c.h.b16 %v4736
        %v6322 = vunpack.c.l.b16 %v4737
        %v6323 = vunpack.c.h.b16 %v4737
        %v6324 = vunpack.c.l.b16 %v4738
        %v6325 = vunpack.c.h.b16 %v4738
        %v6326 = vunpack.c.l.b16 %v4739
        %v6327 = vunpack.c.h.b16 %v4739
        %v6328 = vunpack.c.l.b16 %v4740
        %v6329 = vunpack.c.h.b16 %v4740
        %v6330 = vunpack.c.l.b16 %v4741
        %v6331 = vunpack.c.h.b16 %v4741
        %v6332 = vunpack.c.l.b16 %v4742
        %v6333 = vunpack.c.h.b16 %v4742
        %v6334 = vunpack.c.l.b16 %v4743
        %v6335 = vunpack.c.h.b16 %v4743
        %v6336 = vunpack.c.l.b16 %v4744
        %v6337 = vunpack.c.h.b16 %v4744
        %v6338 = vunpack.c.l.b16 %v4745
        %v6339 = vunpack.c.h.b16 %v4745
        %v6340 = vunpack.c.l.b16 %v4746
        %v6341 = vunpack.c.h.b16 %v4746
        %v6342 = vunpack.c.l.b16 %v4747
        %v6343 = vunpack.c.h.b16 %v4747
        %v6344 = vunpack.c.l.b16 %v4748
        %v6345 = vunpack.c.h.b16 %v4748
        %v6346 = vunpack.c.l.b16 %v4749
        %v6347 = vunpack.c.h.b16 %v4749
        %v6348 = vunpack.c.l.b16 %v4750
        %v6349 = vunpack.c.h.b16 %v4750
        %v6350 = vunpack.c.l.b16 %v4751
        %v6351 = vunpack.c.h.b16 %v4751
        %v6352 = vunpack.c.l.b16 %v4752
        %v6353 = vunpack.c.h.b16 %v4752
        %v6354 = vunpack.c.l.b16 %v4753
        %v6355 = vunpack.c.h.b16 %v4753
        %v6356 = vunpack.c.l.b16 %v4754
        %v6357 = vunpack.c.h.b16 %v4754
        %v6358 = vunpack.c.l.b16 %v4755
        %v6359 = vunpack.c.h.b16 %v4755
        %v6360 = vunpack.c.l.b16 %v4756
        %v6361 = vunpack.c.h.b16 %v4756
        %v6362 = vunpack.c.l.b16 %v4757
        %v6363 = vunpack.c.h.b16 %v4757
        %v6364 = vunpack.c.l.b16 %v4758
        %v6365 = vunpack.c.h.b16 %v4758
        %v6366 = vunpack.c.l.b16 %v4759
        %v6367 = vunpack.c.h.b16 %v4759
        %v6368 = vunpack.c.l.b16 %v4760
        %v6369 = vunpack.c.h.b16 %v4760
        %v6370 = vunpack.c.l.b16 %v4761
        %v6371 = vunpack.c.h.b16 %v4761
        %v6372 = vunpack.c.l.b16 %v4762
        %v6373 = vunpack.c.h.b16 %v4762
        %v6374 = vunpack.c.l.b16 %v4763
        %v6375 = vunpack.c.h.b16 %v4763
        %v6376 = vunpack.c.l.b16 %v4764
        %v6377 = vunpack.c.h.b16 %v4764
        %v6378 = vunpack.c.l.b16 %v4765
        %v6379 = vunpack.c.h.b16 %v4765
        %v6380 = vunpack.c.l.b16 %v4766
        %v6381 = vunpack.c.h.b16 %v4766
        %v6382 = vunpack.c.l.b16 %v4767
        %v6383 = vunpack.c.h.b16 %v4767
        %v6384 = vunpack.c.l.b16 %v4768
        %v6385 = vunpack.c.h.b16 %v4768
        %v6386 = vunpack.c.l.b16 %v4769
        %v6387 = vunpack.c.h.b16 %v4769
        %v6388 = vunpack.c.l.b16 %v4770
        %v6389 = vunpack.c.h.b16 %v4770
        %v6390 = vunpack.c.l.b16 %v4771
        %v6391 = vunpack.c.h.b16 %v4771
        %v6392 = vunpack.c.l.b16 %v4772
        %v6393 = vunpack.c.h.b16 %v4772
        %v6394 = vunpack.c.l.b16 %v4773
        %v6395 = vunpack.c.h.b16 %v4773
        %v6396 = vunpack.c.l.b16 %v4774
        %v6397 = vunpack.c.h.b16 %v4774
        %v6398 = vunpack.c.l.b16 %v4775
        %v6399 = vunpack.c.h.b16 %v4775
        %v6400 = vunpack.c.l.b16 %v4776
        %v6401 = vunpack.c.h.b16 %v4776
        %v6402 = vunpack.c.l.b16 %v4777
        %v6403 = vunpack.c.h.b16 %v4777
        %v6404 = vunpack.c.l.b16 %v4778
        %v6405 = vunpack.c.h.b16 %v4778
        %v6406 = vunpack.c.l.b16 %v4779
        %v6407 = vunpack.c.h.b16 %v4779
        %v6408 = vunpack.c.l.b16 %v4780
        %v6409 = vunpack.c.h.b16 %v4780
        %v6410 = vunpack.c.l.b16 %v4781
        %v6411 = vunpack.c.h.b16 %v4781
        %v6412 = vunpack.c.l.b16 %v4782
        %v6413 = vunpack.c.h.b16 %v4782
        %v6414 = vpack.c.b16 %v6288, %v6286
        %v6415 = vpack.c.b16 %v6289, %v6287
        %v6416 = vpack.c.b16 %v6292, %v6290
        %v6417 = vpack.c.b16 %v6293, %v6291
        %v6418 = vpack.c.b16 %v6296, %v6294
        %v6419 = vpack.c.b16 %v6297, %v6295
        %v6420 = vpack.c.b16 %v6300, %v6298
        %v6421 = vpack.c.b16 %v6301, %v6299
        %v6422 = vpack.c.b16 %v6304, %v6302
        %v6423 = vpack.c.b16 %v6305, %v6303
        %v6424 = vpack.c.b16 %v6308, %v6306
        %v6425 = vpack.c.b16 %v6309, %v6307
        %v6426 = vpack.c.b16 %v6312, %v6310
        %v6427 = vpack.c.b16 %v6313, %v6311
        %v6428 = vpack.c.b16 %v6316, %v6314
        %v6429 = vpack.c.b16 %v6317, %v6315
        %v6430 = vpack.c.b16 %v6320, %v6318
        %v6431 = vpack.c.b16 %v6321, %v6319
        %v6432 = vpack.c.b16 %v6324, %v6322
        %v6433 = vpack.c.b16 %v6325, %v6323
        %v6434 = vpack.c.b16 %v6328, %v6326
        %v6435 = vpack.c.b16 %v6329, %v6327
        %v6436 = vpack.c.b16 %v6332, %v6330
        %v6437 = vpack.c.b16 %v6333, %v6331
        %v6438 = vpack.c.b16 %v6336, %v6334
        %v6439 = vpack.c.b16 %v6337, %v6335
        %v6440 = vpack.c.b16 %v6340, %v6338
        %v6441 = vpack.c.b16 %v6341, %v6339
        %v6442 = vpack.c.b16 %v6344, %v6342
        %v6443 = vpack.c.b16 %v6345, %v6343
        %v6444 = vpack.c.b16 %v6348, %v6346
        %v6445 = vpack.c.b16 %v6349, %v6347
        %v6446 = vpack.c.b16 %v6352, %v6350
        %v6447 = vpack.c.b16 %v6353, %v6351
        %v6448 = vpack.c.b16 %v6356, %v6354
        %v6449 = vpack.c.b16 %v6357, %v6355
        %v6450 = vpack.c.b16 %v6360, %v6358
        %v6451 = vpack.c.b16 %v6361, %v6359
        %v6452 = vpack.c.b16 %v6364, %v6362
        %v6453 = vpack.c.b16 %v6365, %v6363
        %v6454 = vpack.c.b16 %v6368, %v6366
        %v6455 = vpack.c.b16 %v6369, %v6367
        %v6456 = vpack.c.b16 %v6372, %v6370
        %v6457 = vpack.c.b16 %v6373, %v6371
        %v6458 = vpack.c.b16 %v6376, %v6374
        %v6459 = vpack.c.b16 %v6377, %v6375
        %v6460 = vpack.c.b16 %v6380, %v6378
        %v6461 = vpack.c.b16 %v6381, %v6379
        %v6462 = vpack.c.b16 %v6384, %v6382
        %v6463 = vpack.c.b16 %v6385, %v6383
        %v6464 = vpack.c.b16 %v6388, %v6386
        %v6465 = vpack.c.b16 %v6389, %v6387
        %v6466 = vpack.c.b16 %v6392, %v6390
        %v6467 = vpack.c.b16 %v6393, %v6391
        %v6468 = vpack.c.b16 %v6396, %v6394
        %v6469 = vpack.c.b16 %v6397, %v6395
        %v6470 = vpack.c.b16 %v6400, %v6398
        %v6471 = vpack.c.b16 %v6401, %v6399
        %v6472 = vpack.c.b16 %v6404, %v6402
        %v6473 = vpack.c.b16 %v6405, %v6403
        %v6474 = vpack.c.b16 %v6408, %v6406
        %v6475 = vpack.c.b16 %v6409, %v6407
        %v6476 = vpack.c.b16 %v6412, %v6410
        %v6477 = vpack.c.b16 %v6413, %v6411
        %6542 = vmatprep.subr.bf16.mxu0 %v6415
        %6543 = vmatpush1.bf16.msra.mxu0 %v6414
        %6544 = vmatprep.subr.bf16.mxu0 %v6417
        %6545 = vmatpush1.bf16.msra.mxu0 %v6416
        %6546 = vmatprep.subr.bf16.mxu0 %v6419
        %6547 = vmatpush1.bf16.msra.mxu0 %v6418
        %6548 = vmatprep.subr.bf16.mxu0 %v6421
        %6549 = vmatpush1.bf16.msra.mxu0 %v6420
        %6550 = vmatprep.subr.bf16.mxu0 %v6423
        %6551 = vmatpush1.bf16.msra.mxu0 %v6422
        %6552 = vmatprep.subr.bf16.mxu0 %v6425
        %6553 = vmatpush1.bf16.msra.mxu0 %v6424
        %6554 = vmatprep.subr.bf16.mxu0 %v6427
        %6555 = vmatpush1.bf16.msra.mxu0 %v6426
        %6556 = vmatprep.subr.bf16.mxu0 %v6429
        %6557 = vmatpush1.bf16.msra.mxu0 %v6428
        %6558 = vmatprep.subr.bf16.mxu0 %v6431
        %6559 = vmatpush1.bf16.msra.mxu0 %v6430
        %6560 = vmatprep.subr.bf16.mxu0 %v6433
        %6561 = vmatpush1.bf16.msra.mxu0 %v6432
        %6562 = vmatprep.subr.bf16.mxu0 %v6435
        %6563 = vmatpush1.bf16.msra.mxu0 %v6434
        %6564 = vmatprep.subr.bf16.mxu0 %v6437
        %6565 = vmatpush1.bf16.msra.mxu0 %v6436
        %6566 = vmatprep.subr.bf16.mxu0 %v6439
        %6567 = vmatpush1.bf16.msra.mxu0 %v6438
        %6568 = vmatprep.subr.bf16.mxu0 %v6441
        %6569 = vmatpush1.bf16.msra.mxu0 %v6440
        %6570 = vmatprep.subr.bf16.mxu0 %v6443
        %6571 = vmatpush1.bf16.msra.mxu0 %v6442
        %6572 = vmatprep.subr.bf16.mxu0 %v6445
        %6573 = vmatpush1.bf16.msra.mxu0 %v6444
        %6574 = vmatprep.mubr.bf16.mxu0 %v6143
        %6575 = vmatmul.mubr.bf16.gmra.mrb[0].mxu0 %v6142
        %v6576 = vpop.f32.mrb[0].mxu0
        %v6577 = vadd.f32 %v5924, %v6576
        %v6578 = vpop.f32.mrb[0].mxu0
        %v6579 = vadd.f32 %v5926, %v6578
        %v6580 = vpop.f32.mrb[0].mxu0
        %v6581 = vadd.f32 %v5928, %v6580
        %v6582 = vpop.f32.mrb[0].mxu0
        %v6583 = vadd.f32 %v5930, %v6582
        %6584 = vmatprep.mubr.bf16.mxu0 %v6147
        %6585 = vmatmul.mubr.bf16.gmra.mrb[0].mxu0 %v6146
        %v6586 = vpop.f32.mrb[0].mxu0
        %v6587 = vadd.f32 %v5934, %v6586
        %v6588 = vpop.f32.mrb[0].mxu0
        %v6589 = vadd.f32 %v5936, %v6588
        %v6590 = vpop.f32.mrb[0].mxu0
        %v6591 = vadd.f32 %v5938, %v6590
        %v6592 = vpop.f32.mrb[0].mxu0
        %v6593 = vadd.f32 %v5940, %v6592
        %6594 = vmatprep.mubr.bf16.mxu0 %v6151
        %6595 = vmatmul.mubr.bf16.gmra.mrb[0].mxu0 %v6150
        %v6596 = vpop.f32.mrb[0].mxu0
        %v6597 = vadd.f32 %v5944, %v6596
        %v6598 = vpop.f32.mrb[0].mxu0
        %v6599 = vadd.f32 %v5946, %v6598
        %v6600 = vpop.f32.mrb[0].mxu0
        %v6601 = vadd.f32 %v5948, %v6600
        %v6602 = vpop.f32.mrb[0].mxu0
        %v6603 = vadd.f32 %v5950, %v6602
        %6604 = vmatprep.mubr.bf16.mxu0 %v6155
        %6605 = vmatmul.mubr.bf16.gmra.mrb[0].mxu0 %v6154
        %v6606 = vpop.f32.mrb[0].mxu0
        %v6607 = vadd.f32 %v5954, %v6606
        %v6608 = vpop.f32.mrb[0].mxu0
        %v6609 = vadd.f32 %v5956, %v6608
        %v6610 = vpop.f32.mrb[0].mxu0
        %v6611 = vadd.f32 %v5958, %v6610
        %v6612 = vpop.f32.mrb[0].mxu0
        %v6613 = vadd.f32 %v5960, %v6612
        %6614 = vmatprep.mubr.bf16.mxu0 %v6159
        %6615 = vmatmul.mubr.bf16.gmra.mrb[0].mxu0 %v6158
        %v6616 = vpop.f32.mrb[0].mxu0
        %v6617 = vadd.f32 %v5964, %v6616
        %v6618 = vpop.f32.mrb[0].mxu0
        %v6619 = vadd.f32 %v5966, %v6618
        %v6620 = vpop.f32.mrb[0].mxu0
        %v6621 = vadd.f32 %v5968, %v6620
        %v6622 = vpop.f32.mrb[0].mxu0
        %v6623 = vadd.f32 %v5970, %v6622
        %6624 = vmatprep.mubr.bf16.mxu0 %v6163
        %6625 = vmatmul.mubr.bf16.gmra.mrb[0].mxu0 %v6162
        %v6626 = vpop.f32.mrb[0].mxu0
        %v6627 = vadd.f32 %v5974, %v6626
        %v6628 = vpop.f32.mrb[0].mxu0
        %v6629 = vadd.f32 %v5976, %v6628
        %v6630 = vpop.f32.mrb[0].mxu0
        %v6631 = vadd.f32 %v5978, %v6630
        %v6632 = vpop.f32.mrb[0].mxu0
        %v6633 = vadd.f32 %v5980, %v6632
        %6634 = vmatprep.mubr.bf16.mxu0 %v6167
        %6635 = vmatmul.mubr.bf16.gmra.mrb[0].mxu0 %v6166
        %v6636 = vpop.f32.mrb[0].mxu0
        %v6637 = vadd.f32 %v5984, %v6636
        %v6638 = vpop.f32.mrb[0].mxu0
        %v6639 = vadd.f32 %v5986, %v6638
        %v6640 = vpop.f32.mrb[0].mxu0
        %v6641 = vadd.f32 %v5988, %v6640
        %v6642 = vpop.f32.mrb[0].mxu0
        %v6643 = vadd.f32 %v5990, %v6642
        %6644 = vmatprep.mubr.bf16.mxu0 %v6171
        %6645 = vmatmul.mubr.bf16.gmra.mrb[0].mxu0 %v6170
        %v6646 = vpop.f32.mrb[0].mxu0
        %v6647 = vadd.f32 %v5994, %v6646
        %v6648 = vpop.f32.mrb[0].mxu0
        %v6649 = vadd.f32 %v5996, %v6648
        %v6650 = vpop.f32.mrb[0].mxu0
        %v6651 = vadd.f32 %v5998, %v6650
        %v6652 = vpop.f32.mrb[0].mxu0
        %v6653 = vadd.f32 %v6000, %v6652
        %6654 = vmatprep.mubr.bf16.mxu0 %v6175
        %6655 = vmatmul.mubr.bf16.gmra.mrb[0].mxu0 %v6174
        %v6656 = vpop.f32.mrb[0].mxu0
        %v6657 = vadd.f32 %v6004, %v6656
        %v6658 = vpop.f32.mrb[0].mxu0
        %v6659 = vadd.f32 %v6006, %v6658
        %v6660 = vpop.f32.mrb[0].mxu0
        %v6661 = vadd.f32 %v6008, %v6660
        %v6662 = vpop.f32.mrb[0].mxu0
        %v6663 = vadd.f32 %v6010, %v6662
        %6664 = vmatprep.mubr.bf16.mxu0 %v6179
        %6665 = vmatmul.mubr.bf16.gmra.mrb[0].mxu0 %v6178
        %v6666 = vpop.f32.mrb[0].mxu0
        %v6667 = vadd.f32 %v6014, %v6666
        %v6668 = vpop.f32.mrb[0].mxu0
        %v6669 = vadd.f32 %v6016, %v6668
        %v6670 = vpop.f32.mrb[0].mxu0
        %v6671 = vadd.f32 %v6018, %v6670
        %v6672 = vpop.f32.mrb[0].mxu0
        %v6673 = vadd.f32 %v6020, %v6672
        %6674 = vdwg.mxu0
        %6675 = vmatprep.subr.bf16.mxu0 %v6447
        %6676 = vmatpush1.bf16.msra.mxu0 %v6446
        %6677 = vmatprep.subr.bf16.mxu0 %v6449
        %6678 = vmatpush1.bf16.msra.mxu0 %v6448
        %6679 = vmatprep.subr.bf16.mxu0 %v6451
        %6680 = vmatpush1.bf16.msra.mxu0 %v6450
        %6681 = vmatprep.subr.bf16.mxu0 %v6453
        %6682 = vmatpush1.bf16.msra.mxu0 %v6452
        %6683 = vmatprep.subr.bf16.mxu0 %v6455
        %6684 = vmatpush1.bf16.msra.mxu0 %v6454
        %6685 = vmatprep.subr.bf16.mxu0 %v6457
        %6686 = vmatpush1.bf16.msra.mxu0 %v6456
        %6687 = vmatprep.subr.bf16.mxu0 %v6459
        %6688 = vmatpush1.bf16.msra.mxu0 %v6458
        %6689 = vmatprep.subr.bf16.mxu0 %v6461
        %6690 = vmatpush1.bf16.msra.mxu0 %v6460
        %6691 = vmatprep.subr.bf16.mxu0 %v6463
        %6692 = vmatpush1.bf16.msra.mxu0 %v6462
        %6693 = vmatprep.subr.bf16.mxu0 %v6465
        %6694 = vmatpush1.bf16.msra.mxu0 %v6464
        %6695 = vmatprep.subr.bf16.mxu0 %v6467
        %6696 = vmatpush1.bf16.msra.mxu0 %v6466
        %6697 = vmatprep.subr.bf16.mxu0 %v6469
        %6698 = vmatpush1.bf16.msra.mxu0 %v6468
        %6699 = vmatprep.subr.bf16.mxu0 %v6471
        %6700 = vmatpush1.bf16.msra.mxu0 %v6470
        %6701 = vmatprep.subr.bf16.mxu0 %v6473
        %6702 = vmatpush1.bf16.msra.mxu0 %v6472
        %6703 = vmatprep.subr.bf16.mxu0 %v6475
        %6704 = vmatpush1.bf16.msra.mxu0 %v6474
        %6705 = vmatprep.subr.bf16.mxu0 %v6477
        %6706 = vmatpush1.bf16.msra.mxu0 %v6476
        %6707 = vmatprep.mubr.bf16.mxu0 %v6145
        %6708 = vmatmul.mubr.bf16.gmra.mrb[0].mxu0 %v6144
        %v6709 = vpop.f32.mrb[0].mxu0
        %v6710 = vadd.f32 %v6577, %v6709
        %v6711 = vpop.f32.mrb[0].mxu0
        %v6712 = vadd.f32 %v6579, %v6711
        %v6713 = vpop.f32.mrb[0].mxu0
        %v6714 = vadd.f32 %v6581, %v6713
        %v6715 = vpop.f32.mrb[0].mxu0
        %v6716 = vadd.f32 %v6583, %v6715
        %6717 = vmatprep.mubr.bf16.mxu0 %v6149
        %6718 = vmatmul.mubr.bf16.gmra.mrb[0].mxu0 %v6148
        %v6719 = vpop.f32.mrb[0].mxu0
        %v6720 = vadd.f32 %v6587, %v6719
        %v6721 = vpop.f32.mrb[0].mxu0
        %v6722 = vadd.f32 %v6589, %v6721
        %v6723 = vpop.f32.mrb[0].mxu0
        %v6724 = vadd.f32 %v6591, %v6723
        %v6725 = vpop.f32.mrb[0].mxu0
        %v6726 = vadd.f32 %v6593, %v6725
        %6727 = vmatprep.mubr.bf16.mxu0 %v6153
        %6728 = vmatmul.mubr.bf16.gmra.mrb[0].mxu0 %v6152
        %v6729 = vpop.f32.mrb[0].mxu0
        %v6730 = vadd.f32 %v6597, %v6729
        %v6731 = vpop.f32.mrb[0].mxu0
        %v6732 = vadd.f32 %v6599, %v6731
        %v6733 = vpop.f32.mrb[0].mxu0
        %v6734 = vadd.f32 %v6601, %v6733
        %v6735 = vpop.f32.mrb[0].mxu0
        %v6736 = vadd.f32 %v6603, %v6735
        %6737 = vmatprep.mubr.bf16.mxu0 %v6157
        %6738 = vmatmul.mubr.bf16.gmra.mrb[0].mxu0 %v6156
        %v6739 = vpop.f32.mrb[0].mxu0
        %v6740 = vadd.f32 %v6607, %v6739
        %v6741 = vpop.f32.mrb[0].mxu0
        %v6742 = vadd.f32 %v6609, %v6741
        %v6743 = vpop.f32.mrb[0].mxu0
        %v6744 = vadd.f32 %v6611, %v6743
        %v6745 = vpop.f32.mrb[0].mxu0
        %v6746 = vadd.f32 %v6613, %v6745
        %6747 = vmatprep.mubr.bf16.mxu0 %v6161
        %6748 = vmatmul.mubr.bf16.gmra.mrb[0].mxu0 %v6160
        %v6749 = vpop.f32.mrb[0].mxu0
        %v6750 = vadd.f32 %v6617, %v6749
        %v6751 = vpop.f32.mrb[0].mxu0
        %v6752 = vadd.f32 %v6619, %v6751
        %v6753 = vpop.f32.mrb[0].mxu0
        %v6754 = vadd.f32 %v6621, %v6753
        %v6755 = vpop.f32.mrb[0].mxu0
        %v6756 = vadd.f32 %v6623, %v6755
        %6757 = vmatprep.mubr.bf16.mxu0 %v6165
        %6758 = vmatmul.mubr.bf16.gmra.mrb[0].mxu0 %v6164
        %v6759 = vpop.f32.mrb[0].mxu0
        %v6760 = vadd.f32 %v6627, %v6759
        %v6761 = vpop.f32.mrb[0].mxu0
        %v6762 = vadd.f32 %v6629, %v6761
        %v6763 = vpop.f32.mrb[0].mxu0
        %v6764 = vadd.f32 %v6631, %v6763
        %v6765 = vpop.f32.mrb[0].mxu0
        %v6766 = vadd.f32 %v6633, %v6765
        %6767 = vmatprep.mubr.bf16.mxu0 %v6169
        %6768 = vmatmul.mubr.bf16.gmra.mrb[0].mxu0 %v6168
        %v6769 = vpop.f32.mrb[0].mxu0
        %v6770 = vadd.f32 %v6637, %v6769
        %v6771 = vpop.f32.mrb[0].mxu0
        %v6772 = vadd.f32 %v6639, %v6771
        %v6773 = vpop.f32.mrb[0].mxu0
        %v6774 = vadd.f32 %v6641, %v6773
        %v6775 = vpop.f32.mrb[0].mxu0
        %v6776 = vadd.f32 %v6643, %v6775
        %6777 = vmatprep.mubr.bf16.mxu0 %v6173
        %6778 = vmatmul.mubr.bf16.gmra.mrb[0].mxu0 %v6172
        %v6779 = vpop.f32.mrb[0].mxu0
        %v6780 = vadd.f32 %v6647, %v6779
        %v6781 = vpop.f32.mrb[0].mxu0
        %v6782 = vadd.f32 %v6649, %v6781
        %v6783 = vpop.f32.mrb[0].mxu0
        %v6784 = vadd.f32 %v6651, %v6783
        %v6785 = vpop.f32.mrb[0].mxu0
        %v6786 = vadd.f32 %v6653, %v6785
        %6787 = vmatprep.mubr.bf16.mxu0 %v6177
        %6788 = vmatmul.mubr.bf16.gmra.mrb[0].mxu0 %v6176
        %v6789 = vpop.f32.mrb[0].mxu0
        %v6790 = vadd.f32 %v6657, %v6789
        %v6791 = vpop.f32.mrb[0].mxu0
        %v6792 = vadd.f32 %v6659, %v6791
        %v6793 = vpop.f32.mrb[0].mxu0
        %v6794 = vadd.f32 %v6661, %v6793
        %v6795 = vpop.f32.mrb[0].mxu0
        %v6796 = vadd.f32 %v6663, %v6795
        %6797 = vmatprep.mubr.bf16.mxu0 %v6181
        %6798 = vmatmul.mubr.bf16.gmra.mrb[0].mxu0 %v6180
        %v6799 = vpop.f32.mrb[0].mxu0
        %v6800 = vadd.f32 %v6667, %v6799
        %v6801 = vpop.f32.mrb[0].mxu0
        %v6802 = vadd.f32 %v6669, %v6801
        %v6803 = vpop.f32.mrb[0].mxu0
        %v6804 = vadd.f32 %v6671, %v6803
        %v6805 = vpop.f32.mrb[0].mxu0
        %v6806 = vadd.f32 %v6673, %v6805
        %6807 = vdwg.mxu0
        %v6808 = vld [vmem:[#allocation2] sm:$0xee]
        %v6809 = vld [vmem:[#allocation2 + $0x8] sm:$0xee]
        %s6810 = scalar_lea.vmem [#allocation9], 1024
        %v6811 = vld [vmem:[%s6810] sm:$0xff]
        %v6812 = vld [vmem:[%s6810 + $0x8] sm:$0xff]
        %v6813 = vld [vmem:[%s6810 + $0x10] sm:$0xff]
        %v6814 = vld [vmem:[%s6810 + $0x18] sm:$0xff]
        %v6815 = vld [vmem:[%s6810 + $0x20] sm:$0xff]
        %v6816 = vld [vmem:[%s6810 + $0x28] sm:$0xff]
        %v6817 = vld [vmem:[%s6810 + $0x30] sm:$0xff]
        %v6818 = vld [vmem:[%s6810 + $0x38] sm:$0xff]
        %v6819 = vld [vmem:[%s6810 + $0x40] sm:$0xff]
        %v6820 = vld [vmem:[%s6810 + $0x48] sm:$0xff]
        %v6821 = vld [vmem:[%s6810 + $0x50] sm:$0xff]
        %v6822 = vld [vmem:[%s6810 + $0x58] sm:$0xff]
        %v6823 = vld [vmem:[%s6810 + $0x60] sm:$0xff]
        %v6824 = vld [vmem:[%s6810 + $0x68] sm:$0xff]
        %v6825 = vld [vmem:[%s6810 + $0x70] sm:$0xff]
        %v6826 = vld [vmem:[%s6810 + $0x78] sm:$0xff]
        %v6827 = vld [vmem:[%s6810 + $0x80] sm:$0xff]
        %v6828 = vld [vmem:[%s6810 + $0x88] sm:$0xff]
        %v6829 = vld [vmem:[%s6810 + $0x90] sm:$0xff]
        %v6830 = vld [vmem:[%s6810 + $0x98] sm:$0xff]
        %v6831 = vld [vmem:[%s6810 + $0xa0] sm:$0xff]
        %v6832 = vld [vmem:[%s6810 + $0xa8] sm:$0xff]
        %v6833 = vld [vmem:[%s6810 + $0xb0] sm:$0xff]
        %v6834 = vld [vmem:[%s6810 + $0xb8] sm:$0xff]
        %v6835 = vld [vmem:[%s6810 + $0xc0] sm:$0xff]
        %v6836 = vld [vmem:[%s6810 + $0xc8] sm:$0xff]
        %v6837 = vld [vmem:[%s6810 + $0xd0] sm:$0xff]
        %v6838 = vld [vmem:[%s6810 + $0xd8] sm:$0xff]
        %v6839 = vld [vmem:[%s6810 + $0xe0] sm:$0xff]
        %v6840 = vld [vmem:[%s6810 + $0xe8] sm:$0xff]
        %v6841 = vld [vmem:[%s6810 + $0xf0] sm:$0xff]
        %v6842 = vld [vmem:[%s6810 + $0xf8] sm:$0xff]
        %v6843 = vld [vmem:[%s6810 + $0x100] sm:$0xff]
        %v6844 = vld [vmem:[%s6810 + $0x108] sm:$0xff]
        %v6845 = vld [vmem:[%s6810 + $0x110] sm:$0xff]
        %v6846 = vld [vmem:[%s6810 + $0x118] sm:$0xff]
        %v6847 = vld [vmem:[%s6810 + $0x120] sm:$0xff]
        %v6848 = vld [vmem:[%s6810 + $0x128] sm:$0xff]
        %v6849 = vld [vmem:[%s6810 + $0x130] sm:$0xff]
        %v6850 = vld [vmem:[%s6810 + $0x138] sm:$0xff]
        %v6851 = vld [vmem:[%s6810 + $0x140] sm:$0xff]
        %v6852 = vld [vmem:[%s6810 + $0x148] sm:$0xff]
        %v6853 = vld [vmem:[%s6810 + $0x150] sm:$0xff]
        %v6854 = vld [vmem:[%s6810 + $0x158] sm:$0xff]
        %v6855 = vld [vmem:[%s6810 + $0x160] sm:$0xff]
        %v6856 = vld [vmem:[%s6810 + $0x168] sm:$0xff]
        %v6857 = vld [vmem:[%s6810 + $0x170] sm:$0xff]
        %v6858 = vld [vmem:[%s6810 + $0x178] sm:$0xff]
        %v6859 = vld [vmem:[%s6810 + $0x180] sm:$0xff]
        %v6860 = vld [vmem:[%s6810 + $0x188] sm:$0xff]
        %v6861 = vld [vmem:[%s6810 + $0x190] sm:$0xff]
        %v6862 = vld [vmem:[%s6810 + $0x198] sm:$0xff]
        %v6863 = vld [vmem:[%s6810 + $0x1a0] sm:$0xff]
        %v6864 = vld [vmem:[%s6810 + $0x1a8] sm:$0xff]
        %v6865 = vld [vmem:[%s6810 + $0x1b0] sm:$0xff]
        %v6866 = vld [vmem:[%s6810 + $0x1b8] sm:$0xff]
        %v6867 = vld [vmem:[%s6810 + $0x1c0] sm:$0xff]
        %v6868 = vld [vmem:[%s6810 + $0x1c8] sm:$0xff]
        %v6869 = vld [vmem:[%s6810 + $0x1d0] sm:$0xff]
        %v6870 = vld [vmem:[%s6810 + $0x1d8] sm:$0xff]
        %v6871 = vld [vmem:[%s6810 + $0x1e0] sm:$0xff]
        %v6872 = vld [vmem:[%s6810 + $0x1e8] sm:$0xff]
        %v6873 = vld [vmem:[%s6810 + $0x1f0] sm:$0xff]
        %v6874 = vld [vmem:[%s6810 + $0x1f8] sm:$0xff]
        %v6877 = vunpack.c.l.b16 %v6808
        %v6878 = vunpack.c.h.b16 %v6808
        %v6879 = vunpack.c.l.b16 %v6809
        %v6880 = vunpack.c.h.b16 %v6809
        %v6881 = vpack.c.b16 %v4936, %v6877
        %v6882 = vpack.c.b16 %v4937, %v6878
        %v6883 = vpack.c.b16 %v4938, %v6879
        %v6884 = vpack.c.b16 %v4939, %v6880
        %v6885 = vrot.slane %v6881, 1
        %v6886 = vrot.slane %v5020, 1
        %v6887 = vsel %vm3286, %v6885, %v6886
        %v6888 = vrot.slane %v6882, 1
        %v6889 = vrot.slane %v5021, 1
        %v6890 = vsel %vm3286, %v6888, %v6889
        %v6891 = vrot.slane %v6883, 1
        %v6892 = vrot.slane %v5022, 1
        %v6893 = vsel %vm3286, %v6891, %v6892
        %v6894 = vrot.slane %v6884, 1
        %v6895 = vrot.slane %v5023, 1
        %v6896 = vsel %vm3286, %v6894, %v6895
        %v6897 = vrot.slane %v5024, 1
        %v6898 = vsel %vm3286, %v6886, %v6897
        %v6899 = vrot.slane %v5025, 1
        %v6900 = vsel %vm3286, %v6889, %v6899
        %v6901 = vrot.slane %v5026, 1
        %v6902 = vsel %vm3286, %v6892, %v6901
        %v6903 = vrot.slane %v5027, 1
        %v6904 = vsel %vm3286, %v6895, %v6903
        %v6905 = vrot.slane %v5028, 1
        %v6906 = vsel %vm3286, %v6897, %v6905
        %v6907 = vrot.slane %v5029, 1
        %v6908 = vsel %vm3286, %v6899, %v6907
        %v6909 = vrot.slane %v5030, 1
        %v6910 = vsel %vm3286, %v6901, %v6909
        %v6911 = vrot.slane %v5031, 1
        %v6912 = vsel %vm3286, %v6903, %v6911
        %v6913 = vrot.slane %v5032, 1
        %v6914 = vsel %vm3286, %v6905, %v6913
        %v6915 = vrot.slane %v5033, 1
        %v6916 = vsel %vm3286, %v6907, %v6915
        %v6917 = vrot.slane %v5034, 1
        %v6918 = vsel %vm3286, %v6909, %v6917
        %v6919 = vrot.slane %v5035, 1
        %v6920 = vsel %vm3286, %v6911, %v6919
        %v6921 = vrot.slane %v5036, 1
        %v6922 = vsel %vm3286, %v6913, %v6921
        %v6923 = vrot.slane %v5037, 1
        %v6924 = vsel %vm3286, %v6915, %v6923
        %v6925 = vrot.slane %v5038, 1
        %v6926 = vsel %vm3286, %v6917, %v6925
        %v6927 = vrot.slane %v5039, 1
        %v6928 = vsel %vm3286, %v6919, %v6927
        %v6929 = vrot.slane %v5040, 1
        %v6930 = vsel %vm3286, %v6921, %v6929
        %v6931 = vrot.slane %v5041, 1
        %v6932 = vsel %vm3286, %v6923, %v6931
        %v6933 = vrot.slane %v5042, 1
        %v6934 = vsel %vm3286, %v6925, %v6933
        %v6935 = vrot.slane %v5043, 1
        %v6936 = vsel %vm3286, %v6927, %v6935
        %v6937 = vrot.slane %v5044, 1
        %v6938 = vsel %vm3286, %v6929, %v6937
        %v6939 = vrot.slane %v5045, 1
        %v6940 = vsel %vm3286, %v6931, %v6939
        %v6941 = vrot.slane %v5046, 1
        %v6942 = vsel %vm3286, %v6933, %v6941
        %v6943 = vrot.slane %v5047, 1
        %v6944 = vsel %vm3286, %v6935, %v6943
        %v6945 = vrot.slane %v5048, 1
        %v6946 = vsel %vm3286, %v6937, %v6945
        %v6947 = vrot.slane %v5049, 1
        %v6948 = vsel %vm3286, %v6939, %v6947
        %v6949 = vrot.slane %v5050, 1
        %v6950 = vsel %vm3286, %v6941, %v6949
        %v6951 = vrot.slane %v5051, 1
        %v6952 = vsel %vm3286, %v6943, %v6951
        %v6953 = vrot.slane %v5052, 1
        %v6954 = vsel %vm3286, %v6945, %v6953
        %v6955 = vrot.slane %v5053, 1
        %v6956 = vsel %vm3286, %v6947, %v6955
        %v6957 = vrot.slane %v5054, 1
        %v6958 = vsel %vm3286, %v6949, %v6957
        %v6959 = vrot.slane %v5055, 1
        %v6960 = vsel %vm3286, %v6951, %v6959
        %v6961 = vrot.slane %v5056, 1
        %v6962 = vsel %vm3286, %v6953, %v6961
        %v6963 = vrot.slane %v5057, 1
        %v6964 = vsel %vm3286, %v6955, %v6963
        %v6965 = vrot.slane %v5058, 1
        %v6966 = vsel %vm3286, %v6957, %v6965
        %v6967 = vrot.slane %v5059, 1
        %v6968 = vsel %vm3286, %v6959, %v6967
        %v7073 = vunpack.c.l.b16 %v6811
        %v7074 = vunpack.c.h.b16 %v6811
        %v7075 = vunpack.c.l.b16 %v6812
        %v7076 = vunpack.c.h.b16 %v6812
        %v7077 = vunpack.c.l.b16 %v6813
        %v7078 = vunpack.c.h.b16 %v6813
        %v7079 = vunpack.c.l.b16 %v6814
        %v7080 = vunpack.c.h.b16 %v6814
        %v7081 = vunpack.c.l.b16 %v6815
        %v7082 = vunpack.c.h.b16 %v6815
        %v7083 = vunpack.c.l.b16 %v6816
        %v7084 = vunpack.c.h.b16 %v6816
        %v7085 = vunpack.c.l.b16 %v6817
        %v7086 = vunpack.c.h.b16 %v6817
        %v7087 = vunpack.c.l.b16 %v6818
        %v7088 = vunpack.c.h.b16 %v6818
        %v7089 = vunpack.c.l.b16 %v6819
        %v7090 = vunpack.c.h.b16 %v6819
        %v7091 = vunpack.c.l.b16 %v6820
        %v7092 = vunpack.c.h.b16 %v6820
        %v7093 = vunpack.c.l.b16 %v6821
        %v7094 = vunpack.c.h.b16 %v6821
        %v7095 = vunpack.c.l.b16 %v6822
        %v7096 = vunpack.c.h.b16 %v6822
        %v7097 = vunpack.c.l.b16 %v6823
        %v7098 = vunpack.c.h.b16 %v6823
        %v7099 = vunpack.c.l.b16 %v6824
        %v7100 = vunpack.c.h.b16 %v6824
        %v7101 = vunpack.c.l.b16 %v6825
        %v7102 = vunpack.c.h.b16 %v6825
        %v7103 = vunpack.c.l.b16 %v6826
        %v7104 = vunpack.c.h.b16 %v6826
        %v7105 = vunpack.c.l.b16 %v6827
        %v7106 = vunpack.c.h.b16 %v6827
        %v7107 = vunpack.c.l.b16 %v6828
        %v7108 = vunpack.c.h.b16 %v6828
        %v7109 = vunpack.c.l.b16 %v6829
        %v7110 = vunpack.c.h.b16 %v6829
        %v7111 = vunpack.c.l.b16 %v6830
        %v7112 = vunpack.c.h.b16 %v6830
        %v7113 = vunpack.c.l.b16 %v6831
        %v7114 = vunpack.c.h.b16 %v6831
        %v7115 = vunpack.c.l.b16 %v6832
        %v7116 = vunpack.c.h.b16 %v6832
        %v7117 = vunpack.c.l.b16 %v6833
        %v7118 = vunpack.c.h.b16 %v6833
        %v7119 = vunpack.c.l.b16 %v6834
        %v7120 = vunpack.c.h.b16 %v6834
        %v7121 = vunpack.c.l.b16 %v6835
        %v7122 = vunpack.c.h.b16 %v6835
        %v7123 = vunpack.c.l.b16 %v6836
        %v7124 = vunpack.c.h.b16 %v6836
        %v7125 = vunpack.c.l.b16 %v6837
        %v7126 = vunpack.c.h.b16 %v6837
        %v7127 = vunpack.c.l.b16 %v6838
        %v7128 = vunpack.c.h.b16 %v6838
        %v7129 = vunpack.c.l.b16 %v6839
        %v7130 = vunpack.c.h.b16 %v6839
        %v7131 = vunpack.c.l.b16 %v6840
        %v7132 = vunpack.c.h.b16 %v6840
        %v7133 = vunpack.c.l.b16 %v6841
        %v7134 = vunpack.c.h.b16 %v6841
        %v7135 = vunpack.c.l.b16 %v6842
        %v7136 = vunpack.c.h.b16 %v6842
        %v7137 = vunpack.c.l.b16 %v6843
        %v7138 = vunpack.c.h.b16 %v6843
        %v7139 = vunpack.c.l.b16 %v6844
        %v7140 = vunpack.c.h.b16 %v6844
        %v7141 = vunpack.c.l.b16 %v6845
        %v7142 = vunpack.c.h.b16 %v6845
        %v7143 = vunpack.c.l.b16 %v6846
        %v7144 = vunpack.c.h.b16 %v6846
        %v7145 = vunpack.c.l.b16 %v6847
        %v7146 = vunpack.c.h.b16 %v6847
        %v7147 = vunpack.c.l.b16 %v6848
        %v7148 = vunpack.c.h.b16 %v6848
        %v7149 = vunpack.c.l.b16 %v6849
        %v7150 = vunpack.c.h.b16 %v6849
        %v7151 = vunpack.c.l.b16 %v6850
        %v7152 = vunpack.c.h.b16 %v6850
        %v7153 = vunpack.c.l.b16 %v6851
        %v7154 = vunpack.c.h.b16 %v6851
        %v7155 = vunpack.c.l.b16 %v6852
        %v7156 = vunpack.c.h.b16 %v6852
        %v7157 = vunpack.c.l.b16 %v6853
        %v7158 = vunpack.c.h.b16 %v6853
        %v7159 = vunpack.c.l.b16 %v6854
        %v7160 = vunpack.c.h.b16 %v6854
        %v7161 = vunpack.c.l.b16 %v6855
        %v7162 = vunpack.c.h.b16 %v6855
        %v7163 = vunpack.c.l.b16 %v6856
        %v7164 = vunpack.c.h.b16 %v6856
        %v7165 = vunpack.c.l.b16 %v6857
        %v7166 = vunpack.c.h.b16 %v6857
        %v7167 = vunpack.c.l.b16 %v6858
        %v7168 = vunpack.c.h.b16 %v6858
        %v7169 = vunpack.c.l.b16 %v6859
        %v7170 = vunpack.c.h.b16 %v6859
        %v7171 = vunpack.c.l.b16 %v6860
        %v7172 = vunpack.c.h.b16 %v6860
        %v7173 = vunpack.c.l.b16 %v6861
        %v7174 = vunpack.c.h.b16 %v6861
        %v7175 = vunpack.c.l.b16 %v6862
        %v7176 = vunpack.c.h.b16 %v6862
        %v7177 = vunpack.c.l.b16 %v6863
        %v7178 = vunpack.c.h.b16 %v6863
        %v7179 = vunpack.c.l.b16 %v6864
        %v7180 = vunpack.c.h.b16 %v6864
        %v7181 = vunpack.c.l.b16 %v6865
        %v7182 = vunpack.c.h.b16 %v6865
        %v7183 = vunpack.c.l.b16 %v6866
        %v7184 = vunpack.c.h.b16 %v6866
        %v7185 = vunpack.c.l.b16 %v6867
        %v7186 = vunpack.c.h.b16 %v6867
        %v7187 = vunpack.c.l.b16 %v6868
        %v7188 = vunpack.c.h.b16 %v6868
        %v7189 = vunpack.c.l.b16 %v6869
        %v7190 = vunpack.c.h.b16 %v6869
        %v7191 = vunpack.c.l.b16 %v6870
        %v7192 = vunpack.c.h.b16 %v6870
        %v7193 = vunpack.c.l.b16 %v6871
        %v7194 = vunpack.c.h.b16 %v6871
        %v7195 = vunpack.c.l.b16 %v6872
        %v7196 = vunpack.c.h.b16 %v6872
        %v7197 = vunpack.c.l.b16 %v6873
        %v7198 = vunpack.c.h.b16 %v6873
        %v7199 = vunpack.c.l.b16 %v6874
        %v7200 = vunpack.c.h.b16 %v6874
        %v7201 = vpack.c.b16 %v7075, %v7073
        %v7202 = vpack.c.b16 %v7076, %v7074
        %v7203 = vpack.c.b16 %v7079, %v7077
        %v7204 = vpack.c.b16 %v7080, %v7078
        %v7205 = vpack.c.b16 %v7083, %v7081
        %v7206 = vpack.c.b16 %v7084, %v7082
        %v7207 = vpack.c.b16 %v7087, %v7085
        %v7208 = vpack.c.b16 %v7088, %v7086
        %v7209 = vpack.c.b16 %v7091, %v7089
        %v7210 = vpack.c.b16 %v7092, %v7090
        %v7211 = vpack.c.b16 %v7095, %v7093
        %v7212 = vpack.c.b16 %v7096, %v7094
        %v7213 = vpack.c.b16 %v7099, %v7097
        %v7214 = vpack.c.b16 %v7100, %v7098
        %v7215 = vpack.c.b16 %v7103, %v7101
        %v7216 = vpack.c.b16 %v7104, %v7102
        %v7217 = vpack.c.b16 %v7107, %v7105
        %v7218 = vpack.c.b16 %v7108, %v7106
        %v7219 = vpack.c.b16 %v7111, %v7109
        %v7220 = vpack.c.b16 %v7112, %v7110
        %v7221 = vpack.c.b16 %v7115, %v7113
        %v7222 = vpack.c.b16 %v7116, %v7114
        %v7223 = vpack.c.b16 %v7119, %v7117
        %v7224 = vpack.c.b16 %v7120, %v7118
        %v7225 = vpack.c.b16 %v7123, %v7121
        %v7226 = vpack.c.b16 %v7124, %v7122
        %v7227 = vpack.c.b16 %v7127, %v7125
        %v7228 = vpack.c.b16 %v7128, %v7126
        %v7229 = vpack.c.b16 %v7131, %v7129
        %v7230 = vpack.c.b16 %v7132, %v7130
        %v7231 = vpack.c.b16 %v7135, %v7133
        %v7232 = vpack.c.b16 %v7136, %v7134
        %v7233 = vpack.c.b16 %v7139, %v7137
        %v7234 = vpack.c.b16 %v7140, %v7138
        %v7235 = vpack.c.b16 %v7143, %v7141
        %v7236 = vpack.c.b16 %v7144, %v7142
        %v7237 = vpack.c.b16 %v7147, %v7145
        %v7238 = vpack.c.b16 %v7148, %v7146
        %v7239 = vpack.c.b16 %v7151, %v7149
        %v7240 = vpack.c.b16 %v7152, %v7150
        %v7241 = vpack.c.b16 %v7155, %v7153
        %v7242 = vpack.c.b16 %v7156, %v7154
        %v7243 = vpack.c.b16 %v7159, %v7157
        %v7244 = vpack.c.b16 %v7160, %v7158
        %v7245 = vpack.c.b16 %v7163, %v7161
        %v7246 = vpack.c.b16 %v7164, %v7162
        %v7247 = vpack.c.b16 %v7167, %v7165
        %v7248 = vpack.c.b16 %v7168, %v7166
        %v7249 = vpack.c.b16 %v7171, %v7169
        %v7250 = vpack.c.b16 %v7172, %v7170
        %v7251 = vpack.c.b16 %v7175, %v7173
        %v7252 = vpack.c.b16 %v7176, %v7174
        %v7253 = vpack.c.b16 %v7179, %v7177
        %v7254 = vpack.c.b16 %v7180, %v7178
        %v7255 = vpack.c.b16 %v7183, %v7181
        %v7256 = vpack.c.b16 %v7184, %v7182
        %v7257 = vpack.c.b16 %v7187, %v7185
        %v7258 = vpack.c.b16 %v7188, %v7186
        %v7259 = vpack.c.b16 %v7191, %v7189
        %v7260 = vpack.c.b16 %v7192, %v7190
        %v7261 = vpack.c.b16 %v7195, %v7193
        %v7262 = vpack.c.b16 %v7196, %v7194
        %v7263 = vpack.c.b16 %v7199, %v7197
        %v7264 = vpack.c.b16 %v7200, %v7198
        %7329 = vmatprep.subr.bf16.mxu0 %v7202
        %7330 = vmatpush1.bf16.msra.mxu0 %v7201
        %7331 = vmatprep.subr.bf16.mxu0 %v7204
        %7332 = vmatpush1.bf16.msra.mxu0 %v7203
        %7333 = vmatprep.subr.bf16.mxu0 %v7206
        %7334 = vmatpush1.bf16.msra.mxu0 %v7205
        %7335 = vmatprep.subr.bf16.mxu0 %v7208
        %7336 = vmatpush1.bf16.msra.mxu0 %v7207
        %7337 = vmatprep.subr.bf16.mxu0 %v7210
        %7338 = vmatpush1.bf16.msra.mxu0 %v7209
        %7339 = vmatprep.subr.bf16.mxu0 %v7212
        %7340 = vmatpush1.bf16.msra.mxu0 %v7211
        %7341 = vmatprep.subr.bf16.mxu0 %v7214
        %7342 = vmatpush1.bf16.msra.mxu0 %v7213
        %7343 = vmatprep.subr.bf16.mxu0 %v7216
        %7344 = vmatpush1.bf16.msra.mxu0 %v7215
        %7345 = vmatprep.subr.bf16.mxu0 %v7218
        %7346 = vmatpush1.bf16.msra.mxu0 %v7217
        %7347 = vmatprep.subr.bf16.mxu0 %v7220
        %7348 = vmatpush1.bf16.msra.mxu0 %v7219
        %7349 = vmatprep.subr.bf16.mxu0 %v7222
        %7350 = vmatpush1.bf16.msra.mxu0 %v7221
        %7351 = vmatprep.subr.bf16.mxu0 %v7224
        %7352 = vmatpush1.bf16.msra.mxu0 %v7223
        %7353 = vmatprep.subr.bf16.mxu0 %v7226
        %7354 = vmatpush1.bf16.msra.mxu0 %v7225
        %7355 = vmatprep.subr.bf16.mxu0 %v7228
        %7356 = vmatpush1.bf16.msra.mxu0 %v7227
        %7357 = vmatprep.subr.bf16.mxu0 %v7230
        %7358 = vmatpush1.bf16.msra.mxu0 %v7229
        %7359 = vmatprep.subr.bf16.mxu0 %v7232
        %7360 = vmatpush1.bf16.msra.mxu0 %v7231
        %7361 = vmatprep.mubr.bf16.mxu0 %v6890
        %7362 = vmatmul.mubr.bf16.gmra.mrb[0].mxu0 %v6887
        %v7363 = vpop.f32.mrb[0].mxu0
        %v7364 = vadd.f32 0.0, %v7363
        %v7365 = vpop.f32.mrb[0].mxu0
        %v7366 = vadd.f32 0.0, %v7365
        %v7367 = vpop.f32.mrb[0].mxu0
        %v7368 = vadd.f32 0.0, %v7367
        %v7369 = vpop.f32.mrb[0].mxu0
        %v7370 = vadd.f32 0.0, %v7369
        %7371 = vmatprep.mubr.bf16.mxu0 %v6900
        %7372 = vmatmul.mubr.bf16.gmra.mrb[0].mxu0 %v6898
        %v7373 = vpop.f32.mrb[0].mxu0
        %v7374 = vadd.f32 0.0, %v7373
        %v7375 = vpop.f32.mrb[0].mxu0
        %v7376 = vadd.f32 0.0, %v7375
        %v7377 = vpop.f32.mrb[0].mxu0
        %v7378 = vadd.f32 0.0, %v7377
        %v7379 = vpop.f32.mrb[0].mxu0
        %v7380 = vadd.f32 0.0, %v7379
        %7381 = vmatprep.mubr.bf16.mxu0 %v6908
        %7382 = vmatmul.mubr.bf16.gmra.mrb[0].mxu0 %v6906
        %v7383 = vpop.f32.mrb[0].mxu0
        %v7384 = vadd.f32 0.0, %v7383
        %v7385 = vpop.f32.mrb[0].mxu0
        %v7386 = vadd.f32 0.0, %v7385
        %v7387 = vpop.f32.mrb[0].mxu0
        %v7388 = vadd.f32 0.0, %v7387
        %v7389 = vpop.f32.mrb[0].mxu0
        %v7390 = vadd.f32 0.0, %v7389
        %7391 = vmatprep.mubr.bf16.mxu0 %v6916
        %7392 = vmatmul.mubr.bf16.gmra.mrb[0].mxu0 %v6914
        %v7393 = vpop.f32.mrb[0].mxu0
        %v7394 = vadd.f32 0.0, %v7393
        %v7395 = vpop.f32.mrb[0].mxu0
        %v7396 = vadd.f32 0.0, %v7395
        %v7397 = vpop.f32.mrb[0].mxu0
        %v7398 = vadd.f32 0.0, %v7397
        %v7399 = vpop.f32.mrb[0].mxu0
        %v7400 = vadd.f32 0.0, %v7399
        %7401 = vmatprep.mubr.bf16.mxu0 %v6924
        %7402 = vmatmul.mubr.bf16.gmra.mrb[0].mxu0 %v6922
        %v7403 = vpop.f32.mrb[0].mxu0
        %v7404 = vadd.f32 0.0, %v7403
        %v7405 = vpop.f32.mrb[0].mxu0
        %v7406 = vadd.f32 0.0, %v7405
        %v7407 = vpop.f32.mrb[0].mxu0
        %v7408 = vadd.f32 0.0, %v7407
        %v7409 = vpop.f32.mrb[0].mxu0
        %v7410 = vadd.f32 0.0, %v7409
        %7411 = vmatprep.mubr.bf16.mxu0 %v6932
        %7412 = vmatmul.mubr.bf16.gmra.mrb[0].mxu0 %v6930
        %v7413 = vpop.f32.mrb[0].mxu0
        %v7414 = vadd.f32 0.0, %v7413
        %v7415 = vpop.f32.mrb[0].mxu0
        %v7416 = vadd.f32 0.0, %v7415
        %v7417 = vpop.f32.mrb[0].mxu0
        %v7418 = vadd.f32 0.0, %v7417
        %v7419 = vpop.f32.mrb[0].mxu0
        %v7420 = vadd.f32 0.0, %v7419
        %7421 = vmatprep.mubr.bf16.mxu0 %v6940
        %7422 = vmatmul.mubr.bf16.gmra.mrb[0].mxu0 %v6938
        %v7423 = vpop.f32.mrb[0].mxu0
        %v7424 = vadd.f32 0.0, %v7423
        %v7425 = vpop.f32.mrb[0].mxu0
        %v7426 = vadd.f32 0.0, %v7425
        %v7427 = vpop.f32.mrb[0].mxu0
        %v7428 = vadd.f32 0.0, %v7427
        %v7429 = vpop.f32.mrb[0].mxu0
        %v7430 = vadd.f32 0.0, %v7429
        %7431 = vmatprep.mubr.bf16.mxu0 %v6948
        %7432 = vmatmul.mubr.bf16.gmra.mrb[0].mxu0 %v6946
        %v7433 = vpop.f32.mrb[0].mxu0
        %v7434 = vadd.f32 0.0, %v7433
        %v7435 = vpop.f32.mrb[0].mxu0
        %v7436 = vadd.f32 0.0, %v7435
        %v7437 = vpop.f32.mrb[0].mxu0
        %v7438 = vadd.f32 0.0, %v7437
        %v7439 = vpop.f32.mrb[0].mxu0
        %v7440 = vadd.f32 0.0, %v7439
        %7441 = vmatprep.mubr.bf16.mxu0 %v6956
        %7442 = vmatmul.mubr.bf16.gmra.mrb[0].mxu0 %v6954
        %v7443 = vpop.f32.mrb[0].mxu0
        %v7444 = vadd.f32 0.0, %v7443
        %v7445 = vpop.f32.mrb[0].mxu0
        %v7446 = vadd.f32 0.0, %v7445
        %v7447 = vpop.f32.mrb[0].mxu0
        %v7448 = vadd.f32 0.0, %v7447
        %v7449 = vpop.f32.mrb[0].mxu0
        %v7450 = vadd.f32 0.0, %v7449
        %7451 = vmatprep.mubr.bf16.mxu0 %v6964
        %7452 = vmatmul.mubr.bf16.gmra.mrb[0].mxu0 %v6962
        %v7453 = vpop.f32.mrb[0].mxu0
        %v7454 = vadd.f32 0.0, %v7453
        %v7455 = vpop.f32.mrb[0].mxu0
        %v7456 = vadd.f32 0.0, %v7455
        %v7457 = vpop.f32.mrb[0].mxu0
        %v7458 = vadd.f32 0.0, %v7457
        %v7459 = vpop.f32.mrb[0].mxu0
        %v7460 = vadd.f32 0.0, %v7459
        %7461 = vdwg.mxu0
        %7462 = vmatprep.subr.bf16.mxu0 %v7234
        %7463 = vmatpush1.bf16.msra.mxu0 %v7233
        %7464 = vmatprep.subr.bf16.mxu0 %v7236
        %7465 = vmatpush1.bf16.msra.mxu0 %v7235
        %7466 = vmatprep.subr.bf16.mxu0 %v7238
        %7467 = vmatpush1.bf16.msra.mxu0 %v7237
        %7468 = vmatprep.subr.bf16.mxu0 %v7240
        %7469 = vmatpush1.bf16.msra.mxu0 %v7239
        %7470 = vmatprep.subr.bf16.mxu0 %v7242
        %7471 = vmatpush1.bf16.msra.mxu0 %v7241
        %7472 = vmatprep.subr.bf16.mxu0 %v7244
        %7473 = vmatpush1.bf16.msra.mxu0 %v7243
        %7474 = vmatprep.subr.bf16.mxu0 %v7246
        %7475 = vmatpush1.bf16.msra.mxu0 %v7245
        %7476 = vmatprep.subr.bf16.mxu0 %v7248
        %7477 = vmatpush1.bf16.msra.mxu0 %v7247
        %7478 = vmatprep.subr.bf16.mxu0 %v7250
        %7479 = vmatpush1.bf16.msra.mxu0 %v7249
        %7480 = vmatprep.subr.bf16.mxu0 %v7252
        %7481 = vmatpush1.bf16.msra.mxu0 %v7251
        %7482 = vmatprep.subr.bf16.mxu0 %v7254
        %7483 = vmatpush1.bf16.msra.mxu0 %v7253
        %7484 = vmatprep.subr.bf16.mxu0 %v7256
        %7485 = vmatpush1.bf16.msra.mxu0 %v7255
        %7486 = vmatprep.subr.bf16.mxu0 %v7258
        %7487 = vmatpush1.bf16.msra.mxu0 %v7257
        %7488 = vmatprep.subr.bf16.mxu0 %v7260
        %7489 = vmatpush1.bf16.msra.mxu0 %v7259
        %7490 = vmatprep.subr.bf16.mxu0 %v7262
        %7491 = vmatpush1.bf16.msra.mxu0 %v7261
        %7492 = vmatprep.subr.bf16.mxu0 %v7264
        %7493 = vmatpush1.bf16.msra.mxu0 %v7263
        %7494 = vmatprep.mubr.bf16.mxu0 %v6896
        %7495 = vmatmul.mubr.bf16.gmra.mrb[0].mxu0 %v6893
        %v7496 = vpop.f32.mrb[0].mxu0
        %v7497 = vadd.f32 %v7364, %v7496
        %v7498 = vpop.f32.mrb[0].mxu0
        %v7499 = vadd.f32 %v7366, %v7498
        %v7500 = vpop.f32.mrb[0].mxu0
        %v7501 = vadd.f32 %v7368, %v7500
        %v7502 = vpop.f32.mrb[0].mxu0
        %v7503 = vadd.f32 %v7370, %v7502
        %7504 = vmatprep.mubr.bf16.mxu0 %v6904
        %7505 = vmatmul.mubr.bf16.gmra.mrb[0].mxu0 %v6902
        %v7506 = vpop.f32.mrb[0].mxu0
        %v7507 = vadd.f32 %v7374, %v7506
        %v7508 = vpop.f32.mrb[0].mxu0
        %v7509 = vadd.f32 %v7376, %v7508
        %v7510 = vpop.f32.mrb[0].mxu0
        %v7511 = vadd.f32 %v7378, %v7510
        %v7512 = vpop.f32.mrb[0].mxu0
        %v7513 = vadd.f32 %v7380, %v7512
        %7514 = vmatprep.mubr.bf16.mxu0 %v6912
        %7515 = vmatmul.mubr.bf16.gmra.mrb[0].mxu0 %v6910
        %v7516 = vpop.f32.mrb[0].mxu0
        %v7517 = vadd.f32 %v7384, %v7516
        %v7518 = vpop.f32.mrb[0].mxu0
        %v7519 = vadd.f32 %v7386, %v7518
        %v7520 = vpop.f32.mrb[0].mxu0
        %v7521 = vadd.f32 %v7388, %v7520
        %v7522 = vpop.f32.mrb[0].mxu0
        %v7523 = vadd.f32 %v7390, %v7522
        %7524 = vmatprep.mubr.bf16.mxu0 %v6920
        %7525 = vmatmul.mubr.bf16.gmra.mrb[0].mxu0 %v6918
        %v7526 = vpop.f32.mrb[0].mxu0
        %v7527 = vadd.f32 %v7394, %v7526
        %v7528 = vpop.f32.mrb[0].mxu0
        %v7529 = vadd.f32 %v7396, %v7528
        %v7530 = vpop.f32.mrb[0].mxu0
        %v7531 = vadd.f32 %v7398, %v7530
        %v7532 = vpop.f32.mrb[0].mxu0
        %v7533 = vadd.f32 %v7400, %v7532
        %7534 = vmatprep.mubr.bf16.mxu0 %v6928
        %7535 = vmatmul.mubr.bf16.gmra.mrb[0].mxu0 %v6926
        %v7536 = vpop.f32.mrb[0].mxu0
        %v7537 = vadd.f32 %v7404, %v7536
        %v7538 = vpop.f32.mrb[0].mxu0
        %v7539 = vadd.f32 %v7406, %v7538
        %v7540 = vpop.f32.mrb[0].mxu0
        %v7541 = vadd.f32 %v7408, %v7540
        %v7542 = vpop.f32.mrb[0].mxu0
        %v7543 = vadd.f32 %v7410, %v7542
        %7544 = vmatprep.mubr.bf16.mxu0 %v6936
        %7545 = vmatmul.mubr.bf16.gmra.mrb[0].mxu0 %v6934
        %v7546 = vpop.f32.mrb[0].mxu0
        %v7547 = vadd.f32 %v7414, %v7546
        %v7548 = vpop.f32.mrb[0].mxu0
        %v7549 = vadd.f32 %v7416, %v7548
        %v7550 = vpop.f32.mrb[0].mxu0
        %v7551 = vadd.f32 %v7418, %v7550
        %v7552 = vpop.f32.mrb[0].mxu0
        %v7553 = vadd.f32 %v7420, %v7552
        %7554 = vmatprep.mubr.bf16.mxu0 %v6944
        %7555 = vmatmul.mubr.bf16.gmra.mrb[0].mxu0 %v6942
        %v7556 = vpop.f32.mrb[0].mxu0
        %v7557 = vadd.f32 %v7424, %v7556
        %v7558 = vpop.f32.mrb[0].mxu0
        %v7559 = vadd.f32 %v7426, %v7558
        %v7560 = vpop.f32.mrb[0].mxu0
        %v7561 = vadd.f32 %v7428, %v7560
        %v7562 = vpop.f32.mrb[0].mxu0
        %v7563 = vadd.f32 %v7430, %v7562
        %7564 = vmatprep.mubr.bf16.mxu0 %v6952
        %7565 = vmatmul.mubr.bf16.gmra.mrb[0].mxu0 %v6950
        %v7566 = vpop.f32.mrb[0].mxu0
        %v7567 = vadd.f32 %v7434, %v7566
        %v7568 = vpop.f32.mrb[0].mxu0
        %v7569 = vadd.f32 %v7436, %v7568
        %v7570 = vpop.f32.mrb[0].mxu0
        %v7571 = vadd.f32 %v7438, %v7570
        %v7572 = vpop.f32.mrb[0].mxu0
        %v7573 = vadd.f32 %v7440, %v7572
        %7574 = vmatprep.mubr.bf16.mxu0 %v6960
        %7575 = vmatmul.mubr.bf16.gmra.mrb[0].mxu0 %v6958
        %v7576 = vpop.f32.mrb[0].mxu0
        %v7577 = vadd.f32 %v7444, %v7576
        %v7578 = vpop.f32.mrb[0].mxu0
        %v7579 = vadd.f32 %v7446, %v7578
        %v7580 = vpop.f32.mrb[0].mxu0
        %v7581 = vadd.f32 %v7448, %v7580
        %v7582 = vpop.f32.mrb[0].mxu0
        %v7583 = vadd.f32 %v7450, %v7582
        %7584 = vmatprep.mubr.bf16.mxu0 %v6968
        %7585 = vmatmul.mubr.bf16.gmra.mrb[0].mxu0 %v6966
        %v7586 = vpop.f32.mrb[0].mxu0
        %v7587 = vadd.f32 %v7454, %v7586
        %v7588 = vpop.f32.mrb[0].mxu0
        %v7589 = vadd.f32 %v7456, %v7588
        %v7590 = vpop.f32.mrb[0].mxu0
        %v7591 = vadd.f32 %v7458, %v7590
        %v7592 = vpop.f32.mrb[0].mxu0
        %v7593 = vadd.f32 %v7460, %v7592
        %7594 = vdwg.mxu0
        %v7595 = vadd.f32 %v6710, %v7497
        %v7596 = vadd.f32 %v6712, %v7499
        %v7597 = vadd.f32 %v6714, %v7501
        %v7598 = vadd.f32 %v6716, %v7503
        %v7599 = vadd.f32 %v6720, %v7507
        %v7600 = vadd.f32 %v6722, %v7509
        %v7601 = vadd.f32 %v6724, %v7511
        %v7602 = vadd.f32 %v6726, %v7513
        %v7603 = vadd.f32 %v6730, %v7517
        %v7604 = vadd.f32 %v6732, %v7519
        %v7605 = vadd.f32 %v6734, %v7521
        %v7606 = vadd.f32 %v6736, %v7523
        %v7607 = vadd.f32 %v6740, %v7527
        %v7608 = vadd.f32 %v6742, %v7529
        %v7609 = vadd.f32 %v6744, %v7531
        %v7610 = vadd.f32 %v6746, %v7533
        %v7611 = vadd.f32 %v6750, %v7537
        %v7612 = vadd.f32 %v6752, %v7539
        %v7613 = vadd.f32 %v6754, %v7541
        %v7614 = vadd.f32 %v6756, %v7543
        %v7615 = vadd.f32 %v6760, %v7547
        %v7616 = vadd.f32 %v6762, %v7549
        %v7617 = vadd.f32 %v6764, %v7551
        %v7618 = vadd.f32 %v6766, %v7553
        %v7619 = vadd.f32 %v6770, %v7557
        %v7620 = vadd.f32 %v6772, %v7559
        %v7621 = vadd.f32 %v6774, %v7561
        %v7622 = vadd.f32 %v6776, %v7563
        %v7623 = vadd.f32 %v6780, %v7567
        %v7624 = vadd.f32 %v6782, %v7569
        %v7625 = vadd.f32 %v6784, %v7571
        %v7626 = vadd.f32 %v6786, %v7573
        %v7627 = vadd.f32 %v6790, %v7577
        %v7628 = vadd.f32 %v6792, %v7579
        %v7629 = vadd.f32 %v6794, %v7581
        %v7630 = vadd.f32 %v6796, %v7583
        %v7631 = vadd.f32 %v6800, %v7587
        %v7632 = vadd.f32 %v6802, %v7589
        %v7633 = vadd.f32 %v6804, %v7591
        %v7634 = vadd.f32 %v6806, %v7593
        %v7635 = vld [vmem:[%s10] sm:$0x1]
        %v7636 = vld [vmem:[%s7] sm:$0x1]
        %v7637 = vld [vmem:[%s7 + $0x1] sm:$0x1]
        %v7638 = vld [vmem:[%s9] sm:$0x1]
        %v7639 = vld [vmem:[%s9 + $0x1] sm:$0x1]
        %s7640 = sld [smem:[#allocation10]]
        %s7641 = sld [smem:[#allocation10 + $0x1]]
        %v7642 = vrot.slane %v7595, 4
        %v7643 = vadd.f32 %v7595, %v7642
        %v7644 = vrot.slane %v7643, 2
        %v7645 = vadd.f32 %v7643, %v7644
        %v7646 = vrot.slane %v7645, 1
        %v7647 = vadd.f32 %v7645, %v7646
        %v7648 = vrot.slane %v7596, 4
        %v7649 = vadd.f32 %v7596, %v7648
        %v7650 = vrot.slane %v7649, 2
        %v7651 = vadd.f32 %v7649, %v7650
        %v7652 = vrot.slane %v7651, 1
        %v7653 = vadd.f32 %v7651, %v7652
        %7655 = vrot.lane.b32.xlu0 %v7647, 96
        %v7656 = vpop.permute.xlu0 %7655
        %v7658 = vadd.f32 %v7647, %v7656
        %7659 = vrot.lane.b32.xlu0 %v7647, 64
        %v7660 = vpop.permute.xlu0 %7659
        %v7662 = vadd.f32 %v7658, %v7660
        %7663 = vrot.lane.b32.xlu0 %v7647, 32
        %v7664 = vpop.permute.xlu0 %7663
        %v7666 = vadd.f32 %v7662, %v7664
        %v7667 = vadd.f32 %v7666, %v7653
        %7669 = vrot.lane.b32.xlu0 %v7653, 96
        %v7670 = vpop.permute.xlu0 %7669
        %v7672 = vadd.f32 %v7667, %v7670
        %7673 = vrot.lane.b32.xlu0 %v7653, 64
        %v7674 = vpop.permute.xlu0 %7673
        %v7676 = vadd.f32 %v7672, %v7674
        %7677 = vrot.lane.b32.xlu0 %v7653, 32
        %v7678 = vpop.permute.xlu0 %7677
        %v7680 = vadd.f32 %v7676, %v7678
        %v7681 = vmul.f32 %v7680, 0.015625
        %v7682 = vmul.f32 %v7681, %v7636
        %vm7683 = vcmask 253952
        %v7684 = vsel %vm7683, %v7682, 0.0
        %7685 = vadd.xlane.f32.xlu0 %v7684
        %v7686 = vpop.xlane.xlu0 %7685
        %v7687 = vstv %s7640
        %v7688 = vadd.f32 %v7686, %v7687
        %v7689 = vmax.f32 %v7688, 0.0
        %v7690 = vmul.f32 %v7689, %v7638
        %v7691 = vadd.f32 %v7635, %v7690
        %v7692 = vmul.f32 %v7681, %v7637
        %v7693 = vsel %vm7683, %v7692, 0.0
        %7694 = vadd.xlane.f32.xlu0 %v7693
        %v7695 = vpop.xlane.xlu0 %7694
        %v7696 = vstv %s7641
        %v7697 = vadd.f32 %v7695, %v7696
        %v7698 = vmax.f32 %v7697, 0.0
        %v7699 = vmul.f32 %v7698, %v7639
        %v7700 = vadd.f32 %v7691, %v7699
        %v7701 = vxor.u32 %v7700, 2147483648
        %v7702 = vmul.f32 %v7701, 1.442695
        %v7703 = vpow.pop %v7702
        %v7704 = vadd.f32 %v7703, 1.0
        %v7705 = vrcp.pop %v7704
        %v7706 = vmul.f32 1.0, %v7705
        %v7708 = vlaneseq
        %v7709 = vshrl.u32 %v7708, 7
        %v7710 = vsub.s32 0, %v7709
        %v7711 = vrot.slane %v7706, %v7710
        %7712 = vrot.lane.b32.xlu0 %v7711, 32
        %v7713 = vpop.permute.xlu0 %7712
        %7715 = vrot.lane.b32.xlu0 %v7711, 64
        %v7716 = vpop.permute.xlu0 %7715
        %7718 = vrot.lane.b32.xlu0 %v7711, 96
        %v7719 = vpop.permute.xlu0 %7718
        %vm7721 = vcmask 261120
        %v7722 = vsel %vm7721, %v7706, %v7713
        %vm7723 = vcmask 523264
        %v7724 = vsel %vm7723, %v7722, %v7716
        %vm7725 = vcmask 785408
        %v7726 = vsel %vm7725, %v7724, %v7719
        %v7727 = vlaneseq
        %v7728 = vshrl.u32 %v7727, 7
        %v7729 = vsub.s32 0, %v7728
        %v7730 = vrot.slane %v7726, %v7729
        %v7731 = vmul.f32 %v7595, %v7730
        %v7732 = vmul.f32 %v7596, %v7730
        %v7733 = vld [vmem:[%s397] sm:$0xff]
        %v7734 = vld [vmem:[%s397 + $0x8] sm:$0xff]
        %v7735 = vadd.f32 %v7731, %v7733
        %v7736 = vadd.f32 %v7732, %v7734
        %7737 = vst [vmem:[%s448] sm:$0xff] %v7735
        %7738 = vst [vmem:[%s448 + $0x8] sm:$0xff] %v7736
        %vm7743 = vcmask 1045504
        %v7744 = vrot.slane %v7597, 2
        %v7745 = vrot.slane %v7599, 2
        %v7746 = vsel %vm7743, %v7744, %v7745
        %v7747 = vrot.slane %v7598, 2
        %v7748 = vrot.slane %v7600, 2
        %v7749 = vsel %vm7743, %v7747, %v7748
        %v7752 = vrot.slane %v7746, 4
        %v7753 = vadd.f32 %v7746, %v7752
        %v7754 = vrot.slane %v7753, 2
        %v7755 = vadd.f32 %v7753, %v7754
        %v7756 = vrot.slane %v7755, 1
        %v7757 = vadd.f32 %v7755, %v7756
        %v7758 = vrot.slane %v7749, 4
        %v7759 = vadd.f32 %v7749, %v7758
        %v7760 = vrot.slane %v7759, 2
        %v7761 = vadd.f32 %v7759, %v7760
        %v7762 = vrot.slane %v7761, 1
        %v7763 = vadd.f32 %v7761, %v7762
        %7765 = vrot.lane.b32.xlu0 %v7757, 96
        %v7766 = vpop.permute.xlu0 %7765
        %v7768 = vadd.f32 %v7757, %v7766
        %7769 = vrot.lane.b32.xlu0 %v7757, 64
        %v7770 = vpop.permute.xlu0 %7769
        %v7772 = vadd.f32 %v7768, %v7770
        %7773 = vrot.lane.b32.xlu0 %v7757, 32
        %v7774 = vpop.permute.xlu0 %7773
        %v7776 = vadd.f32 %v7772, %v7774
        %v7777 = vadd.f32 %v7776, %v7763
        %7779 = vrot.lane.b32.xlu0 %v7763, 96
        %v7780 = vpop.permute.xlu0 %7779
        %v7782 = vadd.f32 %v7777, %v7780
        %7783 = vrot.lane.b32.xlu0 %v7763, 64
        %v7784 = vpop.permute.xlu0 %7783
        %v7786 = vadd.f32 %v7782, %v7784
        %7787 = vrot.lane.b32.xlu0 %v7763, 32
        %v7788 = vpop.permute.xlu0 %7787
        %v7790 = vadd.f32 %v7786, %v7788
        %v7791 = vmul.f32 %v7790, 0.015625
        %v7792 = vmul.f32 %v7791, %v7636
        %v7793 = vsel %vm7683, %v7792, 0.0
        %7794 = vadd.xlane.f32.xlu0 %v7793
        %v7795 = vpop.xlane.xlu0 %7794
        %v7796 = vadd.f32 %v7795, %v7687
        %v7797 = vmax.f32 %v7796, 0.0
        %v7798 = vmul.f32 %v7797, %v7638
        %v7799 = vadd.f32 %v7635, %v7798
        %v7800 = vmul.f32 %v7791, %v7637
        %v7801 = vsel %vm7683, %v7800, 0.0
        %7802 = vadd.xlane.f32.xlu0 %v7801
        %v7803 = vpop.xlane.xlu0 %7802
        %v7804 = vadd.f32 %v7803, %v7696
        %v7805 = vmax.f32 %v7804, 0.0
        %v7806 = vmul.f32 %v7805, %v7639
        %v7807 = vadd.f32 %v7799, %v7806
        %v7808 = vxor.u32 %v7807, 2147483648
        %v7809 = vmul.f32 %v7808, 1.442695
        %v7810 = vpow.pop %v7809
        %v7811 = vadd.f32 %v7810, 1.0
        %v7812 = vrcp.pop %v7811
        %v7813 = vmul.f32 1.0, %v7812
        %v7815 = vlaneseq
        %v7816 = vshrl.u32 %v7815, 7
        %v7817 = vsub.s32 0, %v7816
        %v7818 = vrot.slane %v7813, %v7817
        %7819 = vrot.lane.b32.xlu0 %v7818, 32
        %v7820 = vpop.permute.xlu0 %7819
        %7822 = vrot.lane.b32.xlu0 %v7818, 64
        %v7823 = vpop.permute.xlu0 %7822
        %7825 = vrot.lane.b32.xlu0 %v7818, 96
        %v7826 = vpop.permute.xlu0 %7825
        %v7828 = vsel %vm7721, %v7813, %v7820
        %v7829 = vsel %vm7723, %v7828, %v7823
        %v7830 = vsel %vm7725, %v7829, %v7826
        %v7831 = vlaneseq
        %v7832 = vshrl.u32 %v7831, 7
        %v7833 = vsub.s32 0, %v7832
        %v7834 = vrot.slane %v7830, %v7833
        %v7835 = vmul.f32 %v7597, %v7834
        %v7836 = vmul.f32 %v7598, %v7834
        %v7837 = vmul.f32 %v7599, %v7834
        %v7838 = vmul.f32 %v7600, %v7834
        %s7839 = scalar_lea.vmem %s397, 16 [#allocation3]
        %v7840 = vld [vmem:[%s7839] sm:$0xff]
        %v7841 = vld [vmem:[%s7839 + $0x8] sm:$0xff]
        %v7844 = vrot.slane %v7840, 6
        %v7845 = vrot.slane %v7841, 6
        %v7848 = vadd.f32 %v7835, %v7844
        %v7849 = vadd.f32 %v7836, %v7845
        %v7850 = vadd.f32 %v7837, %v7844
        %v7851 = vadd.f32 %v7838, %v7845
        %v7856 = vrot.slane %v7848, 2
        %v7857 = vrot.slane %v7850, 2
        %v7858 = vsel %vm7743, %v7856, %v7857
        %v7859 = vrot.slane %v7849, 2
        %v7860 = vrot.slane %v7851, 2
        %v7861 = vsel %vm7743, %v7859, %v7860
        %s7864 = scalar_lea.vmem %s448, 16 [#allocation11]
        %7865 = vst [vmem:[%s7864] sm:$0xff] %v7858
        %7866 = vst [vmem:[%s7864 + $0x8] sm:$0xff] %v7861
        %vm7869 = vcmask 1043456
        %v7870 = vrot.slane %v7599, 4
        %v7871 = vrot.slane %v7601, 4
        %v7872 = vsel %vm7869, %v7870, %v7871
        %v7873 = vrot.slane %v7600, 4
        %v7874 = vrot.slane %v7602, 4
        %v7875 = vsel %vm7869, %v7873, %v7874
        %v7878 = vrot.slane %v7872, 4
        %v7879 = vadd.f32 %v7872, %v7878
        %v7880 = vrot.slane %v7879, 2
        %v7881 = vadd.f32 %v7879, %v7880
        %v7882 = vrot.slane %v7881, 1
        %v7883 = vadd.f32 %v7881, %v7882
        %v7884 = vrot.slane %v7875, 4
        %v7885 = vadd.f32 %v7875, %v7884
        %v7886 = vrot.slane %v7885, 2
        %v7887 = vadd.f32 %v7885, %v7886
        %v7888 = vrot.slane %v7887, 1
        %v7889 = vadd.f32 %v7887, %v7888
        %7891 = vrot.lane.b32.xlu0 %v7883, 96
        %v7892 = vpop.permute.xlu0 %7891
        %v7894 = vadd.f32 %v7883, %v7892
        %7895 = vrot.lane.b32.xlu0 %v7883, 64
        %v7896 = vpop.permute.xlu0 %7895
        %v7898 = vadd.f32 %v7894, %v7896
        %7899 = vrot.lane.b32.xlu0 %v7883, 32
        %v7900 = vpop.permute.xlu0 %7899
        %v7902 = vadd.f32 %v7898, %v7900
        %v7903 = vadd.f32 %v7902, %v7889
        %7905 = vrot.lane.b32.xlu0 %v7889, 96
        %v7906 = vpop.permute.xlu0 %7905
        %v7908 = vadd.f32 %v7903, %v7906
        %7909 = vrot.lane.b32.xlu0 %v7889, 64
        %v7910 = vpop.permute.xlu0 %7909
        %v7912 = vadd.f32 %v7908, %v7910
        %7913 = vrot.lane.b32.xlu0 %v7889, 32
        %v7914 = vpop.permute.xlu0 %7913
        %v7916 = vadd.f32 %v7912, %v7914
        %v7917 = vmul.f32 %v7916, 0.015625
        %v7918 = vmul.f32 %v7917, %v7636
        %v7919 = vsel %vm7683, %v7918, 0.0
        %7920 = vadd.xlane.f32.xlu0 %v7919
        %v7921 = vpop.xlane.xlu0 %7920
        %v7922 = vadd.f32 %v7921, %v7687
        %v7923 = vmax.f32 %v7922, 0.0
        %v7924 = vmul.f32 %v7923, %v7638
        %v7925 = vadd.f32 %v7635, %v7924
        %v7926 = vmul.f32 %v7917, %v7637
        %v7927 = vsel %vm7683, %v7926, 0.0
        %7928 = vadd.xlane.f32.xlu0 %v7927
        %v7929 = vpop.xlane.xlu0 %7928
        %v7930 = vadd.f32 %v7929, %v7696
        %v7931 = vmax.f32 %v7930, 0.0
        %v7932 = vmul.f32 %v7931, %v7639
        %v7933 = vadd.f32 %v7925, %v7932
        %v7934 = vxor.u32 %v7933, 2147483648
        %v7935 = vmul.f32 %v7934, 1.442695
        %v7936 = vpow.pop %v7935
        %v7937 = vadd.f32 %v7936, 1.0
        %v7938 = vrcp.pop %v7937
        %v7939 = vmul.f32 1.0, %v7938
        %v7941 = vlaneseq
        %v7942 = vshrl.u32 %v7941, 7
        %v7943 = vsub.s32 0, %v7942
        %v7944 = vrot.slane %v7939, %v7943
        %7945 = vrot.lane.b32.xlu0 %v7944, 32
        %v7946 = vpop.permute.xlu0 %7945
        %7948 = vrot.lane.b32.xlu0 %v7944, 64
        %v7949 = vpop.permute.xlu0 %7948
        %7951 = vrot.lane.b32.xlu0 %v7944, 96
        %v7952 = vpop.permute.xlu0 %7951
        %v7954 = vsel %vm7721, %v7939, %v7946
        %v7955 = vsel %vm7723, %v7954, %v7949
        %v7956 = vsel %vm7725, %v7955, %v7952
        %v7957 = vlaneseq
        %v7958 = vshrl.u32 %v7957, 7
        %v7959 = vsub.s32 0, %v7958
        %v7960 = vrot.slane %v7956, %v7959
        %v7961 = vmul.f32 %v7599, %v7960
        %v7962 = vmul.f32 %v7600, %v7960
        %v7963 = vmul.f32 %v7601, %v7960
        %v7964 = vmul.f32 %v7602, %v7960
        %s7965 = scalar_lea.vmem %s397, 32 [#allocation3]
        %v7966 = vld [vmem:[%s7965] sm:$0xff]
        %v7967 = vld [vmem:[%s7965 + $0x8] sm:$0xff]
        %v7970 = vrot.slane %v7966, 4
        %v7971 = vrot.slane %v7967, 4
        %v7974 = vadd.f32 %v7961, %v7970
        %v7975 = vadd.f32 %v7962, %v7971
        %v7976 = vadd.f32 %v7963, %v7970
        %v7977 = vadd.f32 %v7964, %v7971
        %v7982 = vrot.slane %v7974, 4
        %v7983 = vrot.slane %v7976, 4
        %v7984 = vsel %vm7869, %v7982, %v7983
        %v7985 = vrot.slane %v7975, 4
        %v7986 = vrot.slane %v7977, 4
        %v7987 = vsel %vm7869, %v7985, %v7986
        %s7990 = scalar_lea.vmem %s448, 32 [#allocation11]
        %7991 = vst [vmem:[%s7990] sm:$0xff] %v7984
        %7992 = vst [vmem:[%s7990 + $0x8] sm:$0xff] %v7987
        %vm7995 = vcmask 1041408
        %v7996 = vrot.slane %v7601, 6
        %v7997 = vrot.slane %v7603, 6
        %v7998 = vsel %vm7995, %v7996, %v7997
        %v7999 = vrot.slane %v7602, 6
        %v8000 = vrot.slane %v7604, 6
        %v8001 = vsel %vm7995, %v7999, %v8000
        %v8004 = vrot.slane %v7998, 4
        %v8005 = vadd.f32 %v7998, %v8004
        %v8006 = vrot.slane %v8005, 2
        %v8007 = vadd.f32 %v8005, %v8006
        %v8008 = vrot.slane %v8007, 1
        %v8009 = vadd.f32 %v8007, %v8008
        %v8010 = vrot.slane %v8001, 4
        %v8011 = vadd.f32 %v8001, %v8010
        %v8012 = vrot.slane %v8011, 2
        %v8013 = vadd.f32 %v8011, %v8012
        %v8014 = vrot.slane %v8013, 1
        %v8015 = vadd.f32 %v8013, %v8014
        %8017 = vrot.lane.b32.xlu0 %v8009, 96
        %v8018 = vpop.permute.xlu0 %8017
        %v8020 = vadd.f32 %v8009, %v8018
        %8021 = vrot.lane.b32.xlu0 %v8009, 64
        %v8022 = vpop.permute.xlu0 %8021
        %v8024 = vadd.f32 %v8020, %v8022
        %8025 = vrot.lane.b32.xlu0 %v8009, 32
        %v8026 = vpop.permute.xlu0 %8025
        %v8028 = vadd.f32 %v8024, %v8026
        %v8029 = vadd.f32 %v8028, %v8015
        %8031 = vrot.lane.b32.xlu0 %v8015, 96
        %v8032 = vpop.permute.xlu0 %8031
        %v8034 = vadd.f32 %v8029, %v8032
        %8035 = vrot.lane.b32.xlu0 %v8015, 64
        %v8036 = vpop.permute.xlu0 %8035
        %v8038 = vadd.f32 %v8034, %v8036
        %8039 = vrot.lane.b32.xlu0 %v8015, 32
        %v8040 = vpop.permute.xlu0 %8039
        %v8042 = vadd.f32 %v8038, %v8040
        %v8043 = vmul.f32 %v8042, 0.015625
        %v8044 = vmul.f32 %v8043, %v7636
        %v8045 = vsel %vm7683, %v8044, 0.0
        %8046 = vadd.xlane.f32.xlu0 %v8045
        %v8047 = vpop.xlane.xlu0 %8046
        %v8048 = vadd.f32 %v8047, %v7687
        %v8049 = vmax.f32 %v8048, 0.0
        %v8050 = vmul.f32 %v8049, %v7638
        %v8051 = vadd.f32 %v7635, %v8050
        %v8052 = vmul.f32 %v8043, %v7637
        %v8053 = vsel %vm7683, %v8052, 0.0
        %8054 = vadd.xlane.f32.xlu0 %v8053
        %v8055 = vpop.xlane.xlu0 %8054
        %v8056 = vadd.f32 %v8055, %v7696
        %v8057 = vmax.f32 %v8056, 0.0
        %v8058 = vmul.f32 %v8057, %v7639
        %v8059 = vadd.f32 %v8051, %v8058
        %v8060 = vxor.u32 %v8059, 2147483648
        %v8061 = vmul.f32 %v8060, 1.442695
        %v8062 = vpow.pop %v8061
        %v8063 = vadd.f32 %v8062, 1.0
        %v8064 = vrcp.pop %v8063
        %v8065 = vmul.f32 1.0, %v8064
        %v8067 = vlaneseq
        %v8068 = vshrl.u32 %v8067, 7
        %v8069 = vsub.s32 0, %v8068
        %v8070 = vrot.slane %v8065, %v8069
        %8071 = vrot.lane.b32.xlu0 %v8070, 32
        %v8072 = vpop.permute.xlu0 %8071
        %8074 = vrot.lane.b32.xlu0 %v8070, 64
        %v8075 = vpop.permute.xlu0 %8074
        %8077 = vrot.lane.b32.xlu0 %v8070, 96
        %v8078 = vpop.permute.xlu0 %8077
        %v8080 = vsel %vm7721, %v8065, %v8072
        %v8081 = vsel %vm7723, %v8080, %v8075
        %v8082 = vsel %vm7725, %v8081, %v8078
        %v8083 = vlaneseq
        %v8084 = vshrl.u32 %v8083, 7
        %v8085 = vsub.s32 0, %v8084
        %v8086 = vrot.slane %v8082, %v8085
        %v8087 = vmul.f32 %v7601, %v8086
        %v8088 = vmul.f32 %v7602, %v8086
        %v8089 = vmul.f32 %v7603, %v8086
        %v8090 = vmul.f32 %v7604, %v8086
        %s8091 = scalar_lea.vmem %s397, 48 [#allocation3]
        %v8092 = vld [vmem:[%s8091] sm:$0xff]
        %v8093 = vld [vmem:[%s8091 + $0x8] sm:$0xff]
        %v8096 = vrot.slane %v8092, 2
        %v8097 = vrot.slane %v8093, 2
        %v8100 = vadd.f32 %v8087, %v8096
        %v8101 = vadd.f32 %v8088, %v8097
        %v8102 = vadd.f32 %v8089, %v8096
        %v8103 = vadd.f32 %v8090, %v8097
        %v8108 = vrot.slane %v8100, 6
        %v8109 = vrot.slane %v8102, 6
        %v8110 = vsel %vm7995, %v8108, %v8109
        %v8111 = vrot.slane %v8101, 6
        %v8112 = vrot.slane %v8103, 6
        %v8113 = vsel %vm7995, %v8111, %v8112
        %s8116 = scalar_lea.vmem %s448, 48 [#allocation11]
        %8117 = vst [vmem:[%s8116] sm:$0xff] %v8110
        %8118 = vst [vmem:[%s8116 + $0x8] sm:$0xff] %v8113
        %v8119 = vrot.slane %v7605, 4
        %v8120 = vadd.f32 %v7605, %v8119
        %v8121 = vrot.slane %v8120, 2
        %v8122 = vadd.f32 %v8120, %v8121
        %v8123 = vrot.slane %v8122, 1
        %v8124 = vadd.f32 %v8122, %v8123
        %v8125 = vrot.slane %v7606, 4
        %v8126 = vadd.f32 %v7606, %v8125
        %v8127 = vrot.slane %v8126, 2
        %v8128 = vadd.f32 %v8126, %v8127
        %v8129 = vrot.slane %v8128, 1
        %v8130 = vadd.f32 %v8128, %v8129
        %8132 = vrot.lane.b32.xlu0 %v8124, 96
        %v8133 = vpop.permute.xlu0 %8132
        %v8135 = vadd.f32 %v8124, %v8133
        %8136 = vrot.lane.b32.xlu0 %v8124, 64
        %v8137 = vpop.permute.xlu0 %8136
        %v8139 = vadd.f32 %v8135, %v8137
        %8140 = vrot.lane.b32.xlu0 %v8124, 32
        %v8141 = vpop.permute.xlu0 %8140
        %v8143 = vadd.f32 %v8139, %v8141
        %v8144 = vadd.f32 %v8143, %v8130
        %8146 = vrot.lane.b32.xlu0 %v8130, 96
        %v8147 = vpop.permute.xlu0 %8146
        %v8149 = vadd.f32 %v8144, %v8147
        %8150 = vrot.lane.b32.xlu0 %v8130, 64
        %v8151 = vpop.permute.xlu0 %8150
        %v8153 = vadd.f32 %v8149, %v8151
        %8154 = vrot.lane.b32.xlu0 %v8130, 32
        %v8155 = vpop.permute.xlu0 %8154
        %v8157 = vadd.f32 %v8153, %v8155
        %v8158 = vmul.f32 %v8157, 0.015625
        %v8159 = vmul.f32 %v8158, %v7636
        %v8160 = vsel %vm7683, %v8159, 0.0
        %8161 = vadd.xlane.f32.xlu0 %v8160
        %v8162 = vpop.xlane.xlu0 %8161
        %v8163 = vadd.f32 %v8162, %v7687
        %v8164 = vmax.f32 %v8163, 0.0
        %v8165 = vmul.f32 %v8164, %v7638
        %v8166 = vadd.f32 %v7635, %v8165
        %v8167 = vmul.f32 %v8158, %v7637
        %v8168 = vsel %vm7683, %v8167, 0.0
        %8169 = vadd.xlane.f32.xlu0 %v8168
        %v8170 = vpop.xlane.xlu0 %8169
        %v8171 = vadd.f32 %v8170, %v7696
        %v8172 = vmax.f32 %v8171, 0.0
        %v8173 = vmul.f32 %v8172, %v7639
        %v8174 = vadd.f32 %v8166, %v8173
        %v8175 = vxor.u32 %v8174, 2147483648
        %v8176 = vmul.f32 %v8175, 1.442695
        %v8177 = vpow.pop %v8176
        %v8178 = vadd.f32 %v8177, 1.0
        %v8179 = vrcp.pop %v8178
        %v8180 = vmul.f32 1.0, %v8179
        %v8182 = vlaneseq
        %v8183 = vshrl.u32 %v8182, 7
        %v8184 = vsub.s32 0, %v8183
        %v8185 = vrot.slane %v8180, %v8184
        %8186 = vrot.lane.b32.xlu0 %v8185, 32
        %v8187 = vpop.permute.xlu0 %8186
        %8189 = vrot.lane.b32.xlu0 %v8185, 64
        %v8190 = vpop.permute.xlu0 %8189
        %8192 = vrot.lane.b32.xlu0 %v8185, 96
        %v8193 = vpop.permute.xlu0 %8192
        %v8195 = vsel %vm7721, %v8180, %v8187
        %v8196 = vsel %vm7723, %v8195, %v8190
        %v8197 = vsel %vm7725, %v8196, %v8193
        %v8198 = vlaneseq
        %v8199 = vshrl.u32 %v8198, 7
        %v8200 = vsub.s32 0, %v8199
        %v8201 = vrot.slane %v8197, %v8200
        %v8202 = vmul.f32 %v7605, %v8201
        %v8203 = vmul.f32 %v7606, %v8201
        %s8204 = scalar_lea.vmem %s397, 64 [#allocation3]
        %v8205 = vld [vmem:[%s8204] sm:$0xff]
        %v8206 = vld [vmem:[%s8204 + $0x8] sm:$0xff]
        %v8207 = vadd.f32 %v8202, %v8205
        %v8208 = vadd.f32 %v8203, %v8206
        %s8209 = scalar_lea.vmem %s448, 64 [#allocation11]
        %8210 = vst [vmem:[%s8209] sm:$0xff] %v8207
        %8211 = vst [vmem:[%s8209 + $0x8] sm:$0xff] %v8208
        %v8216 = vrot.slane %v7607, 2
        %v8217 = vrot.slane %v7609, 2
        %v8218 = vsel %vm7743, %v8216, %v8217
        %v8219 = vrot.slane %v7608, 2
        %v8220 = vrot.slane %v7610, 2
        %v8221 = vsel %vm7743, %v8219, %v8220
        %v8224 = vrot.slane %v8218, 4
        %v8225 = vadd.f32 %v8218, %v8224
        %v8226 = vrot.slane %v8225, 2
        %v8227 = vadd.f32 %v8225, %v8226
        %v8228 = vrot.slane %v8227, 1
        %v8229 = vadd.f32 %v8227, %v8228
        %v8230 = vrot.slane %v8221, 4
        %v8231 = vadd.f32 %v8221, %v8230
        %v8232 = vrot.slane %v8231, 2
        %v8233 = vadd.f32 %v8231, %v8232
        %v8234 = vrot.slane %v8233, 1
        %v8235 = vadd.f32 %v8233, %v8234
        %8237 = vrot.lane.b32.xlu0 %v8229, 96
        %v8238 = vpop.permute.xlu0 %8237
        %v8240 = vadd.f32 %v8229, %v8238
        %8241 = vrot.lane.b32.xlu0 %v8229, 64
        %v8242 = vpop.permute.xlu0 %8241
        %v8244 = vadd.f32 %v8240, %v8242
        %8245 = vrot.lane.b32.xlu0 %v8229, 32
        %v8246 = vpop.permute.xlu0 %8245
        %v8248 = vadd.f32 %v8244, %v8246
        %v8249 = vadd.f32 %v8248, %v8235
        %8251 = vrot.lane.b32.xlu0 %v8235, 96
        %v8252 = vpop.permute.xlu0 %8251
        %v8254 = vadd.f32 %v8249, %v8252
        %8255 = vrot.lane.b32.xlu0 %v8235, 64
        %v8256 = vpop.permute.xlu0 %8255
        %v8258 = vadd.f32 %v8254, %v8256
        %8259 = vrot.lane.b32.xlu0 %v8235, 32
        %v8260 = vpop.permute.xlu0 %8259
        %v8262 = vadd.f32 %v8258, %v8260
        %v8263 = vmul.f32 %v8262, 0.015625
        %v8264 = vmul.f32 %v8263, %v7636
        %v8265 = vsel %vm7683, %v8264, 0.0
        %8266 = vadd.xlane.f32.xlu0 %v8265
        %v8267 = vpop.xlane.xlu0 %8266
        %v8268 = vadd.f32 %v8267, %v7687
        %v8269 = vmax.f32 %v8268, 0.0
        %v8270 = vmul.f32 %v8269, %v7638
        %v8271 = vadd.f32 %v7635, %v8270
        %v8272 = vmul.f32 %v8263, %v7637
        %v8273 = vsel %vm7683, %v8272, 0.0
        %8274 = vadd.xlane.f32.xlu0 %v8273
        %v8275 = vpop.xlane.xlu0 %8274
        %v8276 = vadd.f32 %v8275, %v7696
        %v8277 = vmax.f32 %v8276, 0.0
        %v8278 = vmul.f32 %v8277, %v7639
        %v8279 = vadd.f32 %v8271, %v8278
        %v8280 = vxor.u32 %v8279, 2147483648
        %v8281 = vmul.f32 %v8280, 1.442695
        %v8282 = vpow.pop %v8281
        %v8283 = vadd.f32 %v8282, 1.0
        %v8284 = vrcp.pop %v8283
        %v8285 = vmul.f32 1.0, %v8284
        %v8287 = vlaneseq
        %v8288 = vshrl.u32 %v8287, 7
        %v8289 = vsub.s32 0, %v8288
        %v8290 = vrot.slane %v8285, %v8289
        %8291 = vrot.lane.b32.xlu0 %v8290, 32
        %v8292 = vpop.permute.xlu0 %8291
        %8294 = vrot.lane.b32.xlu0 %v8290, 64
        %v8295 = vpop.permute.xlu0 %8294
        %8297 = vrot.lane.b32.xlu0 %v8290, 96
        %v8298 = vpop.permute.xlu0 %8297
        %v8300 = vsel %vm7721, %v8285, %v8292
        %v8301 = vsel %vm7723, %v8300, %v8295
        %v8302 = vsel %vm7725, %v8301, %v8298
        %v8303 = vlaneseq
        %v8304 = vshrl.u32 %v8303, 7
        %v8305 = vsub.s32 0, %v8304
        %v8306 = vrot.slane %v8302, %v8305
        %v8307 = vmul.f32 %v7607, %v8306
        %v8308 = vmul.f32 %v7608, %v8306
        %v8309 = vmul.f32 %v7609, %v8306
        %v8310 = vmul.f32 %v7610, %v8306
        %s8311 = scalar_lea.vmem %s397, 80 [#allocation3]
        %v8312 = vld [vmem:[%s8311] sm:$0xff]
        %v8313 = vld [vmem:[%s8311 + $0x8] sm:$0xff]
        %v8316 = vrot.slane %v8312, 6
        %v8317 = vrot.slane %v8313, 6
        %v8320 = vadd.f32 %v8307, %v8316
        %v8321 = vadd.f32 %v8308, %v8317
        %v8322 = vadd.f32 %v8309, %v8316
        %v8323 = vadd.f32 %v8310, %v8317
        %v8328 = vrot.slane %v8320, 2
        %v8329 = vrot.slane %v8322, 2
        %v8330 = vsel %vm7743, %v8328, %v8329
        %v8331 = vrot.slane %v8321, 2
        %v8332 = vrot.slane %v8323, 2
        %v8333 = vsel %vm7743, %v8331, %v8332
        %s8336 = scalar_lea.vmem %s448, 80 [#allocation11]
        %8337 = vst [vmem:[%s8336] sm:$0xff] %v8330
        %8338 = vst [vmem:[%s8336 + $0x8] sm:$0xff] %v8333
        %v8341 = vrot.slane %v7609, 4
        %v8342 = vrot.slane %v7611, 4
        %v8343 = vsel %vm7869, %v8341, %v8342
        %v8344 = vrot.slane %v7610, 4
        %v8345 = vrot.slane %v7612, 4
        %v8346 = vsel %vm7869, %v8344, %v8345
        %v8349 = vrot.slane %v8343, 4
        %v8350 = vadd.f32 %v8343, %v8349
        %v8351 = vrot.slane %v8350, 2
        %v8352 = vadd.f32 %v8350, %v8351
        %v8353 = vrot.slane %v8352, 1
        %v8354 = vadd.f32 %v8352, %v8353
        %v8355 = vrot.slane %v8346, 4
        %v8356 = vadd.f32 %v8346, %v8355
        %v8357 = vrot.slane %v8356, 2
        %v8358 = vadd.f32 %v8356, %v8357
        %v8359 = vrot.slane %v8358, 1
        %v8360 = vadd.f32 %v8358, %v8359
        %8362 = vrot.lane.b32.xlu0 %v8354, 96
        %v8363 = vpop.permute.xlu0 %8362
        %v8365 = vadd.f32 %v8354, %v8363
        %8366 = vrot.lane.b32.xlu0 %v8354, 64
        %v8367 = vpop.permute.xlu0 %8366
        %v8369 = vadd.f32 %v8365, %v8367
        %8370 = vrot.lane.b32.xlu0 %v8354, 32
        %v8371 = vpop.permute.xlu0 %8370
        %v8373 = vadd.f32 %v8369, %v8371
        %v8374 = vadd.f32 %v8373, %v8360
        %8376 = vrot.lane.b32.xlu0 %v8360, 96
        %v8377 = vpop.permute.xlu0 %8376
        %v8379 = vadd.f32 %v8374, %v8377
        %8380 = vrot.lane.b32.xlu0 %v8360, 64
        %v8381 = vpop.permute.xlu0 %8380
        %v8383 = vadd.f32 %v8379, %v8381
        %8384 = vrot.lane.b32.xlu0 %v8360, 32
        %v8385 = vpop.permute.xlu0 %8384
        %v8387 = vadd.f32 %v8383, %v8385
        %v8388 = vmul.f32 %v8387, 0.015625
        %v8389 = vmul.f32 %v8388, %v7636
        %v8390 = vsel %vm7683, %v8389, 0.0
        %8391 = vadd.xlane.f32.xlu0 %v8390
        %v8392 = vpop.xlane.xlu0 %8391
        %v8393 = vadd.f32 %v8392, %v7687
        %v8394 = vmax.f32 %v8393, 0.0
        %v8395 = vmul.f32 %v8394, %v7638
        %v8396 = vadd.f32 %v7635, %v8395
        %v8397 = vmul.f32 %v8388, %v7637
        %v8398 = vsel %vm7683, %v8397, 0.0
        %8399 = vadd.xlane.f32.xlu0 %v8398
        %v8400 = vpop.xlane.xlu0 %8399
        %v8401 = vadd.f32 %v8400, %v7696
        %v8402 = vmax.f32 %v8401, 0.0
        %v8403 = vmul.f32 %v8402, %v7639
        %v8404 = vadd.f32 %v8396, %v8403
        %v8405 = vxor.u32 %v8404, 2147483648
        %v8406 = vmul.f32 %v8405, 1.442695
        %v8407 = vpow.pop %v8406
        %v8408 = vadd.f32 %v8407, 1.0
        %v8409 = vrcp.pop %v8408
        %v8410 = vmul.f32 1.0, %v8409
        %v8412 = vlaneseq
        %v8413 = vshrl.u32 %v8412, 7
        %v8414 = vsub.s32 0, %v8413
        %v8415 = vrot.slane %v8410, %v8414
        %8416 = vrot.lane.b32.xlu0 %v8415, 32
        %v8417 = vpop.permute.xlu0 %8416
        %8419 = vrot.lane.b32.xlu0 %v8415, 64
        %v8420 = vpop.permute.xlu0 %8419
        %8422 = vrot.lane.b32.xlu0 %v8415, 96
        %v8423 = vpop.permute.xlu0 %8422
        %v8425 = vsel %vm7721, %v8410, %v8417
        %v8426 = vsel %vm7723, %v8425, %v8420
        %v8427 = vsel %vm7725, %v8426, %v8423
        %v8428 = vlaneseq
        %v8429 = vshrl.u32 %v8428, 7
        %v8430 = vsub.s32 0, %v8429
        %v8431 = vrot.slane %v8427, %v8430
        %v8432 = vmul.f32 %v7609, %v8431
        %v8433 = vmul.f32 %v7610, %v8431
        %v8434 = vmul.f32 %v7611, %v8431
        %v8435 = vmul.f32 %v7612, %v8431
        %s8436 = scalar_lea.vmem %s397, 96 [#allocation3]
        %v8437 = vld [vmem:[%s8436] sm:$0xff]
        %v8438 = vld [vmem:[%s8436 + $0x8] sm:$0xff]
        %v8441 = vrot.slane %v8437, 4
        %v8442 = vrot.slane %v8438, 4
        %v8445 = vadd.f32 %v8432, %v8441
        %v8446 = vadd.f32 %v8433, %v8442
        %v8447 = vadd.f32 %v8434, %v8441
        %v8448 = vadd.f32 %v8435, %v8442
        %v8453 = vrot.slane %v8445, 4
        %v8454 = vrot.slane %v8447, 4
        %v8455 = vsel %vm7869, %v8453, %v8454
        %v8456 = vrot.slane %v8446, 4
        %v8457 = vrot.slane %v8448, 4
        %v8458 = vsel %vm7869, %v8456, %v8457
        %s8461 = scalar_lea.vmem %s448, 96 [#allocation11]
        %8462 = vst [vmem:[%s8461] sm:$0xff] %v8455
        %8463 = vst [vmem:[%s8461 + $0x8] sm:$0xff] %v8458
        %v8466 = vrot.slane %v7611, 6
        %v8467 = vrot.slane %v7613, 6
        %v8468 = vsel %vm7995, %v8466, %v8467
        %v8469 = vrot.slane %v7612, 6
        %v8470 = vrot.slane %v7614, 6
        %v8471 = vsel %vm7995, %v8469, %v8470
        %v8474 = vrot.slane %v8468, 4
        %v8475 = vadd.f32 %v8468, %v8474
        %v8476 = vrot.slane %v8475, 2
        %v8477 = vadd.f32 %v8475, %v8476
        %v8478 = vrot.slane %v8477, 1
        %v8479 = vadd.f32 %v8477, %v8478
        %v8480 = vrot.slane %v8471, 4
        %v8481 = vadd.f32 %v8471, %v8480
        %v8482 = vrot.slane %v8481, 2
        %v8483 = vadd.f32 %v8481, %v8482
        %v8484 = vrot.slane %v8483, 1
        %v8485 = vadd.f32 %v8483, %v8484
        %8487 = vrot.lane.b32.xlu0 %v8479, 96
        %v8488 = vpop.permute.xlu0 %8487
        %v8490 = vadd.f32 %v8479, %v8488
        %8491 = vrot.lane.b32.xlu0 %v8479, 64
        %v8492 = vpop.permute.xlu0 %8491
        %v8494 = vadd.f32 %v8490, %v8492
        %8495 = vrot.lane.b32.xlu0 %v8479, 32
        %v8496 = vpop.permute.xlu0 %8495
        %v8498 = vadd.f32 %v8494, %v8496
        %v8499 = vadd.f32 %v8498, %v8485
        %8501 = vrot.lane.b32.xlu0 %v8485, 96
        %v8502 = vpop.permute.xlu0 %8501
        %v8504 = vadd.f32 %v8499, %v8502
        %8505 = vrot.lane.b32.xlu0 %v8485, 64
        %v8506 = vpop.permute.xlu0 %8505
        %v8508 = vadd.f32 %v8504, %v8506
        %8509 = vrot.lane.b32.xlu0 %v8485, 32
        %v8510 = vpop.permute.xlu0 %8509
        %v8512 = vadd.f32 %v8508, %v8510
        %v8513 = vmul.f32 %v8512, 0.015625
        %v8514 = vmul.f32 %v8513, %v7636
        %v8515 = vsel %vm7683, %v8514, 0.0
        %8516 = vadd.xlane.f32.xlu0 %v8515
        %v8517 = vpop.xlane.xlu0 %8516
        %v8518 = vadd.f32 %v8517, %v7687
        %v8519 = vmax.f32 %v8518, 0.0
        %v8520 = vmul.f32 %v8519, %v7638
        %v8521 = vadd.f32 %v7635, %v8520
        %v8522 = vmul.f32 %v8513, %v7637
        %v8523 = vsel %vm7683, %v8522, 0.0
        %8524 = vadd.xlane.f32.xlu0 %v8523
        %v8525 = vpop.xlane.xlu0 %8524
        %v8526 = vadd.f32 %v8525, %v7696
        %v8527 = vmax.f32 %v8526, 0.0
        %v8528 = vmul.f32 %v8527, %v7639
        %v8529 = vadd.f32 %v8521, %v8528
        %v8530 = vxor.u32 %v8529, 2147483648
        %v8531 = vmul.f32 %v8530, 1.442695
        %v8532 = vpow.pop %v8531
        %v8533 = vadd.f32 %v8532, 1.0
        %v8534 = vrcp.pop %v8533
        %v8535 = vmul.f32 1.0, %v8534
        %v8537 = vlaneseq
        %v8538 = vshrl.u32 %v8537, 7
        %v8539 = vsub.s32 0, %v8538
        %v8540 = vrot.slane %v8535, %v8539
        %8541 = vrot.lane.b32.xlu0 %v8540, 32
        %v8542 = vpop.permute.xlu0 %8541
        %8544 = vrot.lane.b32.xlu0 %v8540, 64
        %v8545 = vpop.permute.xlu0 %8544
        %8547 = vrot.lane.b32.xlu0 %v8540, 96
        %v8548 = vpop.permute.xlu0 %8547
        %v8550 = vsel %vm7721, %v8535, %v8542
        %v8551 = vsel %vm7723, %v8550, %v8545
        %v8552 = vsel %vm7725, %v8551, %v8548
        %v8553 = vlaneseq
        %v8554 = vshrl.u32 %v8553, 7
        %v8555 = vsub.s32 0, %v8554
        %v8556 = vrot.slane %v8552, %v8555
        %v8557 = vmul.f32 %v7611, %v8556
        %v8558 = vmul.f32 %v7612, %v8556
        %v8559 = vmul.f32 %v7613, %v8556
        %v8560 = vmul.f32 %v7614, %v8556
        %s8561 = scalar_lea.vmem %s397, 112 [#allocation3]
        %v8562 = vld [vmem:[%s8561] sm:$0xff]
        %v8563 = vld [vmem:[%s8561 + $0x8] sm:$0xff]
        %v8566 = vrot.slane %v8562, 2
        %v8567 = vrot.slane %v8563, 2
        %v8570 = vadd.f32 %v8557, %v8566
        %v8571 = vadd.f32 %v8558, %v8567
        %v8572 = vadd.f32 %v8559, %v8566
        %v8573 = vadd.f32 %v8560, %v8567
        %v8578 = vrot.slane %v8570, 6
        %v8579 = vrot.slane %v8572, 6
        %v8580 = vsel %vm7995, %v8578, %v8579
        %v8581 = vrot.slane %v8571, 6
        %v8582 = vrot.slane %v8573, 6
        %v8583 = vsel %vm7995, %v8581, %v8582
        %s8586 = scalar_lea.vmem %s448, 112 [#allocation11]
        %8587 = vst [vmem:[%s8586] sm:$0xff] %v8580
        %8588 = vst [vmem:[%s8586 + $0x8] sm:$0xff] %v8583
        %v8589 = vrot.slane %v7615, 4
        %v8590 = vadd.f32 %v7615, %v8589
        %v8591 = vrot.slane %v8590, 2
        %v8592 = vadd.f32 %v8590, %v8591
        %v8593 = vrot.slane %v8592, 1
        %v8594 = vadd.f32 %v8592, %v8593
        %v8595 = vrot.slane %v7616, 4
        %v8596 = vadd.f32 %v7616, %v8595
        %v8597 = vrot.slane %v8596, 2
        %v8598 = vadd.f32 %v8596, %v8597
        %v8599 = vrot.slane %v8598, 1
        %v8600 = vadd.f32 %v8598, %v8599
        %8602 = vrot.lane.b32.xlu0 %v8594, 96
        %v8603 = vpop.permute.xlu0 %8602
        %v8605 = vadd.f32 %v8594, %v8603
        %8606 = vrot.lane.b32.xlu0 %v8594, 64
        %v8607 = vpop.permute.xlu0 %8606
        %v8609 = vadd.f32 %v8605, %v8607
        %8610 = vrot.lane.b32.xlu0 %v8594, 32
        %v8611 = vpop.permute.xlu0 %8610
        %v8613 = vadd.f32 %v8609, %v8611
        %v8614 = vadd.f32 %v8613, %v8600
        %8616 = vrot.lane.b32.xlu0 %v8600, 96
        %v8617 = vpop.permute.xlu0 %8616
        %v8619 = vadd.f32 %v8614, %v8617
        %8620 = vrot.lane.b32.xlu0 %v8600, 64
        %v8621 = vpop.permute.xlu0 %8620
        %v8623 = vadd.f32 %v8619, %v8621
        %8624 = vrot.lane.b32.xlu0 %v8600, 32
        %v8625 = vpop.permute.xlu0 %8624
        %v8627 = vadd.f32 %v8623, %v8625
        %v8628 = vmul.f32 %v8627, 0.015625
        %v8629 = vmul.f32 %v8628, %v7636
        %v8630 = vsel %vm7683, %v8629, 0.0
        %8631 = vadd.xlane.f32.xlu0 %v8630
        %v8632 = vpop.xlane.xlu0 %8631
        %v8633 = vadd.f32 %v8632, %v7687
        %v8634 = vmax.f32 %v8633, 0.0
        %v8635 = vmul.f32 %v8634, %v7638
        %v8636 = vadd.f32 %v7635, %v8635
        %v8637 = vmul.f32 %v8628, %v7637
        %v8638 = vsel %vm7683, %v8637, 0.0
        %8639 = vadd.xlane.f32.xlu0 %v8638
        %v8640 = vpop.xlane.xlu0 %8639
        %v8641 = vadd.f32 %v8640, %v7696
        %v8642 = vmax.f32 %v8641, 0.0
        %v8643 = vmul.f32 %v8642, %v7639
        %v8644 = vadd.f32 %v8636, %v8643
        %v8645 = vxor.u32 %v8644, 2147483648
        %v8646 = vmul.f32 %v8645, 1.442695
        %v8647 = vpow.pop %v8646
        %v8648 = vadd.f32 %v8647, 1.0
        %v8649 = vrcp.pop %v8648
        %v8650 = vmul.f32 1.0, %v8649
        %v8652 = vlaneseq
        %v8653 = vshrl.u32 %v8652, 7
        %v8654 = vsub.s32 0, %v8653
        %v8655 = vrot.slane %v8650, %v8654
        %8656 = vrot.lane.b32.xlu0 %v8655, 32
        %v8657 = vpop.permute.xlu0 %8656
        %8659 = vrot.lane.b32.xlu0 %v8655, 64
        %v8660 = vpop.permute.xlu0 %8659
        %8662 = vrot.lane.b32.xlu0 %v8655, 96
        %v8663 = vpop.permute.xlu0 %8662
        %v8665 = vsel %vm7721, %v8650, %v8657
        %v8666 = vsel %vm7723, %v8665, %v8660
        %v8667 = vsel %vm7725, %v8666, %v8663
        %v8668 = vlaneseq
        %v8669 = vshrl.u32 %v8668, 7
        %v8670 = vsub.s32 0, %v8669
        %v8671 = vrot.slane %v8667, %v8670
        %v8672 = vmul.f32 %v7615, %v8671
        %v8673 = vmul.f32 %v7616, %v8671
        %s8674 = scalar_lea.vmem %s397, 128 [#allocation3]
        %v8675 = vld [vmem:[%s8674] sm:$0xff]
        %v8676 = vld [vmem:[%s8674 + $0x8] sm:$0xff]
        %v8677 = vadd.f32 %v8672, %v8675
        %v8678 = vadd.f32 %v8673, %v8676
        %s8679 = scalar_lea.vmem %s448, 128 [#allocation11]
        %8680 = vst [vmem:[%s8679] sm:$0xff] %v8677
        %8681 = vst [vmem:[%s8679 + $0x8] sm:$0xff] %v8678
        %v8686 = vrot.slane %v7617, 2
        %v8687 = vrot.slane %v7619, 2
        %v8688 = vsel %vm7743, %v8686, %v8687
        %v8689 = vrot.slane %v7618, 2
        %v8690 = vrot.slane %v7620, 2
        %v8691 = vsel %vm7743, %v8689, %v8690
        %v8694 = vrot.slane %v8688, 4
        %v8695 = vadd.f32 %v8688, %v8694
        %v8696 = vrot.slane %v8695, 2
        %v8697 = vadd.f32 %v8695, %v8696
        %v8698 = vrot.slane %v8697, 1
        %v8699 = vadd.f32 %v8697, %v8698
        %v8700 = vrot.slane %v8691, 4
        %v8701 = vadd.f32 %v8691, %v8700
        %v8702 = vrot.slane %v8701, 2
        %v8703 = vadd.f32 %v8701, %v8702
        %v8704 = vrot.slane %v8703, 1
        %v8705 = vadd.f32 %v8703, %v8704
        %8707 = vrot.lane.b32.xlu0 %v8699, 96
        %v8708 = vpop.permute.xlu0 %8707
        %v8710 = vadd.f32 %v8699, %v8708
        %8711 = vrot.lane.b32.xlu0 %v8699, 64
        %v8712 = vpop.permute.xlu0 %8711
        %v8714 = vadd.f32 %v8710, %v8712
        %8715 = vrot.lane.b32.xlu0 %v8699, 32
        %v8716 = vpop.permute.xlu0 %8715
        %v8718 = vadd.f32 %v8714, %v8716
        %v8719 = vadd.f32 %v8718, %v8705
        %8721 = vrot.lane.b32.xlu0 %v8705, 96
        %v8722 = vpop.permute.xlu0 %8721
        %v8724 = vadd.f32 %v8719, %v8722
        %8725 = vrot.lane.b32.xlu0 %v8705, 64
        %v8726 = vpop.permute.xlu0 %8725
        %v8728 = vadd.f32 %v8724, %v8726
        %8729 = vrot.lane.b32.xlu0 %v8705, 32
        %v8730 = vpop.permute.xlu0 %8729
        %v8732 = vadd.f32 %v8728, %v8730
        %v8733 = vmul.f32 %v8732, 0.015625
        %v8734 = vmul.f32 %v8733, %v7636
        %v8735 = vsel %vm7683, %v8734, 0.0
        %8736 = vadd.xlane.f32.xlu0 %v8735
        %v8737 = vpop.xlane.xlu0 %8736
        %v8738 = vadd.f32 %v8737, %v7687
        %v8739 = vmax.f32 %v8738, 0.0
        %v8740 = vmul.f32 %v8739, %v7638
        %v8741 = vadd.f32 %v7635, %v8740
        %v8742 = vmul.f32 %v8733, %v7637
        %v8743 = vsel %vm7683, %v8742, 0.0
        %8744 = vadd.xlane.f32.xlu0 %v8743
        %v8745 = vpop.xlane.xlu0 %8744
        %v8746 = vadd.f32 %v8745, %v7696
        %v8747 = vmax.f32 %v8746, 0.0
        %v8748 = vmul.f32 %v8747, %v7639
        %v8749 = vadd.f32 %v8741, %v8748
        %v8750 = vxor.u32 %v8749, 2147483648
        %v8751 = vmul.f32 %v8750, 1.442695
        %v8752 = vpow.pop %v8751
        %v8753 = vadd.f32 %v8752, 1.0
        %v8754 = vrcp.pop %v8753
        %v8755 = vmul.f32 1.0, %v8754
        %v8757 = vlaneseq
        %v8758 = vshrl.u32 %v8757, 7
        %v8759 = vsub.s32 0, %v8758
        %v8760 = vrot.slane %v8755, %v8759
        %8761 = vrot.lane.b32.xlu0 %v8760, 32
        %v8762 = vpop.permute.xlu0 %8761
        %8764 = vrot.lane.b32.xlu0 %v8760, 64
        %v8765 = vpop.permute.xlu0 %8764
        %8767 = vrot.lane.b32.xlu0 %v8760, 96
        %v8768 = vpop.permute.xlu0 %8767
        %v8770 = vsel %vm7721, %v8755, %v8762
        %v8771 = vsel %vm7723, %v8770, %v8765
        %v8772 = vsel %vm7725, %v8771, %v8768
        %v8773 = vlaneseq
        %v8774 = vshrl.u32 %v8773, 7
        %v8775 = vsub.s32 0, %v8774
        %v8776 = vrot.slane %v8772, %v8775
        %v8777 = vmul.f32 %v7617, %v8776
        %v8778 = vmul.f32 %v7618, %v8776
        %v8779 = vmul.f32 %v7619, %v8776
        %v8780 = vmul.f32 %v7620, %v8776
        %s8781 = scalar_lea.vmem %s397, 144 [#allocation3]
        %v8782 = vld [vmem:[%s8781] sm:$0xff]
        %v8783 = vld [vmem:[%s8781 + $0x8] sm:$0xff]
        %v8786 = vrot.slane %v8782, 6
        %v8787 = vrot.slane %v8783, 6
        %v8790 = vadd.f32 %v8777, %v8786
        %v8791 = vadd.f32 %v8778, %v8787
        %v8792 = vadd.f32 %v8779, %v8786
        %v8793 = vadd.f32 %v8780, %v8787
        %v8798 = vrot.slane %v8790, 2
        %v8799 = vrot.slane %v8792, 2
        %v8800 = vsel %vm7743, %v8798, %v8799
        %v8801 = vrot.slane %v8791, 2
        %v8802 = vrot.slane %v8793, 2
        %v8803 = vsel %vm7743, %v8801, %v8802
        %s8806 = scalar_lea.vmem %s448, 144 [#allocation11]
        %8807 = vst [vmem:[%s8806] sm:$0xff] %v8800
        %8808 = vst [vmem:[%s8806 + $0x8] sm:$0xff] %v8803
        %v8811 = vrot.slane %v7619, 4
        %v8812 = vrot.slane %v7621, 4
        %v8813 = vsel %vm7869, %v8811, %v8812
        %v8814 = vrot.slane %v7620, 4
        %v8815 = vrot.slane %v7622, 4
        %v8816 = vsel %vm7869, %v8814, %v8815
        %v8819 = vrot.slane %v8813, 4
        %v8820 = vadd.f32 %v8813, %v8819
        %v8821 = vrot.slane %v8820, 2
        %v8822 = vadd.f32 %v8820, %v8821
        %v8823 = vrot.slane %v8822, 1
        %v8824 = vadd.f32 %v8822, %v8823
        %v8825 = vrot.slane %v8816, 4
        %v8826 = vadd.f32 %v8816, %v8825
        %v8827 = vrot.slane %v8826, 2
        %v8828 = vadd.f32 %v8826, %v8827
        %v8829 = vrot.slane %v8828, 1
        %v8830 = vadd.f32 %v8828, %v8829
        %8832 = vrot.lane.b32.xlu0 %v8824, 96
        %v8833 = vpop.permute.xlu0 %8832
        %v8835 = vadd.f32 %v8824, %v8833
        %8836 = vrot.lane.b32.xlu0 %v8824, 64
        %v8837 = vpop.permute.xlu0 %8836
        %v8839 = vadd.f32 %v8835, %v8837
        %8840 = vrot.lane.b32.xlu0 %v8824, 32
        %v8841 = vpop.permute.xlu0 %8840
        %v8843 = vadd.f32 %v8839, %v8841
        %v8844 = vadd.f32 %v8843, %v8830
        %8846 = vrot.lane.b32.xlu0 %v8830, 96
        %v8847 = vpop.permute.xlu0 %8846
        %v8849 = vadd.f32 %v8844, %v8847
        %8850 = vrot.lane.b32.xlu0 %v8830, 64
        %v8851 = vpop.permute.xlu0 %8850
        %v8853 = vadd.f32 %v8849, %v8851
        %8854 = vrot.lane.b32.xlu0 %v8830, 32
        %v8855 = vpop.permute.xlu0 %8854
        %v8857 = vadd.f32 %v8853, %v8855
        %v8858 = vmul.f32 %v8857, 0.015625
        %v8859 = vmul.f32 %v8858, %v7636
        %v8860 = vsel %vm7683, %v8859, 0.0
        %8861 = vadd.xlane.f32.xlu0 %v8860
        %v8862 = vpop.xlane.xlu0 %8861
        %v8863 = vadd.f32 %v8862, %v7687
        %v8864 = vmax.f32 %v8863, 0.0
        %v8865 = vmul.f32 %v8864, %v7638
        %v8866 = vadd.f32 %v7635, %v8865
        %v8867 = vmul.f32 %v8858, %v7637
        %v8868 = vsel %vm7683, %v8867, 0.0
        %8869 = vadd.xlane.f32.xlu0 %v8868
        %v8870 = vpop.xlane.xlu0 %8869
        %v8871 = vadd.f32 %v8870, %v7696
        %v8872 = vmax.f32 %v8871, 0.0
        %v8873 = vmul.f32 %v8872, %v7639
        %v8874 = vadd.f32 %v8866, %v8873
        %v8875 = vxor.u32 %v8874, 2147483648
        %v8876 = vmul.f32 %v8875, 1.442695
        %v8877 = vpow.pop %v8876
        %v8878 = vadd.f32 %v8877, 1.0
        %v8879 = vrcp.pop %v8878
        %v8880 = vmul.f32 1.0, %v8879
        %v8882 = vlaneseq
        %v8883 = vshrl.u32 %v8882, 7
        %v8884 = vsub.s32 0, %v8883
        %v8885 = vrot.slane %v8880, %v8884
        %8886 = vrot.lane.b32.xlu0 %v8885, 32
        %v8887 = vpop.permute.xlu0 %8886
        %8889 = vrot.lane.b32.xlu0 %v8885, 64
        %v8890 = vpop.permute.xlu0 %8889
        %8892 = vrot.lane.b32.xlu0 %v8885, 96
        %v8893 = vpop.permute.xlu0 %8892
        %v8895 = vsel %vm7721, %v8880, %v8887
        %v8896 = vsel %vm7723, %v8895, %v8890
        %v8897 = vsel %vm7725, %v8896, %v8893
        %v8898 = vlaneseq
        %v8899 = vshrl.u32 %v8898, 7
        %v8900 = vsub.s32 0, %v8899
        %v8901 = vrot.slane %v8897, %v8900
        %v8902 = vmul.f32 %v7619, %v8901
        %v8903 = vmul.f32 %v7620, %v8901
        %v8904 = vmul.f32 %v7621, %v8901
        %v8905 = vmul.f32 %v7622, %v8901
        %s8906 = scalar_lea.vmem %s397, 160 [#allocation3]
        %v8907 = vld [vmem:[%s8906] sm:$0xff]
        %v8908 = vld [vmem:[%s8906 + $0x8] sm:$0xff]
        %v8911 = vrot.slane %v8907, 4
        %v8912 = vrot.slane %v8908, 4
        %v8915 = vadd.f32 %v8902, %v8911
        %v8916 = vadd.f32 %v8903, %v8912
        %v8917 = vadd.f32 %v8904, %v8911
        %v8918 = vadd.f32 %v8905, %v8912
        %v8923 = vrot.slane %v8915, 4
        %v8924 = vrot.slane %v8917, 4
        %v8925 = vsel %vm7869, %v8923, %v8924
        %v8926 = vrot.slane %v8916, 4
        %v8927 = vrot.slane %v8918, 4
        %v8928 = vsel %vm7869, %v8926, %v8927
        %s8931 = scalar_lea.vmem %s448, 160 [#allocation11]
        %8932 = vst [vmem:[%s8931] sm:$0xff] %v8925
        %8933 = vst [vmem:[%s8931 + $0x8] sm:$0xff] %v8928
        %v8936 = vrot.slane %v7621, 6
        %v8937 = vrot.slane %v7623, 6
        %v8938 = vsel %vm7995, %v8936, %v8937
        %v8939 = vrot.slane %v7622, 6
        %v8940 = vrot.slane %v7624, 6
        %v8941 = vsel %vm7995, %v8939, %v8940
        %v8944 = vrot.slane %v8938, 4
        %v8945 = vadd.f32 %v8938, %v8944
        %v8946 = vrot.slane %v8945, 2
        %v8947 = vadd.f32 %v8945, %v8946
        %v8948 = vrot.slane %v8947, 1
        %v8949 = vadd.f32 %v8947, %v8948
        %v8950 = vrot.slane %v8941, 4
        %v8951 = vadd.f32 %v8941, %v8950
        %v8952 = vrot.slane %v8951, 2
        %v8953 = vadd.f32 %v8951, %v8952
        %v8954 = vrot.slane %v8953, 1
        %v8955 = vadd.f32 %v8953, %v8954
        %8957 = vrot.lane.b32.xlu0 %v8949, 96
        %v8958 = vpop.permute.xlu0 %8957
        %v8960 = vadd.f32 %v8949, %v8958
        %8961 = vrot.lane.b32.xlu0 %v8949, 64
        %v8962 = vpop.permute.xlu0 %8961
        %v8964 = vadd.f32 %v8960, %v8962
        %8965 = vrot.lane.b32.xlu0 %v8949, 32
        %v8966 = vpop.permute.xlu0 %8965
        %v8968 = vadd.f32 %v8964, %v8966
        %v8969 = vadd.f32 %v8968, %v8955
        %8971 = vrot.lane.b32.xlu0 %v8955, 96
        %v8972 = vpop.permute.xlu0 %8971
        %v8974 = vadd.f32 %v8969, %v8972
        %8975 = vrot.lane.b32.xlu0 %v8955, 64
        %v8976 = vpop.permute.xlu0 %8975
        %v8978 = vadd.f32 %v8974, %v8976
        %8979 = vrot.lane.b32.xlu0 %v8955, 32
        %v8980 = vpop.permute.xlu0 %8979
        %v8982 = vadd.f32 %v8978, %v8980
        %v8983 = vmul.f32 %v8982, 0.015625
        %v8984 = vmul.f32 %v8983, %v7636
        %v8985 = vsel %vm7683, %v8984, 0.0
        %8986 = vadd.xlane.f32.xlu0 %v8985
        %v8987 = vpop.xlane.xlu0 %8986
        %v8988 = vadd.f32 %v8987, %v7687
        %v8989 = vmax.f32 %v8988, 0.0
        %v8990 = vmul.f32 %v8989, %v7638
        %v8991 = vadd.f32 %v7635, %v8990
        %v8992 = vmul.f32 %v8983, %v7637
        %v8993 = vsel %vm7683, %v8992, 0.0
        %8994 = vadd.xlane.f32.xlu0 %v8993
        %v8995 = vpop.xlane.xlu0 %8994
        %v8996 = vadd.f32 %v8995, %v7696
        %v8997 = vmax.f32 %v8996, 0.0
        %v8998 = vmul.f32 %v8997, %v7639
        %v8999 = vadd.f32 %v8991, %v8998
        %v9000 = vxor.u32 %v8999, 2147483648
        %v9001 = vmul.f32 %v9000, 1.442695
        %v9002 = vpow.pop %v9001
        %v9003 = vadd.f32 %v9002, 1.0
        %v9004 = vrcp.pop %v9003
        %v9005 = vmul.f32 1.0, %v9004
        %v9007 = vlaneseq
        %v9008 = vshrl.u32 %v9007, 7
        %v9009 = vsub.s32 0, %v9008
        %v9010 = vrot.slane %v9005, %v9009
        %9011 = vrot.lane.b32.xlu0 %v9010, 32
        %v9012 = vpop.permute.xlu0 %9011
        %9014 = vrot.lane.b32.xlu0 %v9010, 64
        %v9015 = vpop.permute.xlu0 %9014
        %9017 = vrot.lane.b32.xlu0 %v9010, 96
        %v9018 = vpop.permute.xlu0 %9017
        %v9020 = vsel %vm7721, %v9005, %v9012
        %v9021 = vsel %vm7723, %v9020, %v9015
        %v9022 = vsel %vm7725, %v9021, %v9018
        %v9023 = vlaneseq
        %v9024 = vshrl.u32 %v9023, 7
        %v9025 = vsub.s32 0, %v9024
        %v9026 = vrot.slane %v9022, %v9025
        %v9027 = vmul.f32 %v7621, %v9026
        %v9028 = vmul.f32 %v7622, %v9026
        %v9029 = vmul.f32 %v7623, %v9026
        %v9030 = vmul.f32 %v7624, %v9026
        %s9031 = scalar_lea.vmem %s397, 176 [#allocation3]
        %v9032 = vld [vmem:[%s9031] sm:$0xff]
        %v9033 = vld [vmem:[%s9031 + $0x8] sm:$0xff]
        %v9036 = vrot.slane %v9032, 2
        %v9037 = vrot.slane %v9033, 2
        %v9040 = vadd.f32 %v9027, %v9036
        %v9041 = vadd.f32 %v9028, %v9037
        %v9042 = vadd.f32 %v9029, %v9036
        %v9043 = vadd.f32 %v9030, %v9037
        %v9048 = vrot.slane %v9040, 6
        %v9049 = vrot.slane %v9042, 6
        %v9050 = vsel %vm7995, %v9048, %v9049
        %v9051 = vrot.slane %v9041, 6
        %v9052 = vrot.slane %v9043, 6
        %v9053 = vsel %vm7995, %v9051, %v9052
        %s9056 = scalar_lea.vmem %s448, 176 [#allocation11]
        %9057 = vst [vmem:[%s9056] sm:$0xff] %v9050
        %9058 = vst [vmem:[%s9056 + $0x8] sm:$0xff] %v9053
        %v9059 = vrot.slane %v7625, 4
        %v9060 = vadd.f32 %v7625, %v9059
        %v9061 = vrot.slane %v9060, 2
        %v9062 = vadd.f32 %v9060, %v9061
        %v9063 = vrot.slane %v9062, 1
        %v9064 = vadd.f32 %v9062, %v9063
        %v9065 = vrot.slane %v7626, 4
        %v9066 = vadd.f32 %v7626, %v9065
        %v9067 = vrot.slane %v9066, 2
        %v9068 = vadd.f32 %v9066, %v9067
        %v9069 = vrot.slane %v9068, 1
        %v9070 = vadd.f32 %v9068, %v9069
        %9072 = vrot.lane.b32.xlu0 %v9064, 96
        %v9073 = vpop.permute.xlu0 %9072
        %v9075 = vadd.f32 %v9064, %v9073
        %9076 = vrot.lane.b32.xlu0 %v9064, 64
        %v9077 = vpop.permute.xlu0 %9076
        %v9079 = vadd.f32 %v9075, %v9077
        %9080 = vrot.lane.b32.xlu0 %v9064, 32
        %v9081 = vpop.permute.xlu0 %9080
        %v9083 = vadd.f32 %v9079, %v9081
        %v9084 = vadd.f32 %v9083, %v9070
        %9086 = vrot.lane.b32.xlu0 %v9070, 96
        %v9087 = vpop.permute.xlu0 %9086
        %v9089 = vadd.f32 %v9084, %v9087
        %9090 = vrot.lane.b32.xlu0 %v9070, 64
        %v9091 = vpop.permute.xlu0 %9090
        %v9093 = vadd.f32 %v9089, %v9091
        %9094 = vrot.lane.b32.xlu0 %v9070, 32
        %v9095 = vpop.permute.xlu0 %9094
        %v9097 = vadd.f32 %v9093, %v9095
        %v9098 = vmul.f32 %v9097, 0.015625
        %v9099 = vmul.f32 %v9098, %v7636
        %v9100 = vsel %vm7683, %v9099, 0.0
        %9101 = vadd.xlane.f32.xlu0 %v9100
        %v9102 = vpop.xlane.xlu0 %9101
        %v9103 = vadd.f32 %v9102, %v7687
        %v9104 = vmax.f32 %v9103, 0.0
        %v9105 = vmul.f32 %v9104, %v7638
        %v9106 = vadd.f32 %v7635, %v9105
        %v9107 = vmul.f32 %v9098, %v7637
        %v9108 = vsel %vm7683, %v9107, 0.0
        %9109 = vadd.xlane.f32.xlu0 %v9108
        %v9110 = vpop.xlane.xlu0 %9109
        %v9111 = vadd.f32 %v9110, %v7696
        %v9112 = vmax.f32 %v9111, 0.0
        %v9113 = vmul.f32 %v9112, %v7639
        %v9114 = vadd.f32 %v9106, %v9113
        %v9115 = vxor.u32 %v9114, 2147483648
        %v9116 = vmul.f32 %v9115, 1.442695
        %v9117 = vpow.pop %v9116
        %v9118 = vadd.f32 %v9117, 1.0
        %v9119 = vrcp.pop %v9118
        %v9120 = vmul.f32 1.0, %v9119
        %v9122 = vlaneseq
        %v9123 = vshrl.u32 %v9122, 7
        %v9124 = vsub.s32 0, %v9123
        %v9125 = vrot.slane %v9120, %v9124
        %9126 = vrot.lane.b32.xlu0 %v9125, 32
        %v9127 = vpop.permute.xlu0 %9126
        %9129 = vrot.lane.b32.xlu0 %v9125, 64
        %v9130 = vpop.permute.xlu0 %9129
        %9132 = vrot.lane.b32.xlu0 %v9125, 96
        %v9133 = vpop.permute.xlu0 %9132
        %v9135 = vsel %vm7721, %v9120, %v9127
        %v9136 = vsel %vm7723, %v9135, %v9130
        %v9137 = vsel %vm7725, %v9136, %v9133
        %v9138 = vlaneseq
        %v9139 = vshrl.u32 %v9138, 7
        %v9140 = vsub.s32 0, %v9139
        %v9141 = vrot.slane %v9137, %v9140
        %v9142 = vmul.f32 %v7625, %v9141
        %v9143 = vmul.f32 %v7626, %v9141
        %s9144 = scalar_lea.vmem %s397, 192 [#allocation3]
        %v9145 = vld [vmem:[%s9144] sm:$0xff]
        %v9146 = vld [vmem:[%s9144 + $0x8] sm:$0xff]
        %v9147 = vadd.f32 %v9142, %v9145
        %v9148 = vadd.f32 %v9143, %v9146
        %s9149 = scalar_lea.vmem %s448, 192 [#allocation11]
        %9150 = vst [vmem:[%s9149] sm:$0xff] %v9147
        %9151 = vst [vmem:[%s9149 + $0x8] sm:$0xff] %v9148
        %v9156 = vrot.slane %v7627, 2
        %v9157 = vrot.slane %v7629, 2
        %v9158 = vsel %vm7743, %v9156, %v9157
        %v9159 = vrot.slane %v7628, 2
        %v9160 = vrot.slane %v7630, 2
        %v9161 = vsel %vm7743, %v9159, %v9160
        %v9164 = vrot.slane %v9158, 4
        %v9165 = vadd.f32 %v9158, %v9164
        %v9166 = vrot.slane %v9165, 2
        %v9167 = vadd.f32 %v9165, %v9166
        %v9168 = vrot.slane %v9167, 1
        %v9169 = vadd.f32 %v9167, %v9168
        %v9170 = vrot.slane %v9161, 4
        %v9171 = vadd.f32 %v9161, %v9170
        %v9172 = vrot.slane %v9171, 2
        %v9173 = vadd.f32 %v9171, %v9172
        %v9174 = vrot.slane %v9173, 1
        %v9175 = vadd.f32 %v9173, %v9174
        %9177 = vrot.lane.b32.xlu0 %v9169, 96
        %v9178 = vpop.permute.xlu0 %9177
        %v9180 = vadd.f32 %v9169, %v9178
        %9181 = vrot.lane.b32.xlu0 %v9169, 64
        %v9182 = vpop.permute.xlu0 %9181
        %v9184 = vadd.f32 %v9180, %v9182
        %9185 = vrot.lane.b32.xlu0 %v9169, 32
        %v9186 = vpop.permute.xlu0 %9185
        %v9188 = vadd.f32 %v9184, %v9186
        %v9189 = vadd.f32 %v9188, %v9175
        %9191 = vrot.lane.b32.xlu0 %v9175, 96
        %v9192 = vpop.permute.xlu0 %9191
        %v9194 = vadd.f32 %v9189, %v9192
        %9195 = vrot.lane.b32.xlu0 %v9175, 64
        %v9196 = vpop.permute.xlu0 %9195
        %v9198 = vadd.f32 %v9194, %v9196
        %9199 = vrot.lane.b32.xlu0 %v9175, 32
        %v9200 = vpop.permute.xlu0 %9199
        %v9202 = vadd.f32 %v9198, %v9200
        %v9203 = vmul.f32 %v9202, 0.015625
        %v9204 = vmul.f32 %v9203, %v7636
        %v9205 = vsel %vm7683, %v9204, 0.0
        %9206 = vadd.xlane.f32.xlu0 %v9205
        %v9207 = vpop.xlane.xlu0 %9206
        %v9208 = vadd.f32 %v9207, %v7687
        %v9209 = vmax.f32 %v9208, 0.0
        %v9210 = vmul.f32 %v9209, %v7638
        %v9211 = vadd.f32 %v7635, %v9210
        %v9212 = vmul.f32 %v9203, %v7637
        %v9213 = vsel %vm7683, %v9212, 0.0
        %9214 = vadd.xlane.f32.xlu0 %v9213
        %v9215 = vpop.xlane.xlu0 %9214
        %v9216 = vadd.f32 %v9215, %v7696
        %v9217 = vmax.f32 %v9216, 0.0
        %v9218 = vmul.f32 %v9217, %v7639
        %v9219 = vadd.f32 %v9211, %v9218
        %v9220 = vxor.u32 %v9219, 2147483648
        %v9221 = vmul.f32 %v9220, 1.442695
        %v9222 = vpow.pop %v9221
        %v9223 = vadd.f32 %v9222, 1.0
        %v9224 = vrcp.pop %v9223
        %v9225 = vmul.f32 1.0, %v9224
        %v9227 = vlaneseq
        %v9228 = vshrl.u32 %v9227, 7
        %v9229 = vsub.s32 0, %v9228
        %v9230 = vrot.slane %v9225, %v9229
        %9231 = vrot.lane.b32.xlu0 %v9230, 32
        %v9232 = vpop.permute.xlu0 %9231
        %9234 = vrot.lane.b32.xlu0 %v9230, 64
        %v9235 = vpop.permute.xlu0 %9234
        %9237 = vrot.lane.b32.xlu0 %v9230, 96
        %v9238 = vpop.permute.xlu0 %9237
        %v9240 = vsel %vm7721, %v9225, %v9232
        %v9241 = vsel %vm7723, %v9240, %v9235
        %v9242 = vsel %vm7725, %v9241, %v9238
        %v9243 = vlaneseq
        %v9244 = vshrl.u32 %v9243, 7
        %v9245 = vsub.s32 0, %v9244
        %v9246 = vrot.slane %v9242, %v9245
        %v9247 = vmul.f32 %v7627, %v9246
        %v9248 = vmul.f32 %v7628, %v9246
        %v9249 = vmul.f32 %v7629, %v9246
        %v9250 = vmul.f32 %v7630, %v9246
        %s9251 = scalar_lea.vmem %s397, 208 [#allocation3]
        %v9252 = vld [vmem:[%s9251] sm:$0xff]
        %v9253 = vld [vmem:[%s9251 + $0x8] sm:$0xff]
        %v9256 = vrot.slane %v9252, 6
        %v9257 = vrot.slane %v9253, 6
        %v9260 = vadd.f32 %v9247, %v9256
        %v9261 = vadd.f32 %v9248, %v9257
        %v9262 = vadd.f32 %v9249, %v9256
        %v9263 = vadd.f32 %v9250, %v9257
        %v9268 = vrot.slane %v9260, 2
        %v9269 = vrot.slane %v9262, 2
        %v9270 = vsel %vm7743, %v9268, %v9269
        %v9271 = vrot.slane %v9261, 2
        %v9272 = vrot.slane %v9263, 2
        %v9273 = vsel %vm7743, %v9271, %v9272
        %s9276 = scalar_lea.vmem %s448, 208 [#allocation11]
        %9277 = vst [vmem:[%s9276] sm:$0xff] %v9270
        %9278 = vst [vmem:[%s9276 + $0x8] sm:$0xff] %v9273
        %v9281 = vrot.slane %v7629, 4
        %v9282 = vrot.slane %v7631, 4
        %v9283 = vsel %vm7869, %v9281, %v9282
        %v9284 = vrot.slane %v7630, 4
        %v9285 = vrot.slane %v7632, 4
        %v9286 = vsel %vm7869, %v9284, %v9285
        %v9289 = vrot.slane %v9283, 4
        %v9290 = vadd.f32 %v9283, %v9289
        %v9291 = vrot.slane %v9290, 2
        %v9292 = vadd.f32 %v9290, %v9291
        %v9293 = vrot.slane %v9292, 1
        %v9294 = vadd.f32 %v9292, %v9293
        %v9295 = vrot.slane %v9286, 4
        %v9296 = vadd.f32 %v9286, %v9295
        %v9297 = vrot.slane %v9296, 2
        %v9298 = vadd.f32 %v9296, %v9297
        %v9299 = vrot.slane %v9298, 1
        %v9300 = vadd.f32 %v9298, %v9299
        %9302 = vrot.lane.b32.xlu0 %v9294, 96
        %v9303 = vpop.permute.xlu0 %9302
        %v9305 = vadd.f32 %v9294, %v9303
        %9306 = vrot.lane.b32.xlu0 %v9294, 64
        %v9307 = vpop.permute.xlu0 %9306
        %v9309 = vadd.f32 %v9305, %v9307
        %9310 = vrot.lane.b32.xlu0 %v9294, 32
        %v9311 = vpop.permute.xlu0 %9310
        %v9313 = vadd.f32 %v9309, %v9311
        %v9314 = vadd.f32 %v9313, %v9300
        %9316 = vrot.lane.b32.xlu0 %v9300, 96
        %v9317 = vpop.permute.xlu0 %9316
        %v9319 = vadd.f32 %v9314, %v9317
        %9320 = vrot.lane.b32.xlu0 %v9300, 64
        %v9321 = vpop.permute.xlu0 %9320
        %v9323 = vadd.f32 %v9319, %v9321
        %9324 = vrot.lane.b32.xlu0 %v9300, 32
        %v9325 = vpop.permute.xlu0 %9324
        %v9327 = vadd.f32 %v9323, %v9325
        %v9328 = vmul.f32 %v9327, 0.015625
        %v9329 = vmul.f32 %v9328, %v7636
        %v9330 = vsel %vm7683, %v9329, 0.0
        %9331 = vadd.xlane.f32.xlu0 %v9330
        %v9332 = vpop.xlane.xlu0 %9331
        %v9333 = vadd.f32 %v9332, %v7687
        %v9334 = vmax.f32 %v9333, 0.0
        %v9335 = vmul.f32 %v9334, %v7638
        %v9336 = vadd.f32 %v7635, %v9335
        %v9337 = vmul.f32 %v9328, %v7637
        %v9338 = vsel %vm7683, %v9337, 0.0
        %9339 = vadd.xlane.f32.xlu0 %v9338
        %v9340 = vpop.xlane.xlu0 %9339
        %v9341 = vadd.f32 %v9340, %v7696
        %v9342 = vmax.f32 %v9341, 0.0
        %v9343 = vmul.f32 %v9342, %v7639
        %v9344 = vadd.f32 %v9336, %v9343
        %v9345 = vxor.u32 %v9344, 2147483648
        %v9346 = vmul.f32 %v9345, 1.442695
        %v9347 = vpow.pop %v9346
        %v9348 = vadd.f32 %v9347, 1.0
        %v9349 = vrcp.pop %v9348
        %v9350 = vmul.f32 1.0, %v9349
        %v9352 = vlaneseq
        %v9353 = vshrl.u32 %v9352, 7
        %v9354 = vsub.s32 0, %v9353
        %v9355 = vrot.slane %v9350, %v9354
        %9356 = vrot.lane.b32.xlu0 %v9355, 32
        %v9357 = vpop.permute.xlu0 %9356
        %9359 = vrot.lane.b32.xlu0 %v9355, 64
        %v9360 = vpop.permute.xlu0 %9359
        %9362 = vrot.lane.b32.xlu0 %v9355, 96
        %v9363 = vpop.permute.xlu0 %9362
        %v9365 = vsel %vm7721, %v9350, %v9357
        %v9366 = vsel %vm7723, %v9365, %v9360
        %v9367 = vsel %vm7725, %v9366, %v9363
        %v9368 = vlaneseq
        %v9369 = vshrl.u32 %v9368, 7
        %v9370 = vsub.s32 0, %v9369
        %v9371 = vrot.slane %v9367, %v9370
        %v9372 = vmul.f32 %v7629, %v9371
        %v9373 = vmul.f32 %v7630, %v9371
        %v9374 = vmul.f32 %v7631, %v9371
        %v9375 = vmul.f32 %v7632, %v9371
        %s9376 = scalar_lea.vmem %s397, 224 [#allocation3]
        %v9377 = vld [vmem:[%s9376] sm:$0xff]
        %v9378 = vld [vmem:[%s9376 + $0x8] sm:$0xff]
        %v9381 = vrot.slane %v9377, 4
        %v9382 = vrot.slane %v9378, 4
        %v9385 = vadd.f32 %v9372, %v9381
        %v9386 = vadd.f32 %v9373, %v9382
        %v9387 = vadd.f32 %v9374, %v9381
        %v9388 = vadd.f32 %v9375, %v9382
        %v9393 = vrot.slane %v9385, 4
        %v9394 = vrot.slane %v9387, 4
        %v9395 = vsel %vm7869, %v9393, %v9394
        %v9396 = vrot.slane %v9386, 4
        %v9397 = vrot.slane %v9388, 4
        %v9398 = vsel %vm7869, %v9396, %v9397
        %s9401 = scalar_lea.vmem %s448, 224 [#allocation11]
        %9402 = vst [vmem:[%s9401] sm:$0xff] %v9395
        %9403 = vst [vmem:[%s9401 + $0x8] sm:$0xff] %v9398
        %v9406 = vrot.slane %v7631, 6
        %v9407 = vrot.slane %v7633, 6
        %v9408 = vsel %vm7995, %v9406, %v9407
        %v9409 = vrot.slane %v7632, 6
        %v9410 = vrot.slane %v7634, 6
        %v9411 = vsel %vm7995, %v9409, %v9410
        %v9414 = vrot.slane %v9408, 4
        %v9415 = vadd.f32 %v9408, %v9414
        %v9416 = vrot.slane %v9415, 2
        %v9417 = vadd.f32 %v9415, %v9416
        %v9418 = vrot.slane %v9417, 1
        %v9419 = vadd.f32 %v9417, %v9418
        %v9420 = vrot.slane %v9411, 4
        %v9421 = vadd.f32 %v9411, %v9420
        %v9422 = vrot.slane %v9421, 2
        %v9423 = vadd.f32 %v9421, %v9422
        %v9424 = vrot.slane %v9423, 1
        %v9425 = vadd.f32 %v9423, %v9424
        %9427 = vrot.lane.b32.xlu0 %v9419, 96
        %v9428 = vpop.permute.xlu0 %9427
        %v9430 = vadd.f32 %v9419, %v9428
        %9431 = vrot.lane.b32.xlu0 %v9419, 64
        %v9432 = vpop.permute.xlu0 %9431
        %v9434 = vadd.f32 %v9430, %v9432
        %9435 = vrot.lane.b32.xlu0 %v9419, 32
        %v9436 = vpop.permute.xlu0 %9435
        %v9438 = vadd.f32 %v9434, %v9436
        %v9439 = vadd.f32 %v9438, %v9425
        %9441 = vrot.lane.b32.xlu0 %v9425, 96
        %v9442 = vpop.permute.xlu0 %9441
        %v9444 = vadd.f32 %v9439, %v9442
        %9445 = vrot.lane.b32.xlu0 %v9425, 64
        %v9446 = vpop.permute.xlu0 %9445
        %v9448 = vadd.f32 %v9444, %v9446
        %9449 = vrot.lane.b32.xlu0 %v9425, 32
        %v9450 = vpop.permute.xlu0 %9449
        %v9452 = vadd.f32 %v9448, %v9450
        %v9453 = vmul.f32 %v9452, 0.015625
        %v9454 = vmul.f32 %v9453, %v7636
        %v9455 = vsel %vm7683, %v9454, 0.0
        %9456 = vadd.xlane.f32.xlu0 %v9455
        %v9457 = vpop.xlane.xlu0 %9456
        %v9458 = vadd.f32 %v9457, %v7687
        %v9459 = vmax.f32 %v9458, 0.0
        %v9460 = vmul.f32 %v9459, %v7638
        %v9461 = vadd.f32 %v7635, %v9460
        %v9462 = vmul.f32 %v9453, %v7637
        %v9463 = vsel %vm7683, %v9462, 0.0
        %9464 = vadd.xlane.f32.xlu0 %v9463
        %v9465 = vpop.xlane.xlu0 %9464
        %v9466 = vadd.f32 %v9465, %v7696
        %v9467 = vmax.f32 %v9466, 0.0
        %v9468 = vmul.f32 %v9467, %v7639
        %v9469 = vadd.f32 %v9461, %v9468
        %v9470 = vxor.u32 %v9469, 2147483648
        %v9471 = vmul.f32 %v9470, 1.442695
        %v9472 = vpow.pop %v9471
        %v9473 = vadd.f32 %v9472, 1.0
        %v9474 = vrcp.pop %v9473
        %v9475 = vmul.f32 1.0, %v9474
        %v9477 = vlaneseq
        %v9478 = vshrl.u32 %v9477, 7
        %v9479 = vsub.s32 0, %v9478
        %v9480 = vrot.slane %v9475, %v9479
        %9481 = vrot.lane.b32.xlu0 %v9480, 32
        %v9482 = vpop.permute.xlu0 %9481
        %9484 = vrot.lane.b32.xlu0 %v9480, 64
        %v9485 = vpop.permute.xlu0 %9484
        %9487 = vrot.lane.b32.xlu0 %v9480, 96
        %v9488 = vpop.permute.xlu0 %9487
        %v9490 = vsel %vm7721, %v9475, %v9482
        %v9491 = vsel %vm7723, %v9490, %v9485
        %v9492 = vsel %vm7725, %v9491, %v9488
        %v9493 = vlaneseq
        %v9494 = vshrl.u32 %v9493, 7
        %v9495 = vsub.s32 0, %v9494
        %v9496 = vrot.slane %v9492, %v9495
        %v9497 = vmul.f32 %v7631, %v9496
        %v9498 = vmul.f32 %v7632, %v9496
        %v9499 = vmul.f32 %v7633, %v9496
        %v9500 = vmul.f32 %v7634, %v9496
        %s9501 = scalar_lea.vmem %s397, 240 [#allocation3]
        %v9502 = vld [vmem:[%s9501] sm:$0xff]
        %v9503 = vld [vmem:[%s9501 + $0x8] sm:$0xff]
        %v9506 = vrot.slane %v9502, 2
        %v9507 = vrot.slane %v9503, 2
        %v9510 = vadd.f32 %v9497, %v9506
        %v9511 = vadd.f32 %v9498, %v9507
        %v9512 = vadd.f32 %v9499, %v9506
        %v9513 = vadd.f32 %v9500, %v9507
        %v9518 = vrot.slane %v9510, 6
        %v9519 = vrot.slane %v9512, 6
        %v9520 = vsel %vm7995, %v9518, %v9519
        %v9521 = vrot.slane %v9511, 6
        %v9522 = vrot.slane %v9513, 6
        %v9523 = vsel %vm7995, %v9521, %v9522
        %s9526 = scalar_lea.vmem %s448, 240 [#allocation11]
        %9527 = vst [vmem:[%s9526] sm:$0xff] %v9520
        %9528 = vst [vmem:[%s9526 + $0x8] sm:$0xff] %v9523
        %s9529 = sand.u32 %s274, 1
        %s9530 = scalar_lea.sflag [#allocation5], %s9529
        %s9531 = sand.u32 %s274, 1
        %s9532 = smul.addr %s9531, 256
        %s9533 = scalar_lea.vmem [#allocation11], %s9532
        // Predicated region
        $region81: #{tpu_custom_call.1} parent=63 // pred_check
          %p9534 = pneg %p284
        $region82: #{tpu_custom_call.1} parent=63 // pred_check_branch
          %9536 = sbr.rel (%p9534) target = $region84
        $region83: #{tpu_custom_call.1} parent=63 // pred_region
          %s9537 = smul.u32 16, %s30
          %s9539 = ssub.s32 4096, 4096
          %9540 = vsyncadd %s9530, %s9539
          %s9541 = smul.addr %s9537, 2
          %s9542 = smul.addr %s9541, 128
          %s9543 = scalar_lea.hbm %s11, %s9542
          %s9544 = sshll.u32 %s9533, 4
          %s9545 = int_to_ptr.vmem [resolvable:$true] %s9544
          %9550 = dma.vmem_to_hbm [thread:$0]  %s9545, 4096, %s9543, %s9530, 256, 256, 16
        $region84: #{tpu_custom_call.1} parent=63 // pred_fallthru
          _
      $region64: #{tpu_custom_call.1} parent=5 // pred_fallthru
        _
      %p9551 = scmp.le.s32.totalorder 2, %s25
      // Predicated region
      $region85: #{tpu_custom_call.1} parent=5 // pred_check
        %p9552 = pneg %p9551
      $region86: #{tpu_custom_call.1} parent=5 // pred_check_branch
        %9554 = sbr.rel (%p9552) target = $region88
      $region87: #{tpu_custom_call.1} parent=5 // pred_region
        %s9555 = ssub.s32 %s25, 2
        // Predicated region
        $region89: #{tpu_custom_call.1} parent=87 // pred_check
          %p9556 = pneg %p290
        $region90: #{tpu_custom_call.1} parent=87 // pred_check_branch
          %9558 = sbr.rel (%p9556) target = $region92
        $region91: #{tpu_custom_call.1} parent=87 // pred_region
          %s9559 = sand.u32 %s275, 1
          %s9560 = scalar_lea.sflag [#allocation5], %s9559
          %s9561 = sand.u32 %s275, 1
          %s9562 = smul.addr %s9561, 256
          %s9563 = scalar_lea.vmem [#allocation11], %s9562
          %9564 = dma.done %s9560, 4096
        $region92: #{tpu_custom_call.1} parent=87 // pred_fallthru
          _
      $region88: #{tpu_custom_call.1} parent=5 // pred_fallthru
        _
    $region6: #{tpu_custom_call.1} parent=1 // loop_footer
      %s29 = sadd.s32 1, %s25
    $region7: #{tpu_custom_call.1} parent=1 // loop_footer_branch
      %24 = sbr.rel target = $region3
    $region8: #{tpu_custom_call.1} parent=1 // loop_exit
      _
    %9565 = vsyncpa [#allocation4], 1
    %s9566 = scalar_lea.sflag [#allocation4], 1
    %9567 = vsyncpa %s9566, 1
    %9568 = vsyncpa [#allocation8], 1
    %9569 = vsyncpa [#allocation5], 1
    %s9570 = scalar_lea.sflag [#allocation5], 1
    %9571 = vsyncpa %s9570, 1
    %9572 = vsyncpa [#allocation6], 1
    %s9573 = scalar_lea.sflag [#allocation6], 1
    %9574 = vsyncpa %s9573, 1

</llo_original>
